<compile_context>
chip_gen: v7x
topology: tpu7x:2x2x1
jax: 0.10.0
libtpu: 0.0.40
codegen_flags: <defaults>
</compile_context>

<pallas_src>
import functools

import jax
import jax.numpy as jnp
from jax.experimental import pallas as pl
from jax.experimental.pallas import tpu as pltpu

LANE = 128            # lane width used to pad the tiny FC outputs (trans=9, logits=k)
BB = 8                # clouds (sublanes) per conv grid step
ROWS_PER_STEP = 2048  # point-rows per conv grid step (~8 MiB of f32 1024-wide activations)


def _round_up(x, m):
    return ((x + m - 1) // m) * m


def _vmem_limit_bytes():
    """Scoped-VMEM limit that is legal on every generation (v7x has 64 MiB per TC)."""
    cap = 64 * 1024 * 1024
    try:
        cap = min(cap, int(pltpu.get_tpu_info().vmem_capacity_bytes))
    except Exception:   # older jax / no query available: keep the conservative cap
        pass
    return (cap * 3) // 4


# ------------------------------ Pallas kernels ------------------------------

def _accumulate_max(pool_ref, tile_max, t):
    """Running per-cloud max across the point-tile (reduction) grid axis."""
    @pl.when(t == 0)
    def _():
        pool_ref[...] = tile_max

    @pl.when(t != 0)
    def _():
        pool_ref[...] = jnp.maximum(pool_ref[...], tile_max)


def _conv23_and_pool(h1, w2, b2, w3, b3, last_relu, bb, tm):
    """conv2+bn2+relu -> conv3+bn3(+relu) -> per-cloud max.  h1: (bb*tm, 64) f32."""
    h = jnp.dot(h1.astype(jnp.bfloat16), w2[...],
                preferred_element_type=jnp.float32) + b2[...]
    h = jnp.maximum(h, 0.0)                                        # (bb*tm, 128)
    h = jnp.dot(h.astype(jnp.bfloat16), w3[...],
                preferred_element_type=jnp.float32) + b3[...]      # (bb*tm, 1024)
    if last_relu:
        h = jnp.maximum(h, 0.0)
    c_out = w3.shape[-1]
    return jnp.max(h.reshape(bb, tm, c_out), axis=1)               # (bb, 1024)


def stn_kernel(x_ref, w1, b1, w2, b2, w3, b3,
               f1w, f1b, f2w, f2b, f3w, f3b,
               trans_ref, pool_ref):
    """STN3d: conv1..3 (+folded BN, ReLU), global max-pool, FC head fused at last tile."""
    t = pl.program_id(1)
    bb, tm, _ = x_ref.shape
    x = x_ref[...].reshape(bb * tm, 3)                             # f32 points
    h1 = jnp.maximum(
        jnp.dot(x, w1[...], preferred_element_type=jnp.float32) + b1[...], 0.0)
    tile_max = _conv23_and_pool(h1, w2, b2, w3, b3, True, bb, tm)
    _accumulate_max(pool_ref, tile_max, t)

    @pl.when(t == pl.num_programs(1) - 1)
    def _():
        # FC head: 1024 -> 512 -> 256 -> 9 (identity folded into f3b, lane-padded).
        g = pool_ref[...]
        h = jnp.maximum(jnp.dot(g, f1w[...],
                                preferred_element_type=jnp.float32) + f1b[...], 0.0)
        h = jnp.maximum(jnp.dot(h, f2w[...],
                                preferred_element_type=jnp.float32) + f2b[...], 0.0)
        trans_ref[...] = jnp.dot(h, f3w[...],
                                 preferred_element_type=jnp.float32) + f3b[...]


def feat_kernel(x_ref, trans_ref, w1, b1, w2, b2, w3, b3,
                c1w, c1b, c2w, c2b, c3w, c3b,
                x1_ref, logp_ref):
    """PointNetfeat conv stack (STN transform folded into conv1) + classifier head."""
    t = pl.program_id(1)
    bb, tm, _ = x_ref.shape
    # W1_eff[b] = trans[b] @ W1 : tiny batched matmul, recomputed per step.
    w1_b = jnp.broadcast_to(w1[...], (bb,) + w1.shape)             # (bb, 3, 64)
    w1e = jnp.einsum('bij,bjk->bik', trans_ref[...], w1_b,
                     preferred_element_type=jnp.float32)           # (bb, 3, 64)
    h1 = jnp.einsum('btc,bcd->btd', x_ref[...], w1e,
                    preferred_element_type=jnp.float32).reshape(bb * tm, 64)
    h1 = jnp.maximum(h1 + b1[...], 0.0)
    # conv3+bn3 has NO ReLU before the max pool (matches PointNetfeat).
    tile_max = _conv23_and_pool(h1, w2, b2, w3, b3, False, bb, tm)
    _accumulate_max(x1_ref, tile_max, t)

    @pl.when(t == pl.num_programs(1) - 1)
    def _():
        # Classifier head + log_softmax; padded logit columns carry a -1e30 bias.
        g = x1_ref[...]
        h = jnp.maximum(jnp.dot(g, c1w[...],
                                preferred_element_type=jnp.float32) + c1b[...], 0.0)
        h = jnp.maximum(jnp.dot(h, c2w[...],
                                preferred_element_type=jnp.float32) + c2b[...], 0.0)
        xy = jnp.dot(h, c3w[...], preferred_element_type=jnp.float32) + c3b[...]
        m = jnp.max(xy, axis=1, keepdims=True)
        z = xy - m
        logp_ref[...] = z - jnp.log(jnp.sum(jnp.exp(z), axis=1, keepdims=True))


# ------------------------------- JAX wrapper --------------------------------

def _resident(arr):
    """Full-array VMEM block with a constant index_map (stays resident, no re-DMA)."""
    nd = arr.ndim
    return pl.BlockSpec(tuple(arr.shape), lambda i, t: (0,) * nd)


def pointnet_cls_forward(x_bcn, params, k=2):
    """x_bcn: (B, 3, N) f32 (PyTorch NCW).  Returns (log_softmax, trans, None, x1)."""
    B, C, N = x_bcn.shape
    assert C == 3

    # ---- tiling over clouds (BB = 8 sublanes) and points (TM) ----
    B_pad = _round_up(B, BB)
    TM = min(_round_up(N, 8), max(8, (ROWS_PER_STEP // BB) // 8 * 8))
    N_pad = _round_up(N, TM)
    grid = (B_pad // BB, N_pad // TM)

    # channels-last; pad the point axis by replicating edge points (max-pool safe),
    # pad the batch axis with zero clouds (sliced off below).
    x_pts = jnp.transpose(x_bcn, (0, 2, 1))          # (B, N, 3)
    if N_pad != N:
        x_pts = jnp.pad(x_pts, ((0, 0), (0, N_pad - N), (0, 0)), mode="edge")
    if B_pad != B:
        x_pts = jnp.pad(x_pts, ((0, B_pad - B), (0, 0), (0, 0)))

    x_spec = pl.BlockSpec((BB, TM, 3), lambda i, t: (i, t, 0))
    pool_spec = pl.BlockSpec((BB, 1024), lambda i, t: (i, 0))
    slab_spec = pl.BlockSpec((BB, LANE), lambda i, t: (i, 0))
    conv_cp = pltpu.CompilerParams(
        dimension_semantics=("parallel", "arbitrary"),
        vmem_limit_bytes=_vmem_limit_bytes())

    # ---- kernel A: STN3d conv stack + max pool + FC head -> trans (B, 3, 3) ----
    stn_args = params["stn_conv"] + params["stn_fc"]
    trans_slab = pl.pallas_call(
        stn_kernel,
        out_shape=jax.ShapeDtypeStruct((B_pad, LANE), jnp.float32),
        grid=grid,
        in_specs=[x_spec] + [_resident(w) for w in stn_args],
        out_specs=slab_spec,
        scratch_shapes=[pltpu.VMEM((BB, 1024), jnp.float32)],
        compiler_params=conv_cp,
    )(x_pts, *stn_args)
    trans_full = trans_slab[:, :9].reshape(B_pad, 3, 3)
    trans = trans_full[:B]

    # ---- kernel B: feat conv stack + max pool + classifier head -> (x1, logp) ----
    trans_spec = pl.BlockSpec((BB, 3, 3), lambda i, t: (i, 0, 0))
    feat_args = params["feat_conv"] + params["cls_fc"]
    x1_pad, logp_slab = pl.pallas_call(
        feat_kernel,
        out_shape=(jax.ShapeDtypeStruct((B_pad, 1024), jnp.float32),
                   jax.ShapeDtypeStruct((B_pad, LANE), jnp.float32)),
        grid=grid,
        in_specs=[x_spec, trans_spec] + [_resident(w) for w in feat_args],
        out_specs=(pool_spec, slab_spec),
        compiler_params=conv_cp,
    )(x_pts, trans_full, *feat_args)

    x1 = x1_pad[:B]
    logp = logp_slab[:B, :k]

    return logp, trans, None, x1   # (F.log_softmax(xy), trans, trans_feat, x1)


# --------------------------- deterministic params ---------------------------

def _linear_params(key, cin, cout):
    kw, kb = jax.random.split(key)
    bound = float(cin) ** -0.5
    w = jax.random.uniform(kw, (cin, cout), jnp.float32, -bound, bound)
    b = jax.random.uniform(kb, (1, cout), jnp.float32, -bound, bound)
    return w, b


def _fold_bn(w, b, eps=1e-5):
    # Inference-mode BatchNorm with default running stats, folded into (w, b).
    cout = w.shape[1]
    gamma = jnp.ones((cout,), jnp.float32)
    beta = jnp.zeros((cout,), jnp.float32)
    mean = jnp.zeros((cout,), jnp.float32)
    var = jnp.ones((cout,), jnp.float32)
    scale = gamma * jax.lax.rsqrt(var + eps)
    shift = beta - mean * scale
    return w * scale[None, :], b * scale[None, :] + shift[None, :]


def init_params(key, k=2):
    keys = iter(jax.random.split(key, 16))

    def bn_linear(cin, cout):
        return _fold_bn(*_linear_params(next(keys), cin, cout))

    def conv_stack():
        w1, b1 = bn_linear(3, 64)
        w2, b2 = bn_linear(64, 128)
        w3, b3 = bn_linear(128, 1024)
        # conv2/conv3 matmul operands in bf16 (MXU native); biases stay f32.
        return (w1, b1, w2.astype(jnp.bfloat16), b2, w3.astype(jnp.bfloat16), b3)

    stn_conv = conv_stack()
    f1w, f1b = bn_linear(1024, 512)
    f2w, f2b = bn_linear(512, 256)
    f3w, f3b = _linear_params(next(keys), 256, 9)
    # Fold the flattened 3x3 identity into the fc3 bias and lane-pad to 128.
    iden = jnp.eye(3, dtype=jnp.float32).reshape(1, 9)
    f3w = jnp.pad(f3w, ((0, 0), (0, LANE - 9)))
    f3b = jnp.pad(f3b + iden, ((0, 0), (0, LANE - 9)))

    feat_conv = conv_stack()
    c1w, c1b = bn_linear(1024, 512)
    c2w, c2b = bn_linear(512, 256)
    c3w, c3b = _linear_params(next(keys), 256, k)
    c3w = jnp.pad(c3w, ((0, 0), (0, LANE - k)))
    # -1e30 bias on padded logit columns keeps log_softmax exact for real classes.
    c3b = jnp.pad(c3b, ((0, 0), (0, LANE - k)), constant_values=-1e30)

    return {
        "stn_conv": stn_conv,
        "stn_fc": (f1w, f1b, f2w, f2b, f3w, f3b),
        "feat_conv": feat_conv,
        "cls_fc": (c1w, c1b, c2w, c2b, c3w, c3b),
    }


# ------------------------------------ main -----------------------------------

if __name__ == "__main__":
    B, C, N, K = 2, 3, 16, 2   # small shapes: batch=2, 3-D points, 16 points, 2 classes
    key = jax.random.PRNGKey(0)
    k_x, k_p = jax.random.split(key)
    x = jax.random.normal(k_x, (B, C, N), jnp.float32)
    params = init_params(k_p, k=K)

    fwd = jax.jit(functools.partial(pointnet_cls_forward, k=K))
    logp, trans, trans_feat, x1 = fwd(x, params)
    jax.block_until_ready((logp, trans, x1))

    assert logp.shape == (B, K)
    assert trans.shape == (B, 3, 3)
    assert trans_feat is None
    assert x1.shape == (B, 1024)
    # log_softmax rows must exponent-sum to ~1 (checks the lane-padding is benign).
    assert bool(jnp.all(jnp.abs(jnp.sum(jnp.exp(logp), axis=1) - 1.0) < 1e-3))
    print("KERNEL_OK")
</pallas_src>

<mosaic_0001>
module attributes {stable_mosaic.version = 11 : i64} {
  func.func @stn_kernel(%arg0: i32, %arg1: i32, %arg2: memref<8x16x3xf32, #tpu.memory_space<vmem>>, %arg3: memref<3x64xf32, #tpu.memory_space<vmem>>, %arg4: memref<1x64xf32, #tpu.memory_space<vmem>>, %arg5: memref<64x128xbf16, #tpu.memory_space<vmem>>, %arg6: memref<1x128xf32, #tpu.memory_space<vmem>>, %arg7: memref<128x1024xbf16, #tpu.memory_space<vmem>>, %arg8: memref<1x1024xf32, #tpu.memory_space<vmem>>, %arg9: memref<1024x512xf32, #tpu.memory_space<vmem>>, %arg10: memref<1x512xf32, #tpu.memory_space<vmem>>, %arg11: memref<512x256xf32, #tpu.memory_space<vmem>>, %arg12: memref<1x256xf32, #tpu.memory_space<vmem>>, %arg13: memref<256x128xf32, #tpu.memory_space<vmem>>, %arg14: memref<1x128xf32, #tpu.memory_space<vmem>>, %arg15: memref<8x128xf32, #tpu.memory_space<vmem>>, %arg16: memref<8x1024xf32, #tpu.memory_space<vmem>>) attributes {dimension_semantics = [#tpu.dimension_semantics<parallel>, #tpu.dimension_semantics<arbitrary>], iteration_bounds = array<i64: 1, 1>, scalar_prefetch = 0 : i64, scratch_operands = 1 : i64, tpu.core_type = #tpu.core_type<tc>, window_params = [{transform_indices = @transform_0, window_bounds = array<i64: 8, 16, 3>}, {pipeline_mode = #tpu.pipeline_mode<synchronous>, transform_indices = @transform_1, window_bounds = array<i64: 3, 64>}, {pipeline_mode = #tpu.pipeline_mode<synchronous>, transform_indices = @transform_2, window_bounds = array<i64: 1, 64>}, {pipeline_mode = #tpu.pipeline_mode<synchronous>, transform_indices = @transform_3, window_bounds = array<i64: 64, 128>}, {pipeline_mode = #tpu.pipeline_mode<synchronous>, transform_indices = @transform_4, window_bounds = array<i64: 1, 128>}, {pipeline_mode = #tpu.pipeline_mode<synchronous>, transform_indices = @transform_5, window_bounds = array<i64: 128, 1024>}, {pipeline_mode = #tpu.pipeline_mode<synchronous>, transform_indices = @transform_6, window_bounds = array<i64: 1, 1024>}, {pipeline_mode = #tpu.pipeline_mode<synchronous>, transform_indices = @transform_7, window_bounds = array<i64: 1024, 512>}, {pipeline_mode = #tpu.pipeline_mode<synchronous>, transform_indices = @transform_8, window_bounds = array<i64: 1, 512>}, {pipeline_mode = #tpu.pipeline_mode<synchronous>, transform_indices = @transform_9, window_bounds = array<i64: 512, 256>}, {pipeline_mode = #tpu.pipeline_mode<synchronous>, transform_indices = @transform_10, window_bounds = array<i64: 1, 256>}, {pipeline_mode = #tpu.pipeline_mode<synchronous>, transform_indices = @transform_11, window_bounds = array<i64: 256, 128>}, {pipeline_mode = #tpu.pipeline_mode<synchronous>, transform_indices = @transform_12, window_bounds = array<i64: 1, 128>}, {transform_indices = @transform_13, window_bounds = array<i64: 8, 128>}]} {
    %c0 = arith.constant 0 : index
    %c0_0 = arith.constant 0 : index
    %c0_1 = arith.constant 0 : index
    %0 = vector.load %arg2[%c0, %c0_0, %c0_1] : memref<8x16x3xf32, #tpu.memory_space<vmem>>, vector<8x16x3xf32>
    %1 = vector.shape_cast %0 : vector<8x16x3xf32> to vector<128x3xf32>
    %c0_2 = arith.constant 0 : index
    %c0_3 = arith.constant 0 : index
    %2 = vector.load %arg3[%c0_2, %c0_3] : memref<3x64xf32, #tpu.memory_space<vmem>>, vector<3x64xf32>
    %cst = arith.constant dense<0.000000e+00> : vector<128x64xf32>
    %3 = tpu.matmul %1, %2, %cst {dimension_numbers = #tpu.dot_dimension_numbers<[1], [0], [0], [1], [0, 0, 1, 1], [], []>} : vector<128x3xf32>, vector<3x64xf32>, vector<128x64xf32> -> vector<128x64xf32>
    %c0_4 = arith.constant 0 : index
    %c0_5 = arith.constant 0 : index
    %4 = vector.load %arg4[%c0_4, %c0_5] : memref<1x64xf32, #tpu.memory_space<vmem>>, vector<1x64xf32>
    %5 = vector.broadcast %4 : vector<1x64xf32> to vector<128x64xf32>
    %6 = arith.addf %3, %5 : vector<128x64xf32>
    %cst_6 = arith.constant 0.000000e+00 : f32
    %7 = vector.broadcast %cst_6 : f32 to vector<128x64xf32>
    %8 = arith.maximumf %6, %7 : vector<128x64xf32>
    %9 = arith.truncf %8 : vector<128x64xf32> to vector<128x64xbf16>
    %c0_7 = arith.constant 0 : index
    %c0_8 = arith.constant 0 : index
    %10 = vector.load %arg5[%c0_7, %c0_8] : memref<64x128xbf16, #tpu.memory_space<vmem>>, vector<64x128xbf16>
    %cst_9 = arith.constant dense<0.000000e+00> : vector<128x128xf32>
    %11 = tpu.matmul %9, %10, %cst_9 {dimension_numbers = #tpu.dot_dimension_numbers<[1], [0], [0], [1], [0, 0, 1, 1], [], []>} : vector<128x64xbf16>, vector<64x128xbf16>, vector<128x128xf32> -> vector<128x128xf32>
    %c0_10 = arith.constant 0 : index
    %c0_11 = arith.constant 0 : index
    %12 = vector.load %arg6[%c0_10, %c0_11] : memref<1x128xf32, #tpu.memory_space<vmem>>, vector<1x128xf32>
    %13 = vector.broadcast %12 : vector<1x128xf32> to vector<128x128xf32>
    %14 = arith.addf %11, %13 : vector<128x128xf32>
    %cst_12 = arith.constant 0.000000e+00 : f32
    %15 = vector.broadcast %cst_12 : f32 to vector<128x128xf32>
    %16 = arith.maximumf %14, %15 : vector<128x128xf32>
    %17 = arith.truncf %16 : vector<128x128xf32> to vector<128x128xbf16>
    %c0_13 = arith.constant 0 : index
    %c0_14 = arith.constant 0 : index
    %18 = vector.load %arg7[%c0_13, %c0_14] : memref<128x1024xbf16, #tpu.memory_space<vmem>>, vector<128x1024xbf16>
    %cst_15 = arith.constant dense<0.000000e+00> : vector<128x1024xf32>
    %19 = tpu.matmul %17, %18, %cst_15 {dimension_numbers = #tpu.dot_dimension_numbers<[1], [0], [0], [1], [0, 0, 1, 1], [], []>} : vector<128x128xbf16>, vector<128x1024xbf16>, vector<128x1024xf32> -> vector<128x1024xf32>
    %c0_16 = arith.constant 0 : index
    %c0_17 = arith.constant 0 : index
    %20 = vector.load %arg8[%c0_16, %c0_17] : memref<1x1024xf32, #tpu.memory_space<vmem>>, vector<1x1024xf32>
    %21 = vector.broadcast %20 : vector<1x1024xf32> to vector<128x1024xf32>
    %22 = arith.addf %19, %21 : vector<128x1024xf32>
    %cst_18 = arith.constant 0.000000e+00 : f32
    %23 = vector.broadcast %cst_18 : f32 to vector<128x1024xf32>
    %24 = arith.maximumf %22, %23 : vector<128x1024xf32>
    %25 = vector.shape_cast %24 : vector<128x1024xf32> to vector<8x16x1024xf32>
    %cst_19 = arith.constant dense<0xFF800000> : vector<8x1024xf32>
    %26 = vector.multi_reduction <maximumf>, %25, %cst_19 [1] : vector<8x16x1024xf32> to vector<8x1024xf32>
    %c0_i32 = arith.constant 0 : i32
    %27 = arith.cmpi eq, %arg1, %c0_i32 : i32
    %28 = arith.extui %27 : i1 to i32
    %c0_i32_20 = arith.constant 0 : i32
    %29 = arith.cmpi ne, %28, %c0_i32_20 : i32
    scf.if %29 {
      %c0_25 = arith.constant 0 : index
      %c0_26 = arith.constant 0 : index
      %36 = vector.load %arg16[%c0_25, %c0_26] : memref<8x1024xf32, #tpu.memory_space<vmem>>, vector<8x1024xf32>
      tpu.vector_store %arg16[%c0_25, %c0_26], %26 {strides = array<i32>} : memref<8x1024xf32, #tpu.memory_space<vmem>>, vector<8x1024xf32>,
    } else {
    }
    %c0_i32_21 = arith.constant 0 : i32
    %30 = arith.cmpi ne, %arg1, %c0_i32_21 : i32
    %31 = arith.extui %30 : i1 to i32
    %c0_i32_22 = arith.constant 0 : i32
    %32 = arith.cmpi ne, %31, %c0_i32_22 : i32
    scf.if %32 {
      %c0_25 = arith.constant 0 : index
      %c0_26 = arith.constant 0 : index
      %36 = vector.load %arg16[%c0_25, %c0_26] : memref<8x1024xf32, #tpu.memory_space<vmem>>, vector<8x1024xf32>
      %37 = arith.maximumf %36, %26 : vector<8x1024xf32>
      %c0_27 = arith.constant 0 : index
      %c0_28 = arith.constant 0 : index
      %38 = vector.load %arg16[%c0_27, %c0_28] : memref<8x1024xf32, #tpu.memory_space<vmem>>, vector<8x1024xf32>
      tpu.vector_store %arg16[%c0_27, %c0_28], %37 {strides = array<i32>} : memref<8x1024xf32, #tpu.memory_space<vmem>>, vector<8x1024xf32>,
    } else {
    }
    %c0_i32_23 = arith.constant 0 : i32
    %33 = arith.cmpi eq, %arg1, %c0_i32_23 : i32
    %34 = arith.extui %33 : i1 to i32
    %c0_i32_24 = arith.constant 0 : i32
    %35 = arith.cmpi ne, %34, %c0_i32_24 : i32
    scf.if %35 {
      %c0_25 = arith.constant 0 : index
      %c0_26 = arith.constant 0 : index
      %36 = vector.load %arg16[%c0_25, %c0_26] : memref<8x1024xf32, #tpu.memory_space<vmem>>, vector<8x1024xf32>
      %c0_27 = arith.constant 0 : index
      %c0_28 = arith.constant 0 : index
      %37 = vector.load %arg9[%c0_27, %c0_28] : memref<1024x512xf32, #tpu.memory_space<vmem>>, vector<1024x512xf32>
      %cst_29 = arith.constant dense<0.000000e+00> : vector<8x512xf32>
      %38 = tpu.matmul %36, %37, %cst_29 {dimension_numbers = #tpu.dot_dimension_numbers<[1], [0], [0], [1], [0, 0, 1, 1], [], []>} : vector<8x1024xf32>, vector<1024x512xf32>, vector<8x512xf32> -> vector<8x512xf32>
      %c0_30 = arith.constant 0 : index
      %c0_31 = arith.constant 0 : index
      %39 = vector.load %arg10[%c0_30, %c0_31] : memref<1x512xf32, #tpu.memory_space<vmem>>, vector<1x512xf32>
      %40 = vector.broadcast %39 : vector<1x512xf32> to vector<8x512xf32>
      %41 = arith.addf %38, %40 : vector<8x512xf32>
      %cst_32 = arith.constant 0.000000e+00 : f32
      %42 = vector.broadcast %cst_32 : f32 to vector<8x512xf32>
      %43 = arith.maximumf %41, %42 : vector<8x512xf32>
      %c0_33 = arith.constant 0 : index
      %c0_34 = arith.constant 0 : index
      %44 = vector.load %arg11[%c0_33, %c0_34] : memref<512x256xf32, #tpu.memory_space<vmem>>, vector<512x256xf32>
      %cst_35 = arith.constant dense<0.000000e+00> : vector<8x256xf32>
      %45 = tpu.matmul %43, %44, %cst_35 {dimension_numbers = #tpu.dot_dimension_numbers<[1], [0], [0], [1], [0, 0, 1, 1], [], []>} : vector<8x512xf32>, vector<512x256xf32>, vector<8x256xf32> -> vector<8x256xf32>
      %c0_36 = arith.constant 0 : index
      %c0_37 = arith.constant 0 : index
      %46 = vector.load %arg12[%c0_36, %c0_37] : memref<1x256xf32, #tpu.memory_space<vmem>>, vector<1x256xf32>
      %47 = vector.broadcast %46 : vector<1x256xf32> to vector<8x256xf32>
      %48 = arith.addf %45, %47 : vector<8x256xf32>
      %cst_38 = arith.constant 0.000000e+00 : f32
      %49 = vector.broadcast %cst_38 : f32 to vector<8x256xf32>
      %50 = arith.maximumf %48, %49 : vector<8x256xf32>
      %c0_39 = arith.constant 0 : index
      %c0_40 = arith.constant 0 : index
      %51 = vector.load %arg13[%c0_39, %c0_40] : memref<256x128xf32, #tpu.memory_space<vmem>>, vector<256x128xf32>
      %cst_41 = arith.constant dense<0.000000e+00> : vector<8x128xf32>
      %52 = tpu.matmul %50, %51, %cst_41 {dimension_numbers = #tpu.dot_dimension_numbers<[1], [0], [0], [1], [0, 0, 1, 1], [], []>} : vector<8x256xf32>, vector<256x128xf32>, vector<8x128xf32> -> vector<8x128xf32>
      %c0_42 = arith.constant 0 : index
      %c0_43 = arith.constant 0 : index
      %53 = vector.load %arg14[%c0_42, %c0_43] : memref<1x128xf32, #tpu.memory_space<vmem>>, vector<1x128xf32>
      %54 = vector.broadcast %53 : vector<1x128xf32> to vector<8x128xf32>
      %55 = arith.addf %52, %54 : vector<8x128xf32>
      %c0_44 = arith.constant 0 : index
      %c0_45 = arith.constant 0 : index
      %56 = vector.load %arg15[%c0_44, %c0_45] : memref<8x128xf32, #tpu.memory_space<vmem>>, vector<8x128xf32>
      tpu.vector_store %arg15[%c0_44, %c0_45], %55 {strides = array<i32>} : memref<8x128xf32, #tpu.memory_space<vmem>>, vector<8x128xf32>,
    } else {
    }
    return
  }
  func.func @transform_0(%arg0: i32, %arg1: i32) -> (i32, i32, i32) {
    %c0_i32 = arith.constant 0 : i32
    %c0_i32_0 = arith.constant 0 : i32
    return %arg0, %arg1, %c0_i32 : i32, i32, i32
  }
  func.func @transform_1(%arg0: i32, %arg1: i32) -> (i32, i32) {
    %c0_i32 = arith.constant 0 : i32
    %c0_i32_0 = arith.constant 0 : i32
    %c0_i32_1 = arith.constant 0 : i32
    return %c0_i32, %c0_i32_0 : i32, i32
  }
  func.func @transform_2(%arg0: i32, %arg1: i32) -> (i32, i32) {
    %c0_i32 = arith.constant 0 : i32
    %c0_i32_0 = arith.constant 0 : i32
    %c0_i32_1 = arith.constant 0 : i32
    return %c0_i32, %c0_i32_0 : i32, i32
  }
  func.func @transform_3(%arg0: i32, %arg1: i32) -> (i32, i32) {
    %c0_i32 = arith.constant 0 : i32
    %c0_i32_0 = arith.constant 0 : i32
    %c0_i32_1 = arith.constant 0 : i32
    return %c0_i32, %c0_i32_0 : i32, i32
  }
  func.func @transform_4(%arg0: i32, %arg1: i32) -> (i32, i32) {
    %c0_i32 = arith.constant 0 : i32
    %c0_i32_0 = arith.constant 0 : i32
    %c0_i32_1 = arith.constant 0 : i32
    return %c0_i32, %c0_i32_0 : i32, i32
  }
  func.func @transform_5(%arg0: i32, %arg1: i32) -> (i32, i32) {
    %c0_i32 = arith.constant 0 : i32
    %c0_i32_0 = arith.constant 0 : i32
    %c0_i32_1 = arith.constant 0 : i32
    return %c0_i32, %c0_i32_0 : i32, i32
  }
  func.func @transform_6(%arg0: i32, %arg1: i32) -> (i32, i32) {
    %c0_i32 = arith.constant 0 : i32
    %c0_i32_0 = arith.constant 0 : i32
    %c0_i32_1 = arith.constant 0 : i32
    return %c0_i32, %c0_i32_0 : i32, i32
  }
  func.func @transform_7(%arg0: i32, %arg1: i32) -> (i32, i32) {
    %c0_i32 = arith.constant 0 : i32
    %c0_i32_0 = arith.constant 0 : i32
    %c0_i32_1 = arith.constant 0 : i32
    return %c0_i32, %c0_i32_0 : i32, i32
  }
  func.func @transform_8(%arg0: i32, %arg1: i32) -> (i32, i32) {
    %c0_i32 = arith.constant 0 : i32
    %c0_i32_0 = arith.constant 0 : i32
    %c0_i32_1 = arith.constant 0 : i32
    return %c0_i32, %c0_i32_0 : i32, i32
  }
  func.func @transform_9(%arg0: i32, %arg1: i32) -> (i32, i32) {
    %c0_i32 = arith.constant 0 : i32
    %c0_i32_0 = arith.constant 0 : i32
    %c0_i32_1 = arith.constant 0 : i32
    return %c0_i32, %c0_i32_0 : i32, i32
  }
  func.func @transform_10(%arg0: i32, %arg1: i32) -> (i32, i32) {
    %c0_i32 = arith.constant 0 : i32
    %c0_i32_0 = arith.constant 0 : i32
    %c0_i32_1 = arith.constant 0 : i32
    return %c0_i32, %c0_i32_0 : i32, i32
  }
  func.func @transform_11(%arg0: i32, %arg1: i32) -> (i32, i32) {
    %c0_i32 = arith.constant 0 : i32
    %c0_i32_0 = arith.constant 0 : i32
    %c0_i32_1 = arith.constant 0 : i32
    return %c0_i32, %c0_i32_0 : i32, i32
  }
  func.func @transform_12(%arg0: i32, %arg1: i32) -> (i32, i32) {
    %c0_i32 = arith.constant 0 : i32
    %c0_i32_0 = arith.constant 0 : i32
    %c0_i32_1 = arith.constant 0 : i32
    return %c0_i32, %c0_i32_0 : i32, i32
  }
  func.func @transform_13(%arg0: i32, %arg1: i32) -> (i32, i32) {
    %c0_i32 = arith.constant 0 : i32
    %c0_i32_0 = arith.constant 0 : i32
    return %arg0, %c0_i32 : i32, i32
  }
}

module attributes {stable_mosaic.version = 11 : i64} {
  func.func @feat_kernel(%arg0: i32, %arg1: i32, %arg2: memref<8x16x3xf32, #tpu.memory_space<vmem>>, %arg3: memref<8x3x3xf32, #tpu.memory_space<vmem>>, %arg4: memref<3x64xf32, #tpu.memory_space<vmem>>, %arg5: memref<1x64xf32, #tpu.memory_space<vmem>>, %arg6: memref<64x128xbf16, #tpu.memory_space<vmem>>, %arg7: memref<1x128xf32, #tpu.memory_space<vmem>>, %arg8: memref<128x1024xbf16, #tpu.memory_space<vmem>>, %arg9: memref<1x1024xf32, #tpu.memory_space<vmem>>, %arg10: memref<1024x512xf32, #tpu.memory_space<vmem>>, %arg11: memref<1x512xf32, #tpu.memory_space<vmem>>, %arg12: memref<512x256xf32, #tpu.memory_space<vmem>>, %arg13: memref<1x256xf32, #tpu.memory_space<vmem>>, %arg14: memref<256x128xf32, #tpu.memory_space<vmem>>, %arg15: memref<1x128xf32, #tpu.memory_space<vmem>>, %arg16: memref<8x1024xf32, #tpu.memory_space<vmem>>, %arg17: memref<8x128xf32, #tpu.memory_space<vmem>>) attributes {dimension_semantics = [#tpu.dimension_semantics<parallel>, #tpu.dimension_semantics<arbitrary>], iteration_bounds = array<i64: 1, 1>, scalar_prefetch = 0 : i64, scratch_operands = 0 : i64, tpu.core_type = #tpu.core_type<tc>, window_params = [{transform_indices = @transform_0, window_bounds = array<i64: 8, 16, 3>}, {transform_indices = @transform_1, window_bounds = array<i64: 8, 3, 3>}, {pipeline_mode = #tpu.pipeline_mode<synchronous>, transform_indices = @transform_2, window_bounds = array<i64: 3, 64>}, {pipeline_mode = #tpu.pipeline_mode<synchronous>, transform_indices = @transform_3, window_bounds = array<i64: 1, 64>}, {pipeline_mode = #tpu.pipeline_mode<synchronous>, transform_indices = @transform_4, window_bounds = array<i64: 64, 128>}, {pipeline_mode = #tpu.pipeline_mode<synchronous>, transform_indices = @transform_5, window_bounds = array<i64: 1, 128>}, {pipeline_mode = #tpu.pipeline_mode<synchronous>, transform_indices = @transform_6, window_bounds = array<i64: 128, 1024>}, {pipeline_mode = #tpu.pipeline_mode<synchronous>, transform_indices = @transform_7, window_bounds = array<i64: 1, 1024>}, {pipeline_mode = #tpu.pipeline_mode<synchronous>, transform_indices = @transform_8, window_bounds = array<i64: 1024, 512>}, {pipeline_mode = #tpu.pipeline_mode<synchronous>, transform_indices = @transform_9, window_bounds = array<i64: 1, 512>}, {pipeline_mode = #tpu.pipeline_mode<synchronous>, transform_indices = @transform_10, window_bounds = array<i64: 512, 256>}, {pipeline_mode = #tpu.pipeline_mode<synchronous>, transform_indices = @transform_11, window_bounds = array<i64: 1, 256>}, {pipeline_mode = #tpu.pipeline_mode<synchronous>, transform_indices = @transform_12, window_bounds = array<i64: 256, 128>}, {pipeline_mode = #tpu.pipeline_mode<synchronous>, transform_indices = @transform_13, window_bounds = array<i64: 1, 128>}, {transform_indices = @transform_14, window_bounds = array<i64: 8, 1024>}, {transform_indices = @transform_15, window_bounds = array<i64: 8, 128>}]} {
    %c0 = arith.constant 0 : index
    %c0_0 = arith.constant 0 : index
    %0 = vector.load %arg4[%c0, %c0_0] : memref<3x64xf32, #tpu.memory_space<vmem>>, vector<3x64xf32>
    %1 = vector.shape_cast %0 : vector<3x64xf32> to vector<1x3x64xf32>
    %2 = vector.broadcast %1 : vector<1x3x64xf32> to vector<8x3x64xf32>
    %c0_1 = arith.constant 0 : index
    %c0_2 = arith.constant 0 : index
    %c0_3 = arith.constant 0 : index
    %3 = vector.load %arg3[%c0_1, %c0_2, %c0_3] : memref<8x3x3xf32, #tpu.memory_space<vmem>>, vector<8x3x3xf32>
    "tpu.trace_start"() <{level = 10 : i32, message = "bij,bjk->bik"}> : () -> ()
    %cst = arith.constant dense<0.000000e+00> : vector<8x3x64xf32>
    %4 = tpu.matmul %3, %2, %cst {dimension_numbers = #tpu.dot_dimension_numbers<[2], [1], [1], [2], [0, 0, 0, 1, 1, 2], [0], [0]>} : vector<8x3x3xf32>, vector<8x3x64xf32>, vector<8x3x64xf32> -> vector<8x3x64xf32>
    "tpu.trace_stop"() : () -> ()
    %c0_4 = arith.constant 0 : index
    %c0_5 = arith.constant 0 : index
    %c0_6 = arith.constant 0 : index
    %5 = vector.load %arg2[%c0_4, %c0_5, %c0_6] : memref<8x16x3xf32, #tpu.memory_space<vmem>>, vector<8x16x3xf32>
    "tpu.trace_start"() <{level = 10 : i32, message = "btc,bcd->btd"}> : () -> ()
    %cst_7 = arith.constant dense<0.000000e+00> : vector<8x16x64xf32>
    %6 = tpu.matmul %5, %4, %cst_7 {dimension_numbers = #tpu.dot_dimension_numbers<[2], [1], [1], [2], [0, 0, 0, 1, 1, 2], [0], [0]>} : vector<8x16x3xf32>, vector<8x3x64xf32>, vector<8x16x64xf32> -> vector<8x16x64xf32>
    "tpu.trace_stop"() : () -> ()
    %7 = vector.shape_cast %6 : vector<8x16x64xf32> to vector<128x64xf32>
    %c0_8 = arith.constant 0 : index
    %c0_9 = arith.constant 0 : index
    %8 = vector.load %arg5[%c0_8, %c0_9] : memref<1x64xf32, #tpu.memory_space<vmem>>, vector<1x64xf32>
    %9 = vector.broadcast %8 : vector<1x64xf32> to vector<128x64xf32>
    %10 = arith.addf %7, %9 : vector<128x64xf32>
    %cst_10 = arith.constant 0.000000e+00 : f32
    %11 = vector.broadcast %cst_10 : f32 to vector<128x64xf32>
    %12 = arith.maximumf %10, %11 : vector<128x64xf32>
    %13 = arith.truncf %12 : vector<128x64xf32> to vector<128x64xbf16>
    %c0_11 = arith.constant 0 : index
    %c0_12 = arith.constant 0 : index
    %14 = vector.load %arg6[%c0_11, %c0_12] : memref<64x128xbf16, #tpu.memory_space<vmem>>, vector<64x128xbf16>
    %cst_13 = arith.constant dense<0.000000e+00> : vector<128x128xf32>
    %15 = tpu.matmul %13, %14, %cst_13 {dimension_numbers = #tpu.dot_dimension_numbers<[1], [0], [0], [1], [0, 0, 1, 1], [], []>} : vector<128x64xbf16>, vector<64x128xbf16>, vector<128x128xf32> -> vector<128x128xf32>
    %c0_14 = arith.constant 0 : index
    %c0_15 = arith.constant 0 : index
    %16 = vector.load %arg7[%c0_14, %c0_15] : memref<1x128xf32, #tpu.memory_space<vmem>>, vector<1x128xf32>
    %17 = vector.broadcast %16 : vector<1x128xf32> to vector<128x128xf32>
    %18 = arith.addf %15, %17 : vector<128x128xf32>
    %cst_16 = arith.constant 0.000000e+00 : f32
    %19 = vector.broadcast %cst_16 : f32 to vector<128x128xf32>
    %20 = arith.maximumf %18, %19 : vector<128x128xf32>
    %21 = arith.truncf %20 : vector<128x128xf32> to vector<128x128xbf16>
    %c0_17 = arith.constant 0 : index
    %c0_18 = arith.constant 0 : index
    %22 = vector.load %arg8[%c0_17, %c0_18] : memref<128x1024xbf16, #tpu.memory_space<vmem>>, vector<128x1024xbf16>
    %cst_19 = arith.constant dense<0.000000e+00> : vector<128x1024xf32>
    %23 = tpu.matmul %21, %22, %cst_19 {dimension_numbers = #tpu.dot_dimension_numbers<[1], [0], [0], [1], [0, 0, 1, 1], [], []>} : vector<128x128xbf16>, vector<128x1024xbf16>, vector<128x1024xf32> -> vector<128x1024xf32>
    %c0_20 = arith.constant 0 : index
    %c0_21 = arith.constant 0 : index
    %24 = vector.load %arg9[%c0_20, %c0_21] : memref<1x1024xf32, #tpu.memory_space<vmem>>, vector<1x1024xf32>
    %25 = vector.broadcast %24 : vector<1x1024xf32> to vector<128x1024xf32>
    %26 = arith.addf %23, %25 : vector<128x1024xf32>
    %27 = vector.shape_cast %26 : vector<128x1024xf32> to vector<8x16x1024xf32>
    %cst_22 = arith.constant dense<0xFF800000> : vector<8x1024xf32>
    %28 = vector.multi_reduction <maximumf>, %27, %cst_22 [1] : vector<8x16x1024xf32> to vector<8x1024xf32>
    %c0_i32 = arith.constant 0 : i32
    %29 = arith.cmpi eq, %arg1, %c0_i32 : i32
    %30 = arith.extui %29 : i1 to i32
    %c0_i32_23 = arith.constant 0 : i32
    %31 = arith.cmpi ne, %30, %c0_i32_23 : i32
    scf.if %31 {
      %c0_28 = arith.constant 0 : index
      %c0_29 = arith.constant 0 : index
      %38 = vector.load %arg16[%c0_28, %c0_29] : memref<8x1024xf32, #tpu.memory_space<vmem>>, vector<8x1024xf32>
      tpu.vector_store %arg16[%c0_28, %c0_29], %28 {strides = array<i32>} : memref<8x1024xf32, #tpu.memory_space<vmem>>, vector<8x1024xf32>,
    } else {
    }
    %c0_i32_24 = arith.constant 0 : i32
    %32 = arith.cmpi ne, %arg1, %c0_i32_24 : i32
    %33 = arith.extui %32 : i1 to i32
    %c0_i32_25 = arith.constant 0 : i32
    %34 = arith.cmpi ne, %33, %c0_i32_25 : i32
    scf.if %34 {
      %c0_28 = arith.constant 0 : index
      %c0_29 = arith.constant 0 : index
      %38 = vector.load %arg16[%c0_28, %c0_29] : memref<8x1024xf32, #tpu.memory_space<vmem>>, vector<8x1024xf32>
      %39 = arith.maximumf %38, %28 : vector<8x1024xf32>
      %c0_30 = arith.constant 0 : index
      %c0_31 = arith.constant 0 : index
      %40 = vector.load %arg16[%c0_30, %c0_31] : memref<8x1024xf32, #tpu.memory_space<vmem>>, vector<8x1024xf32>
      tpu.vector_store %arg16[%c0_30, %c0_31], %39 {strides = array<i32>} : memref<8x1024xf32, #tpu.memory_space<vmem>>, vector<8x1024xf32>,
    } else {
    }
    %c0_i32_26 = arith.constant 0 : i32
    %35 = arith.cmpi eq, %arg1, %c0_i32_26 : i32
    %36 = arith.extui %35 : i1 to i32
    %c0_i32_27 = arith.constant 0 : i32
    %37 = arith.cmpi ne, %36, %c0_i32_27 : i32
    scf.if %37 {
      %c0_28 = arith.constant 0 : index
      %c0_29 = arith.constant 0 : index
      %38 = vector.load %arg16[%c0_28, %c0_29] : memref<8x1024xf32, #tpu.memory_space<vmem>>, vector<8x1024xf32>
      %c0_30 = arith.constant 0 : index
      %c0_31 = arith.constant 0 : index
      %39 = vector.load %arg10[%c0_30, %c0_31] : memref<1024x512xf32, #tpu.memory_space<vmem>>, vector<1024x512xf32>
      %cst_32 = arith.constant dense<0.000000e+00> : vector<8x512xf32>
      %40 = tpu.matmul %38, %39, %cst_32 {dimension_numbers = #tpu.dot_dimension_numbers<[1], [0], [0], [1], [0, 0, 1, 1], [], []>} : vector<8x1024xf32>, vector<1024x512xf32>, vector<8x512xf32> -> vector<8x512xf32>
      %c0_33 = arith.constant 0 : index
      %c0_34 = arith.constant 0 : index
      %41 = vector.load %arg11[%c0_33, %c0_34] : memref<1x512xf32, #tpu.memory_space<vmem>>, vector<1x512xf32>
      %42 = vector.broadcast %41 : vector<1x512xf32> to vector<8x512xf32>
      %43 = arith.addf %40, %42 : vector<8x512xf32>
      %cst_35 = arith.constant 0.000000e+00 : f32
      %44 = vector.broadcast %cst_35 : f32 to vector<8x512xf32>
      %45 = arith.maximumf %43, %44 : vector<8x512xf32>
      %c0_36 = arith.constant 0 : index
      %c0_37 = arith.constant 0 : index
      %46 = vector.load %arg12[%c0_36, %c0_37] : memref<512x256xf32, #tpu.memory_space<vmem>>, vector<512x256xf32>
      %cst_38 = arith.constant dense<0.000000e+00> : vector<8x256xf32>
      %47 = tpu.matmul %45, %46, %cst_38 {dimension_numbers = #tpu.dot_dimension_numbers<[1], [0], [0], [1], [0, 0, 1, 1], [], []>} : vector<8x512xf32>, vector<512x256xf32>, vector<8x256xf32> -> vector<8x256xf32>
      %c0_39 = arith.constant 0 : index
      %c0_40 = arith.constant 0 : index
      %48 = vector.load %arg13[%c0_39, %c0_40] : memref<1x256xf32, #tpu.memory_space<vmem>>, vector<1x256xf32>
      %49 = vector.broadcast %48 : vector<1x256xf32> to vector<8x256xf32>
      %50 = arith.addf %47, %49 : vector<8x256xf32>
      %cst_41 = arith.constant 0.000000e+00 : f32
      %51 = vector.broadcast %cst_41 : f32 to vector<8x256xf32>
      %52 = arith.maximumf %50, %51 : vector<8x256xf32>
      %c0_42 = arith.constant 0 : index
      %c0_43 = arith.constant 0 : index
      %53 = vector.load %arg14[%c0_42, %c0_43] : memref<256x128xf32, #tpu.memory_space<vmem>>, vector<256x128xf32>
      %cst_44 = arith.constant dense<0.000000e+00> : vector<8x128xf32>
      %54 = tpu.matmul %52, %53, %cst_44 {dimension_numbers = #tpu.dot_dimension_numbers<[1], [0], [0], [1], [0, 0, 1, 1], [], []>} : vector<8x256xf32>, vector<256x128xf32>, vector<8x128xf32> -> vector<8x128xf32>
      %c0_45 = arith.constant 0 : index
      %c0_46 = arith.constant 0 : index
      %55 = vector.load %arg15[%c0_45, %c0_46] : memref<1x128xf32, #tpu.memory_space<vmem>>, vector<1x128xf32>
      %56 = vector.broadcast %55 : vector<1x128xf32> to vector<8x128xf32>
      %57 = arith.addf %54, %56 : vector<8x128xf32>
      %cst_47 = arith.constant dense<0xFF800000> : vector<8xf32>
      %58 = vector.multi_reduction <maximumf>, %57, %cst_47 [1] : vector<8x128xf32> to vector<8xf32>
      %59 = vector.shape_cast %58 : vector<8xf32> to vector<8x1xf32>
      %60 = vector.broadcast %59 : vector<8x1xf32> to vector<8x128xf32>
      %61 = arith.subf %57, %60 : vector<8x128xf32>
      %62 = math.exp %61 : vector<8x128xf32>
      %cst_48 = arith.constant dense<0.000000e+00> : vector<8xf32>
      %63 = vector.multi_reduction <add>, %62, %cst_48 [1] : vector<8x128xf32> to vector<8xf32>
      %64 = vector.shape_cast %63 : vector<8xf32> to vector<8x1xf32>
      %65 = math.log %64 : vector<8x1xf32>
      %66 = vector.broadcast %65 : vector<8x1xf32> to vector<8x128xf32>
      %67 = arith.subf %61, %66 : vector<8x128xf32>
      %c0_49 = arith.constant 0 : index
      %c0_50 = arith.constant 0 : index
      %68 = vector.load %arg17[%c0_49, %c0_50] : memref<8x128xf32, #tpu.memory_space<vmem>>, vector<8x128xf32>
      tpu.vector_store %arg17[%c0_49, %c0_50], %67 {strides = array<i32>} : memref<8x128xf32, #tpu.memory_space<vmem>>, vector<8x128xf32>,
    } else {
    }
    return
  }
  func.func @transform_0(%arg0: i32, %arg1: i32) -> (i32, i32, i32) {
    %c0_i32 = arith.constant 0 : i32
    %c0_i32_0 = arith.constant 0 : i32
    return %arg0, %arg1, %c0_i32 : i32, i32, i32
  }
  func.func @transform_1(%arg0: i32, %arg1: i32) -> (i32, i32, i32) {
    %c0_i32 = arith.constant 0 : i32
    %c0_i32_0 = arith.constant 0 : i32
    %c0_i32_1 = arith.constant 0 : i32
    return %arg0, %c0_i32, %c0_i32_0 : i32, i32, i32
  }
  func.func @transform_2(%arg0: i32, %arg1: i32) -> (i32, i32) {
    %c0_i32 = arith.constant 0 : i32
    %c0_i32_0 = arith.constant 0 : i32
    %c0_i32_1 = arith.constant 0 : i32
    return %c0_i32, %c0_i32_0 : i32, i32
  }
  func.func @transform_3(%arg0: i32, %arg1: i32) -> (i32, i32) {
    %c0_i32 = arith.constant 0 : i32
    %c0_i32_0 = arith.constant 0 : i32
    %c0_i32_1 = arith.constant 0 : i32
    return %c0_i32, %c0_i32_0 : i32, i32
  }
  func.func @transform_4(%arg0: i32, %arg1: i32) -> (i32, i32) {
    %c0_i32 = arith.constant 0 : i32
    %c0_i32_0 = arith.constant 0 : i32
    %c0_i32_1 = arith.constant 0 : i32
    return %c0_i32, %c0_i32_0 : i32, i32
  }
  func.func @transform_5(%arg0: i32, %arg1: i32) -> (i32, i32) {
    %c0_i32 = arith.constant 0 : i32
    %c0_i32_0 = arith.constant 0 : i32
    %c0_i32_1 = arith.constant 0 : i32
    return %c0_i32, %c0_i32_0 : i32, i32
  }
  func.func @transform_6(%arg0: i32, %arg1: i32) -> (i32, i32) {
    %c0_i32 = arith.constant 0 : i32
    %c0_i32_0 = arith.constant 0 : i32
    %c0_i32_1 = arith.constant 0 : i32
    return %c0_i32, %c0_i32_0 : i32, i32
  }
  func.func @transform_7(%arg0: i32, %arg1: i32) -> (i32, i32) {
    %c0_i32 = arith.constant 0 : i32
    %c0_i32_0 = arith.constant 0 : i32
    %c0_i32_1 = arith.constant 0 : i32
    return %c0_i32, %c0_i32_0 : i32, i32
  }
  func.func @transform_8(%arg0: i32, %arg1: i32) -> (i32, i32) {
    %c0_i32 = arith.constant 0 : i32
    %c0_i32_0 = arith.constant 0 : i32
    %c0_i32_1 = arith.constant 0 : i32
    return %c0_i32, %c0_i32_0 : i32, i32
  }
  func.func @transform_9(%arg0: i32, %arg1: i32) -> (i32, i32) {
    %c0_i32 = arith.constant 0 : i32
    %c0_i32_0 = arith.constant 0 : i32
    %c0_i32_1 = arith.constant 0 : i32
    return %c0_i32, %c0_i32_0 : i32, i32
  }
  func.func @transform_10(%arg0: i32, %arg1: i32) -> (i32, i32) {
    %c0_i32 = arith.constant 0 : i32
    %c0_i32_0 = arith.constant 0 : i32
    %c0_i32_1 = arith.constant 0 : i32
    return %c0_i32, %c0_i32_0 : i32, i32
  }
  func.func @transform_11(%arg0: i32, %arg1: i32) -> (i32, i32) {
    %c0_i32 = arith.constant 0 : i32
    %c0_i32_0 = arith.constant 0 : i32
    %c0_i32_1 = arith.constant 0 : i32
    return %c0_i32, %c0_i32_0 : i32, i32
  }
  func.func @transform_12(%arg0: i32, %arg1: i32) -> (i32, i32) {
    %c0_i32 = arith.constant 0 : i32
    %c0_i32_0 = arith.constant 0 : i32
    %c0_i32_1 = arith.constant 0 : i32
    return %c0_i32, %c0_i32_0 : i32, i32
  }
  func.func @transform_13(%arg0: i32, %arg1: i32) -> (i32, i32) {
    %c0_i32 = arith.constant 0 : i32
    %c0_i32_0 = arith.constant 0 : i32
    %c0_i32_1 = arith.constant 0 : i32
    return %c0_i32, %c0_i32_0 : i32, i32
  }
  func.func @transform_14(%arg0: i32, %arg1: i32) -> (i32, i32) {
    %c0_i32 = arith.constant 0 : i32
    %c0_i32_0 = arith.constant 0 : i32
    return %arg0, %c0_i32 : i32, i32
  }
  func.func @transform_15(%arg0: i32, %arg1: i32) -> (i32, i32) {
    %c0_i32 = arith.constant 0 : i32
    %c0_i32_0 = arith.constant 0 : i32
    return %arg0, %c0_i32 : i32, i32
  }
}

</mosaic_0001>

<llo_original>
// kernel: pointnet_cls_forward.2
$region0: #{pointnet_cls_forward.2}
  #allocation0 [shape = 'u32[]', space=smem, size = 0x4, offset = 0x4, fixed_abs, tag = 'smem constant byte address 0x4 - core index']
  #allocation1 [shape = 'u32[144,128]{1,0:T(1,128)}', space=vmem, size = 0x12000, scoped, tag = 'internal scratch']
  #allocation2 [shape = 'f32[8,1024]{1,0:T(8,128)}', space=vmem, size = 0x8000, scoped, tag = 'scratch operand']
  %s0 = inlined_call_operand.vmem [shape: f32[8,16,3], index: 0, kind: input, shape index: {}]
  %s1 = inlined_call_operand.hbm [shape: f32[3,64], index: 1, kind: input, shape index: {}]
  %s2 = inlined_call_operand.hbm [shape: f32[1,64], index: 2, kind: input, shape index: {}]
  %s3 = inlined_call_operand.hbm [shape: bf16[64,128], index: 3, kind: input, shape index: {}]
  %s4 = inlined_call_operand.hbm [shape: f32[1,128], index: 4, kind: input, shape index: {}]
  %s5 = inlined_call_operand.hbm [shape: bf16[128,1024], index: 5, kind: input, shape index: {}]
  %s6 = inlined_call_operand.hbm [shape: f32[1,1024], index: 6, kind: input, shape index: {}]
  %s7 = inlined_call_operand.hbm [shape: f32[1024,512], index: 7, kind: input, shape index: {}]
  %s8 = inlined_call_operand.hbm [shape: f32[1,512], index: 8, kind: input, shape index: {}]
  %s9 = inlined_call_operand.hbm [shape: f32[512,256], index: 9, kind: input, shape index: {}]
  %s10 = inlined_call_operand.hbm [shape: f32[1,256], index: 10, kind: input, shape index: {}]
  %s11 = inlined_call_operand.hbm [shape: f32[256,128], index: 11, kind: input, shape index: {}]
  %s12 = inlined_call_operand.hbm [shape: f32[1,128], index: 12, kind: input, shape index: {}]
  %s13 = inlined_call_operand.vmem [shape: f32[8,128], index: 13, kind: output, shape index: {}]
  %s14 = sld [smem:[#allocation0]]
  $region122: #{pointnet_cls_forward.2} parent=0
    _
  %s16 = ssub.s32 1, %s14
  %s17 = scalar_select 0, %s16, %s14
  $region1: #{pointnet_cls_forward.2} parent=0
    #allocation3 [shape = 'u8[2048]{0}', space=vmem, size = 0x800, scoped, tag = 'input window, operand 1, single buffered']
    #allocation4 [shape = 's32[1]{0}', space=sflag, size = 0x4, scoped, tag = 'scoped memory for pointnet_cls_forward.2']
    #allocation5 [shape = 'u8[512]{0}', space=vmem, size = 0x400, scoped, tag = 'input window, operand 2, single buffered']
    #allocation6 [shape = 's32[1]{0}', space=sflag, size = 0x4, scoped, tag = 'scoped memory for pointnet_cls_forward.2']
    #allocation7 [shape = 'u8[16384]{0}', space=vmem, size = 0x4000, scoped, tag = 'input window, operand 3, single buffered']
    #allocation8 [shape = 'u8[512]{0}', space=vmem, size = 0x400, scoped, tag = 'input window, operand 4, single buffered']
    #allocation9 [shape = 's32[1]{0}', space=sflag, size = 0x4, scoped, tag = 'scoped memory for pointnet_cls_forward.2']
    #allocation10 [shape = 'u8[262144]{0}', space=vmem, size = 0x40000, scoped, tag = 'input window, operand 5, single buffered']
    #allocation11 [shape = 'u8[4096]{0}', space=vmem, size = 0x1000, scoped, tag = 'input window, operand 6, single buffered']
    #allocation12 [shape = 's32[1]{0}', space=sflag, size = 0x4, scoped, tag = 'scoped memory for pointnet_cls_forward.2']
    #allocation13 [shape = 'u8[2097152]{0}', space=vmem, size = 0x200000, scoped, tag = 'input window, operand 7, single buffered']
    #allocation14 [shape = 'u8[2048]{0}', space=vmem, size = 0x800, scoped, tag = 'input window, operand 8, single buffered']
    #allocation15 [shape = 's32[1]{0}', space=sflag, size = 0x4, scoped, tag = 'scoped memory for pointnet_cls_forward.2']
    #allocation16 [shape = 'u8[524288]{0}', space=vmem, size = 0x80000, scoped, tag = 'input window, operand 9, single buffered']
    #allocation17 [shape = 'u8[1024]{0}', space=vmem, size = 0x400, scoped, tag = 'input window, operand 10, single buffered']
    #allocation18 [shape = 's32[1]{0}', space=sflag, size = 0x4, scoped, tag = 'scoped memory for pointnet_cls_forward.2']
    #allocation19 [shape = 'u8[131072]{0}', space=vmem, size = 0x20000, scoped, tag = 'input window, operand 11, single buffered']
    #allocation20 [shape = 'u8[512]{0}', space=vmem, size = 0x400, scoped, tag = 'input window, operand 12, single buffered']
    #allocation21 [shape = 's32[1]{0}', space=sflag, size = 0x4, scoped, tag = 'scoped memory for pointnet_cls_forward.2']
    %18 = vsyncpa [#allocation4], 0
    %19 = vsyncpa [#allocation6], 0
    %20 = vsyncpa [#allocation9], 0
    %21 = vsyncpa [#allocation12], 0
    %22 = vsyncpa [#allocation15], 0
    %23 = vsyncpa [#allocation18], 0
    %24 = vsyncpa [#allocation21], 0
    // Predicated region
    $region2: #{pointnet_cls_forward.2} parent=1 // pred_check
      _
    $region3: #{pointnet_cls_forward.2} parent=1 // pred_check_branch
      %26 = sbr.rel (0) target = $region5
    $region4: #{pointnet_cls_forward.2} parent=1 // pred_region
      _
    $region5: #{pointnet_cls_forward.2} parent=1 // pred_fallthru
      _
    // Predicated region
    $region6: #{pointnet_cls_forward.2} parent=1 // pred_check
      _
    $region7: #{pointnet_cls_forward.2} parent=1 // pred_check_branch
      %28 = sbr.rel (0) target = $region9
    $region8: #{pointnet_cls_forward.2} parent=1 // pred_region
      %s30 = ssub.s32 64, 64
      %31 = vsyncadd [#allocation4], %s30
      %s33 = sshll.u32 [#allocation3], 4
      %s34 = int_to_ptr.vmem [resolvable:$true] %s33
      %36 = dma.hbm_to_vmem [thread:$0]  %s1, 64, %s34, [#allocation4]
    $region9: #{pointnet_cls_forward.2} parent=1 // pred_fallthru
      _
    // Predicated region
    $region10: #{pointnet_cls_forward.2} parent=1 // pred_check
      _
    $region11: #{pointnet_cls_forward.2} parent=1 // pred_check_branch
      %38 = sbr.rel (0) target = $region13
    $region12: #{pointnet_cls_forward.2} parent=1 // pred_region
      %s40 = ssub.s32 16, 16
      %41 = vsyncadd [#allocation6], %s40
      %s43 = sshll.u32 [#allocation5], 4
      %s44 = int_to_ptr.vmem [resolvable:$true] %s43
      %46 = dma.hbm_to_vmem [thread:$0]  %s2, 16, %s44, [#allocation6]
    $region13: #{pointnet_cls_forward.2} parent=1 // pred_fallthru
      _
    // Predicated region
    $region14: #{pointnet_cls_forward.2} parent=1 // pred_check
      _
    $region15: #{pointnet_cls_forward.2} parent=1 // pred_check_branch
      %48 = sbr.rel (0) target = $region17
    $region16: #{pointnet_cls_forward.2} parent=1 // pred_region
      %s50 = ssub.s32 512, 512
      %51 = vsyncadd [#allocation6], %s50
      %s52 = sshll.u32 [#allocation7], 4
      %s53 = int_to_ptr.vmem [resolvable:$true] %s52
      %58 = dma.hbm_to_vmem [thread:$0]  %s3, 512, %s53, [#allocation6], 64, 64, 4
    $region17: #{pointnet_cls_forward.2} parent=1 // pred_fallthru
      _
    // Predicated region
    $region18: #{pointnet_cls_forward.2} parent=1 // pred_check
      _
    $region19: #{pointnet_cls_forward.2} parent=1 // pred_check_branch
      %60 = sbr.rel (0) target = $region21
    $region20: #{pointnet_cls_forward.2} parent=1 // pred_region
      %s62 = ssub.s32 16, 16
      %63 = vsyncadd [#allocation9], %s62
      %s65 = sshll.u32 [#allocation8], 4
      %s66 = int_to_ptr.vmem [resolvable:$true] %s65
      %68 = dma.hbm_to_vmem [thread:$0]  %s4, 16, %s66, [#allocation9]
    $region21: #{pointnet_cls_forward.2} parent=1 // pred_fallthru
      _
    // Predicated region
    $region22: #{pointnet_cls_forward.2} parent=1 // pred_check
      _
    $region23: #{pointnet_cls_forward.2} parent=1 // pred_check_branch
      %70 = sbr.rel (0) target = $region25
    $region24: #{pointnet_cls_forward.2} parent=1 // pred_region
      %s72 = ssub.s32 8192, 8192
      %73 = vsyncadd [#allocation9], %s72
      %s74 = sshll.u32 [#allocation10], 4
      %s75 = int_to_ptr.vmem [resolvable:$true] %s74
      %80 = dma.hbm_to_vmem [thread:$0]  %s5, 8192, %s75, [#allocation9], 512, 512, 32
    $region25: #{pointnet_cls_forward.2} parent=1 // pred_fallthru
      _
    // Predicated region
    $region26: #{pointnet_cls_forward.2} parent=1 // pred_check
      _
    $region27: #{pointnet_cls_forward.2} parent=1 // pred_check_branch
      %82 = sbr.rel (0) target = $region29
    $region28: #{pointnet_cls_forward.2} parent=1 // pred_region
      %s84 = ssub.s32 128, 128
      %85 = vsyncadd [#allocation12], %s84
      %s87 = sshll.u32 [#allocation11], 4
      %s88 = int_to_ptr.vmem [resolvable:$true] %s87
      %90 = dma.hbm_to_vmem [thread:$0]  %s6, 128, %s88, [#allocation12]
    $region29: #{pointnet_cls_forward.2} parent=1 // pred_fallthru
      _
    // Predicated region
    $region30: #{pointnet_cls_forward.2} parent=1 // pred_check
      _
    $region31: #{pointnet_cls_forward.2} parent=1 // pred_check_branch
      %92 = sbr.rel (0) target = $region33
    $region32: #{pointnet_cls_forward.2} parent=1 // pred_region
      %s94 = ssub.s32 65536, 65536
      %95 = vsyncadd [#allocation12], %s94
      %s96 = sshll.u32 [#allocation13], 4
      %s97 = int_to_ptr.vmem [resolvable:$true] %s96
      %102 = dma.hbm_to_vmem [thread:$0]  %s7, 65536, %s97, [#allocation12], 512, 512, 32
    $region33: #{pointnet_cls_forward.2} parent=1 // pred_fallthru
      _
    // Predicated region
    $region34: #{pointnet_cls_forward.2} parent=1 // pred_check
      _
    $region35: #{pointnet_cls_forward.2} parent=1 // pred_check_branch
      %104 = sbr.rel (0) target = $region37
    $region36: #{pointnet_cls_forward.2} parent=1 // pred_region
      %s106 = ssub.s32 64, 64
      %107 = vsyncadd [#allocation15], %s106
      %s109 = sshll.u32 [#allocation14], 4
      %s110 = int_to_ptr.vmem [resolvable:$true] %s109
      %112 = dma.hbm_to_vmem [thread:$0]  %s8, 64, %s110, [#allocation15]
    $region37: #{pointnet_cls_forward.2} parent=1 // pred_fallthru
      _
    // Predicated region
    $region38: #{pointnet_cls_forward.2} parent=1 // pred_check
      _
    $region39: #{pointnet_cls_forward.2} parent=1 // pred_check_branch
      %114 = sbr.rel (0) target = $region41
    $region40: #{pointnet_cls_forward.2} parent=1 // pred_region
      %s116 = ssub.s32 16384, 16384
      %117 = vsyncadd [#allocation15], %s116
      %s118 = sshll.u32 [#allocation16], 4
      %s119 = int_to_ptr.vmem [resolvable:$true] %s118
      %124 = dma.hbm_to_vmem [thread:$0]  %s9, 16384, %s119, [#allocation15], 256, 256, 16
    $region41: #{pointnet_cls_forward.2} parent=1 // pred_fallthru
      _
    // Predicated region
    $region42: #{pointnet_cls_forward.2} parent=1 // pred_check
      _
    $region43: #{pointnet_cls_forward.2} parent=1 // pred_check_branch
      %126 = sbr.rel (0) target = $region45
    $region44: #{pointnet_cls_forward.2} parent=1 // pred_region
      %s128 = ssub.s32 32, 32
      %129 = vsyncadd [#allocation18], %s128
      %s131 = sshll.u32 [#allocation17], 4
      %s132 = int_to_ptr.vmem [resolvable:$true] %s131
      %134 = dma.hbm_to_vmem [thread:$0]  %s10, 32, %s132, [#allocation18]
    $region45: #{pointnet_cls_forward.2} parent=1 // pred_fallthru
      _
    // Predicated region
    $region46: #{pointnet_cls_forward.2} parent=1 // pred_check
      _
    $region47: #{pointnet_cls_forward.2} parent=1 // pred_check_branch
      %136 = sbr.rel (0) target = $region49
    $region48: #{pointnet_cls_forward.2} parent=1 // pred_region
      %s138 = ssub.s32 4096, 4096
      %139 = vsyncadd [#allocation18], %s138
      %s140 = sshll.u32 [#allocation19], 4
      %s141 = int_to_ptr.vmem [resolvable:$true] %s140
      %146 = dma.hbm_to_vmem [thread:$0]  %s11, 4096, %s141, [#allocation18], 128, 128, 8
    $region49: #{pointnet_cls_forward.2} parent=1 // pred_fallthru
      _
    // Predicated region
    $region50: #{pointnet_cls_forward.2} parent=1 // pred_check
      _
    $region51: #{pointnet_cls_forward.2} parent=1 // pred_check_branch
      %148 = sbr.rel (0) target = $region53
    $region52: #{pointnet_cls_forward.2} parent=1 // pred_region
      %s150 = ssub.s32 16, 16
      %151 = vsyncadd [#allocation21], %s150
      %s153 = sshll.u32 [#allocation20], 4
      %s154 = int_to_ptr.vmem [resolvable:$true] %s153
      %156 = dma.hbm_to_vmem [thread:$0]  %s12, 16, %s154, [#allocation21]
    $region53: #{pointnet_cls_forward.2} parent=1 // pred_fallthru
      _
    // Predicated region
    $region54: #{pointnet_cls_forward.2} parent=1 // pred_check
      _
    $region55: #{pointnet_cls_forward.2} parent=1 // pred_check_branch
      %158 = sbr.rel (0) target = $region57
    $region56: #{pointnet_cls_forward.2} parent=1 // pred_region
      %159 = dma.done [#allocation4], 64
    $region57: #{pointnet_cls_forward.2} parent=1 // pred_fallthru
      _
    // Predicated region
    $region58: #{pointnet_cls_forward.2} parent=1 // pred_check
      _
    $region59: #{pointnet_cls_forward.2} parent=1 // pred_check_branch
      %161 = sbr.rel (0) target = $region61
    $region60: #{pointnet_cls_forward.2} parent=1 // pred_region
      %162 = dma.done [#allocation6], 16
    $region61: #{pointnet_cls_forward.2} parent=1 // pred_fallthru
      _
    // Predicated region
    $region62: #{pointnet_cls_forward.2} parent=1 // pred_check
      _
    $region63: #{pointnet_cls_forward.2} parent=1 // pred_check_branch
      %164 = sbr.rel (0) target = $region65
    $region64: #{pointnet_cls_forward.2} parent=1 // pred_region
      %165 = dma.done [#allocation6], 512
    $region65: #{pointnet_cls_forward.2} parent=1 // pred_fallthru
      _
    // Predicated region
    $region66: #{pointnet_cls_forward.2} parent=1 // pred_check
      _
    $region67: #{pointnet_cls_forward.2} parent=1 // pred_check_branch
      %167 = sbr.rel (0) target = $region69
    $region68: #{pointnet_cls_forward.2} parent=1 // pred_region
      %168 = dma.done [#allocation9], 16
    $region69: #{pointnet_cls_forward.2} parent=1 // pred_fallthru
      _
    // Predicated region
    $region70: #{pointnet_cls_forward.2} parent=1 // pred_check
      _
    $region71: #{pointnet_cls_forward.2} parent=1 // pred_check_branch
      %170 = sbr.rel (0) target = $region73
    $region72: #{pointnet_cls_forward.2} parent=1 // pred_region
      %171 = dma.done [#allocation9], 8192
    $region73: #{pointnet_cls_forward.2} parent=1 // pred_fallthru
      _
    // Predicated region
    $region74: #{pointnet_cls_forward.2} parent=1 // pred_check
      _
    $region75: #{pointnet_cls_forward.2} parent=1 // pred_check_branch
      %173 = sbr.rel (0) target = $region77
    $region76: #{pointnet_cls_forward.2} parent=1 // pred_region
      %174 = dma.done [#allocation12], 128
    $region77: #{pointnet_cls_forward.2} parent=1 // pred_fallthru
      _
    // Predicated region
    $region78: #{pointnet_cls_forward.2} parent=1 // pred_check
      _
    $region79: #{pointnet_cls_forward.2} parent=1 // pred_check_branch
      %176 = sbr.rel (0) target = $region81
    $region80: #{pointnet_cls_forward.2} parent=1 // pred_region
      %177 = dma.done [#allocation12], 65536
    $region81: #{pointnet_cls_forward.2} parent=1 // pred_fallthru
      _
    // Predicated region
    $region82: #{pointnet_cls_forward.2} parent=1 // pred_check
      _
    $region83: #{pointnet_cls_forward.2} parent=1 // pred_check_branch
      %179 = sbr.rel (0) target = $region85
    $region84: #{pointnet_cls_forward.2} parent=1 // pred_region
      %180 = dma.done [#allocation15], 64
    $region85: #{pointnet_cls_forward.2} parent=1 // pred_fallthru
      _
    // Predicated region
    $region86: #{pointnet_cls_forward.2} parent=1 // pred_check
      _
    $region87: #{pointnet_cls_forward.2} parent=1 // pred_check_branch
      %182 = sbr.rel (0) target = $region89
    $region88: #{pointnet_cls_forward.2} parent=1 // pred_region
      %183 = dma.done [#allocation15], 16384
    $region89: #{pointnet_cls_forward.2} parent=1 // pred_fallthru
      _
    // Predicated region
    $region90: #{pointnet_cls_forward.2} parent=1 // pred_check
      _
    $region91: #{pointnet_cls_forward.2} parent=1 // pred_check_branch
      %185 = sbr.rel (0) target = $region93
    $region92: #{pointnet_cls_forward.2} parent=1 // pred_region
      %186 = dma.done [#allocation18], 32
    $region93: #{pointnet_cls_forward.2} parent=1 // pred_fallthru
      _
    // Predicated region
    $region94: #{pointnet_cls_forward.2} parent=1 // pred_check
      _
    $region95: #{pointnet_cls_forward.2} parent=1 // pred_check_branch
      %188 = sbr.rel (0) target = $region97
    $region96: #{pointnet_cls_forward.2} parent=1 // pred_region
      %189 = dma.done [#allocation18], 4096
    $region97: #{pointnet_cls_forward.2} parent=1 // pred_fallthru
      _
    // Predicated region
    $region98: #{pointnet_cls_forward.2} parent=1 // pred_check
      _
    $region99: #{pointnet_cls_forward.2} parent=1 // pred_check_branch
      %191 = sbr.rel (0) target = $region101
    $region100: #{pointnet_cls_forward.2} parent=1 // pred_region
      %192 = dma.done [#allocation21], 16
    $region101: #{pointnet_cls_forward.2} parent=1 // pred_fallthru
      _
    %v194 = vld [vmem:[%s0] sm:$0xff]
    %v195 = vld [vmem:[%s0 + $0x8] sm:$0xff]
    %v196 = vld [vmem:[%s0 + $0x10] sm:$0xff]
    %v197 = vld [vmem:[%s0 + $0x18] sm:$0xff]
    %v198 = vld [vmem:[%s0 + $0x20] sm:$0xff]
    %v199 = vld [vmem:[%s0 + $0x28] sm:$0xff]
    %v200 = vld [vmem:[%s0 + $0x30] sm:$0xff]
    %v201 = vld [vmem:[%s0 + $0x38] sm:$0xff]
    %v202 = vld [vmem:[%s0 + $0x40] sm:$0xff]
    %v203 = vld [vmem:[%s0 + $0x48] sm:$0xff]
    %v204 = vld [vmem:[%s0 + $0x50] sm:$0xff]
    %v205 = vld [vmem:[%s0 + $0x58] sm:$0xff]
    %v206 = vld [vmem:[%s0 + $0x60] sm:$0xff]
    %v207 = vld [vmem:[%s0 + $0x68] sm:$0xff]
    %v208 = vld [vmem:[%s0 + $0x70] sm:$0xff]
    %v209 = vld [vmem:[%s0 + $0x78] sm:$0xff]
    %v210 = vld [vmem:[#allocation3] sm:$0x7]
    %v211 = vld [vmem:[#allocation5] sm:$0x1]
    %v213 = vlaneseq
    %v214 = vshrl.u32 %v213, 7
    %v215 = vsub.s32 0, %v214
    %v216 = vrot.slane %v211, %v215
    %vm218 = vcmask 23552
    %v220 = vsel %vm218, %v194, 0
    %v223 = vsel %vm218, %v195, 0
    %v226 = vsel %vm218, %v196, 0
    %v229 = vsel %vm218, %v197, 0
    %v232 = vsel %vm218, %v198, 0
    %v235 = vsel %vm218, %v199, 0
    %v238 = vsel %vm218, %v200, 0
    %v241 = vsel %vm218, %v201, 0
    %v244 = vsel %vm218, %v202, 0
    %v247 = vsel %vm218, %v203, 0
    %v250 = vsel %vm218, %v204, 0
    %v253 = vsel %vm218, %v205, 0
    %v256 = vsel %vm218, %v206, 0
    %v259 = vsel %vm218, %v207, 0
    %v262 = vsel %vm218, %v208, 0
    %v265 = vsel %vm218, %v209, 0
    %vm267 = vcmask 1042432
    %v269 = vsel %vm267, %v210, 0
    %271 = vmatprep.subr.mxu0 0.0
    %272 = vmatpush1.msra.mxu0 %v269
    %273 = vmatprep.subr.mxu0 0.0
    %274 = vmatpush1.msra.mxu0 0.0
    %275 = vmatprep.subr.mxu0 0.0
    %276 = vmatpush1.msra.mxu0 0.0
    %277 = vmatprep.subr.mxu0 0.0
    %278 = vmatpush1.msra.mxu0 0.0
    %279 = vmatprep.subr.mxu0 0.0
    %280 = vmatpush1.msra.mxu0 0.0
    %281 = vmatprep.subr.mxu0 0.0
    %282 = vmatpush1.msra.mxu0 0.0
    %283 = vmatprep.subr.mxu0 0.0
    %284 = vmatpush1.msra.mxu0 0.0
    %285 = vmatprep.subr.mxu0 0.0
    %286 = vmatpush1.msra.mxu0 0.0
    %287 = vmatprep.subr.mxu0 0.0
    %288 = vmatpush1.msra.mxu0 0.0
    %289 = vmatprep.subr.mxu0 0.0
    %290 = vmatpush1.msra.mxu0 0.0
    %291 = vmatprep.subr.mxu0 0.0
    %292 = vmatpush1.msra.mxu0 0.0
    %293 = vmatprep.subr.mxu0 0.0
    %294 = vmatpush1.msra.mxu0 0.0
    %295 = vmatprep.subr.mxu0 0.0
    %296 = vmatpush1.msra.mxu0 0.0
    %297 = vmatprep.subr.mxu0 0.0
    %298 = vmatpush1.msra.mxu0 0.0
    %299 = vmatprep.subr.mxu0 0.0
    %300 = vmatpush1.msra.mxu0 0.0
    %301 = vmatprep.subr.mxu0 0.0
    %302 = vmatpush1.msra.mxu0 0.0
    %303 = vmatprep.subr.mxu0 0.0
    %304 = vmatpush1.msra.mxu0 0.0
    %305 = vmatprep.subr.mxu0 0.0
    %306 = vmatpush1.msra.mxu0 0.0
    %307 = vmatprep.subr.mxu0 0.0
    %308 = vmatpush1.msra.mxu0 0.0
    %309 = vmatprep.subr.mxu0 0.0
    %310 = vmatpush1.msra.mxu0 0.0
    %311 = vmatprep.subr.mxu0 0.0
    %312 = vmatpush1.msra.mxu0 0.0
    %313 = vmatprep.subr.mxu0 0.0
    %314 = vmatpush1.msra.mxu0 0.0
    %315 = vmatprep.subr.mxu0 0.0
    %316 = vmatpush1.msra.mxu0 0.0
    %317 = vmatprep.subr.mxu0 0.0
    %318 = vmatpush1.msra.mxu0 0.0
    %319 = vmatprep.subr.mxu0 0.0
    %320 = vmatpush1.msra.mxu0 0.0
    %321 = vmatprep.subr.mxu0 0.0
    %322 = vmatpush1.msra.mxu0 0.0
    %323 = vmatprep.subr.mxu0 0.0
    %324 = vmatpush1.msra.mxu0 0.0
    %325 = vmatprep.subr.mxu0 0.0
    %326 = vmatpush1.msra.mxu0 0.0
    %327 = vmatprep.subr.mxu0 0.0
    %328 = vmatpush1.msra.mxu0 0.0
    %329 = vmatprep.subr.mxu0 0.0
    %330 = vmatpush1.msra.mxu0 0.0
    %331 = vmatprep.subr.mxu0 0.0
    %332 = vmatpush1.msra.mxu0 0.0
    %333 = vmatprep.subr.mxu0 0.0
    %334 = vmatpush1.msra.mxu0 0.0
    %335 = vmatprep.mubr.f32.mxu0 0.0
    %336 = vmatmul.mubr.f32.gmra.mrb[0].mxu0 %v220
    %v337 = vpop.f32.mrb[0].mxu0
    %v338 = vadd.f32 %v216, %v337
    %v339 = vpop.f32.mrb[0].mxu0
    %340 = vmatprep.mubr.f32.mxu0 0.0
    %341 = vmatmul.mubr.f32.gmra.mrb[0].mxu0 %v223
    %v342 = vpop.f32.mrb[0].mxu0
    %v343 = vadd.f32 %v216, %v342
    %v344 = vpop.f32.mrb[0].mxu0
    %345 = vmatprep.mubr.f32.mxu0 0.0
    %346 = vmatmul.mubr.f32.gmra.mrb[0].mxu0 %v226
    %v347 = vpop.f32.mrb[0].mxu0
    %v348 = vadd.f32 %v216, %v347
    %v349 = vpop.f32.mrb[0].mxu0
    %350 = vmatprep.mubr.f32.mxu0 0.0
    %351 = vmatmul.mubr.f32.gmra.mrb[0].mxu0 %v229
    %v352 = vpop.f32.mrb[0].mxu0
    %v353 = vadd.f32 %v216, %v352
    %v354 = vpop.f32.mrb[0].mxu0
    %355 = vmatprep.mubr.f32.mxu0 0.0
    %356 = vmatmul.mubr.f32.gmra.mrb[0].mxu0 %v232
    %v357 = vpop.f32.mrb[0].mxu0
    %v358 = vadd.f32 %v216, %v357
    %v359 = vpop.f32.mrb[0].mxu0
    %360 = vmatprep.mubr.f32.mxu0 0.0
    %361 = vmatmul.mubr.f32.gmra.mrb[0].mxu0 %v235
    %v362 = vpop.f32.mrb[0].mxu0
    %v363 = vadd.f32 %v216, %v362
    %v364 = vpop.f32.mrb[0].mxu0
    %365 = vmatprep.mubr.f32.mxu0 0.0
    %366 = vmatmul.mubr.f32.gmra.mrb[0].mxu0 %v238
    %v367 = vpop.f32.mrb[0].mxu0
    %v368 = vadd.f32 %v216, %v367
    %v369 = vpop.f32.mrb[0].mxu0
    %370 = vmatprep.mubr.f32.mxu0 0.0
    %371 = vmatmul.mubr.f32.gmra.mrb[0].mxu0 %v241
    %v372 = vpop.f32.mrb[0].mxu0
    %v373 = vadd.f32 %v216, %v372
    %v374 = vpop.f32.mrb[0].mxu0
    %375 = vmatprep.mubr.f32.mxu0 0.0
    %376 = vmatmul.mubr.f32.gmra.mrb[0].mxu0 %v244
    %v377 = vpop.f32.mrb[0].mxu0
    %v378 = vadd.f32 %v216, %v377
    %v379 = vpop.f32.mrb[0].mxu0
    %380 = vmatprep.mubr.f32.mxu0 0.0
    %381 = vmatmul.mubr.f32.gmra.mrb[0].mxu0 %v247
    %v382 = vpop.f32.mrb[0].mxu0
    %v383 = vadd.f32 %v216, %v382
    %v384 = vpop.f32.mrb[0].mxu0
    %385 = vmatprep.mubr.f32.mxu0 0.0
    %386 = vmatmul.mubr.f32.gmra.mrb[0].mxu0 %v250
    %v387 = vpop.f32.mrb[0].mxu0
    %v388 = vadd.f32 %v216, %v387
    %v389 = vpop.f32.mrb[0].mxu0
    %390 = vmatprep.mubr.f32.mxu0 0.0
    %391 = vmatmul.mubr.f32.gmra.mrb[0].mxu0 %v253
    %v392 = vpop.f32.mrb[0].mxu0
    %v393 = vadd.f32 %v216, %v392
    %v394 = vpop.f32.mrb[0].mxu0
    %395 = vmatprep.mubr.f32.mxu0 0.0
    %396 = vmatmul.mubr.f32.gmra.mrb[0].mxu0 %v256
    %v397 = vpop.f32.mrb[0].mxu0
    %v398 = vadd.f32 %v216, %v397
    %v399 = vpop.f32.mrb[0].mxu0
    %400 = vmatprep.mubr.f32.mxu0 0.0
    %401 = vmatmul.mubr.f32.gmra.mrb[0].mxu0 %v259
    %v402 = vpop.f32.mrb[0].mxu0
    %v403 = vadd.f32 %v216, %v402
    %v404 = vpop.f32.mrb[0].mxu0
    %405 = vmatprep.mubr.f32.mxu0 0.0
    %406 = vmatmul.mubr.f32.gmra.mrb[0].mxu0 %v262
    %v407 = vpop.f32.mrb[0].mxu0
    %v408 = vadd.f32 %v216, %v407
    %v409 = vpop.f32.mrb[0].mxu0
    %410 = vmatprep.mubr.f32.mxu0 0.0
    %411 = vmatmul.mubr.f32.gmra.mrb[0].mxu0 %v265
    %v412 = vpop.f32.mrb[0].mxu0
    %v413 = vadd.f32 %v216, %v412
    %v414 = vpop.f32.mrb[0].mxu0
    %415 = vdwg.mxu0
    %v416 = vmax.f32 %v338, 0.0
    %v417 = vmax.f32 %v343, 0.0
    %v418 = vmax.f32 %v348, 0.0
    %v419 = vmax.f32 %v353, 0.0
    %v420 = vmax.f32 %v358, 0.0
    %v421 = vmax.f32 %v363, 0.0
    %v422 = vmax.f32 %v368, 0.0
    %v423 = vmax.f32 %v373, 0.0
    %v424 = vmax.f32 %v378, 0.0
    %v425 = vmax.f32 %v383, 0.0
    %v426 = vmax.f32 %v388, 0.0
    %v427 = vmax.f32 %v393, 0.0
    %v428 = vmax.f32 %v398, 0.0
    %v429 = vmax.f32 %v403, 0.0
    %v430 = vmax.f32 %v408, 0.0
    %v431 = vmax.f32 %v413, 0.0
    %v432 = vpack.c.bf16 %v417, %v416
    %v433 = vpack.c.bf16 %v419, %v418
    %v434 = vpack.c.bf16 %v421, %v420
    %v435 = vpack.c.bf16 %v423, %v422
    %v436 = vpack.c.bf16 %v425, %v424
    %v437 = vpack.c.bf16 %v427, %v426
    %v438 = vpack.c.bf16 %v429, %v428
    %v439 = vpack.c.bf16 %v431, %v430
    %v440 = vld [vmem:[#allocation7] sm:$0xf]
    %v441 = vld [vmem:[#allocation7 + $0x4] sm:$0xf]
    %v442 = vld [vmem:[#allocation7 + $0x8] sm:$0xf]
    %v443 = vld [vmem:[#allocation7 + $0xc] sm:$0xf]
    %v444 = vld [vmem:[#allocation7 + $0x10] sm:$0xf]
    %v445 = vld [vmem:[#allocation7 + $0x14] sm:$0xf]
    %v446 = vld [vmem:[#allocation7 + $0x18] sm:$0xf]
    %v447 = vld [vmem:[#allocation7 + $0x1c] sm:$0xf]
    %v448 = vld [vmem:[#allocation8] sm:$0x1]
    %v450 = vlaneseq
    %v451 = vshrl.u32 %v450, 7
    %v452 = vsub.s32 0, %v451
    %v453 = vrot.slane %v448, %v452
    %v463 = vunpack.c.l.b16 %v440
    %v464 = vunpack.c.l.b16 %v441
    %v465 = vunpack.c.l.b16 %v442
    %v466 = vunpack.c.l.b16 %v443
    %v467 = vunpack.c.l.b16 %v444
    %v468 = vunpack.c.l.b16 %v445
    %v469 = vunpack.c.l.b16 %v446
    %v470 = vunpack.c.l.b16 %v447
    %v471 = vpack.c.b16 %v464, %v463
    %v472 = vpack.c.b16 %v466, %v465
    %v473 = vpack.c.b16 %v468, %v467
    %v474 = vpack.c.b16 %v470, %v469
    %vm479 = vcmask 523264
    %v481 = vsel %vm479, %v432, 0
    %v484 = vsel %vm479, %v433, 0
    %v487 = vsel %vm479, %v434, 0
    %v490 = vsel %vm479, %v435, 0
    %v493 = vsel %vm479, %v436, 0
    %v496 = vsel %vm479, %v437, 0
    %v499 = vsel %vm479, %v438, 0
    %v502 = vsel %vm479, %v439, 0
    %504 = vmatprep.subr.bf16.mxu0 0
    %505 = vmatpush1.bf16.msra.mxu0 %v471
    %506 = vmatprep.subr.bf16.mxu0 0
    %507 = vmatpush1.bf16.msra.mxu0 %v472
    %508 = vmatprep.subr.bf16.mxu0 0
    %509 = vmatpush1.bf16.msra.mxu0 %v473
    %510 = vmatprep.subr.bf16.mxu0 0
    %511 = vmatpush1.bf16.msra.mxu0 %v474
    %512 = vmatprep.subr.bf16.mxu0 0
    %513 = vmatpush1.bf16.msra.mxu0 0
    %514 = vmatprep.subr.bf16.mxu0 0
    %515 = vmatpush1.bf16.msra.mxu0 0
    %516 = vmatprep.subr.bf16.mxu0 0
    %517 = vmatpush1.bf16.msra.mxu0 0
    %518 = vmatprep.subr.bf16.mxu0 0
    %519 = vmatpush1.bf16.msra.mxu0 0
    %520 = vmatprep.subr.bf16.mxu0 0
    %521 = vmatpush1.bf16.msra.mxu0 0
    %522 = vmatprep.subr.bf16.mxu0 0
    %523 = vmatpush1.bf16.msra.mxu0 0
    %524 = vmatprep.subr.bf16.mxu0 0
    %525 = vmatpush1.bf16.msra.mxu0 0
    %526 = vmatprep.subr.bf16.mxu0 0
    %527 = vmatpush1.bf16.msra.mxu0 0
    %528 = vmatprep.subr.bf16.mxu0 0
    %529 = vmatpush1.bf16.msra.mxu0 0
    %530 = vmatprep.subr.bf16.mxu0 0
    %531 = vmatpush1.bf16.msra.mxu0 0
    %532 = vmatprep.subr.bf16.mxu0 0
    %533 = vmatpush1.bf16.msra.mxu0 0
    %534 = vmatprep.subr.bf16.mxu0 0
    %535 = vmatpush1.bf16.msra.mxu0 0
    %536 = vmatprep.mubr.bf16.mxu0 0
    %537 = vmatmul.mubr.bf16.gmra.mrb[0].mxu0 %v481
    %v538 = vpop.f32.mrb[0].mxu0
    %v539 = vadd.f32 %v453, %v538
    %v540 = vpop.f32.mrb[0].mxu0
    %v541 = vpop.f32.mrb[0].mxu0
    %v542 = vadd.f32 %v453, %v541
    %v543 = vpop.f32.mrb[0].mxu0
    %544 = vmatprep.mubr.bf16.mxu0 0
    %545 = vmatmul.mubr.bf16.gmra.mrb[0].mxu0 %v484
    %v546 = vpop.f32.mrb[0].mxu0
    %v547 = vadd.f32 %v453, %v546
    %v548 = vpop.f32.mrb[0].mxu0
    %v549 = vpop.f32.mrb[0].mxu0
    %v550 = vadd.f32 %v453, %v549
    %v551 = vpop.f32.mrb[0].mxu0
    %552 = vmatprep.mubr.bf16.mxu0 0
    %553 = vmatmul.mubr.bf16.gmra.mrb[0].mxu0 %v487
    %v554 = vpop.f32.mrb[0].mxu0
    %v555 = vadd.f32 %v453, %v554
    %v556 = vpop.f32.mrb[0].mxu0
    %v557 = vpop.f32.mrb[0].mxu0
    %v558 = vadd.f32 %v453, %v557
    %v559 = vpop.f32.mrb[0].mxu0
    %560 = vmatprep.mubr.bf16.mxu0 0
    %561 = vmatmul.mubr.bf16.gmra.mrb[0].mxu0 %v490
    %v562 = vpop.f32.mrb[0].mxu0
    %v563 = vadd.f32 %v453, %v562
    %v564 = vpop.f32.mrb[0].mxu0
    %v565 = vpop.f32.mrb[0].mxu0
    %v566 = vadd.f32 %v453, %v565
    %v567 = vpop.f32.mrb[0].mxu0
    %568 = vmatprep.mubr.bf16.mxu0 0
    %569 = vmatmul.mubr.bf16.gmra.mrb[0].mxu0 %v493
    %v570 = vpop.f32.mrb[0].mxu0
    %v571 = vadd.f32 %v453, %v570
    %v572 = vpop.f32.mrb[0].mxu0
    %v573 = vpop.f32.mrb[0].mxu0
    %v574 = vadd.f32 %v453, %v573
    %v575 = vpop.f32.mrb[0].mxu0
    %576 = vmatprep.mubr.bf16.mxu0 0
    %577 = vmatmul.mubr.bf16.gmra.mrb[0].mxu0 %v496
    %v578 = vpop.f32.mrb[0].mxu0
    %v579 = vadd.f32 %v453, %v578
    %v580 = vpop.f32.mrb[0].mxu0
    %v581 = vpop.f32.mrb[0].mxu0
    %v582 = vadd.f32 %v453, %v581
    %v583 = vpop.f32.mrb[0].mxu0
    %584 = vmatprep.mubr.bf16.mxu0 0
    %585 = vmatmul.mubr.bf16.gmra.mrb[0].mxu0 %v499
    %v586 = vpop.f32.mrb[0].mxu0
    %v587 = vadd.f32 %v453, %v586
    %v588 = vpop.f32.mrb[0].mxu0
    %v589 = vpop.f32.mrb[0].mxu0
    %v590 = vadd.f32 %v453, %v589
    %v591 = vpop.f32.mrb[0].mxu0
    %592 = vmatprep.mubr.bf16.mxu0 0
    %593 = vmatmul.mubr.bf16.gmra.mrb[0].mxu0 %v502
    %v594 = vpop.f32.mrb[0].mxu0
    %v595 = vadd.f32 %v453, %v594
    %v596 = vpop.f32.mrb[0].mxu0
    %v597 = vpop.f32.mrb[0].mxu0
    %v598 = vadd.f32 %v453, %v597
    %v599 = vpop.f32.mrb[0].mxu0
    %600 = vdwg.mxu0
    %v601 = vmax.f32 %v539, 0.0
    %v602 = vmax.f32 %v542, 0.0
    %v603 = vmax.f32 %v547, 0.0
    %v604 = vmax.f32 %v550, 0.0
    %v605 = vmax.f32 %v555, 0.0
    %v606 = vmax.f32 %v558, 0.0
    %v607 = vmax.f32 %v563, 0.0
    %v608 = vmax.f32 %v566, 0.0
    %v609 = vmax.f32 %v571, 0.0
    %v610 = vmax.f32 %v574, 0.0
    %v611 = vmax.f32 %v579, 0.0
    %v612 = vmax.f32 %v582, 0.0
    %v613 = vmax.f32 %v587, 0.0
    %v614 = vmax.f32 %v590, 0.0
    %v615 = vmax.f32 %v595, 0.0
    %v616 = vmax.f32 %v598, 0.0
    %v617 = vpack.c.bf16 %v602, %v601
    %v618 = vpack.c.bf16 %v604, %v603
    %v619 = vpack.c.bf16 %v606, %v605
    %v620 = vpack.c.bf16 %v608, %v607
    %v621 = vpack.c.bf16 %v610, %v609
    %v622 = vpack.c.bf16 %v612, %v611
    %v623 = vpack.c.bf16 %v614, %v613
    %v624 = vpack.c.bf16 %v616, %v615
    %v625 = vld [vmem:[#allocation10] sm:$0xff]
    %v626 = vld [vmem:[#allocation10 + $0x8] sm:$0xff]
    %v627 = vld [vmem:[#allocation10 + $0x10] sm:$0xff]
    %v628 = vld [vmem:[#allocation10 + $0x18] sm:$0xff]
    %v629 = vld [vmem:[#allocation10 + $0x20] sm:$0xff]
    %v630 = vld [vmem:[#allocation10 + $0x28] sm:$0xff]
    %v631 = vld [vmem:[#allocation10 + $0x30] sm:$0xff]
    %v632 = vld [vmem:[#allocation10 + $0x38] sm:$0xff]
    %v633 = vld [vmem:[#allocation10 + $0x40] sm:$0xff]
    %v634 = vld [vmem:[#allocation10 + $0x48] sm:$0xff]
    %v635 = vld [vmem:[#allocation10 + $0x50] sm:$0xff]
    %v636 = vld [vmem:[#allocation10 + $0x58] sm:$0xff]
    %v637 = vld [vmem:[#allocation10 + $0x60] sm:$0xff]
    %v638 = vld [vmem:[#allocation10 + $0x68] sm:$0xff]
    %v639 = vld [vmem:[#allocation10 + $0x70] sm:$0xff]
    %v640 = vld [vmem:[#allocation10 + $0x78] sm:$0xff]
    %v641 = vld [vmem:[#allocation10 + $0x80] sm:$0xff]
    %v642 = vld [vmem:[#allocation10 + $0x88] sm:$0xff]
    %v643 = vld [vmem:[#allocation10 + $0x90] sm:$0xff]
    %v644 = vld [vmem:[#allocation10 + $0x98] sm:$0xff]
    %v645 = vld [vmem:[#allocation10 + $0xa0] sm:$0xff]
    %v646 = vld [vmem:[#allocation10 + $0xa8] sm:$0xff]
    %v647 = vld [vmem:[#allocation10 + $0xb0] sm:$0xff]
    %v648 = vld [vmem:[#allocation10 + $0xb8] sm:$0xff]
    %v649 = vld [vmem:[#allocation10 + $0xc0] sm:$0xff]
    %v650 = vld [vmem:[#allocation10 + $0xc8] sm:$0xff]
    %v651 = vld [vmem:[#allocation10 + $0xd0] sm:$0xff]
    %v652 = vld [vmem:[#allocation10 + $0xd8] sm:$0xff]
    %v653 = vld [vmem:[#allocation10 + $0xe0] sm:$0xff]
    %v654 = vld [vmem:[#allocation10 + $0xe8] sm:$0xff]
    %v655 = vld [vmem:[#allocation10 + $0xf0] sm:$0xff]
    %v656 = vld [vmem:[#allocation10 + $0xf8] sm:$0xff]
    %v657 = vld [vmem:[#allocation10 + $0x100] sm:$0xff]
    %v658 = vld [vmem:[#allocation10 + $0x108] sm:$0xff]
    %v659 = vld [vmem:[#allocation10 + $0x110] sm:$0xff]
    %v660 = vld [vmem:[#allocation10 + $0x118] sm:$0xff]
    %v661 = vld [vmem:[#allocation10 + $0x120] sm:$0xff]
    %v662 = vld [vmem:[#allocation10 + $0x128] sm:$0xff]
    %v663 = vld [vmem:[#allocation10 + $0x130] sm:$0xff]
    %v664 = vld [vmem:[#allocation10 + $0x138] sm:$0xff]
    %v665 = vld [vmem:[#allocation10 + $0x140] sm:$0xff]
    %v666 = vld [vmem:[#allocation10 + $0x148] sm:$0xff]
    %v667 = vld [vmem:[#allocation10 + $0x150] sm:$0xff]
    %v668 = vld [vmem:[#allocation10 + $0x158] sm:$0xff]
    %v669 = vld [vmem:[#allocation10 + $0x160] sm:$0xff]
    %v670 = vld [vmem:[#allocation10 + $0x168] sm:$0xff]
    %v671 = vld [vmem:[#allocation10 + $0x170] sm:$0xff]
    %v672 = vld [vmem:[#allocation10 + $0x178] sm:$0xff]
    %v673 = vld [vmem:[#allocation10 + $0x180] sm:$0xff]
    %v674 = vld [vmem:[#allocation10 + $0x188] sm:$0xff]
    %v675 = vld [vmem:[#allocation10 + $0x190] sm:$0xff]
    %v676 = vld [vmem:[#allocation10 + $0x198] sm:$0xff]
    %v677 = vld [vmem:[#allocation10 + $0x1a0] sm:$0xff]
    %v678 = vld [vmem:[#allocation10 + $0x1a8] sm:$0xff]
    %v679 = vld [vmem:[#allocation10 + $0x1b0] sm:$0xff]
    %v680 = vld [vmem:[#allocation10 + $0x1b8] sm:$0xff]
    %v681 = vld [vmem:[#allocation10 + $0x1c0] sm:$0xff]
    %v682 = vld [vmem:[#allocation10 + $0x1c8] sm:$0xff]
    %v683 = vld [vmem:[#allocation10 + $0x1d0] sm:$0xff]
    %v684 = vld [vmem:[#allocation10 + $0x1d8] sm:$0xff]
    %v685 = vld [vmem:[#allocation10 + $0x1e0] sm:$0xff]
    %v686 = vld [vmem:[#allocation10 + $0x1e8] sm:$0xff]
    %v687 = vld [vmem:[#allocation10 + $0x1f0] sm:$0xff]
    %v688 = vld [vmem:[#allocation10 + $0x1f8] sm:$0xff]
    %v689 = vld [vmem:[#allocation11] sm:$0xff]
    %v691 = vlaneseq
    %v692 = vshrl.u32 %v691, 7
    %v693 = vsub.s32 0, %v692
    %v694 = vrot.slane %v689, %v693
    %v695 = vlaneseq
    %v696 = vshrl.u32 %v695, 7
    %v697 = vsub.s32 1, %v696
    %v698 = vrot.slane %v689, %v697
    %v699 = vlaneseq
    %v700 = vshrl.u32 %v699, 7
    %v701 = vsub.s32 2, %v700
    %v702 = vrot.slane %v689, %v701
    %v703 = vlaneseq
    %v704 = vshrl.u32 %v703, 7
    %v705 = vsub.s32 3, %v704
    %v706 = vrot.slane %v689, %v705
    %v707 = vlaneseq
    %v708 = vshrl.u32 %v707, 7
    %v709 = vsub.s32 4, %v708
    %v710 = vrot.slane %v689, %v709
    %v711 = vlaneseq
    %v712 = vshrl.u32 %v711, 7
    %v713 = vsub.s32 5, %v712
    %v714 = vrot.slane %v689, %v713
    %v715 = vlaneseq
    %v716 = vshrl.u32 %v715, 7
    %v717 = vsub.s32 6, %v716
    %v718 = vrot.slane %v689, %v717
    %v719 = vlaneseq
    %v720 = vshrl.u32 %v719, 7
    %v721 = vsub.s32 7, %v720
    %v722 = vrot.slane %v689, %v721
    %v795 = vunpack.c.l.b16 %v625
    %v796 = vunpack.c.h.b16 %v625
    %v797 = vunpack.c.l.b16 %v626
    %v798 = vunpack.c.h.b16 %v626
    %v799 = vunpack.c.l.b16 %v627
    %v800 = vunpack.c.h.b16 %v627
    %v801 = vunpack.c.l.b16 %v628
    %v802 = vunpack.c.h.b16 %v628
    %v803 = vunpack.c.l.b16 %v629
    %v804 = vunpack.c.h.b16 %v629
    %v805 = vunpack.c.l.b16 %v630
    %v806 = vunpack.c.h.b16 %v630
    %v807 = vunpack.c.l.b16 %v631
    %v808 = vunpack.c.h.b16 %v631
    %v809 = vunpack.c.l.b16 %v632
    %v810 = vunpack.c.h.b16 %v632
    %v811 = vunpack.c.l.b16 %v633
    %v812 = vunpack.c.h.b16 %v633
    %v813 = vunpack.c.l.b16 %v634
    %v814 = vunpack.c.h.b16 %v634
    %v815 = vunpack.c.l.b16 %v635
    %v816 = vunpack.c.h.b16 %v635
    %v817 = vunpack.c.l.b16 %v636
    %v818 = vunpack.c.h.b16 %v636
    %v819 = vunpack.c.l.b16 %v637
    %v820 = vunpack.c.h.b16 %v637
    %v821 = vunpack.c.l.b16 %v638
    %v822 = vunpack.c.h.b16 %v638
    %v823 = vunpack.c.l.b16 %v639
    %v824 = vunpack.c.h.b16 %v639
    %v825 = vunpack.c.l.b16 %v640
    %v826 = vunpack.c.h.b16 %v640
    %v827 = vunpack.c.l.b16 %v641
    %v828 = vunpack.c.h.b16 %v641
    %v829 = vunpack.c.l.b16 %v642
    %v830 = vunpack.c.h.b16 %v642
    %v831 = vunpack.c.l.b16 %v643
    %v832 = vunpack.c.h.b16 %v643
    %v833 = vunpack.c.l.b16 %v644
    %v834 = vunpack.c.h.b16 %v644
    %v835 = vunpack.c.l.b16 %v645
    %v836 = vunpack.c.h.b16 %v645
    %v837 = vunpack.c.l.b16 %v646
    %v838 = vunpack.c.h.b16 %v646
    %v839 = vunpack.c.l.b16 %v647
    %v840 = vunpack.c.h.b16 %v647
    %v841 = vunpack.c.l.b16 %v648
    %v842 = vunpack.c.h.b16 %v648
    %v843 = vunpack.c.l.b16 %v649
    %v844 = vunpack.c.h.b16 %v649
    %v845 = vunpack.c.l.b16 %v650
    %v846 = vunpack.c.h.b16 %v650
    %v847 = vunpack.c.l.b16 %v651
    %v848 = vunpack.c.h.b16 %v651
    %v849 = vunpack.c.l.b16 %v652
    %v850 = vunpack.c.h.b16 %v652
    %v851 = vunpack.c.l.b16 %v653
    %v852 = vunpack.c.h.b16 %v653
    %v853 = vunpack.c.l.b16 %v654
    %v854 = vunpack.c.h.b16 %v654
    %v855 = vunpack.c.l.b16 %v655
    %v856 = vunpack.c.h.b16 %v655
    %v857 = vunpack.c.l.b16 %v656
    %v858 = vunpack.c.h.b16 %v656
    %v859 = vunpack.c.l.b16 %v657
    %v860 = vunpack.c.h.b16 %v657
    %v861 = vunpack.c.l.b16 %v658
    %v862 = vunpack.c.h.b16 %v658
    %v863 = vunpack.c.l.b16 %v659
    %v864 = vunpack.c.h.b16 %v659
    %v865 = vunpack.c.l.b16 %v660
    %v866 = vunpack.c.h.b16 %v660
    %v867 = vunpack.c.l.b16 %v661
    %v868 = vunpack.c.h.b16 %v661
    %v869 = vunpack.c.l.b16 %v662
    %v870 = vunpack.c.h.b16 %v662
    %v871 = vunpack.c.l.b16 %v663
    %v872 = vunpack.c.h.b16 %v663
    %v873 = vunpack.c.l.b16 %v664
    %v874 = vunpack.c.h.b16 %v664
    %v875 = vunpack.c.l.b16 %v665
    %v876 = vunpack.c.h.b16 %v665
    %v877 = vunpack.c.l.b16 %v666
    %v878 = vunpack.c.h.b16 %v666
    %v879 = vunpack.c.l.b16 %v667
    %v880 = vunpack.c.h.b16 %v667
    %v881 = vunpack.c.l.b16 %v668
    %v882 = vunpack.c.h.b16 %v668
    %v883 = vunpack.c.l.b16 %v669
    %v884 = vunpack.c.h.b16 %v669
    %v885 = vunpack.c.l.b16 %v670
    %v886 = vunpack.c.h.b16 %v670
    %v887 = vunpack.c.l.b16 %v671
    %v888 = vunpack.c.h.b16 %v671
    %v889 = vunpack.c.l.b16 %v672
    %v890 = vunpack.c.h.b16 %v672
    %v891 = vunpack.c.l.b16 %v673
    %v892 = vunpack.c.h.b16 %v673
    %v893 = vunpack.c.l.b16 %v674
    %v894 = vunpack.c.h.b16 %v674
    %v895 = vunpack.c.l.b16 %v675
    %v896 = vunpack.c.h.b16 %v675
    %v897 = vunpack.c.l.b16 %v676
    %v898 = vunpack.c.h.b16 %v676
    %v899 = vunpack.c.l.b16 %v677
    %v900 = vunpack.c.h.b16 %v677
    %v901 = vunpack.c.l.b16 %v678
    %v902 = vunpack.c.h.b16 %v678
    %v903 = vunpack.c.l.b16 %v679
    %v904 = vunpack.c.h.b16 %v679
    %v905 = vunpack.c.l.b16 %v680
    %v906 = vunpack.c.h.b16 %v680
    %v907 = vunpack.c.l.b16 %v681
    %v908 = vunpack.c.h.b16 %v681
    %v909 = vunpack.c.l.b16 %v682
    %v910 = vunpack.c.h.b16 %v682
    %v911 = vunpack.c.l.b16 %v683
    %v912 = vunpack.c.h.b16 %v683
    %v913 = vunpack.c.l.b16 %v684
    %v914 = vunpack.c.h.b16 %v684
    %v915 = vunpack.c.l.b16 %v685
    %v916 = vunpack.c.h.b16 %v685
    %v917 = vunpack.c.l.b16 %v686
    %v918 = vunpack.c.h.b16 %v686
    %v919 = vunpack.c.l.b16 %v687
    %v920 = vunpack.c.h.b16 %v687
    %v921 = vunpack.c.l.b16 %v688
    %v922 = vunpack.c.h.b16 %v688
    %v923 = vpack.c.b16 %v803, %v795
    %v924 = vpack.c.b16 %v804, %v796
    %v925 = vpack.c.b16 %v805, %v797
    %v926 = vpack.c.b16 %v806, %v798
    %v927 = vpack.c.b16 %v807, %v799
    %v928 = vpack.c.b16 %v808, %v800
    %v929 = vpack.c.b16 %v809, %v801
    %v930 = vpack.c.b16 %v810, %v802
    %v931 = vpack.c.b16 %v819, %v811
    %v932 = vpack.c.b16 %v820, %v812
    %v933 = vpack.c.b16 %v821, %v813
    %v934 = vpack.c.b16 %v822, %v814
    %v935 = vpack.c.b16 %v823, %v815
    %v936 = vpack.c.b16 %v824, %v816
    %v937 = vpack.c.b16 %v825, %v817
    %v938 = vpack.c.b16 %v826, %v818
    %v939 = vpack.c.b16 %v835, %v827
    %v940 = vpack.c.b16 %v836, %v828
    %v941 = vpack.c.b16 %v837, %v829
    %v942 = vpack.c.b16 %v838, %v830
    %v943 = vpack.c.b16 %v839, %v831
    %v944 = vpack.c.b16 %v840, %v832
    %v945 = vpack.c.b16 %v841, %v833
    %v946 = vpack.c.b16 %v842, %v834
    %v947 = vpack.c.b16 %v851, %v843
    %v948 = vpack.c.b16 %v852, %v844
    %v949 = vpack.c.b16 %v853, %v845
    %v950 = vpack.c.b16 %v854, %v846
    %v951 = vpack.c.b16 %v855, %v847
    %v952 = vpack.c.b16 %v856, %v848
    %v953 = vpack.c.b16 %v857, %v849
    %v954 = vpack.c.b16 %v858, %v850
    %v955 = vpack.c.b16 %v867, %v859
    %v956 = vpack.c.b16 %v868, %v860
    %v957 = vpack.c.b16 %v869, %v861
    %v958 = vpack.c.b16 %v870, %v862
    %v959 = vpack.c.b16 %v871, %v863
    %v960 = vpack.c.b16 %v872, %v864
    %v961 = vpack.c.b16 %v873, %v865
    %v962 = vpack.c.b16 %v874, %v866
    %v963 = vpack.c.b16 %v883, %v875
    %v964 = vpack.c.b16 %v884, %v876
    %v965 = vpack.c.b16 %v885, %v877
    %v966 = vpack.c.b16 %v886, %v878
    %v967 = vpack.c.b16 %v887, %v879
    %v968 = vpack.c.b16 %v888, %v880
    %v969 = vpack.c.b16 %v889, %v881
    %v970 = vpack.c.b16 %v890, %v882
    %v971 = vpack.c.b16 %v899, %v891
    %v972 = vpack.c.b16 %v900, %v892
    %v973 = vpack.c.b16 %v901, %v893
    %v974 = vpack.c.b16 %v902, %v894
    %v975 = vpack.c.b16 %v903, %v895
    %v976 = vpack.c.b16 %v904, %v896
    %v977 = vpack.c.b16 %v905, %v897
    %v978 = vpack.c.b16 %v906, %v898
    %v979 = vpack.c.b16 %v915, %v907
    %v980 = vpack.c.b16 %v916, %v908
    %v981 = vpack.c.b16 %v917, %v909
    %v982 = vpack.c.b16 %v918, %v910
    %v983 = vpack.c.b16 %v919, %v911
    %v984 = vpack.c.b16 %v920, %v912
    %v985 = vpack.c.b16 %v921, %v913
    %v986 = vpack.c.b16 %v922, %v914
    %1051 = vmatprep.subr.bf16.mxu0 %v924
    %1052 = vmatpush1.bf16.msra.mxu0 %v923
    %1053 = vmatprep.subr.bf16.mxu0 %v932
    %1054 = vmatpush1.bf16.msra.mxu0 %v931
    %1055 = vmatprep.subr.bf16.mxu0 %v940
    %1056 = vmatpush1.bf16.msra.mxu0 %v939
    %1057 = vmatprep.subr.bf16.mxu0 %v948
    %1058 = vmatpush1.bf16.msra.mxu0 %v947
    %1059 = vmatprep.subr.bf16.mxu0 %v956
    %1060 = vmatpush1.bf16.msra.mxu0 %v955
    %1061 = vmatprep.subr.bf16.mxu0 %v964
    %1062 = vmatpush1.bf16.msra.mxu0 %v963
    %1063 = vmatprep.subr.bf16.mxu0 %v972
    %1064 = vmatpush1.bf16.msra.mxu0 %v971
    %1065 = vmatprep.subr.bf16.mxu0 %v980
    %1066 = vmatpush1.bf16.msra.mxu0 %v979
    %1067 = vmatprep.subr.bf16.mxu0 0
    %1068 = vmatpush1.bf16.msra.mxu0 0
    %1069 = vmatprep.subr.bf16.mxu0 0
    %1070 = vmatpush1.bf16.msra.mxu0 0
    %1071 = vmatprep.subr.bf16.mxu0 0
    %1072 = vmatpush1.bf16.msra.mxu0 0
    %1073 = vmatprep.subr.bf16.mxu0 0
    %1074 = vmatpush1.bf16.msra.mxu0 0
    %1075 = vmatprep.subr.bf16.mxu0 0
    %1076 = vmatpush1.bf16.msra.mxu0 0
    %1077 = vmatprep.subr.bf16.mxu0 0
    %1078 = vmatpush1.bf16.msra.mxu0 0
    %1079 = vmatprep.subr.bf16.mxu0 0
    %1080 = vmatpush1.bf16.msra.mxu0 0
    %1081 = vmatprep.subr.bf16.mxu0 0
    %1082 = vmatpush1.bf16.msra.mxu0 0
    %1083 = vmatprep.mubr.bf16.mxu0 0
    %1084 = vmatmul.mubr.bf16.gmra.mrb[0].mxu0 %v617
    %v1085 = vpop.f32.mrb[0].mxu0
    %v1086 = vadd.f32 %v694, %v1085
    %v1087 = vpop.f32.mrb[0].mxu0
    %v1088 = vadd.f32 %v698, %v1087
    %v1089 = vpop.f32.mrb[0].mxu0
    %v1090 = vadd.f32 %v694, %v1089
    %v1091 = vpop.f32.mrb[0].mxu0
    %v1092 = vadd.f32 %v698, %v1091
    %1093 = vmatprep.mubr.bf16.mxu0 0
    %1094 = vmatmul.mubr.bf16.gmra.mrb[0].mxu0 %v618
    %v1095 = vpop.f32.mrb[0].mxu0
    %v1096 = vadd.f32 %v694, %v1095
    %v1097 = vpop.f32.mrb[0].mxu0
    %v1098 = vadd.f32 %v698, %v1097
    %v1099 = vpop.f32.mrb[0].mxu0
    %v1100 = vadd.f32 %v694, %v1099
    %v1101 = vpop.f32.mrb[0].mxu0
    %v1102 = vadd.f32 %v698, %v1101
    %1103 = vmatprep.mubr.bf16.mxu0 0
    %1104 = vmatmul.mubr.bf16.gmra.mrb[0].mxu0 %v619
    %v1105 = vpop.f32.mrb[0].mxu0
    %v1106 = vadd.f32 %v694, %v1105
    %v1107 = vpop.f32.mrb[0].mxu0
    %v1108 = vadd.f32 %v698, %v1107
    %v1109 = vpop.f32.mrb[0].mxu0
    %v1110 = vadd.f32 %v694, %v1109
    %v1111 = vpop.f32.mrb[0].mxu0
    %v1112 = vadd.f32 %v698, %v1111
    %1113 = vmatprep.mubr.bf16.mxu0 0
    %1114 = vmatmul.mubr.bf16.gmra.mrb[0].mxu0 %v620
    %v1115 = vpop.f32.mrb[0].mxu0
    %v1116 = vadd.f32 %v694, %v1115
    %v1117 = vpop.f32.mrb[0].mxu0
    %v1118 = vadd.f32 %v698, %v1117
    %v1119 = vpop.f32.mrb[0].mxu0
    %v1120 = vadd.f32 %v694, %v1119
    %v1121 = vpop.f32.mrb[0].mxu0
    %v1122 = vadd.f32 %v698, %v1121
    %1123 = vmatprep.mubr.bf16.mxu0 0
    %1124 = vmatmul.mubr.bf16.gmra.mrb[0].mxu0 %v621
    %v1125 = vpop.f32.mrb[0].mxu0
    %v1126 = vadd.f32 %v694, %v1125
    %v1127 = vpop.f32.mrb[0].mxu0
    %v1128 = vadd.f32 %v698, %v1127
    %v1129 = vpop.f32.mrb[0].mxu0
    %v1130 = vadd.f32 %v694, %v1129
    %v1131 = vpop.f32.mrb[0].mxu0
    %v1132 = vadd.f32 %v698, %v1131
    %1133 = vmatprep.mubr.bf16.mxu0 0
    %1134 = vmatmul.mubr.bf16.gmra.mrb[0].mxu0 %v622
    %v1135 = vpop.f32.mrb[0].mxu0
    %v1136 = vadd.f32 %v694, %v1135
    %v1137 = vpop.f32.mrb[0].mxu0
    %v1138 = vadd.f32 %v698, %v1137
    %v1139 = vpop.f32.mrb[0].mxu0
    %v1140 = vadd.f32 %v694, %v1139
    %v1141 = vpop.f32.mrb[0].mxu0
    %v1142 = vadd.f32 %v698, %v1141
    %1143 = vmatprep.mubr.bf16.mxu0 0
    %1144 = vmatmul.mubr.bf16.gmra.mrb[0].mxu0 %v623
    %v1145 = vpop.f32.mrb[0].mxu0
    %v1146 = vadd.f32 %v694, %v1145
    %v1147 = vpop.f32.mrb[0].mxu0
    %v1148 = vadd.f32 %v698, %v1147
    %v1149 = vpop.f32.mrb[0].mxu0
    %v1150 = vadd.f32 %v694, %v1149
    %v1151 = vpop.f32.mrb[0].mxu0
    %v1152 = vadd.f32 %v698, %v1151
    %1153 = vmatprep.mubr.bf16.mxu0 0
    %1154 = vmatmul.mubr.bf16.gmra.mrb[0].mxu0 %v624
    %v1155 = vpop.f32.mrb[0].mxu0
    %v1156 = vadd.f32 %v694, %v1155
    %v1157 = vpop.f32.mrb[0].mxu0
    %v1158 = vadd.f32 %v698, %v1157
    %v1159 = vpop.f32.mrb[0].mxu0
    %v1160 = vadd.f32 %v694, %v1159
    %v1161 = vpop.f32.mrb[0].mxu0
    %v1162 = vadd.f32 %v698, %v1161
    %1163 = vdwg.mxu0
    %1164 = vmatprep.subr.bf16.mxu0 %v926
    %1165 = vmatpush1.bf16.msra.mxu0 %v925
    %1166 = vmatprep.subr.bf16.mxu0 %v934
    %1167 = vmatpush1.bf16.msra.mxu0 %v933
    %1168 = vmatprep.subr.bf16.mxu0 %v942
    %1169 = vmatpush1.bf16.msra.mxu0 %v941
    %1170 = vmatprep.subr.bf16.mxu0 %v950
    %1171 = vmatpush1.bf16.msra.mxu0 %v949
    %1172 = vmatprep.subr.bf16.mxu0 %v958
    %1173 = vmatpush1.bf16.msra.mxu0 %v957
    %1174 = vmatprep.subr.bf16.mxu0 %v966
    %1175 = vmatpush1.bf16.msra.mxu0 %v965
    %1176 = vmatprep.subr.bf16.mxu0 %v974
    %1177 = vmatpush1.bf16.msra.mxu0 %v973
    %1178 = vmatprep.subr.bf16.mxu0 %v982
    %1179 = vmatpush1.bf16.msra.mxu0 %v981
    %1180 = vmatprep.subr.bf16.mxu0 0
    %1181 = vmatpush1.bf16.msra.mxu0 0
    %1182 = vmatprep.subr.bf16.mxu0 0
    %1183 = vmatpush1.bf16.msra.mxu0 0
    %1184 = vmatprep.subr.bf16.mxu0 0
    %1185 = vmatpush1.bf16.msra.mxu0 0
    %1186 = vmatprep.subr.bf16.mxu0 0
    %1187 = vmatpush1.bf16.msra.mxu0 0
    %1188 = vmatprep.subr.bf16.mxu0 0
    %1189 = vmatpush1.bf16.msra.mxu0 0
    %1190 = vmatprep.subr.bf16.mxu0 0
    %1191 = vmatpush1.bf16.msra.mxu0 0
    %1192 = vmatprep.subr.bf16.mxu0 0
    %1193 = vmatpush1.bf16.msra.mxu0 0
    %1194 = vmatprep.subr.bf16.mxu0 0
    %1195 = vmatpush1.bf16.msra.mxu0 0
    %1196 = vmatprep.mubr.bf16.mxu0 0
    %1197 = vmatmul.mubr.bf16.gmra.mrb[0].mxu0 %v617
    %v1198 = vpop.f32.mrb[0].mxu0
    %v1199 = vadd.f32 %v702, %v1198
    %v1200 = vpop.f32.mrb[0].mxu0
    %v1201 = vadd.f32 %v706, %v1200
    %v1202 = vpop.f32.mrb[0].mxu0
    %v1203 = vadd.f32 %v702, %v1202
    %v1204 = vpop.f32.mrb[0].mxu0
    %v1205 = vadd.f32 %v706, %v1204
    %1206 = vmatprep.mubr.bf16.mxu0 0
    %1207 = vmatmul.mubr.bf16.gmra.mrb[0].mxu0 %v618
    %v1208 = vpop.f32.mrb[0].mxu0
    %v1209 = vadd.f32 %v702, %v1208
    %v1210 = vpop.f32.mrb[0].mxu0
    %v1211 = vadd.f32 %v706, %v1210
    %v1212 = vpop.f32.mrb[0].mxu0
    %v1213 = vadd.f32 %v702, %v1212
    %v1214 = vpop.f32.mrb[0].mxu0
    %v1215 = vadd.f32 %v706, %v1214
    %1216 = vmatprep.mubr.bf16.mxu0 0
    %1217 = vmatmul.mubr.bf16.gmra.mrb[0].mxu0 %v619
    %v1218 = vpop.f32.mrb[0].mxu0
    %v1219 = vadd.f32 %v702, %v1218
    %v1220 = vpop.f32.mrb[0].mxu0
    %v1221 = vadd.f32 %v706, %v1220
    %v1222 = vpop.f32.mrb[0].mxu0
    %v1223 = vadd.f32 %v702, %v1222
    %v1224 = vpop.f32.mrb[0].mxu0
    %v1225 = vadd.f32 %v706, %v1224
    %1226 = vmatprep.mubr.bf16.mxu0 0
    %1227 = vmatmul.mubr.bf16.gmra.mrb[0].mxu0 %v620
    %v1228 = vpop.f32.mrb[0].mxu0
    %v1229 = vadd.f32 %v702, %v1228
    %v1230 = vpop.f32.mrb[0].mxu0
    %v1231 = vadd.f32 %v706, %v1230
    %v1232 = vpop.f32.mrb[0].mxu0
    %v1233 = vadd.f32 %v702, %v1232
    %v1234 = vpop.f32.mrb[0].mxu0
    %v1235 = vadd.f32 %v706, %v1234
    %1236 = vmatprep.mubr.bf16.mxu0 0
    %1237 = vmatmul.mubr.bf16.gmra.mrb[0].mxu0 %v621
    %v1238 = vpop.f32.mrb[0].mxu0
    %v1239 = vadd.f32 %v702, %v1238
    %v1240 = vpop.f32.mrb[0].mxu0
    %v1241 = vadd.f32 %v706, %v1240
    %v1242 = vpop.f32.mrb[0].mxu0
    %v1243 = vadd.f32 %v702, %v1242
    %v1244 = vpop.f32.mrb[0].mxu0
    %v1245 = vadd.f32 %v706, %v1244
    %1246 = vmatprep.mubr.bf16.mxu0 0
    %1247 = vmatmul.mubr.bf16.gmra.mrb[0].mxu0 %v622
    %v1248 = vpop.f32.mrb[0].mxu0
    %v1249 = vadd.f32 %v702, %v1248
    %v1250 = vpop.f32.mrb[0].mxu0
    %v1251 = vadd.f32 %v706, %v1250
    %v1252 = vpop.f32.mrb[0].mxu0
    %v1253 = vadd.f32 %v702, %v1252
    %v1254 = vpop.f32.mrb[0].mxu0
    %v1255 = vadd.f32 %v706, %v1254
    %1256 = vmatprep.mubr.bf16.mxu0 0
    %1257 = vmatmul.mubr.bf16.gmra.mrb[0].mxu0 %v623
    %v1258 = vpop.f32.mrb[0].mxu0
    %v1259 = vadd.f32 %v702, %v1258
    %v1260 = vpop.f32.mrb[0].mxu0
    %v1261 = vadd.f32 %v706, %v1260
    %v1262 = vpop.f32.mrb[0].mxu0
    %v1263 = vadd.f32 %v702, %v1262
    %v1264 = vpop.f32.mrb[0].mxu0
    %v1265 = vadd.f32 %v706, %v1264
    %1266 = vmatprep.mubr.bf16.mxu0 0
    %1267 = vmatmul.mubr.bf16.gmra.mrb[0].mxu0 %v624
    %v1268 = vpop.f32.mrb[0].mxu0
    %v1269 = vadd.f32 %v702, %v1268
    %v1270 = vpop.f32.mrb[0].mxu0
    %v1271 = vadd.f32 %v706, %v1270
    %v1272 = vpop.f32.mrb[0].mxu0
    %v1273 = vadd.f32 %v702, %v1272
    %v1274 = vpop.f32.mrb[0].mxu0
    %v1275 = vadd.f32 %v706, %v1274
    %1276 = vdwg.mxu0
    %1277 = vmatprep.subr.bf16.mxu0 %v928
    %1278 = vmatpush1.bf16.msra.mxu0 %v927
    %1279 = vmatprep.subr.bf16.mxu0 %v936
    %1280 = vmatpush1.bf16.msra.mxu0 %v935
    %1281 = vmatprep.subr.bf16.mxu0 %v944
    %1282 = vmatpush1.bf16.msra.mxu0 %v943
    %1283 = vmatprep.subr.bf16.mxu0 %v952
    %1284 = vmatpush1.bf16.msra.mxu0 %v951
    %1285 = vmatprep.subr.bf16.mxu0 %v960
    %1286 = vmatpush1.bf16.msra.mxu0 %v959
    %1287 = vmatprep.subr.bf16.mxu0 %v968
    %1288 = vmatpush1.bf16.msra.mxu0 %v967
    %1289 = vmatprep.subr.bf16.mxu0 %v976
    %1290 = vmatpush1.bf16.msra.mxu0 %v975
    %1291 = vmatprep.subr.bf16.mxu0 %v984
    %1292 = vmatpush1.bf16.msra.mxu0 %v983
    %1293 = vmatprep.subr.bf16.mxu0 0
    %1294 = vmatpush1.bf16.msra.mxu0 0
    %1295 = vmatprep.subr.bf16.mxu0 0
    %1296 = vmatpush1.bf16.msra.mxu0 0
    %1297 = vmatprep.subr.bf16.mxu0 0
    %1298 = vmatpush1.bf16.msra.mxu0 0
    %1299 = vmatprep.subr.bf16.mxu0 0
    %1300 = vmatpush1.bf16.msra.mxu0 0
    %1301 = vmatprep.subr.bf16.mxu0 0
    %1302 = vmatpush1.bf16.msra.mxu0 0
    %1303 = vmatprep.subr.bf16.mxu0 0
    %1304 = vmatpush1.bf16.msra.mxu0 0
    %1305 = vmatprep.subr.bf16.mxu0 0
    %1306 = vmatpush1.bf16.msra.mxu0 0
    %1307 = vmatprep.subr.bf16.mxu0 0
    %1308 = vmatpush1.bf16.msra.mxu0 0
    %1309 = vmatprep.mubr.bf16.mxu0 0
    %1310 = vmatmul.mubr.bf16.gmra.mrb[0].mxu0 %v617
    %v1311 = vpop.f32.mrb[0].mxu0
    %v1312 = vadd.f32 %v710, %v1311
    %v1313 = vpop.f32.mrb[0].mxu0
    %v1314 = vadd.f32 %v714, %v1313
    %v1315 = vpop.f32.mrb[0].mxu0
    %v1316 = vadd.f32 %v710, %v1315
    %v1317 = vpop.f32.mrb[0].mxu0
    %v1318 = vadd.f32 %v714, %v1317
    %1319 = vmatprep.mubr.bf16.mxu0 0
    %1320 = vmatmul.mubr.bf16.gmra.mrb[0].mxu0 %v618
    %v1321 = vpop.f32.mrb[0].mxu0
    %v1322 = vadd.f32 %v710, %v1321
    %v1323 = vpop.f32.mrb[0].mxu0
    %v1324 = vadd.f32 %v714, %v1323
    %v1325 = vpop.f32.mrb[0].mxu0
    %v1326 = vadd.f32 %v710, %v1325
    %v1327 = vpop.f32.mrb[0].mxu0
    %v1328 = vadd.f32 %v714, %v1327
    %1329 = vmatprep.mubr.bf16.mxu0 0
    %1330 = vmatmul.mubr.bf16.gmra.mrb[0].mxu0 %v619
    %v1331 = vpop.f32.mrb[0].mxu0
    %v1332 = vadd.f32 %v710, %v1331
    %v1333 = vpop.f32.mrb[0].mxu0
    %v1334 = vadd.f32 %v714, %v1333
    %v1335 = vpop.f32.mrb[0].mxu0
    %v1336 = vadd.f32 %v710, %v1335
    %v1337 = vpop.f32.mrb[0].mxu0
    %v1338 = vadd.f32 %v714, %v1337
    %1339 = vmatprep.mubr.bf16.mxu0 0
    %1340 = vmatmul.mubr.bf16.gmra.mrb[0].mxu0 %v620
    %v1341 = vpop.f32.mrb[0].mxu0
    %v1342 = vadd.f32 %v710, %v1341
    %v1343 = vpop.f32.mrb[0].mxu0
    %v1344 = vadd.f32 %v714, %v1343
    %v1345 = vpop.f32.mrb[0].mxu0
    %v1346 = vadd.f32 %v710, %v1345
    %v1347 = vpop.f32.mrb[0].mxu0
    %v1348 = vadd.f32 %v714, %v1347
    %1349 = vmatprep.mubr.bf16.mxu0 0
    %1350 = vmatmul.mubr.bf16.gmra.mrb[0].mxu0 %v621
    %v1351 = vpop.f32.mrb[0].mxu0
    %v1352 = vadd.f32 %v710, %v1351
    %v1353 = vpop.f32.mrb[0].mxu0
    %v1354 = vadd.f32 %v714, %v1353
    %v1355 = vpop.f32.mrb[0].mxu0
    %v1356 = vadd.f32 %v710, %v1355
    %v1357 = vpop.f32.mrb[0].mxu0
    %v1358 = vadd.f32 %v714, %v1357
    %1359 = vmatprep.mubr.bf16.mxu0 0
    %1360 = vmatmul.mubr.bf16.gmra.mrb[0].mxu0 %v622
    %v1361 = vpop.f32.mrb[0].mxu0
    %v1362 = vadd.f32 %v710, %v1361
    %v1363 = vpop.f32.mrb[0].mxu0
    %v1364 = vadd.f32 %v714, %v1363
    %v1365 = vpop.f32.mrb[0].mxu0
    %v1366 = vadd.f32 %v710, %v1365
    %v1367 = vpop.f32.mrb[0].mxu0
    %v1368 = vadd.f32 %v714, %v1367
    %1369 = vmatprep.mubr.bf16.mxu0 0
    %1370 = vmatmul.mubr.bf16.gmra.mrb[0].mxu0 %v623
    %v1371 = vpop.f32.mrb[0].mxu0
    %v1372 = vadd.f32 %v710, %v1371
    %v1373 = vpop.f32.mrb[0].mxu0
    %v1374 = vadd.f32 %v714, %v1373
    %v1375 = vpop.f32.mrb[0].mxu0
    %v1376 = vadd.f32 %v710, %v1375
    %v1377 = vpop.f32.mrb[0].mxu0
    %v1378 = vadd.f32 %v714, %v1377
    %1379 = vmatprep.mubr.bf16.mxu0 0
    %1380 = vmatmul.mubr.bf16.gmra.mrb[0].mxu0 %v624
    %v1381 = vpop.f32.mrb[0].mxu0
    %v1382 = vadd.f32 %v710, %v1381
    %v1383 = vpop.f32.mrb[0].mxu0
    %v1384 = vadd.f32 %v714, %v1383
    %v1385 = vpop.f32.mrb[0].mxu0
    %v1386 = vadd.f32 %v710, %v1385
    %v1387 = vpop.f32.mrb[0].mxu0
    %v1388 = vadd.f32 %v714, %v1387
    %1389 = vdwg.mxu0
    %1390 = vmatprep.subr.bf16.mxu0 %v930
    %1391 = vmatpush1.bf16.msra.mxu0 %v929
    %1392 = vmatprep.subr.bf16.mxu0 %v938
    %1393 = vmatpush1.bf16.msra.mxu0 %v937
    %1394 = vmatprep.subr.bf16.mxu0 %v946
    %1395 = vmatpush1.bf16.msra.mxu0 %v945
    %1396 = vmatprep.subr.bf16.mxu0 %v954
    %1397 = vmatpush1.bf16.msra.mxu0 %v953
    %1398 = vmatprep.subr.bf16.mxu0 %v962
    %1399 = vmatpush1.bf16.msra.mxu0 %v961
    %1400 = vmatprep.subr.bf16.mxu0 %v970
    %1401 = vmatpush1.bf16.msra.mxu0 %v969
    %1402 = vmatprep.subr.bf16.mxu0 %v978
    %1403 = vmatpush1.bf16.msra.mxu0 %v977
    %1404 = vmatprep.subr.bf16.mxu0 %v986
    %1405 = vmatpush1.bf16.msra.mxu0 %v985
    %1406 = vmatprep.subr.bf16.mxu0 0
    %1407 = vmatpush1.bf16.msra.mxu0 0
    %1408 = vmatprep.subr.bf16.mxu0 0
    %1409 = vmatpush1.bf16.msra.mxu0 0
    %1410 = vmatprep.subr.bf16.mxu0 0
    %1411 = vmatpush1.bf16.msra.mxu0 0
    %1412 = vmatprep.subr.bf16.mxu0 0
    %1413 = vmatpush1.bf16.msra.mxu0 0
    %1414 = vmatprep.subr.bf16.mxu0 0
    %1415 = vmatpush1.bf16.msra.mxu0 0
    %1416 = vmatprep.subr.bf16.mxu0 0
    %1417 = vmatpush1.bf16.msra.mxu0 0
    %1418 = vmatprep.subr.bf16.mxu0 0
    %1419 = vmatpush1.bf16.msra.mxu0 0
    %1420 = vmatprep.subr.bf16.mxu0 0
    %1421 = vmatpush1.bf16.msra.mxu0 0
    %1422 = vmatprep.mubr.bf16.mxu0 0
    %1423 = vmatmul.mubr.bf16.gmra.mrb[0].mxu0 %v617
    %v1424 = vpop.f32.mrb[0].mxu0
    %v1425 = vadd.f32 %v718, %v1424
    %v1426 = vpop.f32.mrb[0].mxu0
    %v1427 = vadd.f32 %v722, %v1426
    %v1428 = vpop.f32.mrb[0].mxu0
    %v1429 = vadd.f32 %v718, %v1428
    %v1430 = vpop.f32.mrb[0].mxu0
    %v1431 = vadd.f32 %v722, %v1430
    %1432 = vmatprep.mubr.bf16.mxu0 0
    %1433 = vmatmul.mubr.bf16.gmra.mrb[0].mxu0 %v618
    %v1434 = vpop.f32.mrb[0].mxu0
    %v1435 = vadd.f32 %v718, %v1434
    %v1436 = vpop.f32.mrb[0].mxu0
    %v1437 = vadd.f32 %v722, %v1436
    %v1438 = vpop.f32.mrb[0].mxu0
    %v1439 = vadd.f32 %v718, %v1438
    %v1440 = vpop.f32.mrb[0].mxu0
    %v1441 = vadd.f32 %v722, %v1440
    %1442 = vmatprep.mubr.bf16.mxu0 0
    %1443 = vmatmul.mubr.bf16.gmra.mrb[0].mxu0 %v619
    %v1444 = vpop.f32.mrb[0].mxu0
    %v1445 = vadd.f32 %v718, %v1444
    %v1446 = vpop.f32.mrb[0].mxu0
    %v1447 = vadd.f32 %v722, %v1446
    %v1448 = vpop.f32.mrb[0].mxu0
    %v1449 = vadd.f32 %v718, %v1448
    %v1450 = vpop.f32.mrb[0].mxu0
    %v1451 = vadd.f32 %v722, %v1450
    %1452 = vmatprep.mubr.bf16.mxu0 0
    %1453 = vmatmul.mubr.bf16.gmra.mrb[0].mxu0 %v620
    %v1454 = vpop.f32.mrb[0].mxu0
    %v1455 = vadd.f32 %v718, %v1454
    %v1456 = vpop.f32.mrb[0].mxu0
    %v1457 = vadd.f32 %v722, %v1456
    %v1458 = vpop.f32.mrb[0].mxu0
    %v1459 = vadd.f32 %v718, %v1458
    %v1460 = vpop.f32.mrb[0].mxu0
    %v1461 = vadd.f32 %v722, %v1460
    %1462 = vmatprep.mubr.bf16.mxu0 0
    %1463 = vmatmul.mubr.bf16.gmra.mrb[0].mxu0 %v621
    %v1464 = vpop.f32.mrb[0].mxu0
    %v1465 = vadd.f32 %v718, %v1464
    %v1466 = vpop.f32.mrb[0].mxu0
    %v1467 = vadd.f32 %v722, %v1466
    %v1468 = vpop.f32.mrb[0].mxu0
    %v1469 = vadd.f32 %v718, %v1468
    %v1470 = vpop.f32.mrb[0].mxu0
    %v1471 = vadd.f32 %v722, %v1470
    %1472 = vmatprep.mubr.bf16.mxu0 0
    %1473 = vmatmul.mubr.bf16.gmra.mrb[0].mxu0 %v622
    %v1474 = vpop.f32.mrb[0].mxu0
    %v1475 = vadd.f32 %v718, %v1474
    %v1476 = vpop.f32.mrb[0].mxu0
    %v1477 = vadd.f32 %v722, %v1476
    %v1478 = vpop.f32.mrb[0].mxu0
    %v1479 = vadd.f32 %v718, %v1478
    %v1480 = vpop.f32.mrb[0].mxu0
    %v1481 = vadd.f32 %v722, %v1480
    %1482 = vmatprep.mubr.bf16.mxu0 0
    %1483 = vmatmul.mubr.bf16.gmra.mrb[0].mxu0 %v623
    %v1484 = vpop.f32.mrb[0].mxu0
    %v1485 = vadd.f32 %v718, %v1484
    %v1486 = vpop.f32.mrb[0].mxu0
    %v1487 = vadd.f32 %v722, %v1486
    %v1488 = vpop.f32.mrb[0].mxu0
    %v1489 = vadd.f32 %v718, %v1488
    %v1490 = vpop.f32.mrb[0].mxu0
    %v1491 = vadd.f32 %v722, %v1490
    %1492 = vmatprep.mubr.bf16.mxu0 0
    %1493 = vmatmul.mubr.bf16.gmra.mrb[0].mxu0 %v624
    %v1494 = vpop.f32.mrb[0].mxu0
    %v1495 = vadd.f32 %v718, %v1494
    %v1496 = vpop.f32.mrb[0].mxu0
    %v1497 = vadd.f32 %v722, %v1496
    %v1498 = vpop.f32.mrb[0].mxu0
    %v1499 = vadd.f32 %v718, %v1498
    %v1500 = vpop.f32.mrb[0].mxu0
    %v1501 = vadd.f32 %v722, %v1500
    %1502 = vdwg.mxu0
    %v1503 = vmax.f32 %v1086, 0.0
    %v1504 = vmax.f32 %v1088, 0.0
    %v1505 = vmax.f32 %v1199, 0.0
    %v1506 = vmax.f32 %v1201, 0.0
    %v1507 = vmax.f32 %v1312, 0.0
    %v1508 = vmax.f32 %v1314, 0.0
    %v1509 = vmax.f32 %v1425, 0.0
    %v1510 = vmax.f32 %v1427, 0.0
    %v1511 = vmax.f32 %v1090, 0.0
    %v1512 = vmax.f32 %v1092, 0.0
    %v1513 = vmax.f32 %v1203, 0.0
    %v1514 = vmax.f32 %v1205, 0.0
    %v1515 = vmax.f32 %v1316, 0.0
    %v1516 = vmax.f32 %v1318, 0.0
    %v1517 = vmax.f32 %v1429, 0.0
    %v1518 = vmax.f32 %v1431, 0.0
    %v1519 = vmax.f32 %v1096, 0.0
    %v1520 = vmax.f32 %v1098, 0.0
    %v1521 = vmax.f32 %v1209, 0.0
    %v1522 = vmax.f32 %v1211, 0.0
    %v1523 = vmax.f32 %v1322, 0.0
    %v1524 = vmax.f32 %v1324, 0.0
    %v1525 = vmax.f32 %v1435, 0.0
    %v1526 = vmax.f32 %v1437, 0.0
    %v1527 = vmax.f32 %v1100, 0.0
    %v1528 = vmax.f32 %v1102, 0.0
    %v1529 = vmax.f32 %v1213, 0.0
    %v1530 = vmax.f32 %v1215, 0.0
    %v1531 = vmax.f32 %v1326, 0.0
    %v1532 = vmax.f32 %v1328, 0.0
    %v1533 = vmax.f32 %v1439, 0.0
    %v1534 = vmax.f32 %v1441, 0.0
    %v1535 = vmax.f32 %v1106, 0.0
    %v1536 = vmax.f32 %v1108, 0.0
    %v1537 = vmax.f32 %v1219, 0.0
    %v1538 = vmax.f32 %v1221, 0.0
    %v1539 = vmax.f32 %v1332, 0.0
    %v1540 = vmax.f32 %v1334, 0.0
    %v1541 = vmax.f32 %v1445, 0.0
    %v1542 = vmax.f32 %v1447, 0.0
    %v1543 = vmax.f32 %v1110, 0.0
    %v1544 = vmax.f32 %v1112, 0.0
    %v1545 = vmax.f32 %v1223, 0.0
    %v1546 = vmax.f32 %v1225, 0.0
    %v1547 = vmax.f32 %v1336, 0.0
    %v1548 = vmax.f32 %v1338, 0.0
    %v1549 = vmax.f32 %v1449, 0.0
    %v1550 = vmax.f32 %v1451, 0.0
    %v1551 = vmax.f32 %v1116, 0.0
    %v1552 = vmax.f32 %v1118, 0.0
    %v1553 = vmax.f32 %v1229, 0.0
    %v1554 = vmax.f32 %v1231, 0.0
    %v1555 = vmax.f32 %v1342, 0.0
    %v1556 = vmax.f32 %v1344, 0.0
    %v1557 = vmax.f32 %v1455, 0.0
    %v1558 = vmax.f32 %v1457, 0.0
    %v1559 = vmax.f32 %v1120, 0.0
    %v1560 = vmax.f32 %v1122, 0.0
    %v1561 = vmax.f32 %v1233, 0.0
    %v1562 = vmax.f32 %v1235, 0.0
    %v1563 = vmax.f32 %v1346, 0.0
    %v1564 = vmax.f32 %v1348, 0.0
    %v1565 = vmax.f32 %v1459, 0.0
    %v1566 = vmax.f32 %v1461, 0.0
    %v1567 = vmax.f32 %v1126, 0.0
    %v1568 = vmax.f32 %v1128, 0.0
    %v1569 = vmax.f32 %v1239, 0.0
    %v1570 = vmax.f32 %v1241, 0.0
    %v1571 = vmax.f32 %v1352, 0.0
    %v1572 = vmax.f32 %v1354, 0.0
    %v1573 = vmax.f32 %v1465, 0.0
    %v1574 = vmax.f32 %v1467, 0.0
    %v1575 = vmax.f32 %v1130, 0.0
    %v1576 = vmax.f32 %v1132, 0.0
    %v1577 = vmax.f32 %v1243, 0.0
    %v1578 = vmax.f32 %v1245, 0.0
    %v1579 = vmax.f32 %v1356, 0.0
    %v1580 = vmax.f32 %v1358, 0.0
    %v1581 = vmax.f32 %v1469, 0.0
    %v1582 = vmax.f32 %v1471, 0.0
    %v1583 = vmax.f32 %v1136, 0.0
    %v1584 = vmax.f32 %v1138, 0.0
    %v1585 = vmax.f32 %v1249, 0.0
    %v1586 = vmax.f32 %v1251, 0.0
    %v1587 = vmax.f32 %v1362, 0.0
    %v1588 = vmax.f32 %v1364, 0.0
    %v1589 = vmax.f32 %v1475, 0.0
    %v1590 = vmax.f32 %v1477, 0.0
    %v1591 = vmax.f32 %v1140, 0.0
    %v1592 = vmax.f32 %v1142, 0.0
    %v1593 = vmax.f32 %v1253, 0.0
    %v1594 = vmax.f32 %v1255, 0.0
    %v1595 = vmax.f32 %v1366, 0.0
    %v1596 = vmax.f32 %v1368, 0.0
    %v1597 = vmax.f32 %v1479, 0.0
    %v1598 = vmax.f32 %v1481, 0.0
    %v1599 = vmax.f32 %v1146, 0.0
    %v1600 = vmax.f32 %v1148, 0.0
    %v1601 = vmax.f32 %v1259, 0.0
    %v1602 = vmax.f32 %v1261, 0.0
    %v1603 = vmax.f32 %v1372, 0.0
    %v1604 = vmax.f32 %v1374, 0.0
    %v1605 = vmax.f32 %v1485, 0.0
    %v1606 = vmax.f32 %v1487, 0.0
    %v1607 = vmax.f32 %v1150, 0.0
    %v1608 = vmax.f32 %v1152, 0.0
    %v1609 = vmax.f32 %v1263, 0.0
    %v1610 = vmax.f32 %v1265, 0.0
    %v1611 = vmax.f32 %v1376, 0.0
    %v1612 = vmax.f32 %v1378, 0.0
    %v1613 = vmax.f32 %v1489, 0.0
    %v1614 = vmax.f32 %v1491, 0.0
    %v1615 = vmax.f32 %v1156, 0.0
    %v1616 = vmax.f32 %v1158, 0.0
    %v1617 = vmax.f32 %v1269, 0.0
    %v1618 = vmax.f32 %v1271, 0.0
    %v1619 = vmax.f32 %v1382, 0.0
    %v1620 = vmax.f32 %v1384, 0.0
    %v1621 = vmax.f32 %v1495, 0.0
    %v1622 = vmax.f32 %v1497, 0.0
    %v1623 = vmax.f32 %v1160, 0.0
    %v1624 = vmax.f32 %v1162, 0.0
    %v1625 = vmax.f32 %v1273, 0.0
    %v1626 = vmax.f32 %v1275, 0.0
    %v1627 = vmax.f32 %v1386, 0.0
    %v1628 = vmax.f32 %v1388, 0.0
    %v1629 = vmax.f32 %v1499, 0.0
    %v1630 = vmax.f32 %v1501, 0.0
    %v1631 = vmax.f32 %v1503, %v1511
    %v1632 = vrot.slane %v1631, 4
    %v1633 = vmax.f32 %v1631, %v1632
    %v1634 = vrot.slane %v1633, 2
    %v1635 = vmax.f32 %v1633, %v1634
    %v1636 = vrot.slane %v1635, 1
    %v1637 = vmax.f32 %v1635, %v1636
    %v1638 = vmax.f32 %v1504, %v1512
    %v1639 = vrot.slane %v1638, 4
    %v1640 = vmax.f32 %v1638, %v1639
    %v1641 = vrot.slane %v1640, 2
    %v1642 = vmax.f32 %v1640, %v1641
    %v1643 = vrot.slane %v1642, 1
    %v1644 = vmax.f32 %v1642, %v1643
    %v1645 = vmax.f32 %v1505, %v1513
    %v1646 = vrot.slane %v1645, 4
    %v1647 = vmax.f32 %v1645, %v1646
    %v1648 = vrot.slane %v1647, 2
    %v1649 = vmax.f32 %v1647, %v1648
    %v1650 = vrot.slane %v1649, 1
    %v1651 = vmax.f32 %v1649, %v1650
    %v1652 = vmax.f32 %v1506, %v1514
    %v1653 = vrot.slane %v1652, 4
    %v1654 = vmax.f32 %v1652, %v1653
    %v1655 = vrot.slane %v1654, 2
    %v1656 = vmax.f32 %v1654, %v1655
    %v1657 = vrot.slane %v1656, 1
    %v1658 = vmax.f32 %v1656, %v1657
    %v1659 = vmax.f32 %v1507, %v1515
    %v1660 = vrot.slane %v1659, 4
    %v1661 = vmax.f32 %v1659, %v1660
    %v1662 = vrot.slane %v1661, 2
    %v1663 = vmax.f32 %v1661, %v1662
    %v1664 = vrot.slane %v1663, 1
    %v1665 = vmax.f32 %v1663, %v1664
    %v1666 = vmax.f32 %v1508, %v1516
    %v1667 = vrot.slane %v1666, 4
    %v1668 = vmax.f32 %v1666, %v1667
    %v1669 = vrot.slane %v1668, 2
    %v1670 = vmax.f32 %v1668, %v1669
    %v1671 = vrot.slane %v1670, 1
    %v1672 = vmax.f32 %v1670, %v1671
    %v1673 = vmax.f32 %v1509, %v1517
    %v1674 = vrot.slane %v1673, 4
    %v1675 = vmax.f32 %v1673, %v1674
    %v1676 = vrot.slane %v1675, 2
    %v1677 = vmax.f32 %v1675, %v1676
    %v1678 = vrot.slane %v1677, 1
    %v1679 = vmax.f32 %v1677, %v1678
    %v1680 = vmax.f32 %v1510, %v1518
    %v1681 = vrot.slane %v1680, 4
    %v1682 = vmax.f32 %v1680, %v1681
    %v1683 = vrot.slane %v1682, 2
    %v1684 = vmax.f32 %v1682, %v1683
    %v1685 = vrot.slane %v1684, 1
    %v1686 = vmax.f32 %v1684, %v1685
    %v1687 = vmax.f32 %v1519, %v1527
    %v1688 = vrot.slane %v1687, 4
    %v1689 = vmax.f32 %v1687, %v1688
    %v1690 = vrot.slane %v1689, 2
    %v1691 = vmax.f32 %v1689, %v1690
    %v1692 = vrot.slane %v1691, 1
    %v1693 = vmax.f32 %v1691, %v1692
    %v1694 = vmax.f32 %v1520, %v1528
    %v1695 = vrot.slane %v1694, 4
    %v1696 = vmax.f32 %v1694, %v1695
    %v1697 = vrot.slane %v1696, 2
    %v1698 = vmax.f32 %v1696, %v1697
    %v1699 = vrot.slane %v1698, 1
    %v1700 = vmax.f32 %v1698, %v1699
    %v1701 = vmax.f32 %v1521, %v1529
    %v1702 = vrot.slane %v1701, 4
    %v1703 = vmax.f32 %v1701, %v1702
    %v1704 = vrot.slane %v1703, 2
    %v1705 = vmax.f32 %v1703, %v1704
    %v1706 = vrot.slane %v1705, 1
    %v1707 = vmax.f32 %v1705, %v1706
    %v1708 = vmax.f32 %v1522, %v1530
    %v1709 = vrot.slane %v1708, 4
    %v1710 = vmax.f32 %v1708, %v1709
    %v1711 = vrot.slane %v1710, 2
    %v1712 = vmax.f32 %v1710, %v1711
    %v1713 = vrot.slane %v1712, 1
    %v1714 = vmax.f32 %v1712, %v1713
    %v1715 = vmax.f32 %v1523, %v1531
    %v1716 = vrot.slane %v1715, 4
    %v1717 = vmax.f32 %v1715, %v1716
    %v1718 = vrot.slane %v1717, 2
    %v1719 = vmax.f32 %v1717, %v1718
    %v1720 = vrot.slane %v1719, 1
    %v1721 = vmax.f32 %v1719, %v1720
    %v1722 = vmax.f32 %v1524, %v1532
    %v1723 = vrot.slane %v1722, 4
    %v1724 = vmax.f32 %v1722, %v1723
    %v1725 = vrot.slane %v1724, 2
    %v1726 = vmax.f32 %v1724, %v1725
    %v1727 = vrot.slane %v1726, 1
    %v1728 = vmax.f32 %v1726, %v1727
    %v1729 = vmax.f32 %v1525, %v1533
    %v1730 = vrot.slane %v1729, 4
    %v1731 = vmax.f32 %v1729, %v1730
    %v1732 = vrot.slane %v1731, 2
    %v1733 = vmax.f32 %v1731, %v1732
    %v1734 = vrot.slane %v1733, 1
    %v1735 = vmax.f32 %v1733, %v1734
    %v1736 = vmax.f32 %v1526, %v1534
    %v1737 = vrot.slane %v1736, 4
    %v1738 = vmax.f32 %v1736, %v1737
    %v1739 = vrot.slane %v1738, 2
    %v1740 = vmax.f32 %v1738, %v1739
    %v1741 = vrot.slane %v1740, 1
    %v1742 = vmax.f32 %v1740, %v1741
    %v1743 = vmax.f32 %v1535, %v1543
    %v1744 = vrot.slane %v1743, 4
    %v1745 = vmax.f32 %v1743, %v1744
    %v1746 = vrot.slane %v1745, 2
    %v1747 = vmax.f32 %v1745, %v1746
    %v1748 = vrot.slane %v1747, 1
    %v1749 = vmax.f32 %v1747, %v1748
    %v1750 = vmax.f32 %v1536, %v1544
    %v1751 = vrot.slane %v1750, 4
    %v1752 = vmax.f32 %v1750, %v1751
    %v1753 = vrot.slane %v1752, 2
    %v1754 = vmax.f32 %v1752, %v1753
    %v1755 = vrot.slane %v1754, 1
    %v1756 = vmax.f32 %v1754, %v1755
    %v1757 = vmax.f32 %v1537, %v1545
    %v1758 = vrot.slane %v1757, 4
    %v1759 = vmax.f32 %v1757, %v1758
    %v1760 = vrot.slane %v1759, 2
    %v1761 = vmax.f32 %v1759, %v1760
    %v1762 = vrot.slane %v1761, 1
    %v1763 = vmax.f32 %v1761, %v1762
    %v1764 = vmax.f32 %v1538, %v1546
    %v1765 = vrot.slane %v1764, 4
    %v1766 = vmax.f32 %v1764, %v1765
    %v1767 = vrot.slane %v1766, 2
    %v1768 = vmax.f32 %v1766, %v1767
    %v1769 = vrot.slane %v1768, 1
    %v1770 = vmax.f32 %v1768, %v1769
    %v1771 = vmax.f32 %v1539, %v1547
    %v1772 = vrot.slane %v1771, 4
    %v1773 = vmax.f32 %v1771, %v1772
    %v1774 = vrot.slane %v1773, 2
    %v1775 = vmax.f32 %v1773, %v1774
    %v1776 = vrot.slane %v1775, 1
    %v1777 = vmax.f32 %v1775, %v1776
    %v1778 = vmax.f32 %v1540, %v1548
    %v1779 = vrot.slane %v1778, 4
    %v1780 = vmax.f32 %v1778, %v1779
    %v1781 = vrot.slane %v1780, 2
    %v1782 = vmax.f32 %v1780, %v1781
    %v1783 = vrot.slane %v1782, 1
    %v1784 = vmax.f32 %v1782, %v1783
    %v1785 = vmax.f32 %v1541, %v1549
    %v1786 = vrot.slane %v1785, 4
    %v1787 = vmax.f32 %v1785, %v1786
    %v1788 = vrot.slane %v1787, 2
    %v1789 = vmax.f32 %v1787, %v1788
    %v1790 = vrot.slane %v1789, 1
    %v1791 = vmax.f32 %v1789, %v1790
    %v1792 = vmax.f32 %v1542, %v1550
    %v1793 = vrot.slane %v1792, 4
    %v1794 = vmax.f32 %v1792, %v1793
    %v1795 = vrot.slane %v1794, 2
    %v1796 = vmax.f32 %v1794, %v1795
    %v1797 = vrot.slane %v1796, 1
    %v1798 = vmax.f32 %v1796, %v1797
    %v1799 = vmax.f32 %v1551, %v1559
    %v1800 = vrot.slane %v1799, 4
    %v1801 = vmax.f32 %v1799, %v1800
    %v1802 = vrot.slane %v1801, 2
    %v1803 = vmax.f32 %v1801, %v1802
    %v1804 = vrot.slane %v1803, 1
    %v1805 = vmax.f32 %v1803, %v1804
    %v1806 = vmax.f32 %v1552, %v1560
    %v1807 = vrot.slane %v1806, 4
    %v1808 = vmax.f32 %v1806, %v1807
    %v1809 = vrot.slane %v1808, 2
    %v1810 = vmax.f32 %v1808, %v1809
    %v1811 = vrot.slane %v1810, 1
    %v1812 = vmax.f32 %v1810, %v1811
    %v1813 = vmax.f32 %v1553, %v1561
    %v1814 = vrot.slane %v1813, 4
    %v1815 = vmax.f32 %v1813, %v1814
    %v1816 = vrot.slane %v1815, 2
    %v1817 = vmax.f32 %v1815, %v1816
    %v1818 = vrot.slane %v1817, 1
    %v1819 = vmax.f32 %v1817, %v1818
    %v1820 = vmax.f32 %v1554, %v1562
    %v1821 = vrot.slane %v1820, 4
    %v1822 = vmax.f32 %v1820, %v1821
    %v1823 = vrot.slane %v1822, 2
    %v1824 = vmax.f32 %v1822, %v1823
    %v1825 = vrot.slane %v1824, 1
    %v1826 = vmax.f32 %v1824, %v1825
    %v1827 = vmax.f32 %v1555, %v1563
    %v1828 = vrot.slane %v1827, 4
    %v1829 = vmax.f32 %v1827, %v1828
    %v1830 = vrot.slane %v1829, 2
    %v1831 = vmax.f32 %v1829, %v1830
    %v1832 = vrot.slane %v1831, 1
    %v1833 = vmax.f32 %v1831, %v1832
    %v1834 = vmax.f32 %v1556, %v1564
    %v1835 = vrot.slane %v1834, 4
    %v1836 = vmax.f32 %v1834, %v1835
    %v1837 = vrot.slane %v1836, 2
    %v1838 = vmax.f32 %v1836, %v1837
    %v1839 = vrot.slane %v1838, 1
    %v1840 = vmax.f32 %v1838, %v1839
    %v1841 = vmax.f32 %v1557, %v1565
    %v1842 = vrot.slane %v1841, 4
    %v1843 = vmax.f32 %v1841, %v1842
    %v1844 = vrot.slane %v1843, 2
    %v1845 = vmax.f32 %v1843, %v1844
    %v1846 = vrot.slane %v1845, 1
    %v1847 = vmax.f32 %v1845, %v1846
    %v1848 = vmax.f32 %v1558, %v1566
    %v1849 = vrot.slane %v1848, 4
    %v1850 = vmax.f32 %v1848, %v1849
    %v1851 = vrot.slane %v1850, 2
    %v1852 = vmax.f32 %v1850, %v1851
    %v1853 = vrot.slane %v1852, 1
    %v1854 = vmax.f32 %v1852, %v1853
    %v1855 = vmax.f32 %v1567, %v1575
    %v1856 = vrot.slane %v1855, 4
    %v1857 = vmax.f32 %v1855, %v1856
    %v1858 = vrot.slane %v1857, 2
    %v1859 = vmax.f32 %v1857, %v1858
    %v1860 = vrot.slane %v1859, 1
    %v1861 = vmax.f32 %v1859, %v1860
    %v1862 = vmax.f32 %v1568, %v1576
    %v1863 = vrot.slane %v1862, 4
    %v1864 = vmax.f32 %v1862, %v1863
    %v1865 = vrot.slane %v1864, 2
    %v1866 = vmax.f32 %v1864, %v1865
    %v1867 = vrot.slane %v1866, 1
    %v1868 = vmax.f32 %v1866, %v1867
    %v1869 = vmax.f32 %v1569, %v1577
    %v1870 = vrot.slane %v1869, 4
    %v1871 = vmax.f32 %v1869, %v1870
    %v1872 = vrot.slane %v1871, 2
    %v1873 = vmax.f32 %v1871, %v1872
    %v1874 = vrot.slane %v1873, 1
    %v1875 = vmax.f32 %v1873, %v1874
    %v1876 = vmax.f32 %v1570, %v1578
    %v1877 = vrot.slane %v1876, 4
    %v1878 = vmax.f32 %v1876, %v1877
    %v1879 = vrot.slane %v1878, 2
    %v1880 = vmax.f32 %v1878, %v1879
    %v1881 = vrot.slane %v1880, 1
    %v1882 = vmax.f32 %v1880, %v1881
    %v1883 = vmax.f32 %v1571, %v1579
    %v1884 = vrot.slane %v1883, 4
    %v1885 = vmax.f32 %v1883, %v1884
    %v1886 = vrot.slane %v1885, 2
    %v1887 = vmax.f32 %v1885, %v1886
    %v1888 = vrot.slane %v1887, 1
    %v1889 = vmax.f32 %v1887, %v1888
    %v1890 = vmax.f32 %v1572, %v1580
    %v1891 = vrot.slane %v1890, 4
    %v1892 = vmax.f32 %v1890, %v1891
    %v1893 = vrot.slane %v1892, 2
    %v1894 = vmax.f32 %v1892, %v1893
    %v1895 = vrot.slane %v1894, 1
    %v1896 = vmax.f32 %v1894, %v1895
    %v1897 = vmax.f32 %v1573, %v1581
    %v1898 = vrot.slane %v1897, 4
    %v1899 = vmax.f32 %v1897, %v1898
    %v1900 = vrot.slane %v1899, 2
    %v1901 = vmax.f32 %v1899, %v1900
    %v1902 = vrot.slane %v1901, 1
    %v1903 = vmax.f32 %v1901, %v1902
    %v1904 = vmax.f32 %v1574, %v1582
    %v1905 = vrot.slane %v1904, 4
    %v1906 = vmax.f32 %v1904, %v1905
    %v1907 = vrot.slane %v1906, 2
    %v1908 = vmax.f32 %v1906, %v1907
    %v1909 = vrot.slane %v1908, 1
    %v1910 = vmax.f32 %v1908, %v1909
    %v1911 = vmax.f32 %v1583, %v1591
    %v1912 = vrot.slane %v1911, 4
    %v1913 = vmax.f32 %v1911, %v1912
    %v1914 = vrot.slane %v1913, 2
    %v1915 = vmax.f32 %v1913, %v1914
    %v1916 = vrot.slane %v1915, 1
    %v1917 = vmax.f32 %v1915, %v1916
    %v1918 = vmax.f32 %v1584, %v1592
    %v1919 = vrot.slane %v1918, 4
    %v1920 = vmax.f32 %v1918, %v1919
    %v1921 = vrot.slane %v1920, 2
    %v1922 = vmax.f32 %v1920, %v1921
    %v1923 = vrot.slane %v1922, 1
    %v1924 = vmax.f32 %v1922, %v1923
    %v1925 = vmax.f32 %v1585, %v1593
    %v1926 = vrot.slane %v1925, 4
    %v1927 = vmax.f32 %v1925, %v1926
    %v1928 = vrot.slane %v1927, 2
    %v1929 = vmax.f32 %v1927, %v1928
    %v1930 = vrot.slane %v1929, 1
    %v1931 = vmax.f32 %v1929, %v1930
    %v1932 = vmax.f32 %v1586, %v1594
    %v1933 = vrot.slane %v1932, 4
    %v1934 = vmax.f32 %v1932, %v1933
    %v1935 = vrot.slane %v1934, 2
    %v1936 = vmax.f32 %v1934, %v1935
    %v1937 = vrot.slane %v1936, 1
    %v1938 = vmax.f32 %v1936, %v1937
    %v1939 = vmax.f32 %v1587, %v1595
    %v1940 = vrot.slane %v1939, 4
    %v1941 = vmax.f32 %v1939, %v1940
    %v1942 = vrot.slane %v1941, 2
    %v1943 = vmax.f32 %v1941, %v1942
    %v1944 = vrot.slane %v1943, 1
    %v1945 = vmax.f32 %v1943, %v1944
    %v1946 = vmax.f32 %v1588, %v1596
    %v1947 = vrot.slane %v1946, 4
    %v1948 = vmax.f32 %v1946, %v1947
    %v1949 = vrot.slane %v1948, 2
    %v1950 = vmax.f32 %v1948, %v1949
    %v1951 = vrot.slane %v1950, 1
    %v1952 = vmax.f32 %v1950, %v1951
    %v1953 = vmax.f32 %v1589, %v1597
    %v1954 = vrot.slane %v1953, 4
    %v1955 = vmax.f32 %v1953, %v1954
    %v1956 = vrot.slane %v1955, 2
    %v1957 = vmax.f32 %v1955, %v1956
    %v1958 = vrot.slane %v1957, 1
    %v1959 = vmax.f32 %v1957, %v1958
    %v1960 = vmax.f32 %v1590, %v1598
    %v1961 = vrot.slane %v1960, 4
    %v1962 = vmax.f32 %v1960, %v1961
    %v1963 = vrot.slane %v1962, 2
    %v1964 = vmax.f32 %v1962, %v1963
    %v1965 = vrot.slane %v1964, 1
    %v1966 = vmax.f32 %v1964, %v1965
    %v1967 = vmax.f32 %v1599, %v1607
    %v1968 = vrot.slane %v1967, 4
    %v1969 = vmax.f32 %v1967, %v1968
    %v1970 = vrot.slane %v1969, 2
    %v1971 = vmax.f32 %v1969, %v1970
    %v1972 = vrot.slane %v1971, 1
    %v1973 = vmax.f32 %v1971, %v1972
    %v1974 = vmax.f32 %v1600, %v1608
    %v1975 = vrot.slane %v1974, 4
    %v1976 = vmax.f32 %v1974, %v1975
    %v1977 = vrot.slane %v1976, 2
    %v1978 = vmax.f32 %v1976, %v1977
    %v1979 = vrot.slane %v1978, 1
    %v1980 = vmax.f32 %v1978, %v1979
    %v1981 = vmax.f32 %v1601, %v1609
    %v1982 = vrot.slane %v1981, 4
    %v1983 = vmax.f32 %v1981, %v1982
    %v1984 = vrot.slane %v1983, 2
    %v1985 = vmax.f32 %v1983, %v1984
    %v1986 = vrot.slane %v1985, 1
    %v1987 = vmax.f32 %v1985, %v1986
    %v1988 = vmax.f32 %v1602, %v1610
    %v1989 = vrot.slane %v1988, 4
    %v1990 = vmax.f32 %v1988, %v1989
    %v1991 = vrot.slane %v1990, 2
    %v1992 = vmax.f32 %v1990, %v1991
    %v1993 = vrot.slane %v1992, 1
    %v1994 = vmax.f32 %v1992, %v1993
    %v1995 = vmax.f32 %v1603, %v1611
    %v1996 = vrot.slane %v1995, 4
    %v1997 = vmax.f32 %v1995, %v1996
    %v1998 = vrot.slane %v1997, 2
    %v1999 = vmax.f32 %v1997, %v1998
    %v2000 = vrot.slane %v1999, 1
    %v2001 = vmax.f32 %v1999, %v2000
    %v2002 = vmax.f32 %v1604, %v1612
    %v2003 = vrot.slane %v2002, 4
    %v2004 = vmax.f32 %v2002, %v2003
    %v2005 = vrot.slane %v2004, 2
    %v2006 = vmax.f32 %v2004, %v2005
    %v2007 = vrot.slane %v2006, 1
    %v2008 = vmax.f32 %v2006, %v2007
    %v2009 = vmax.f32 %v1605, %v1613
    %v2010 = vrot.slane %v2009, 4
    %v2011 = vmax.f32 %v2009, %v2010
    %v2012 = vrot.slane %v2011, 2
    %v2013 = vmax.f32 %v2011, %v2012
    %v2014 = vrot.slane %v2013, 1
    %v2015 = vmax.f32 %v2013, %v2014
    %v2016 = vmax.f32 %v1606, %v1614
    %v2017 = vrot.slane %v2016, 4
    %v2018 = vmax.f32 %v2016, %v2017
    %v2019 = vrot.slane %v2018, 2
    %v2020 = vmax.f32 %v2018, %v2019
    %v2021 = vrot.slane %v2020, 1
    %v2022 = vmax.f32 %v2020, %v2021
    %v2023 = vmax.f32 %v1615, %v1623
    %v2024 = vrot.slane %v2023, 4
    %v2025 = vmax.f32 %v2023, %v2024
    %v2026 = vrot.slane %v2025, 2
    %v2027 = vmax.f32 %v2025, %v2026
    %v2028 = vrot.slane %v2027, 1
    %v2029 = vmax.f32 %v2027, %v2028
    %v2030 = vmax.f32 %v1616, %v1624
    %v2031 = vrot.slane %v2030, 4
    %v2032 = vmax.f32 %v2030, %v2031
    %v2033 = vrot.slane %v2032, 2
    %v2034 = vmax.f32 %v2032, %v2033
    %v2035 = vrot.slane %v2034, 1
    %v2036 = vmax.f32 %v2034, %v2035
    %v2037 = vmax.f32 %v1617, %v1625
    %v2038 = vrot.slane %v2037, 4
    %v2039 = vmax.f32 %v2037, %v2038
    %v2040 = vrot.slane %v2039, 2
    %v2041 = vmax.f32 %v2039, %v2040
    %v2042 = vrot.slane %v2041, 1
    %v2043 = vmax.f32 %v2041, %v2042
    %v2044 = vmax.f32 %v1618, %v1626
    %v2045 = vrot.slane %v2044, 4
    %v2046 = vmax.f32 %v2044, %v2045
    %v2047 = vrot.slane %v2046, 2
    %v2048 = vmax.f32 %v2046, %v2047
    %v2049 = vrot.slane %v2048, 1
    %v2050 = vmax.f32 %v2048, %v2049
    %v2051 = vmax.f32 %v1619, %v1627
    %v2052 = vrot.slane %v2051, 4
    %v2053 = vmax.f32 %v2051, %v2052
    %v2054 = vrot.slane %v2053, 2
    %v2055 = vmax.f32 %v2053, %v2054
    %v2056 = vrot.slane %v2055, 1
    %v2057 = vmax.f32 %v2055, %v2056
    %v2058 = vmax.f32 %v1620, %v1628
    %v2059 = vrot.slane %v2058, 4
    %v2060 = vmax.f32 %v2058, %v2059
    %v2061 = vrot.slane %v2060, 2
    %v2062 = vmax.f32 %v2060, %v2061
    %v2063 = vrot.slane %v2062, 1
    %v2064 = vmax.f32 %v2062, %v2063
    %v2065 = vmax.f32 %v1621, %v1629
    %v2066 = vrot.slane %v2065, 4
    %v2067 = vmax.f32 %v2065, %v2066
    %v2068 = vrot.slane %v2067, 2
    %v2069 = vmax.f32 %v2067, %v2068
    %v2070 = vrot.slane %v2069, 1
    %v2071 = vmax.f32 %v2069, %v2070
    %v2072 = vmax.f32 %v1622, %v1630
    %v2073 = vrot.slane %v2072, 4
    %v2074 = vmax.f32 %v2072, %v2073
    %v2075 = vrot.slane %v2074, 2
    %v2076 = vmax.f32 %v2074, %v2075
    %v2077 = vrot.slane %v2076, 1
    %v2078 = vmax.f32 %v2076, %v2077
    %p2079 = scmp.eq.s32.totalorder 0, 0
    // Predicated region
    $region102: #{pointnet_cls_forward.2} parent=1 // pred_check
      %p2080 = pneg %p2079
    $region103: #{pointnet_cls_forward.2} parent=1 // pred_check_branch
      %2082 = sbr.rel (%p2080) target = $region105
    $region104: #{pointnet_cls_forward.2} parent=1 // pred_region
      %vm2147 = vcmask 1041409
      %v2148 = vsel %vm2147, %v1693, %v1637
      %vm2149 = vcmask 1042434
      %v2150 = vsel %vm2149, %v1749, %v2148
      %vm2151 = vcmask 1043459
      %v2152 = vsel %vm2151, %v1805, %v2150
      %vm2153 = vcmask 1044484
      %v2154 = vsel %vm2153, %v1861, %v2152
      %vm2155 = vcmask 1045509
      %v2156 = vsel %vm2155, %v1917, %v2154
      %vm2157 = vcmask 1046534
      %v2158 = vsel %vm2157, %v1973, %v2156
      %vm2159 = vcmask 1047559
      %v2160 = vsel %vm2159, %v2029, %v2158
      %v2161 = vsel %vm2147, %v1700, %v1644
      %v2162 = vsel %vm2149, %v1756, %v2161
      %v2163 = vsel %vm2151, %v1812, %v2162
      %v2164 = vsel %vm2153, %v1868, %v2163
      %v2165 = vsel %vm2155, %v1924, %v2164
      %v2166 = vsel %vm2157, %v1980, %v2165
      %v2167 = vsel %vm2159, %v2036, %v2166
      %v2168 = vsel %vm2147, %v1707, %v1651
      %v2169 = vsel %vm2149, %v1763, %v2168
      %v2170 = vsel %vm2151, %v1819, %v2169
      %v2171 = vsel %vm2153, %v1875, %v2170
      %v2172 = vsel %vm2155, %v1931, %v2171
      %v2173 = vsel %vm2157, %v1987, %v2172
      %v2174 = vsel %vm2159, %v2043, %v2173
      %v2175 = vsel %vm2147, %v1714, %v1658
      %v2176 = vsel %vm2149, %v1770, %v2175
      %v2177 = vsel %vm2151, %v1826, %v2176
      %v2178 = vsel %vm2153, %v1882, %v2177
      %v2179 = vsel %vm2155, %v1938, %v2178
      %v2180 = vsel %vm2157, %v1994, %v2179
      %v2181 = vsel %vm2159, %v2050, %v2180
      %v2182 = vsel %vm2147, %v1721, %v1665
      %v2183 = vsel %vm2149, %v1777, %v2182
      %v2184 = vsel %vm2151, %v1833, %v2183
      %v2185 = vsel %vm2153, %v1889, %v2184
      %v2186 = vsel %vm2155, %v1945, %v2185
      %v2187 = vsel %vm2157, %v2001, %v2186
      %v2188 = vsel %vm2159, %v2057, %v2187
      %v2189 = vsel %vm2147, %v1728, %v1672
      %v2190 = vsel %vm2149, %v1784, %v2189
      %v2191 = vsel %vm2151, %v1840, %v2190
      %v2192 = vsel %vm2153, %v1896, %v2191
      %v2193 = vsel %vm2155, %v1952, %v2192
      %v2194 = vsel %vm2157, %v2008, %v2193
      %v2195 = vsel %vm2159, %v2064, %v2194
      %v2196 = vsel %vm2147, %v1735, %v1679
      %v2197 = vsel %vm2149, %v1791, %v2196
      %v2198 = vsel %vm2151, %v1847, %v2197
      %v2199 = vsel %vm2153, %v1903, %v2198
      %v2200 = vsel %vm2155, %v1959, %v2199
      %v2201 = vsel %vm2157, %v2015, %v2200
      %v2202 = vsel %vm2159, %v2071, %v2201
      %v2203 = vsel %vm2147, %v1742, %v1686
      %v2204 = vsel %vm2149, %v1798, %v2203
      %v2205 = vsel %vm2151, %v1854, %v2204
      %v2206 = vsel %vm2153, %v1910, %v2205
      %v2207 = vsel %vm2155, %v1966, %v2206
      %v2208 = vsel %vm2157, %v2022, %v2207
      %v2209 = vsel %vm2159, %v2078, %v2208
      %2218 = vst [vmem:[#allocation2] sm:$0xff] %v2160
      %2219 = vst [vmem:[#allocation2 + $0x8] sm:$0xff] %v2167
      %2220 = vst [vmem:[#allocation2 + $0x10] sm:$0xff] %v2174
      %2221 = vst [vmem:[#allocation2 + $0x18] sm:$0xff] %v2181
      %2222 = vst [vmem:[#allocation2 + $0x20] sm:$0xff] %v2188
      %2223 = vst [vmem:[#allocation2 + $0x28] sm:$0xff] %v2195
      %2224 = vst [vmem:[#allocation2 + $0x30] sm:$0xff] %v2202
      %2225 = vst [vmem:[#allocation2 + $0x38] sm:$0xff] %v2209
    $region105: #{pointnet_cls_forward.2} parent=1 // pred_fallthru
      _
    %p2226 = scmp.ne.s32.totalorder 0, 0
    // Predicated region
    $region106: #{pointnet_cls_forward.2} parent=1 // pred_check
      %p2227 = pneg %p2226
    $region107: #{pointnet_cls_forward.2} parent=1 // pred_check_branch
      %2229 = sbr.rel (%p2227) target = $region109
    $region108: #{pointnet_cls_forward.2} parent=1 // pred_region
      %v2230 = vld [vmem:[#allocation2] sm:$0xff]
      %v2231 = vld [vmem:[#allocation2 + $0x8] sm:$0xff]
      %v2232 = vld [vmem:[#allocation2 + $0x10] sm:$0xff]
      %v2233 = vld [vmem:[#allocation2 + $0x18] sm:$0xff]
      %v2234 = vld [vmem:[#allocation2 + $0x20] sm:$0xff]
      %v2235 = vld [vmem:[#allocation2 + $0x28] sm:$0xff]
      %v2236 = vld [vmem:[#allocation2 + $0x30] sm:$0xff]
      %v2237 = vld [vmem:[#allocation2 + $0x38] sm:$0xff]
      %vm2302 = vcmask 1041409
      %v2303 = vsel %vm2302, %v1693, %v1637
      %vm2304 = vcmask 1042434
      %v2305 = vsel %vm2304, %v1749, %v2303
      %vm2306 = vcmask 1043459
      %v2307 = vsel %vm2306, %v1805, %v2305
      %vm2308 = vcmask 1044484
      %v2309 = vsel %vm2308, %v1861, %v2307
      %vm2310 = vcmask 1045509
      %v2311 = vsel %vm2310, %v1917, %v2309
      %vm2312 = vcmask 1046534
      %v2313 = vsel %vm2312, %v1973, %v2311
      %vm2314 = vcmask 1047559
      %v2315 = vsel %vm2314, %v2029, %v2313
      %v2316 = vsel %vm2302, %v1700, %v1644
      %v2317 = vsel %vm2304, %v1756, %v2316
      %v2318 = vsel %vm2306, %v1812, %v2317
      %v2319 = vsel %vm2308, %v1868, %v2318
      %v2320 = vsel %vm2310, %v1924, %v2319
      %v2321 = vsel %vm2312, %v1980, %v2320
      %v2322 = vsel %vm2314, %v2036, %v2321
      %v2323 = vsel %vm2302, %v1707, %v1651
      %v2324 = vsel %vm2304, %v1763, %v2323
      %v2325 = vsel %vm2306, %v1819, %v2324
      %v2326 = vsel %vm2308, %v1875, %v2325
      %v2327 = vsel %vm2310, %v1931, %v2326
      %v2328 = vsel %vm2312, %v1987, %v2327
      %v2329 = vsel %vm2314, %v2043, %v2328
      %v2330 = vsel %vm2302, %v1714, %v1658
      %v2331 = vsel %vm2304, %v1770, %v2330
      %v2332 = vsel %vm2306, %v1826, %v2331
      %v2333 = vsel %vm2308, %v1882, %v2332
      %v2334 = vsel %vm2310, %v1938, %v2333
      %v2335 = vsel %vm2312, %v1994, %v2334
      %v2336 = vsel %vm2314, %v2050, %v2335
      %v2337 = vsel %vm2302, %v1721, %v1665
      %v2338 = vsel %vm2304, %v1777, %v2337
      %v2339 = vsel %vm2306, %v1833, %v2338
      %v2340 = vsel %vm2308, %v1889, %v2339
      %v2341 = vsel %vm2310, %v1945, %v2340
      %v2342 = vsel %vm2312, %v2001, %v2341
      %v2343 = vsel %vm2314, %v2057, %v2342
      %v2344 = vsel %vm2302, %v1728, %v1672
      %v2345 = vsel %vm2304, %v1784, %v2344
      %v2346 = vsel %vm2306, %v1840, %v2345
      %v2347 = vsel %vm2308, %v1896, %v2346
      %v2348 = vsel %vm2310, %v1952, %v2347
      %v2349 = vsel %vm2312, %v2008, %v2348
      %v2350 = vsel %vm2314, %v2064, %v2349
      %v2351 = vsel %vm2302, %v1735, %v1679
      %v2352 = vsel %vm2304, %v1791, %v2351
      %v2353 = vsel %vm2306, %v1847, %v2352
      %v2354 = vsel %vm2308, %v1903, %v2353
      %v2355 = vsel %vm2310, %v1959, %v2354
      %v2356 = vsel %vm2312, %v2015, %v2355
      %v2357 = vsel %vm2314, %v2071, %v2356
      %v2358 = vsel %vm2302, %v1742, %v1686
      %v2359 = vsel %vm2304, %v1798, %v2358
      %v2360 = vsel %vm2306, %v1854, %v2359
      %v2361 = vsel %vm2308, %v1910, %v2360
      %v2362 = vsel %vm2310, %v1966, %v2361
      %v2363 = vsel %vm2312, %v2022, %v2362
      %v2364 = vsel %vm2314, %v2078, %v2363
      %v2373 = vmax.f32 %v2230, %v2315
      %v2374 = vmax.f32 %v2231, %v2322
      %v2375 = vmax.f32 %v2232, %v2329
      %v2376 = vmax.f32 %v2233, %v2336
      %v2377 = vmax.f32 %v2234, %v2343
      %v2378 = vmax.f32 %v2235, %v2350
      %v2379 = vmax.f32 %v2236, %v2357
      %v2380 = vmax.f32 %v2237, %v2364
      %2381 = vst [vmem:[#allocation2] sm:$0xff] %v2373
      %2382 = vst [vmem:[#allocation2 + $0x8] sm:$0xff] %v2374
      %2383 = vst [vmem:[#allocation2 + $0x10] sm:$0xff] %v2375
      %2384 = vst [vmem:[#allocation2 + $0x18] sm:$0xff] %v2376
      %2385 = vst [vmem:[#allocation2 + $0x20] sm:$0xff] %v2377
      %2386 = vst [vmem:[#allocation2 + $0x28] sm:$0xff] %v2378
      %2387 = vst [vmem:[#allocation2 + $0x30] sm:$0xff] %v2379
      %2388 = vst [vmem:[#allocation2 + $0x38] sm:$0xff] %v2380
    $region109: #{pointnet_cls_forward.2} parent=1 // pred_fallthru
      _
    // Predicated region
    $region110: #{pointnet_cls_forward.2} parent=1 // pred_check
      %p2389 = pneg %p2079
    $region111: #{pointnet_cls_forward.2} parent=1 // pred_check_branch
      %2391 = sbr.rel (%p2389) target = $region113
    $region112: #{pointnet_cls_forward.2} parent=1 // pred_region
      %v2392 = vld [vmem:[#allocation2] sm:$0xff]
      %v2393 = vld [vmem:[#allocation2 + $0x8] sm:$0xff]
      %v2394 = vld [vmem:[#allocation2 + $0x10] sm:$0xff]
      %v2395 = vld [vmem:[#allocation2 + $0x18] sm:$0xff]
      %v2396 = vld [vmem:[#allocation2 + $0x20] sm:$0xff]
      %v2397 = vld [vmem:[#allocation2 + $0x28] sm:$0xff]
      %v2398 = vld [vmem:[#allocation2 + $0x30] sm:$0xff]
      %v2399 = vld [vmem:[#allocation2 + $0x38] sm:$0xff]
      %v2400 = vld [vmem:[#allocation13] sm:$0xff]
      %v2401 = vld [vmem:[#allocation13 + $0x8] sm:$0xff]
      %v2402 = vld [vmem:[#allocation13 + $0x10] sm:$0xff]
      %v2403 = vld [vmem:[#allocation13 + $0x18] sm:$0xff]
      %v2404 = vld [vmem:[#allocation13 + $0x20] sm:$0xff]
      %v2405 = vld [vmem:[#allocation13 + $0x28] sm:$0xff]
      %v2406 = vld [vmem:[#allocation13 + $0x30] sm:$0xff]
      %v2407 = vld [vmem:[#allocation13 + $0x38] sm:$0xff]
      %v2408 = vld [vmem:[#allocation13 + $0x40] sm:$0xff]
      %v2409 = vld [vmem:[#allocation13 + $0x48] sm:$0xff]
      %v2410 = vld [vmem:[#allocation13 + $0x50] sm:$0xff]
      %v2411 = vld [vmem:[#allocation13 + $0x58] sm:$0xff]
      %v2412 = vld [vmem:[#allocation13 + $0x60] sm:$0xff]
      %v2413 = vld [vmem:[#allocation13 + $0x68] sm:$0xff]
      %v2414 = vld [vmem:[#allocation13 + $0x70] sm:$0xff]
      %v2415 = vld [vmem:[#allocation13 + $0x78] sm:$0xff]
      %v2416 = vld [vmem:[#allocation13 + $0x80] sm:$0xff]
      %v2417 = vld [vmem:[#allocation13 + $0x88] sm:$0xff]
      %v2418 = vld [vmem:[#allocation13 + $0x90] sm:$0xff]
      %v2419 = vld [vmem:[#allocation13 + $0x98] sm:$0xff]
      %v2420 = vld [vmem:[#allocation13 + $0xa0] sm:$0xff]
      %v2421 = vld [vmem:[#allocation13 + $0xa8] sm:$0xff]
      %v2422 = vld [vmem:[#allocation13 + $0xb0] sm:$0xff]
      %v2423 = vld [vmem:[#allocation13 + $0xb8] sm:$0xff]
      %v2424 = vld [vmem:[#allocation13 + $0xc0] sm:$0xff]
      %v2425 = vld [vmem:[#allocation13 + $0xc8] sm:$0xff]
      %v2426 = vld [vmem:[#allocation13 + $0xd0] sm:$0xff]
      %v2427 = vld [vmem:[#allocation13 + $0xd8] sm:$0xff]
      %v2428 = vld [vmem:[#allocation13 + $0xe0] sm:$0xff]
      %v2429 = vld [vmem:[#allocation13 + $0xe8] sm:$0xff]
      %v2430 = vld [vmem:[#allocation13 + $0xf0] sm:$0xff]
      %v2431 = vld [vmem:[#allocation13 + $0xf8] sm:$0xff]
      %v2432 = vld [vmem:[#allocation13 + $0x100] sm:$0xff]
      %v2433 = vld [vmem:[#allocation13 + $0x108] sm:$0xff]
      %v2434 = vld [vmem:[#allocation13 + $0x110] sm:$0xff]
      %v2435 = vld [vmem:[#allocation13 + $0x118] sm:$0xff]
      %v2436 = vld [vmem:[#allocation13 + $0x120] sm:$0xff]
      %v2437 = vld [vmem:[#allocation13 + $0x128] sm:$0xff]
      %v2438 = vld [vmem:[#allocation13 + $0x130] sm:$0xff]
      %v2439 = vld [vmem:[#allocation13 + $0x138] sm:$0xff]
      %v2440 = vld [vmem:[#allocation13 + $0x140] sm:$0xff]
      %v2441 = vld [vmem:[#allocation13 + $0x148] sm:$0xff]
      %v2442 = vld [vmem:[#allocation13 + $0x150] sm:$0xff]
      %v2443 = vld [vmem:[#allocation13 + $0x158] sm:$0xff]
      %v2444 = vld [vmem:[#allocation13 + $0x160] sm:$0xff]
      %v2445 = vld [vmem:[#allocation13 + $0x168] sm:$0xff]
      %v2446 = vld [vmem:[#allocation13 + $0x170] sm:$0xff]
      %v2447 = vld [vmem:[#allocation13 + $0x178] sm:$0xff]
      %v2448 = vld [vmem:[#allocation13 + $0x180] sm:$0xff]
      %v2449 = vld [vmem:[#allocation13 + $0x188] sm:$0xff]
      %v2450 = vld [vmem:[#allocation13 + $0x190] sm:$0xff]
      %v2451 = vld [vmem:[#allocation13 + $0x198] sm:$0xff]
      %v2452 = vld [vmem:[#allocation13 + $0x1a0] sm:$0xff]
      %v2453 = vld [vmem:[#allocation13 + $0x1a8] sm:$0xff]
      %v2454 = vld [vmem:[#allocation13 + $0x1b0] sm:$0xff]
      %v2455 = vld [vmem:[#allocation13 + $0x1b8] sm:$0xff]
      %v2456 = vld [vmem:[#allocation13 + $0x1c0] sm:$0xff]
      %v2457 = vld [vmem:[#allocation13 + $0x1c8] sm:$0xff]
      %v2458 = vld [vmem:[#allocation13 + $0x1d0] sm:$0xff]
      %v2459 = vld [vmem:[#allocation13 + $0x1d8] sm:$0xff]
      %v2460 = vld [vmem:[#allocation13 + $0x1e0] sm:$0xff]
      %v2461 = vld [vmem:[#allocation13 + $0x1e8] sm:$0xff]
      %v2462 = vld [vmem:[#allocation13 + $0x1f0] sm:$0xff]
      %v2463 = vld [vmem:[#allocation13 + $0x1f8] sm:$0xff]
      %v2464 = vld [vmem:[#allocation13 + $0x200] sm:$0xff]
      %v2465 = vld [vmem:[#allocation13 + $0x208] sm:$0xff]
      %v2466 = vld [vmem:[#allocation13 + $0x210] sm:$0xff]
      %v2467 = vld [vmem:[#allocation13 + $0x218] sm:$0xff]
      %v2468 = vld [vmem:[#allocation13 + $0x220] sm:$0xff]
      %v2469 = vld [vmem:[#allocation13 + $0x228] sm:$0xff]
      %v2470 = vld [vmem:[#allocation13 + $0x230] sm:$0xff]
      %v2471 = vld [vmem:[#allocation13 + $0x238] sm:$0xff]
      %v2472 = vld [vmem:[#allocation13 + $0x240] sm:$0xff]
      %v2473 = vld [vmem:[#allocation13 + $0x248] sm:$0xff]
      %v2474 = vld [vmem:[#allocation13 + $0x250] sm:$0xff]
      %v2475 = vld [vmem:[#allocation13 + $0x258] sm:$0xff]
      %v2476 = vld [vmem:[#allocation13 + $0x260] sm:$0xff]
      %v2477 = vld [vmem:[#allocation13 + $0x268] sm:$0xff]
      %v2478 = vld [vmem:[#allocation13 + $0x270] sm:$0xff]
      %v2479 = vld [vmem:[#allocation13 + $0x278] sm:$0xff]
      %v2480 = vld [vmem:[#allocation13 + $0x280] sm:$0xff]
      %v2481 = vld [vmem:[#allocation13 + $0x288] sm:$0xff]
      %v2482 = vld [vmem:[#allocation13 + $0x290] sm:$0xff]
      %v2483 = vld [vmem:[#allocation13 + $0x298] sm:$0xff]
      %v2484 = vld [vmem:[#allocation13 + $0x2a0] sm:$0xff]
      %v2485 = vld [vmem:[#allocation13 + $0x2a8] sm:$0xff]
      %v2486 = vld [vmem:[#allocation13 + $0x2b0] sm:$0xff]
      %v2487 = vld [vmem:[#allocation13 + $0x2b8] sm:$0xff]
      %v2488 = vld [vmem:[#allocation13 + $0x2c0] sm:$0xff]
      %v2489 = vld [vmem:[#allocation13 + $0x2c8] sm:$0xff]
      %v2490 = vld [vmem:[#allocation13 + $0x2d0] sm:$0xff]
      %v2491 = vld [vmem:[#allocation13 + $0x2d8] sm:$0xff]
      %v2492 = vld [vmem:[#allocation13 + $0x2e0] sm:$0xff]
      %v2493 = vld [vmem:[#allocation13 + $0x2e8] sm:$0xff]
      %v2494 = vld [vmem:[#allocation13 + $0x2f0] sm:$0xff]
      %v2495 = vld [vmem:[#allocation13 + $0x2f8] sm:$0xff]
      %v2496 = vld [vmem:[#allocation13 + $0x300] sm:$0xff]
      %v2497 = vld [vmem:[#allocation13 + $0x308] sm:$0xff]
      %v2498 = vld [vmem:[#allocation13 + $0x310] sm:$0xff]
      %v2499 = vld [vmem:[#allocation13 + $0x318] sm:$0xff]
      %v2500 = vld [vmem:[#allocation13 + $0x320] sm:$0xff]
      %v2501 = vld [vmem:[#allocation13 + $0x328] sm:$0xff]
      %v2502 = vld [vmem:[#allocation13 + $0x330] sm:$0xff]
      %v2503 = vld [vmem:[#allocation13 + $0x338] sm:$0xff]
      %v2504 = vld [vmem:[#allocation13 + $0x340] sm:$0xff]
      %v2505 = vld [vmem:[#allocation13 + $0x348] sm:$0xff]
      %v2506 = vld [vmem:[#allocation13 + $0x350] sm:$0xff]
      %v2507 = vld [vmem:[#allocation13 + $0x358] sm:$0xff]
      %v2508 = vld [vmem:[#allocation13 + $0x360] sm:$0xff]
      %v2509 = vld [vmem:[#allocation13 + $0x368] sm:$0xff]
      %v2510 = vld [vmem:[#allocation13 + $0x370] sm:$0xff]
      %v2511 = vld [vmem:[#allocation13 + $0x378] sm:$0xff]
      %v2512 = vld [vmem:[#allocation13 + $0x380] sm:$0xff]
      %v2513 = vld [vmem:[#allocation13 + $0x388] sm:$0xff]
      %v2514 = vld [vmem:[#allocation13 + $0x390] sm:$0xff]
      %v2515 = vld [vmem:[#allocation13 + $0x398] sm:$0xff]
      %v2516 = vld [vmem:[#allocation13 + $0x3a0] sm:$0xff]
      %v2517 = vld [vmem:[#allocation13 + $0x3a8] sm:$0xff]
      %v2518 = vld [vmem:[#allocation13 + $0x3b0] sm:$0xff]
      %v2519 = vld [vmem:[#allocation13 + $0x3b8] sm:$0xff]
      %v2520 = vld [vmem:[#allocation13 + $0x3c0] sm:$0xff]
      %v2521 = vld [vmem:[#allocation13 + $0x3c8] sm:$0xff]
      %v2522 = vld [vmem:[#allocation13 + $0x3d0] sm:$0xff]
      %v2523 = vld [vmem:[#allocation13 + $0x3d8] sm:$0xff]
      %v2524 = vld [vmem:[#allocation13 + $0x3e0] sm:$0xff]
      %v2525 = vld [vmem:[#allocation13 + $0x3e8] sm:$0xff]
      %v2526 = vld [vmem:[#allocation13 + $0x3f0] sm:$0xff]
      %v2527 = vld [vmem:[#allocation13 + $0x3f8] sm:$0xff]
      %v2528 = vld [vmem:[#allocation13 + $0x400] sm:$0xff]
      %v2529 = vld [vmem:[#allocation13 + $0x408] sm:$0xff]
      %v2530 = vld [vmem:[#allocation13 + $0x410] sm:$0xff]
      %v2531 = vld [vmem:[#allocation13 + $0x418] sm:$0xff]
      %v2532 = vld [vmem:[#allocation13 + $0x420] sm:$0xff]
      %v2533 = vld [vmem:[#allocation13 + $0x428] sm:$0xff]
      %v2534 = vld [vmem:[#allocation13 + $0x430] sm:$0xff]
      %v2535 = vld [vmem:[#allocation13 + $0x438] sm:$0xff]
      %v2536 = vld [vmem:[#allocation13 + $0x440] sm:$0xff]
      %v2537 = vld [vmem:[#allocation13 + $0x448] sm:$0xff]
      %v2538 = vld [vmem:[#allocation13 + $0x450] sm:$0xff]
      %v2539 = vld [vmem:[#allocation13 + $0x458] sm:$0xff]
      %v2540 = vld [vmem:[#allocation13 + $0x460] sm:$0xff]
      %v2541 = vld [vmem:[#allocation13 + $0x468] sm:$0xff]
      %v2542 = vld [vmem:[#allocation13 + $0x470] sm:$0xff]
      %v2543 = vld [vmem:[#allocation13 + $0x478] sm:$0xff]
      %v2544 = vld [vmem:[#allocation13 + $0x480] sm:$0xff]
      %v2545 = vld [vmem:[#allocation13 + $0x488] sm:$0xff]
      %v2546 = vld [vmem:[#allocation13 + $0x490] sm:$0xff]
      %v2547 = vld [vmem:[#allocation13 + $0x498] sm:$0xff]
      %v2548 = vld [vmem:[#allocation13 + $0x4a0] sm:$0xff]
      %v2549 = vld [vmem:[#allocation13 + $0x4a8] sm:$0xff]
      %v2550 = vld [vmem:[#allocation13 + $0x4b0] sm:$0xff]
      %v2551 = vld [vmem:[#allocation13 + $0x4b8] sm:$0xff]
      %v2552 = vld [vmem:[#allocation13 + $0x4c0] sm:$0xff]
      %v2553 = vld [vmem:[#allocation13 + $0x4c8] sm:$0xff]
      %v2554 = vld [vmem:[#allocation13 + $0x4d0] sm:$0xff]
      %v2555 = vld [vmem:[#allocation13 + $0x4d8] sm:$0xff]
      %v2556 = vld [vmem:[#allocation13 + $0x4e0] sm:$0xff]
      %v2557 = vld [vmem:[#allocation13 + $0x4e8] sm:$0xff]
      %v2558 = vld [vmem:[#allocation13 + $0x4f0] sm:$0xff]
      %v2559 = vld [vmem:[#allocation13 + $0x4f8] sm:$0xff]
      %v2560 = vld [vmem:[#allocation13 + $0x500] sm:$0xff]
      %v2561 = vld [vmem:[#allocation13 + $0x508] sm:$0xff]
      %v2562 = vld [vmem:[#allocation13 + $0x510] sm:$0xff]
      %v2563 = vld [vmem:[#allocation13 + $0x518] sm:$0xff]
      %v2564 = vld [vmem:[#allocation13 + $0x520] sm:$0xff]
      %v2565 = vld [vmem:[#allocation13 + $0x528] sm:$0xff]
      %v2566 = vld [vmem:[#allocation13 + $0x530] sm:$0xff]
      %v2567 = vld [vmem:[#allocation13 + $0x538] sm:$0xff]
      %v2568 = vld [vmem:[#allocation13 + $0x540] sm:$0xff]
      %v2569 = vld [vmem:[#allocation13 + $0x548] sm:$0xff]
      %v2570 = vld [vmem:[#allocation13 + $0x550] sm:$0xff]
      %v2571 = vld [vmem:[#allocation13 + $0x558] sm:$0xff]
      %v2572 = vld [vmem:[#allocation13 + $0x560] sm:$0xff]
      %v2573 = vld [vmem:[#allocation13 + $0x568] sm:$0xff]
      %v2574 = vld [vmem:[#allocation13 + $0x570] sm:$0xff]
      %v2575 = vld [vmem:[#allocation13 + $0x578] sm:$0xff]
      %v2576 = vld [vmem:[#allocation13 + $0x580] sm:$0xff]
      %v2577 = vld [vmem:[#allocation13 + $0x588] sm:$0xff]
      %v2578 = vld [vmem:[#allocation13 + $0x590] sm:$0xff]
      %v2579 = vld [vmem:[#allocation13 + $0x598] sm:$0xff]
      %v2580 = vld [vmem:[#allocation13 + $0x5a0] sm:$0xff]
      %v2581 = vld [vmem:[#allocation13 + $0x5a8] sm:$0xff]
      %v2582 = vld [vmem:[#allocation13 + $0x5b0] sm:$0xff]
      %v2583 = vld [vmem:[#allocation13 + $0x5b8] sm:$0xff]
      %v2584 = vld [vmem:[#allocation13 + $0x5c0] sm:$0xff]
      %v2585 = vld [vmem:[#allocation13 + $0x5c8] sm:$0xff]
      %v2586 = vld [vmem:[#allocation13 + $0x5d0] sm:$0xff]
      %v2587 = vld [vmem:[#allocation13 + $0x5d8] sm:$0xff]
      %v2588 = vld [vmem:[#allocation13 + $0x5e0] sm:$0xff]
      %v2589 = vld [vmem:[#allocation13 + $0x5e8] sm:$0xff]
      %v2590 = vld [vmem:[#allocation13 + $0x5f0] sm:$0xff]
      %v2591 = vld [vmem:[#allocation13 + $0x5f8] sm:$0xff]
      %v2592 = vld [vmem:[#allocation13 + $0x600] sm:$0xff]
      %v2593 = vld [vmem:[#allocation13 + $0x608] sm:$0xff]
      %v2594 = vld [vmem:[#allocation13 + $0x610] sm:$0xff]
      %v2595 = vld [vmem:[#allocation13 + $0x618] sm:$0xff]
      %v2596 = vld [vmem:[#allocation13 + $0x620] sm:$0xff]
      %v2597 = vld [vmem:[#allocation13 + $0x628] sm:$0xff]
      %v2598 = vld [vmem:[#allocation13 + $0x630] sm:$0xff]
      %v2599 = vld [vmem:[#allocation13 + $0x638] sm:$0xff]
      %v2600 = vld [vmem:[#allocation13 + $0x640] sm:$0xff]
      %v2601 = vld [vmem:[#allocation13 + $0x648] sm:$0xff]
      %v2602 = vld [vmem:[#allocation13 + $0x650] sm:$0xff]
      %v2603 = vld [vmem:[#allocation13 + $0x658] sm:$0xff]
      %v2604 = vld [vmem:[#allocation13 + $0x660] sm:$0xff]
      %v2605 = vld [vmem:[#allocation13 + $0x668] sm:$0xff]
      %v2606 = vld [vmem:[#allocation13 + $0x670] sm:$0xff]
      %v2607 = vld [vmem:[#allocation13 + $0x678] sm:$0xff]
      %v2608 = vld [vmem:[#allocation13 + $0x680] sm:$0xff]
      %v2609 = vld [vmem:[#allocation13 + $0x688] sm:$0xff]
      %v2610 = vld [vmem:[#allocation13 + $0x690] sm:$0xff]
      %v2611 = vld [vmem:[#allocation13 + $0x698] sm:$0xff]
      %v2612 = vld [vmem:[#allocation13 + $0x6a0] sm:$0xff]
      %v2613 = vld [vmem:[#allocation13 + $0x6a8] sm:$0xff]
      %v2614 = vld [vmem:[#allocation13 + $0x6b0] sm:$0xff]
      %v2615 = vld [vmem:[#allocation13 + $0x6b8] sm:$0xff]
      %v2616 = vld [vmem:[#allocation13 + $0x6c0] sm:$0xff]
      %v2617 = vld [vmem:[#allocation13 + $0x6c8] sm:$0xff]
      %v2618 = vld [vmem:[#allocation13 + $0x6d0] sm:$0xff]
      %v2619 = vld [vmem:[#allocation13 + $0x6d8] sm:$0xff]
      %v2620 = vld [vmem:[#allocation13 + $0x6e0] sm:$0xff]
      %v2621 = vld [vmem:[#allocation13 + $0x6e8] sm:$0xff]
      %v2622 = vld [vmem:[#allocation13 + $0x6f0] sm:$0xff]
      %v2623 = vld [vmem:[#allocation13 + $0x6f8] sm:$0xff]
      %v2624 = vld [vmem:[#allocation13 + $0x700] sm:$0xff]
      %v2625 = vld [vmem:[#allocation13 + $0x708] sm:$0xff]
      %v2626 = vld [vmem:[#allocation13 + $0x710] sm:$0xff]
      %v2627 = vld [vmem:[#allocation13 + $0x718] sm:$0xff]
      %v2628 = vld [vmem:[#allocation13 + $0x720] sm:$0xff]
      %v2629 = vld [vmem:[#allocation13 + $0x728] sm:$0xff]
      %v2630 = vld [vmem:[#allocation13 + $0x730] sm:$0xff]
      %v2631 = vld [vmem:[#allocation13 + $0x738] sm:$0xff]
      %v2632 = vld [vmem:[#allocation13 + $0x740] sm:$0xff]
      %v2633 = vld [vmem:[#allocation13 + $0x748] sm:$0xff]
      %v2634 = vld [vmem:[#allocation13 + $0x750] sm:$0xff]
      %v2635 = vld [vmem:[#allocation13 + $0x758] sm:$0xff]
      %v2636 = vld [vmem:[#allocation13 + $0x760] sm:$0xff]
      %v2637 = vld [vmem:[#allocation13 + $0x768] sm:$0xff]
      %v2638 = vld [vmem:[#allocation13 + $0x770] sm:$0xff]
      %v2639 = vld [vmem:[#allocation13 + $0x778] sm:$0xff]
      %v2640 = vld [vmem:[#allocation13 + $0x780] sm:$0xff]
      %v2641 = vld [vmem:[#allocation13 + $0x788] sm:$0xff]
      %v2642 = vld [vmem:[#allocation13 + $0x790] sm:$0xff]
      %v2643 = vld [vmem:[#allocation13 + $0x798] sm:$0xff]
      %v2644 = vld [vmem:[#allocation13 + $0x7a0] sm:$0xff]
      %v2645 = vld [vmem:[#allocation13 + $0x7a8] sm:$0xff]
      %v2646 = vld [vmem:[#allocation13 + $0x7b0] sm:$0xff]
      %v2647 = vld [vmem:[#allocation13 + $0x7b8] sm:$0xff]
      %v2648 = vld [vmem:[#allocation13 + $0x7c0] sm:$0xff]
      %v2649 = vld [vmem:[#allocation13 + $0x7c8] sm:$0xff]
      %v2650 = vld [vmem:[#allocation13 + $0x7d0] sm:$0xff]
      %v2651 = vld [vmem:[#allocation13 + $0x7d8] sm:$0xff]
      %v2652 = vld [vmem:[#allocation13 + $0x7e0] sm:$0xff]
      %v2653 = vld [vmem:[#allocation13 + $0x7e8] sm:$0xff]
      %v2654 = vld [vmem:[#allocation13 + $0x7f0] sm:$0xff]
      %v2655 = vld [vmem:[#allocation13 + $0x7f8] sm:$0xff]
      %v2656 = vld [vmem:[#allocation13 + $0x800] sm:$0xff]
      %v2657 = vld [vmem:[#allocation13 + $0x808] sm:$0xff]
      %v2658 = vld [vmem:[#allocation13 + $0x810] sm:$0xff]
      %v2659 = vld [vmem:[#allocation13 + $0x818] sm:$0xff]
      %v2660 = vld [vmem:[#allocation13 + $0x820] sm:$0xff]
      %v2661 = vld [vmem:[#allocation13 + $0x828] sm:$0xff]
      %v2662 = vld [vmem:[#allocation13 + $0x830] sm:$0xff]
      %v2663 = vld [vmem:[#allocation13 + $0x838] sm:$0xff]
      %v2664 = vld [vmem:[#allocation13 + $0x840] sm:$0xff]
      %v2665 = vld [vmem:[#allocation13 + $0x848] sm:$0xff]
      %v2666 = vld [vmem:[#allocation13 + $0x850] sm:$0xff]
      %v2667 = vld [vmem:[#allocation13 + $0x858] sm:$0xff]
      %v2668 = vld [vmem:[#allocation13 + $0x860] sm:$0xff]
      %v2669 = vld [vmem:[#allocation13 + $0x868] sm:$0xff]
      %v2670 = vld [vmem:[#allocation13 + $0x870] sm:$0xff]
      %v2671 = vld [vmem:[#allocation13 + $0x878] sm:$0xff]
      %v2672 = vld [vmem:[#allocation13 + $0x880] sm:$0xff]
      %v2673 = vld [vmem:[#allocation13 + $0x888] sm:$0xff]
      %v2674 = vld [vmem:[#allocation13 + $0x890] sm:$0xff]
      %v2675 = vld [vmem:[#allocation13 + $0x898] sm:$0xff]
      %v2676 = vld [vmem:[#allocation13 + $0x8a0] sm:$0xff]
      %v2677 = vld [vmem:[#allocation13 + $0x8a8] sm:$0xff]
      %v2678 = vld [vmem:[#allocation13 + $0x8b0] sm:$0xff]
      %v2679 = vld [vmem:[#allocation13 + $0x8b8] sm:$0xff]
      %v2680 = vld [vmem:[#allocation13 + $0x8c0] sm:$0xff]
      %v2681 = vld [vmem:[#allocation13 + $0x8c8] sm:$0xff]
      %v2682 = vld [vmem:[#allocation13 + $0x8d0] sm:$0xff]
      %v2683 = vld [vmem:[#allocation13 + $0x8d8] sm:$0xff]
      %v2684 = vld [vmem:[#allocation13 + $0x8e0] sm:$0xff]
      %v2685 = vld [vmem:[#allocation13 + $0x8e8] sm:$0xff]
      %v2686 = vld [vmem:[#allocation13 + $0x8f0] sm:$0xff]
      %v2687 = vld [vmem:[#allocation13 + $0x8f8] sm:$0xff]
      %v2688 = vld [vmem:[#allocation13 + $0x900] sm:$0xff]
      %v2689 = vld [vmem:[#allocation13 + $0x908] sm:$0xff]
      %v2690 = vld [vmem:[#allocation13 + $0x910] sm:$0xff]
      %v2691 = vld [vmem:[#allocation13 + $0x918] sm:$0xff]
      %v2692 = vld [vmem:[#allocation13 + $0x920] sm:$0xff]
      %v2693 = vld [vmem:[#allocation13 + $0x928] sm:$0xff]
      %v2694 = vld [vmem:[#allocation13 + $0x930] sm:$0xff]
      %v2695 = vld [vmem:[#allocation13 + $0x938] sm:$0xff]
      %v2696 = vld [vmem:[#allocation13 + $0x940] sm:$0xff]
      %v2697 = vld [vmem:[#allocation13 + $0x948] sm:$0xff]
      %v2698 = vld [vmem:[#allocation13 + $0x950] sm:$0xff]
      %v2699 = vld [vmem:[#allocation13 + $0x958] sm:$0xff]
      %v2700 = vld [vmem:[#allocation13 + $0x960] sm:$0xff]
      %v2701 = vld [vmem:[#allocation13 + $0x968] sm:$0xff]
      %v2702 = vld [vmem:[#allocation13 + $0x970] sm:$0xff]
      %v2703 = vld [vmem:[#allocation13 + $0x978] sm:$0xff]
      %v2704 = vld [vmem:[#allocation13 + $0x980] sm:$0xff]
      %v2705 = vld [vmem:[#allocation13 + $0x988] sm:$0xff]
      %v2706 = vld [vmem:[#allocation13 + $0x990] sm:$0xff]
      %v2707 = vld [vmem:[#allocation13 + $0x998] sm:$0xff]
      %v2708 = vld [vmem:[#allocation13 + $0x9a0] sm:$0xff]
      %v2709 = vld [vmem:[#allocation13 + $0x9a8] sm:$0xff]
      %v2710 = vld [vmem:[#allocation13 + $0x9b0] sm:$0xff]
      %v2711 = vld [vmem:[#allocation13 + $0x9b8] sm:$0xff]
      %v2712 = vld [vmem:[#allocation13 + $0x9c0] sm:$0xff]
      %v2713 = vld [vmem:[#allocation13 + $0x9c8] sm:$0xff]
      %v2714 = vld [vmem:[#allocation13 + $0x9d0] sm:$0xff]
      %v2715 = vld [vmem:[#allocation13 + $0x9d8] sm:$0xff]
      %v2716 = vld [vmem:[#allocation13 + $0x9e0] sm:$0xff]
      %v2717 = vld [vmem:[#allocation13 + $0x9e8] sm:$0xff]
      %v2718 = vld [vmem:[#allocation13 + $0x9f0] sm:$0xff]
      %v2719 = vld [vmem:[#allocation13 + $0x9f8] sm:$0xff]
      %v2720 = vld [vmem:[#allocation13 + $0xa00] sm:$0xff]
      %v2721 = vld [vmem:[#allocation13 + $0xa08] sm:$0xff]
      %v2722 = vld [vmem:[#allocation13 + $0xa10] sm:$0xff]
      %v2723 = vld [vmem:[#allocation13 + $0xa18] sm:$0xff]
      %v2724 = vld [vmem:[#allocation13 + $0xa20] sm:$0xff]
      %v2725 = vld [vmem:[#allocation13 + $0xa28] sm:$0xff]
      %v2726 = vld [vmem:[#allocation13 + $0xa30] sm:$0xff]
      %v2727 = vld [vmem:[#allocation13 + $0xa38] sm:$0xff]
      %v2728 = vld [vmem:[#allocation13 + $0xa40] sm:$0xff]
      %v2729 = vld [vmem:[#allocation13 + $0xa48] sm:$0xff]
      %v2730 = vld [vmem:[#allocation13 + $0xa50] sm:$0xff]
      %v2731 = vld [vmem:[#allocation13 + $0xa58] sm:$0xff]
      %v2732 = vld [vmem:[#allocation13 + $0xa60] sm:$0xff]
      %v2733 = vld [vmem:[#allocation13 + $0xa68] sm:$0xff]
      %v2734 = vld [vmem:[#allocation13 + $0xa70] sm:$0xff]
      %v2735 = vld [vmem:[#allocation13 + $0xa78] sm:$0xff]
      %v2736 = vld [vmem:[#allocation13 + $0xa80] sm:$0xff]
      %v2737 = vld [vmem:[#allocation13 + $0xa88] sm:$0xff]
      %v2738 = vld [vmem:[#allocation13 + $0xa90] sm:$0xff]
      %v2739 = vld [vmem:[#allocation13 + $0xa98] sm:$0xff]
      %v2740 = vld [vmem:[#allocation13 + $0xaa0] sm:$0xff]
      %v2741 = vld [vmem:[#allocation13 + $0xaa8] sm:$0xff]
      %v2742 = vld [vmem:[#allocation13 + $0xab0] sm:$0xff]
      %v2743 = vld [vmem:[#allocation13 + $0xab8] sm:$0xff]
      %v2744 = vld [vmem:[#allocation13 + $0xac0] sm:$0xff]
      %v2745 = vld [vmem:[#allocation13 + $0xac8] sm:$0xff]
      %v2746 = vld [vmem:[#allocation13 + $0xad0] sm:$0xff]
      %v2747 = vld [vmem:[#allocation13 + $0xad8] sm:$0xff]
      %v2748 = vld [vmem:[#allocation13 + $0xae0] sm:$0xff]
      %v2749 = vld [vmem:[#allocation13 + $0xae8] sm:$0xff]
      %v2750 = vld [vmem:[#allocation13 + $0xaf0] sm:$0xff]
      %v2751 = vld [vmem:[#allocation13 + $0xaf8] sm:$0xff]
      %v2752 = vld [vmem:[#allocation13 + $0xb00] sm:$0xff]
      %v2753 = vld [vmem:[#allocation13 + $0xb08] sm:$0xff]
      %v2754 = vld [vmem:[#allocation13 + $0xb10] sm:$0xff]
      %v2755 = vld [vmem:[#allocation13 + $0xb18] sm:$0xff]
      %v2756 = vld [vmem:[#allocation13 + $0xb20] sm:$0xff]
      %v2757 = vld [vmem:[#allocation13 + $0xb28] sm:$0xff]
      %v2758 = vld [vmem:[#allocation13 + $0xb30] sm:$0xff]
      %v2759 = vld [vmem:[#allocation13 + $0xb38] sm:$0xff]
      %v2760 = vld [vmem:[#allocation13 + $0xb40] sm:$0xff]
      %v2761 = vld [vmem:[#allocation13 + $0xb48] sm:$0xff]
      %v2762 = vld [vmem:[#allocation13 + $0xb50] sm:$0xff]
      %v2763 = vld [vmem:[#allocation13 + $0xb58] sm:$0xff]
      %v2764 = vld [vmem:[#allocation13 + $0xb60] sm:$0xff]
      %v2765 = vld [vmem:[#allocation13 + $0xb68] sm:$0xff]
      %v2766 = vld [vmem:[#allocation13 + $0xb70] sm:$0xff]
      %v2767 = vld [vmem:[#allocation13 + $0xb78] sm:$0xff]
      %v2768 = vld [vmem:[#allocation13 + $0xb80] sm:$0xff]
      %v2769 = vld [vmem:[#allocation13 + $0xb88] sm:$0xff]
      %v2770 = vld [vmem:[#allocation13 + $0xb90] sm:$0xff]
      %v2771 = vld [vmem:[#allocation13 + $0xb98] sm:$0xff]
      %v2772 = vld [vmem:[#allocation13 + $0xba0] sm:$0xff]
      %v2773 = vld [vmem:[#allocation13 + $0xba8] sm:$0xff]
      %v2774 = vld [vmem:[#allocation13 + $0xbb0] sm:$0xff]
      %v2775 = vld [vmem:[#allocation13 + $0xbb8] sm:$0xff]
      %v2776 = vld [vmem:[#allocation13 + $0xbc0] sm:$0xff]
      %v2777 = vld [vmem:[#allocation13 + $0xbc8] sm:$0xff]
      %v2778 = vld [vmem:[#allocation13 + $0xbd0] sm:$0xff]
      %v2779 = vld [vmem:[#allocation13 + $0xbd8] sm:$0xff]
      %v2780 = vld [vmem:[#allocation13 + $0xbe0] sm:$0xff]
      %v2781 = vld [vmem:[#allocation13 + $0xbe8] sm:$0xff]
      %v2782 = vld [vmem:[#allocation13 + $0xbf0] sm:$0xff]
      %v2783 = vld [vmem:[#allocation13 + $0xbf8] sm:$0xff]
      %v2784 = vld [vmem:[#allocation13 + $0xc00] sm:$0xff]
      %v2785 = vld [vmem:[#allocation13 + $0xc08] sm:$0xff]
      %v2786 = vld [vmem:[#allocation13 + $0xc10] sm:$0xff]
      %v2787 = vld [vmem:[#allocation13 + $0xc18] sm:$0xff]
      %v2788 = vld [vmem:[#allocation13 + $0xc20] sm:$0xff]
      %v2789 = vld [vmem:[#allocation13 + $0xc28] sm:$0xff]
      %v2790 = vld [vmem:[#allocation13 + $0xc30] sm:$0xff]
      %v2791 = vld [vmem:[#allocation13 + $0xc38] sm:$0xff]
      %v2792 = vld [vmem:[#allocation13 + $0xc40] sm:$0xff]
      %v2793 = vld [vmem:[#allocation13 + $0xc48] sm:$0xff]
      %v2794 = vld [vmem:[#allocation13 + $0xc50] sm:$0xff]
      %v2795 = vld [vmem:[#allocation13 + $0xc58] sm:$0xff]
      %v2796 = vld [vmem:[#allocation13 + $0xc60] sm:$0xff]
      %v2797 = vld [vmem:[#allocation13 + $0xc68] sm:$0xff]
      %v2798 = vld [vmem:[#allocation13 + $0xc70] sm:$0xff]
      %v2799 = vld [vmem:[#allocation13 + $0xc78] sm:$0xff]
      %v2800 = vld [vmem:[#allocation13 + $0xc80] sm:$0xff]
      %v2801 = vld [vmem:[#allocation13 + $0xc88] sm:$0xff]
      %v2802 = vld [vmem:[#allocation13 + $0xc90] sm:$0xff]
      %v2803 = vld [vmem:[#allocation13 + $0xc98] sm:$0xff]
      %v2804 = vld [vmem:[#allocation13 + $0xca0] sm:$0xff]
      %v2805 = vld [vmem:[#allocation13 + $0xca8] sm:$0xff]
      %v2806 = vld [vmem:[#allocation13 + $0xcb0] sm:$0xff]
      %v2807 = vld [vmem:[#allocation13 + $0xcb8] sm:$0xff]
      %v2808 = vld [vmem:[#allocation13 + $0xcc0] sm:$0xff]
      %v2809 = vld [vmem:[#allocation13 + $0xcc8] sm:$0xff]
      %v2810 = vld [vmem:[#allocation13 + $0xcd0] sm:$0xff]
      %v2811 = vld [vmem:[#allocation13 + $0xcd8] sm:$0xff]
      %v2812 = vld [vmem:[#allocation13 + $0xce0] sm:$0xff]
      %v2813 = vld [vmem:[#allocation13 + $0xce8] sm:$0xff]
      %v2814 = vld [vmem:[#allocation13 + $0xcf0] sm:$0xff]
      %v2815 = vld [vmem:[#allocation13 + $0xcf8] sm:$0xff]
      %v2816 = vld [vmem:[#allocation13 + $0xd00] sm:$0xff]
      %v2817 = vld [vmem:[#allocation13 + $0xd08] sm:$0xff]
      %v2818 = vld [vmem:[#allocation13 + $0xd10] sm:$0xff]
      %v2819 = vld [vmem:[#allocation13 + $0xd18] sm:$0xff]
      %v2820 = vld [vmem:[#allocation13 + $0xd20] sm:$0xff]
      %v2821 = vld [vmem:[#allocation13 + $0xd28] sm:$0xff]
      %v2822 = vld [vmem:[#allocation13 + $0xd30] sm:$0xff]
      %v2823 = vld [vmem:[#allocation13 + $0xd38] sm:$0xff]
      %v2824 = vld [vmem:[#allocation13 + $0xd40] sm:$0xff]
      %v2825 = vld [vmem:[#allocation13 + $0xd48] sm:$0xff]
      %v2826 = vld [vmem:[#allocation13 + $0xd50] sm:$0xff]
      %v2827 = vld [vmem:[#allocation13 + $0xd58] sm:$0xff]
      %v2828 = vld [vmem:[#allocation13 + $0xd60] sm:$0xff]
      %v2829 = vld [vmem:[#allocation13 + $0xd68] sm:$0xff]
      %v2830 = vld [vmem:[#allocation13 + $0xd70] sm:$0xff]
      %v2831 = vld [vmem:[#allocation13 + $0xd78] sm:$0xff]
      %v2832 = vld [vmem:[#allocation13 + $0xd80] sm:$0xff]
      %v2833 = vld [vmem:[#allocation13 + $0xd88] sm:$0xff]
      %v2834 = vld [vmem:[#allocation13 + $0xd90] sm:$0xff]
      %v2835 = vld [vmem:[#allocation13 + $0xd98] sm:$0xff]
      %v2836 = vld [vmem:[#allocation13 + $0xda0] sm:$0xff]
      %v2837 = vld [vmem:[#allocation13 + $0xda8] sm:$0xff]
      %v2838 = vld [vmem:[#allocation13 + $0xdb0] sm:$0xff]
      %v2839 = vld [vmem:[#allocation13 + $0xdb8] sm:$0xff]
      %v2840 = vld [vmem:[#allocation13 + $0xdc0] sm:$0xff]
      %v2841 = vld [vmem:[#allocation13 + $0xdc8] sm:$0xff]
      %v2842 = vld [vmem:[#allocation13 + $0xdd0] sm:$0xff]
      %v2843 = vld [vmem:[#allocation13 + $0xdd8] sm:$0xff]
      %v2844 = vld [vmem:[#allocation13 + $0xde0] sm:$0xff]
      %v2845 = vld [vmem:[#allocation13 + $0xde8] sm:$0xff]
      %v2846 = vld [vmem:[#allocation13 + $0xdf0] sm:$0xff]
      %v2847 = vld [vmem:[#allocation13 + $0xdf8] sm:$0xff]
      %v2848 = vld [vmem:[#allocation13 + $0xe00] sm:$0xff]
      %v2849 = vld [vmem:[#allocation13 + $0xe08] sm:$0xff]
      %v2850 = vld [vmem:[#allocation13 + $0xe10] sm:$0xff]
      %v2851 = vld [vmem:[#allocation13 + $0xe18] sm:$0xff]
      %v2852 = vld [vmem:[#allocation13 + $0xe20] sm:$0xff]
      %v2853 = vld [vmem:[#allocation13 + $0xe28] sm:$0xff]
      %v2854 = vld [vmem:[#allocation13 + $0xe30] sm:$0xff]
      %v2855 = vld [vmem:[#allocation13 + $0xe38] sm:$0xff]
      %v2856 = vld [vmem:[#allocation13 + $0xe40] sm:$0xff]
      %v2857 = vld [vmem:[#allocation13 + $0xe48] sm:$0xff]
      %v2858 = vld [vmem:[#allocation13 + $0xe50] sm:$0xff]
      %v2859 = vld [vmem:[#allocation13 + $0xe58] sm:$0xff]
      %v2860 = vld [vmem:[#allocation13 + $0xe60] sm:$0xff]
      %v2861 = vld [vmem:[#allocation13 + $0xe68] sm:$0xff]
      %v2862 = vld [vmem:[#allocation13 + $0xe70] sm:$0xff]
      %v2863 = vld [vmem:[#allocation13 + $0xe78] sm:$0xff]
      %v2864 = vld [vmem:[#allocation13 + $0xe80] sm:$0xff]
      %v2865 = vld [vmem:[#allocation13 + $0xe88] sm:$0xff]
      %v2866 = vld [vmem:[#allocation13 + $0xe90] sm:$0xff]
      %v2867 = vld [vmem:[#allocation13 + $0xe98] sm:$0xff]
      %v2868 = vld [vmem:[#allocation13 + $0xea0] sm:$0xff]
      %v2869 = vld [vmem:[#allocation13 + $0xea8] sm:$0xff]
      %v2870 = vld [vmem:[#allocation13 + $0xeb0] sm:$0xff]
      %v2871 = vld [vmem:[#allocation13 + $0xeb8] sm:$0xff]
      %v2872 = vld [vmem:[#allocation13 + $0xec0] sm:$0xff]
      %v2873 = vld [vmem:[#allocation13 + $0xec8] sm:$0xff]
      %v2874 = vld [vmem:[#allocation13 + $0xed0] sm:$0xff]
      %v2875 = vld [vmem:[#allocation13 + $0xed8] sm:$0xff]
      %v2876 = vld [vmem:[#allocation13 + $0xee0] sm:$0xff]
      %v2877 = vld [vmem:[#allocation13 + $0xee8] sm:$0xff]
      %v2878 = vld [vmem:[#allocation13 + $0xef0] sm:$0xff]
      %v2879 = vld [vmem:[#allocation13 + $0xef8] sm:$0xff]
      %v2880 = vld [vmem:[#allocation13 + $0xf00] sm:$0xff]
      %v2881 = vld [vmem:[#allocation13 + $0xf08] sm:$0xff]
      %v2882 = vld [vmem:[#allocation13 + $0xf10] sm:$0xff]
      %v2883 = vld [vmem:[#allocation13 + $0xf18] sm:$0xff]
      %v2884 = vld [vmem:[#allocation13 + $0xf20] sm:$0xff]
      %v2885 = vld [vmem:[#allocation13 + $0xf28] sm:$0xff]
      %v2886 = vld [vmem:[#allocation13 + $0xf30] sm:$0xff]
      %v2887 = vld [vmem:[#allocation13 + $0xf38] sm:$0xff]
      %v2888 = vld [vmem:[#allocation13 + $0xf40] sm:$0xff]
      %v2889 = vld [vmem:[#allocation13 + $0xf48] sm:$0xff]
      %v2890 = vld [vmem:[#allocation13 + $0xf50] sm:$0xff]
      %v2891 = vld [vmem:[#allocation13 + $0xf58] sm:$0xff]
      %v2892 = vld [vmem:[#allocation13 + $0xf60] sm:$0xff]
      %v2893 = vld [vmem:[#allocation13 + $0xf68] sm:$0xff]
      %v2894 = vld [vmem:[#allocation13 + $0xf70] sm:$0xff]
      %v2895 = vld [vmem:[#allocation13 + $0xf78] sm:$0xff]
      %v2896 = vld [vmem:[#allocation13 + $0xf80] sm:$0xff]
      %v2897 = vld [vmem:[#allocation13 + $0xf88] sm:$0xff]
      %v2898 = vld [vmem:[#allocation13 + $0xf90] sm:$0xff]
      %v2899 = vld [vmem:[#allocation13 + $0xf98] sm:$0xff]
      %v2900 = vld [vmem:[#allocation13 + $0xfa0] sm:$0xff]
      %v2901 = vld [vmem:[#allocation13 + $0xfa8] sm:$0xff]
      %v2902 = vld [vmem:[#allocation13 + $0xfb0] sm:$0xff]
      %v2903 = vld [vmem:[#allocation13 + $0xfb8] sm:$0xff]
      %v2904 = vld [vmem:[#allocation13 + $0xfc0] sm:$0xff]
      %v2905 = vld [vmem:[#allocation13 + $0xfc8] sm:$0xff]
      %v2906 = vld [vmem:[#allocation13 + $0xfd0] sm:$0xff]
      %v2907 = vld [vmem:[#allocation13 + $0xfd8] sm:$0xff]
      %v2908 = vld [vmem:[#allocation13 + $0xfe0] sm:$0xff]
      %v2909 = vld [vmem:[#allocation13 + $0xfe8] sm:$0xff]
      %v2910 = vld [vmem:[#allocation13 + $0xff0] sm:$0xff]
      %v2911 = vld [vmem:[#allocation13 + $0xff8] sm:$0xff]
      %v2912 = vld [vmem:[#allocation14] sm:$0xf]
      %v2914 = vlaneseq
      %v2915 = vshrl.u32 %v2914, 7
      %v2916 = vsub.s32 0, %v2915
      %v2917 = vrot.slane %v2912, %v2916
      %v2918 = vlaneseq
      %v2919 = vshrl.u32 %v2918, 7
      %v2920 = vsub.s32 1, %v2919
      %v2921 = vrot.slane %v2912, %v2920
      %v2922 = vlaneseq
      %v2923 = vshrl.u32 %v2922, 7
      %v2924 = vsub.s32 2, %v2923
      %v2925 = vrot.slane %v2912, %v2924
      %v2926 = vlaneseq
      %v2927 = vshrl.u32 %v2926, 7
      %v2928 = vsub.s32 3, %v2927
      %v2929 = vrot.slane %v2912, %v2928
      %2934 = vmatprep.subr.mxu0 %v2401
      %2935 = vmatpush1.msra.mxu0 %v2400
      %2936 = vmatprep.subr.mxu0 %v2405
      %2937 = vmatpush1.msra.mxu0 %v2404
      %2938 = vmatprep.subr.mxu0 %v2409
      %2939 = vmatpush1.msra.mxu0 %v2408
      %2940 = vmatprep.subr.mxu0 %v2413
      %2941 = vmatpush1.msra.mxu0 %v2412
      %2942 = vmatprep.subr.mxu0 %v2417
      %2943 = vmatpush1.msra.mxu0 %v2416
      %2944 = vmatprep.subr.mxu0 %v2421
      %2945 = vmatpush1.msra.mxu0 %v2420
      %2946 = vmatprep.subr.mxu0 %v2425
      %2947 = vmatpush1.msra.mxu0 %v2424
      %2948 = vmatprep.subr.mxu0 %v2429
      %2949 = vmatpush1.msra.mxu0 %v2428
      %2950 = vmatprep.subr.mxu0 %v2433
      %2951 = vmatpush1.msra.mxu0 %v2432
      %2952 = vmatprep.subr.mxu0 %v2437
      %2953 = vmatpush1.msra.mxu0 %v2436
      %2954 = vmatprep.subr.mxu0 %v2441
      %2955 = vmatpush1.msra.mxu0 %v2440
      %2956 = vmatprep.subr.mxu0 %v2445
      %2957 = vmatpush1.msra.mxu0 %v2444
      %2958 = vmatprep.subr.mxu0 %v2449
      %2959 = vmatpush1.msra.mxu0 %v2448
      %2960 = vmatprep.subr.mxu0 %v2453
      %2961 = vmatpush1.msra.mxu0 %v2452
      %2962 = vmatprep.subr.mxu0 %v2457
      %2963 = vmatpush1.msra.mxu0 %v2456
      %2964 = vmatprep.subr.mxu0 %v2461
      %2965 = vmatpush1.msra.mxu0 %v2460
      %2966 = vmatprep.subr.mxu0 %v2465
      %2967 = vmatpush1.msra.mxu0 %v2464
      %2968 = vmatprep.subr.mxu0 %v2469
      %2969 = vmatpush1.msra.mxu0 %v2468
      %2970 = vmatprep.subr.mxu0 %v2473
      %2971 = vmatpush1.msra.mxu0 %v2472
      %2972 = vmatprep.subr.mxu0 %v2477
      %2973 = vmatpush1.msra.mxu0 %v2476
      %2974 = vmatprep.subr.mxu0 %v2481
      %2975 = vmatpush1.msra.mxu0 %v2480
      %2976 = vmatprep.subr.mxu0 %v2485
      %2977 = vmatpush1.msra.mxu0 %v2484
      %2978 = vmatprep.subr.mxu0 %v2489
      %2979 = vmatpush1.msra.mxu0 %v2488
      %2980 = vmatprep.subr.mxu0 %v2493
      %2981 = vmatpush1.msra.mxu0 %v2492
      %2982 = vmatprep.subr.mxu0 %v2497
      %2983 = vmatpush1.msra.mxu0 %v2496
      %2984 = vmatprep.subr.mxu0 %v2501
      %2985 = vmatpush1.msra.mxu0 %v2500
      %2986 = vmatprep.subr.mxu0 %v2505
      %2987 = vmatpush1.msra.mxu0 %v2504
      %2988 = vmatprep.subr.mxu0 %v2509
      %2989 = vmatpush1.msra.mxu0 %v2508
      %2990 = vmatprep.subr.mxu0 %v2513
      %2991 = vmatpush1.msra.mxu0 %v2512
      %2992 = vmatprep.subr.mxu0 %v2517
      %2993 = vmatpush1.msra.mxu0 %v2516
      %2994 = vmatprep.subr.mxu0 %v2521
      %2995 = vmatpush1.msra.mxu0 %v2520
      %2996 = vmatprep.subr.mxu0 %v2525
      %2997 = vmatpush1.msra.mxu0 %v2524
      %2998 = vmatprep.mubr.f32.mxu0 %v2393
      %2999 = vmatmul.mubr.f32.gmra.mrb[0].mxu0 %v2392
      %v3000 = vpop.f32.mrb[0].mxu0
      %v3001 = vadd.f32 %v2917, %v3000
      %v3002 = vpop.f32.mrb[0].mxu0
      %v3003 = vadd.f32 %v2921, %v3002
      %3004 = vdwg.mxu0
      %3005 = vmatprep.subr.mxu0 %v2529
      %3006 = vmatpush1.msra.mxu0 %v2528
      %3007 = vmatprep.subr.mxu0 %v2533
      %3008 = vmatpush1.msra.mxu0 %v2532
      %3009 = vmatprep.subr.mxu0 %v2537
      %3010 = vmatpush1.msra.mxu0 %v2536
      %3011 = vmatprep.subr.mxu0 %v2541
      %3012 = vmatpush1.msra.mxu0 %v2540
      %3013 = vmatprep.subr.mxu0 %v2545
      %3014 = vmatpush1.msra.mxu0 %v2544
      %3015 = vmatprep.subr.mxu0 %v2549
      %3016 = vmatpush1.msra.mxu0 %v2548
      %3017 = vmatprep.subr.mxu0 %v2553
      %3018 = vmatpush1.msra.mxu0 %v2552
      %3019 = vmatprep.subr.mxu0 %v2557
      %3020 = vmatpush1.msra.mxu0 %v2556
      %3021 = vmatprep.subr.mxu0 %v2561
      %3022 = vmatpush1.msra.mxu0 %v2560
      %3023 = vmatprep.subr.mxu0 %v2565
      %3024 = vmatpush1.msra.mxu0 %v2564
      %3025 = vmatprep.subr.mxu0 %v2569
      %3026 = vmatpush1.msra.mxu0 %v2568
      %3027 = vmatprep.subr.mxu0 %v2573
      %3028 = vmatpush1.msra.mxu0 %v2572
      %3029 = vmatprep.subr.mxu0 %v2577
      %3030 = vmatpush1.msra.mxu0 %v2576
      %3031 = vmatprep.subr.mxu0 %v2581
      %3032 = vmatpush1.msra.mxu0 %v2580
      %3033 = vmatprep.subr.mxu0 %v2585
      %3034 = vmatpush1.msra.mxu0 %v2584
      %3035 = vmatprep.subr.mxu0 %v2589
      %3036 = vmatpush1.msra.mxu0 %v2588
      %3037 = vmatprep.subr.mxu0 %v2593
      %3038 = vmatpush1.msra.mxu0 %v2592
      %3039 = vmatprep.subr.mxu0 %v2597
      %3040 = vmatpush1.msra.mxu0 %v2596
      %3041 = vmatprep.subr.mxu0 %v2601
      %3042 = vmatpush1.msra.mxu0 %v2600
      %3043 = vmatprep.subr.mxu0 %v2605
      %3044 = vmatpush1.msra.mxu0 %v2604
      %3045 = vmatprep.subr.mxu0 %v2609
      %3046 = vmatpush1.msra.mxu0 %v2608
      %3047 = vmatprep.subr.mxu0 %v2613
      %3048 = vmatpush1.msra.mxu0 %v2612
      %3049 = vmatprep.subr.mxu0 %v2617
      %3050 = vmatpush1.msra.mxu0 %v2616
      %3051 = vmatprep.subr.mxu0 %v2621
      %3052 = vmatpush1.msra.mxu0 %v2620
      %3053 = vmatprep.subr.mxu0 %v2625
      %3054 = vmatpush1.msra.mxu0 %v2624
      %3055 = vmatprep.subr.mxu0 %v2629
      %3056 = vmatpush1.msra.mxu0 %v2628
      %3057 = vmatprep.subr.mxu0 %v2633
      %3058 = vmatpush1.msra.mxu0 %v2632
      %3059 = vmatprep.subr.mxu0 %v2637
      %3060 = vmatpush1.msra.mxu0 %v2636
      %3061 = vmatprep.subr.mxu0 %v2641
      %3062 = vmatpush1.msra.mxu0 %v2640
      %3063 = vmatprep.subr.mxu0 %v2645
      %3064 = vmatpush1.msra.mxu0 %v2644
      %3065 = vmatprep.subr.mxu0 %v2649
      %3066 = vmatpush1.msra.mxu0 %v2648
      %3067 = vmatprep.subr.mxu0 %v2653
      %3068 = vmatpush1.msra.mxu0 %v2652
      %3069 = vmatprep.mubr.f32.mxu0 %v2395
      %3070 = vmatmul.mubr.f32.gmra.mrb[0].mxu0 %v2394
      %v3071 = vpop.f32.mrb[0].mxu0
      %v3072 = vadd.f32 %v3001, %v3071
      %v3073 = vpop.f32.mrb[0].mxu0
      %v3074 = vadd.f32 %v3003, %v3073
      %3075 = vdwg.mxu0
      %3076 = vmatprep.subr.mxu0 %v2657
      %3077 = vmatpush1.msra.mxu0 %v2656
      %3078 = vmatprep.subr.mxu0 %v2661
      %3079 = vmatpush1.msra.mxu0 %v2660
      %3080 = vmatprep.subr.mxu0 %v2665
      %3081 = vmatpush1.msra.mxu0 %v2664
      %3082 = vmatprep.subr.mxu0 %v2669
      %3083 = vmatpush1.msra.mxu0 %v2668
      %3084 = vmatprep.subr.mxu0 %v2673
      %3085 = vmatpush1.msra.mxu0 %v2672
      %3086 = vmatprep.subr.mxu0 %v2677
      %3087 = vmatpush1.msra.mxu0 %v2676
      %3088 = vmatprep.subr.mxu0 %v2681
      %3089 = vmatpush1.msra.mxu0 %v2680
      %3090 = vmatprep.subr.mxu0 %v2685
      %3091 = vmatpush1.msra.mxu0 %v2684
      %3092 = vmatprep.subr.mxu0 %v2689
      %3093 = vmatpush1.msra.mxu0 %v2688
      %3094 = vmatprep.subr.mxu0 %v2693
      %3095 = vmatpush1.msra.mxu0 %v2692
      %3096 = vmatprep.subr.mxu0 %v2697
      %3097 = vmatpush1.msra.mxu0 %v2696
      %3098 = vmatprep.subr.mxu0 %v2701
      %3099 = vmatpush1.msra.mxu0 %v2700
      %3100 = vmatprep.subr.mxu0 %v2705
      %3101 = vmatpush1.msra.mxu0 %v2704
      %3102 = vmatprep.subr.mxu0 %v2709
      %3103 = vmatpush1.msra.mxu0 %v2708
      %3104 = vmatprep.subr.mxu0 %v2713
      %3105 = vmatpush1.msra.mxu0 %v2712
      %3106 = vmatprep.subr.mxu0 %v2717
      %3107 = vmatpush1.msra.mxu0 %v2716
      %3108 = vmatprep.subr.mxu0 %v2721
      %3109 = vmatpush1.msra.mxu0 %v2720
      %3110 = vmatprep.subr.mxu0 %v2725
      %3111 = vmatpush1.msra.mxu0 %v2724
      %3112 = vmatprep.subr.mxu0 %v2729
      %3113 = vmatpush1.msra.mxu0 %v2728
      %3114 = vmatprep.subr.mxu0 %v2733
      %3115 = vmatpush1.msra.mxu0 %v2732
      %3116 = vmatprep.subr.mxu0 %v2737
      %3117 = vmatpush1.msra.mxu0 %v2736
      %3118 = vmatprep.subr.mxu0 %v2741
      %3119 = vmatpush1.msra.mxu0 %v2740
      %3120 = vmatprep.subr.mxu0 %v2745
      %3121 = vmatpush1.msra.mxu0 %v2744
      %3122 = vmatprep.subr.mxu0 %v2749
      %3123 = vmatpush1.msra.mxu0 %v2748
      %3124 = vmatprep.subr.mxu0 %v2753
      %3125 = vmatpush1.msra.mxu0 %v2752
      %3126 = vmatprep.subr.mxu0 %v2757
      %3127 = vmatpush1.msra.mxu0 %v2756
      %3128 = vmatprep.subr.mxu0 %v2761
      %3129 = vmatpush1.msra.mxu0 %v2760
      %3130 = vmatprep.subr.mxu0 %v2765
      %3131 = vmatpush1.msra.mxu0 %v2764
      %3132 = vmatprep.subr.mxu0 %v2769
      %3133 = vmatpush1.msra.mxu0 %v2768
      %3134 = vmatprep.subr.mxu0 %v2773
      %3135 = vmatpush1.msra.mxu0 %v2772
      %3136 = vmatprep.subr.mxu0 %v2777
      %3137 = vmatpush1.msra.mxu0 %v2776
      %3138 = vmatprep.subr.mxu0 %v2781
      %3139 = vmatpush1.msra.mxu0 %v2780
      %3140 = vmatprep.mubr.f32.mxu0 %v2397
      %3141 = vmatmul.mubr.f32.gmra.mrb[0].mxu0 %v2396
      %v3142 = vpop.f32.mrb[0].mxu0
      %v3143 = vadd.f32 %v3072, %v3142
      %v3144 = vpop.f32.mrb[0].mxu0
      %v3145 = vadd.f32 %v3074, %v3144
      %3146 = vdwg.mxu0
      %3147 = vmatprep.subr.mxu0 %v2785
      %3148 = vmatpush1.msra.mxu0 %v2784
      %3149 = vmatprep.subr.mxu0 %v2789
      %3150 = vmatpush1.msra.mxu0 %v2788
      %3151 = vmatprep.subr.mxu0 %v2793
      %3152 = vmatpush1.msra.mxu0 %v2792
      %3153 = vmatprep.subr.mxu0 %v2797
      %3154 = vmatpush1.msra.mxu0 %v2796
      %3155 = vmatprep.subr.mxu0 %v2801
      %3156 = vmatpush1.msra.mxu0 %v2800
      %3157 = vmatprep.subr.mxu0 %v2805
      %3158 = vmatpush1.msra.mxu0 %v2804
      %3159 = vmatprep.subr.mxu0 %v2809
      %3160 = vmatpush1.msra.mxu0 %v2808
      %3161 = vmatprep.subr.mxu0 %v2813
      %3162 = vmatpush1.msra.mxu0 %v2812
      %3163 = vmatprep.subr.mxu0 %v2817
      %3164 = vmatpush1.msra.mxu0 %v2816
      %3165 = vmatprep.subr.mxu0 %v2821
      %3166 = vmatpush1.msra.mxu0 %v2820
      %3167 = vmatprep.subr.mxu0 %v2825
      %3168 = vmatpush1.msra.mxu0 %v2824
      %3169 = vmatprep.subr.mxu0 %v2829
      %3170 = vmatpush1.msra.mxu0 %v2828
      %3171 = vmatprep.subr.mxu0 %v2833
      %3172 = vmatpush1.msra.mxu0 %v2832
      %3173 = vmatprep.subr.mxu0 %v2837
      %3174 = vmatpush1.msra.mxu0 %v2836
      %3175 = vmatprep.subr.mxu0 %v2841
      %3176 = vmatpush1.msra.mxu0 %v2840
      %3177 = vmatprep.subr.mxu0 %v2845
      %3178 = vmatpush1.msra.mxu0 %v2844
      %3179 = vmatprep.subr.mxu0 %v2849
      %3180 = vmatpush1.msra.mxu0 %v2848
      %3181 = vmatprep.subr.mxu0 %v2853
      %3182 = vmatpush1.msra.mxu0 %v2852
      %3183 = vmatprep.subr.mxu0 %v2857
      %3184 = vmatpush1.msra.mxu0 %v2856
      %3185 = vmatprep.subr.mxu0 %v2861
      %3186 = vmatpush1.msra.mxu0 %v2860
      %3187 = vmatprep.subr.mxu0 %v2865
      %3188 = vmatpush1.msra.mxu0 %v2864
      %3189 = vmatprep.subr.mxu0 %v2869
      %3190 = vmatpush1.msra.mxu0 %v2868
      %3191 = vmatprep.subr.mxu0 %v2873
      %3192 = vmatpush1.msra.mxu0 %v2872
      %3193 = vmatprep.subr.mxu0 %v2877
      %3194 = vmatpush1.msra.mxu0 %v2876
      %3195 = vmatprep.subr.mxu0 %v2881
      %3196 = vmatpush1.msra.mxu0 %v2880
      %3197 = vmatprep.subr.mxu0 %v2885
      %3198 = vmatpush1.msra.mxu0 %v2884
      %3199 = vmatprep.subr.mxu0 %v2889
      %3200 = vmatpush1.msra.mxu0 %v2888
      %3201 = vmatprep.subr.mxu0 %v2893
      %3202 = vmatpush1.msra.mxu0 %v2892
      %3203 = vmatprep.subr.mxu0 %v2897
      %3204 = vmatpush1.msra.mxu0 %v2896
      %3205 = vmatprep.subr.mxu0 %v2901
      %3206 = vmatpush1.msra.mxu0 %v2900
      %3207 = vmatprep.subr.mxu0 %v2905
      %3208 = vmatpush1.msra.mxu0 %v2904
      %3209 = vmatprep.subr.mxu0 %v2909
      %3210 = vmatpush1.msra.mxu0 %v2908
      %3211 = vmatprep.mubr.f32.mxu0 %v2399
      %3212 = vmatmul.mubr.f32.gmra.mrb[0].mxu0 %v2398
      %v3213 = vpop.f32.mrb[0].mxu0
      %v3214 = vadd.f32 %v3143, %v3213
      %v3215 = vpop.f32.mrb[0].mxu0
      %v3216 = vadd.f32 %v3145, %v3215
      %3217 = vdwg.mxu0
      %3218 = vmatprep.subr.mxu0 %v2403
      %3219 = vmatpush1.msra.mxu0 %v2402
      %3220 = vmatprep.subr.mxu0 %v2407
      %3221 = vmatpush1.msra.mxu0 %v2406
      %3222 = vmatprep.subr.mxu0 %v2411
      %3223 = vmatpush1.msra.mxu0 %v2410
      %3224 = vmatprep.subr.mxu0 %v2415
      %3225 = vmatpush1.msra.mxu0 %v2414
      %3226 = vmatprep.subr.mxu0 %v2419
      %3227 = vmatpush1.msra.mxu0 %v2418
      %3228 = vmatprep.subr.mxu0 %v2423
      %3229 = vmatpush1.msra.mxu0 %v2422
      %3230 = vmatprep.subr.mxu0 %v2427
      %3231 = vmatpush1.msra.mxu0 %v2426
      %3232 = vmatprep.subr.mxu0 %v2431
      %3233 = vmatpush1.msra.mxu0 %v2430
      %3234 = vmatprep.subr.mxu0 %v2435
      %3235 = vmatpush1.msra.mxu0 %v2434
      %3236 = vmatprep.subr.mxu0 %v2439
      %3237 = vmatpush1.msra.mxu0 %v2438
      %3238 = vmatprep.subr.mxu0 %v2443
      %3239 = vmatpush1.msra.mxu0 %v2442
      %3240 = vmatprep.subr.mxu0 %v2447
      %3241 = vmatpush1.msra.mxu0 %v2446
      %3242 = vmatprep.subr.mxu0 %v2451
      %3243 = vmatpush1.msra.mxu0 %v2450
      %3244 = vmatprep.subr.mxu0 %v2455
      %3245 = vmatpush1.msra.mxu0 %v2454
      %3246 = vmatprep.subr.mxu0 %v2459
      %3247 = vmatpush1.msra.mxu0 %v2458
      %3248 = vmatprep.subr.mxu0 %v2463
      %3249 = vmatpush1.msra.mxu0 %v2462
      %3250 = vmatprep.subr.mxu0 %v2467
      %3251 = vmatpush1.msra.mxu0 %v2466
      %3252 = vmatprep.subr.mxu0 %v2471
      %3253 = vmatpush1.msra.mxu0 %v2470
      %3254 = vmatprep.subr.mxu0 %v2475
      %3255 = vmatpush1.msra.mxu0 %v2474
      %3256 = vmatprep.subr.mxu0 %v2479
      %3257 = vmatpush1.msra.mxu0 %v2478
      %3258 = vmatprep.subr.mxu0 %v2483
      %3259 = vmatpush1.msra.mxu0 %v2482
      %3260 = vmatprep.subr.mxu0 %v2487
      %3261 = vmatpush1.msra.mxu0 %v2486
      %3262 = vmatprep.subr.mxu0 %v2491
      %3263 = vmatpush1.msra.mxu0 %v2490
      %3264 = vmatprep.subr.mxu0 %v2495
      %3265 = vmatpush1.msra.mxu0 %v2494
      %3266 = vmatprep.subr.mxu0 %v2499
      %3267 = vmatpush1.msra.mxu0 %v2498
      %3268 = vmatprep.subr.mxu0 %v2503
      %3269 = vmatpush1.msra.mxu0 %v2502
      %3270 = vmatprep.subr.mxu0 %v2507
      %3271 = vmatpush1.msra.mxu0 %v2506
      %3272 = vmatprep.subr.mxu0 %v2511
      %3273 = vmatpush1.msra.mxu0 %v2510
      %3274 = vmatprep.subr.mxu0 %v2515
      %3275 = vmatpush1.msra.mxu0 %v2514
      %3276 = vmatprep.subr.mxu0 %v2519
      %3277 = vmatpush1.msra.mxu0 %v2518
      %3278 = vmatprep.subr.mxu0 %v2523
      %3279 = vmatpush1.msra.mxu0 %v2522
      %3280 = vmatprep.subr.mxu0 %v2527
      %3281 = vmatpush1.msra.mxu0 %v2526
      %3282 = vmatprep.mubr.f32.mxu0 %v2393
      %3283 = vmatmul.mubr.f32.gmra.mrb[0].mxu0 %v2392
      %v3284 = vpop.f32.mrb[0].mxu0
      %v3285 = vadd.f32 %v2925, %v3284
      %v3286 = vpop.f32.mrb[0].mxu0
      %v3287 = vadd.f32 %v2929, %v3286
      %3288 = vdwg.mxu0
      %3289 = vmatprep.subr.mxu0 %v2531
      %3290 = vmatpush1.msra.mxu0 %v2530
      %3291 = vmatprep.subr.mxu0 %v2535
      %3292 = vmatpush1.msra.mxu0 %v2534
      %3293 = vmatprep.subr.mxu0 %v2539
      %3294 = vmatpush1.msra.mxu0 %v2538
      %3295 = vmatprep.subr.mxu0 %v2543
      %3296 = vmatpush1.msra.mxu0 %v2542
      %3297 = vmatprep.subr.mxu0 %v2547
      %3298 = vmatpush1.msra.mxu0 %v2546
      %3299 = vmatprep.subr.mxu0 %v2551
      %3300 = vmatpush1.msra.mxu0 %v2550
      %3301 = vmatprep.subr.mxu0 %v2555
      %3302 = vmatpush1.msra.mxu0 %v2554
      %3303 = vmatprep.subr.mxu0 %v2559
      %3304 = vmatpush1.msra.mxu0 %v2558
      %3305 = vmatprep.subr.mxu0 %v2563
      %3306 = vmatpush1.msra.mxu0 %v2562
      %3307 = vmatprep.subr.mxu0 %v2567
      %3308 = vmatpush1.msra.mxu0 %v2566
      %3309 = vmatprep.subr.mxu0 %v2571
      %3310 = vmatpush1.msra.mxu0 %v2570
      %3311 = vmatprep.subr.mxu0 %v2575
      %3312 = vmatpush1.msra.mxu0 %v2574
      %3313 = vmatprep.subr.mxu0 %v2579
      %3314 = vmatpush1.msra.mxu0 %v2578
      %3315 = vmatprep.subr.mxu0 %v2583
      %3316 = vmatpush1.msra.mxu0 %v2582
      %3317 = vmatprep.subr.mxu0 %v2587
      %3318 = vmatpush1.msra.mxu0 %v2586
      %3319 = vmatprep.subr.mxu0 %v2591
      %3320 = vmatpush1.msra.mxu0 %v2590
      %3321 = vmatprep.subr.mxu0 %v2595
      %3322 = vmatpush1.msra.mxu0 %v2594
      %3323 = vmatprep.subr.mxu0 %v2599
      %3324 = vmatpush1.msra.mxu0 %v2598
      %3325 = vmatprep.subr.mxu0 %v2603
      %3326 = vmatpush1.msra.mxu0 %v2602
      %3327 = vmatprep.subr.mxu0 %v2607
      %3328 = vmatpush1.msra.mxu0 %v2606
      %3329 = vmatprep.subr.mxu0 %v2611
      %3330 = vmatpush1.msra.mxu0 %v2610
      %3331 = vmatprep.subr.mxu0 %v2615
      %3332 = vmatpush1.msra.mxu0 %v2614
      %3333 = vmatprep.subr.mxu0 %v2619
      %3334 = vmatpush1.msra.mxu0 %v2618
      %3335 = vmatprep.subr.mxu0 %v2623
      %3336 = vmatpush1.msra.mxu0 %v2622
      %3337 = vmatprep.subr.mxu0 %v2627
      %3338 = vmatpush1.msra.mxu0 %v2626
      %3339 = vmatprep.subr.mxu0 %v2631
      %3340 = vmatpush1.msra.mxu0 %v2630
      %3341 = vmatprep.subr.mxu0 %v2635
      %3342 = vmatpush1.msra.mxu0 %v2634
      %3343 = vmatprep.subr.mxu0 %v2639
      %3344 = vmatpush1.msra.mxu0 %v2638
      %3345 = vmatprep.subr.mxu0 %v2643
      %3346 = vmatpush1.msra.mxu0 %v2642
      %3347 = vmatprep.subr.mxu0 %v2647
      %3348 = vmatpush1.msra.mxu0 %v2646
      %3349 = vmatprep.subr.mxu0 %v2651
      %3350 = vmatpush1.msra.mxu0 %v2650
      %3351 = vmatprep.subr.mxu0 %v2655
      %3352 = vmatpush1.msra.mxu0 %v2654
      %3353 = vmatprep.mubr.f32.mxu0 %v2395
      %3354 = vmatmul.mubr.f32.gmra.mrb[0].mxu0 %v2394
      %v3355 = vpop.f32.mrb[0].mxu0
      %v3356 = vadd.f32 %v3285, %v3355
      %v3357 = vpop.f32.mrb[0].mxu0
      %v3358 = vadd.f32 %v3287, %v3357
      %3359 = vdwg.mxu0
      %3360 = vmatprep.subr.mxu0 %v2659
      %3361 = vmatpush1.msra.mxu0 %v2658
      %3362 = vmatprep.subr.mxu0 %v2663
      %3363 = vmatpush1.msra.mxu0 %v2662
      %3364 = vmatprep.subr.mxu0 %v2667
      %3365 = vmatpush1.msra.mxu0 %v2666
      %3366 = vmatprep.subr.mxu0 %v2671
      %3367 = vmatpush1.msra.mxu0 %v2670
      %3368 = vmatprep.subr.mxu0 %v2675
      %3369 = vmatpush1.msra.mxu0 %v2674
      %3370 = vmatprep.subr.mxu0 %v2679
      %3371 = vmatpush1.msra.mxu0 %v2678
      %3372 = vmatprep.subr.mxu0 %v2683
      %3373 = vmatpush1.msra.mxu0 %v2682
      %3374 = vmatprep.subr.mxu0 %v2687
      %3375 = vmatpush1.msra.mxu0 %v2686
      %3376 = vmatprep.subr.mxu0 %v2691
      %3377 = vmatpush1.msra.mxu0 %v2690
      %3378 = vmatprep.subr.mxu0 %v2695
      %3379 = vmatpush1.msra.mxu0 %v2694
      %3380 = vmatprep.subr.mxu0 %v2699
      %3381 = vmatpush1.msra.mxu0 %v2698
      %3382 = vmatprep.subr.mxu0 %v2703
      %3383 = vmatpush1.msra.mxu0 %v2702
      %3384 = vmatprep.subr.mxu0 %v2707
      %3385 = vmatpush1.msra.mxu0 %v2706
      %3386 = vmatprep.subr.mxu0 %v2711
      %3387 = vmatpush1.msra.mxu0 %v2710
      %3388 = vmatprep.subr.mxu0 %v2715
      %3389 = vmatpush1.msra.mxu0 %v2714
      %3390 = vmatprep.subr.mxu0 %v2719
      %3391 = vmatpush1.msra.mxu0 %v2718
      %3392 = vmatprep.subr.mxu0 %v2723
      %3393 = vmatpush1.msra.mxu0 %v2722
      %3394 = vmatprep.subr.mxu0 %v2727
      %3395 = vmatpush1.msra.mxu0 %v2726
      %3396 = vmatprep.subr.mxu0 %v2731
      %3397 = vmatpush1.msra.mxu0 %v2730
      %3398 = vmatprep.subr.mxu0 %v2735
      %3399 = vmatpush1.msra.mxu0 %v2734
      %3400 = vmatprep.subr.mxu0 %v2739
      %3401 = vmatpush1.msra.mxu0 %v2738
      %3402 = vmatprep.subr.mxu0 %v2743
      %3403 = vmatpush1.msra.mxu0 %v2742
      %3404 = vmatprep.subr.mxu0 %v2747
      %3405 = vmatpush1.msra.mxu0 %v2746
      %3406 = vmatprep.subr.mxu0 %v2751
      %3407 = vmatpush1.msra.mxu0 %v2750
      %3408 = vmatprep.subr.mxu0 %v2755
      %3409 = vmatpush1.msra.mxu0 %v2754
      %3410 = vmatprep.subr.mxu0 %v2759
      %3411 = vmatpush1.msra.mxu0 %v2758
      %3412 = vmatprep.subr.mxu0 %v2763
      %3413 = vmatpush1.msra.mxu0 %v2762
      %3414 = vmatprep.subr.mxu0 %v2767
      %3415 = vmatpush1.msra.mxu0 %v2766
      %3416 = vmatprep.subr.mxu0 %v2771
      %3417 = vmatpush1.msra.mxu0 %v2770
      %3418 = vmatprep.subr.mxu0 %v2775
      %3419 = vmatpush1.msra.mxu0 %v2774
      %3420 = vmatprep.subr.mxu0 %v2779
      %3421 = vmatpush1.msra.mxu0 %v2778
      %3422 = vmatprep.subr.mxu0 %v2783
      %3423 = vmatpush1.msra.mxu0 %v2782
      %3424 = vmatprep.mubr.f32.mxu0 %v2397
      %3425 = vmatmul.mubr.f32.gmra.mrb[0].mxu0 %v2396
      %v3426 = vpop.f32.mrb[0].mxu0
      %v3427 = vadd.f32 %v3356, %v3426
      %v3428 = vpop.f32.mrb[0].mxu0
      %v3429 = vadd.f32 %v3358, %v3428
      %3430 = vdwg.mxu0
      %3431 = vmatprep.subr.mxu0 %v2787
      %3432 = vmatpush1.msra.mxu0 %v2786
      %3433 = vmatprep.subr.mxu0 %v2791
      %3434 = vmatpush1.msra.mxu0 %v2790
      %3435 = vmatprep.subr.mxu0 %v2795
      %3436 = vmatpush1.msra.mxu0 %v2794
      %3437 = vmatprep.subr.mxu0 %v2799
      %3438 = vmatpush1.msra.mxu0 %v2798
      %3439 = vmatprep.subr.mxu0 %v2803
      %3440 = vmatpush1.msra.mxu0 %v2802
      %3441 = vmatprep.subr.mxu0 %v2807
      %3442 = vmatpush1.msra.mxu0 %v2806
      %3443 = vmatprep.subr.mxu0 %v2811
      %3444 = vmatpush1.msra.mxu0 %v2810
      %3445 = vmatprep.subr.mxu0 %v2815
      %3446 = vmatpush1.msra.mxu0 %v2814
      %3447 = vmatprep.subr.mxu0 %v2819
      %3448 = vmatpush1.msra.mxu0 %v2818
      %3449 = vmatprep.subr.mxu0 %v2823
      %3450 = vmatpush1.msra.mxu0 %v2822
      %3451 = vmatprep.subr.mxu0 %v2827
      %3452 = vmatpush1.msra.mxu0 %v2826
      %3453 = vmatprep.subr.mxu0 %v2831
      %3454 = vmatpush1.msra.mxu0 %v2830
      %3455 = vmatprep.subr.mxu0 %v2835
      %3456 = vmatpush1.msra.mxu0 %v2834
      %3457 = vmatprep.subr.mxu0 %v2839
      %3458 = vmatpush1.msra.mxu0 %v2838
      %3459 = vmatprep.subr.mxu0 %v2843
      %3460 = vmatpush1.msra.mxu0 %v2842
      %3461 = vmatprep.subr.mxu0 %v2847
      %3462 = vmatpush1.msra.mxu0 %v2846
      %3463 = vmatprep.subr.mxu0 %v2851
      %3464 = vmatpush1.msra.mxu0 %v2850
      %3465 = vmatprep.subr.mxu0 %v2855
      %3466 = vmatpush1.msra.mxu0 %v2854
      %3467 = vmatprep.subr.mxu0 %v2859
      %3468 = vmatpush1.msra.mxu0 %v2858
      %3469 = vmatprep.subr.mxu0 %v2863
      %3470 = vmatpush1.msra.mxu0 %v2862
      %3471 = vmatprep.subr.mxu0 %v2867
      %3472 = vmatpush1.msra.mxu0 %v2866
      %3473 = vmatprep.subr.mxu0 %v2871
      %3474 = vmatpush1.msra.mxu0 %v2870
      %3475 = vmatprep.subr.mxu0 %v2875
      %3476 = vmatpush1.msra.mxu0 %v2874
      %3477 = vmatprep.subr.mxu0 %v2879
      %3478 = vmatpush1.msra.mxu0 %v2878
      %3479 = vmatprep.subr.mxu0 %v2883
      %3480 = vmatpush1.msra.mxu0 %v2882
      %3481 = vmatprep.subr.mxu0 %v2887
      %3482 = vmatpush1.msra.mxu0 %v2886
      %3483 = vmatprep.subr.mxu0 %v2891
      %3484 = vmatpush1.msra.mxu0 %v2890
      %3485 = vmatprep.subr.mxu0 %v2895
      %3486 = vmatpush1.msra.mxu0 %v2894
      %3487 = vmatprep.subr.mxu0 %v2899
      %3488 = vmatpush1.msra.mxu0 %v2898
      %3489 = vmatprep.subr.mxu0 %v2903
      %3490 = vmatpush1.msra.mxu0 %v2902
      %3491 = vmatprep.subr.mxu0 %v2907
      %3492 = vmatpush1.msra.mxu0 %v2906
      %3493 = vmatprep.subr.mxu0 %v2911
      %3494 = vmatpush1.msra.mxu0 %v2910
      %3495 = vmatprep.mubr.f32.mxu0 %v2399
      %3496 = vmatmul.mubr.f32.gmra.mrb[0].mxu0 %v2398
      %v3497 = vpop.f32.mrb[0].mxu0
      %v3498 = vadd.f32 %v3427, %v3497
      %v3499 = vpop.f32.mrb[0].mxu0
      %v3500 = vadd.f32 %v3429, %v3499
      %3501 = vdwg.mxu0
      %v3502 = vmax.f32 %v3214, 0.0
      %v3503 = vmax.f32 %v3216, 0.0
      %v3504 = vmax.f32 %v3498, 0.0
      %v3505 = vmax.f32 %v3500, 0.0
      %v3506 = vld [vmem:[#allocation16] sm:$0xff]
      %v3507 = vld [vmem:[#allocation16 + $0x8] sm:$0xff]
      %v3508 = vld [vmem:[#allocation16 + $0x10] sm:$0xff]
      %v3509 = vld [vmem:[#allocation16 + $0x18] sm:$0xff]
      %v3510 = vld [vmem:[#allocation16 + $0x20] sm:$0xff]
      %v3511 = vld [vmem:[#allocation16 + $0x28] sm:$0xff]
      %v3512 = vld [vmem:[#allocation16 + $0x30] sm:$0xff]
      %v3513 = vld [vmem:[#allocation16 + $0x38] sm:$0xff]
      %v3514 = vld [vmem:[#allocation16 + $0x40] sm:$0xff]
      %v3515 = vld [vmem:[#allocation16 + $0x48] sm:$0xff]
      %v3516 = vld [vmem:[#allocation16 + $0x50] sm:$0xff]
      %v3517 = vld [vmem:[#allocation16 + $0x58] sm:$0xff]
      %v3518 = vld [vmem:[#allocation16 + $0x60] sm:$0xff]
      %v3519 = vld [vmem:[#allocation16 + $0x68] sm:$0xff]
      %v3520 = vld [vmem:[#allocation16 + $0x70] sm:$0xff]
      %v3521 = vld [vmem:[#allocation16 + $0x78] sm:$0xff]
      %v3522 = vld [vmem:[#allocation16 + $0x80] sm:$0xff]
      %v3523 = vld [vmem:[#allocation16 + $0x88] sm:$0xff]
      %v3524 = vld [vmem:[#allocation16 + $0x90] sm:$0xff]
      %v3525 = vld [vmem:[#allocation16 + $0x98] sm:$0xff]
      %v3526 = vld [vmem:[#allocation16 + $0xa0] sm:$0xff]
      %v3527 = vld [vmem:[#allocation16 + $0xa8] sm:$0xff]
      %v3528 = vld [vmem:[#allocation16 + $0xb0] sm:$0xff]
      %v3529 = vld [vmem:[#allocation16 + $0xb8] sm:$0xff]
      %v3530 = vld [vmem:[#allocation16 + $0xc0] sm:$0xff]
      %v3531 = vld [vmem:[#allocation16 + $0xc8] sm:$0xff]
      %v3532 = vld [vmem:[#allocation16 + $0xd0] sm:$0xff]
      %v3533 = vld [vmem:[#allocation16 + $0xd8] sm:$0xff]
      %v3534 = vld [vmem:[#allocation16 + $0xe0] sm:$0xff]
      %v3535 = vld [vmem:[#allocation16 + $0xe8] sm:$0xff]
      %v3536 = vld [vmem:[#allocation16 + $0xf0] sm:$0xff]
      %v3537 = vld [vmem:[#allocation16 + $0xf8] sm:$0xff]
      %v3538 = vld [vmem:[#allocation16 + $0x100] sm:$0xff]
      %v3539 = vld [vmem:[#allocation16 + $0x108] sm:$0xff]
      %v3540 = vld [vmem:[#allocation16 + $0x110] sm:$0xff]
      %v3541 = vld [vmem:[#allocation16 + $0x118] sm:$0xff]
      %v3542 = vld [vmem:[#allocation16 + $0x120] sm:$0xff]
      %v3543 = vld [vmem:[#allocation16 + $0x128] sm:$0xff]
      %v3544 = vld [vmem:[#allocation16 + $0x130] sm:$0xff]
      %v3545 = vld [vmem:[#allocation16 + $0x138] sm:$0xff]
      %v3546 = vld [vmem:[#allocation16 + $0x140] sm:$0xff]
      %v3547 = vld [vmem:[#allocation16 + $0x148] sm:$0xff]
      %v3548 = vld [vmem:[#allocation16 + $0x150] sm:$0xff]
      %v3549 = vld [vmem:[#allocation16 + $0x158] sm:$0xff]
      %v3550 = vld [vmem:[#allocation16 + $0x160] sm:$0xff]
      %v3551 = vld [vmem:[#allocation16 + $0x168] sm:$0xff]
      %v3552 = vld [vmem:[#allocation16 + $0x170] sm:$0xff]
      %v3553 = vld [vmem:[#allocation16 + $0x178] sm:$0xff]
      %v3554 = vld [vmem:[#allocation16 + $0x180] sm:$0xff]
      %v3555 = vld [vmem:[#allocation16 + $0x188] sm:$0xff]
      %v3556 = vld [vmem:[#allocation16 + $0x190] sm:$0xff]
      %v3557 = vld [vmem:[#allocation16 + $0x198] sm:$0xff]
      %v3558 = vld [vmem:[#allocation16 + $0x1a0] sm:$0xff]
      %v3559 = vld [vmem:[#allocation16 + $0x1a8] sm:$0xff]
      %v3560 = vld [vmem:[#allocation16 + $0x1b0] sm:$0xff]
      %v3561 = vld [vmem:[#allocation16 + $0x1b8] sm:$0xff]
      %v3562 = vld [vmem:[#allocation16 + $0x1c0] sm:$0xff]
      %v3563 = vld [vmem:[#allocation16 + $0x1c8] sm:$0xff]
      %v3564 = vld [vmem:[#allocation16 + $0x1d0] sm:$0xff]
      %v3565 = vld [vmem:[#allocation16 + $0x1d8] sm:$0xff]
      %v3566 = vld [vmem:[#allocation16 + $0x1e0] sm:$0xff]
      %v3567 = vld [vmem:[#allocation16 + $0x1e8] sm:$0xff]
      %v3568 = vld [vmem:[#allocation16 + $0x1f0] sm:$0xff]
      %v3569 = vld [vmem:[#allocation16 + $0x1f8] sm:$0xff]
      %v3570 = vld [vmem:[#allocation16 + $0x200] sm:$0xff]
      %v3571 = vld [vmem:[#allocation16 + $0x208] sm:$0xff]
      %v3572 = vld [vmem:[#allocation16 + $0x210] sm:$0xff]
      %v3573 = vld [vmem:[#allocation16 + $0x218] sm:$0xff]
      %v3574 = vld [vmem:[#allocation16 + $0x220] sm:$0xff]
      %v3575 = vld [vmem:[#allocation16 + $0x228] sm:$0xff]
      %v3576 = vld [vmem:[#allocation16 + $0x230] sm:$0xff]
      %v3577 = vld [vmem:[#allocation16 + $0x238] sm:$0xff]
      %v3578 = vld [vmem:[#allocation16 + $0x240] sm:$0xff]
      %v3579 = vld [vmem:[#allocation16 + $0x248] sm:$0xff]
      %v3580 = vld [vmem:[#allocation16 + $0x250] sm:$0xff]
      %v3581 = vld [vmem:[#allocation16 + $0x258] sm:$0xff]
      %v3582 = vld [vmem:[#allocation16 + $0x260] sm:$0xff]
      %v3583 = vld [vmem:[#allocation16 + $0x268] sm:$0xff]
      %v3584 = vld [vmem:[#allocation16 + $0x270] sm:$0xff]
      %v3585 = vld [vmem:[#allocation16 + $0x278] sm:$0xff]
      %v3586 = vld [vmem:[#allocation16 + $0x280] sm:$0xff]
      %v3587 = vld [vmem:[#allocation16 + $0x288] sm:$0xff]
      %v3588 = vld [vmem:[#allocation16 + $0x290] sm:$0xff]
      %v3589 = vld [vmem:[#allocation16 + $0x298] sm:$0xff]
      %v3590 = vld [vmem:[#allocation16 + $0x2a0] sm:$0xff]
      %v3591 = vld [vmem:[#allocation16 + $0x2a8] sm:$0xff]
      %v3592 = vld [vmem:[#allocation16 + $0x2b0] sm:$0xff]
      %v3593 = vld [vmem:[#allocation16 + $0x2b8] sm:$0xff]
      %v3594 = vld [vmem:[#allocation16 + $0x2c0] sm:$0xff]
      %v3595 = vld [vmem:[#allocation16 + $0x2c8] sm:$0xff]
      %v3596 = vld [vmem:[#allocation16 + $0x2d0] sm:$0xff]
      %v3597 = vld [vmem:[#allocation16 + $0x2d8] sm:$0xff]
      %v3598 = vld [vmem:[#allocation16 + $0x2e0] sm:$0xff]
      %v3599 = vld [vmem:[#allocation16 + $0x2e8] sm:$0xff]
      %v3600 = vld [vmem:[#allocation16 + $0x2f0] sm:$0xff]
      %v3601 = vld [vmem:[#allocation16 + $0x2f8] sm:$0xff]
      %v3602 = vld [vmem:[#allocation16 + $0x300] sm:$0xff]
      %v3603 = vld [vmem:[#allocation16 + $0x308] sm:$0xff]
      %v3604 = vld [vmem:[#allocation16 + $0x310] sm:$0xff]
      %v3605 = vld [vmem:[#allocation16 + $0x318] sm:$0xff]
      %v3606 = vld [vmem:[#allocation16 + $0x320] sm:$0xff]
      %v3607 = vld [vmem:[#allocation16 + $0x328] sm:$0xff]
      %v3608 = vld [vmem:[#allocation16 + $0x330] sm:$0xff]
      %v3609 = vld [vmem:[#allocation16 + $0x338] sm:$0xff]
      %v3610 = vld [vmem:[#allocation16 + $0x340] sm:$0xff]
      %v3611 = vld [vmem:[#allocation16 + $0x348] sm:$0xff]
      %v3612 = vld [vmem:[#allocation16 + $0x350] sm:$0xff]
      %v3613 = vld [vmem:[#allocation16 + $0x358] sm:$0xff]
      %v3614 = vld [vmem:[#allocation16 + $0x360] sm:$0xff]
      %v3615 = vld [vmem:[#allocation16 + $0x368] sm:$0xff]
      %v3616 = vld [vmem:[#allocation16 + $0x370] sm:$0xff]
      %v3617 = vld [vmem:[#allocation16 + $0x378] sm:$0xff]
      %v3618 = vld [vmem:[#allocation16 + $0x380] sm:$0xff]
      %v3619 = vld [vmem:[#allocation16 + $0x388] sm:$0xff]
      %v3620 = vld [vmem:[#allocation16 + $0x390] sm:$0xff]
      %v3621 = vld [vmem:[#allocation16 + $0x398] sm:$0xff]
      %v3622 = vld [vmem:[#allocation16 + $0x3a0] sm:$0xff]
      %v3623 = vld [vmem:[#allocation16 + $0x3a8] sm:$0xff]
      %v3624 = vld [vmem:[#allocation16 + $0x3b0] sm:$0xff]
      %v3625 = vld [vmem:[#allocation16 + $0x3b8] sm:$0xff]
      %v3626 = vld [vmem:[#allocation16 + $0x3c0] sm:$0xff]
      %v3627 = vld [vmem:[#allocation16 + $0x3c8] sm:$0xff]
      %v3628 = vld [vmem:[#allocation16 + $0x3d0] sm:$0xff]
      %v3629 = vld [vmem:[#allocation16 + $0x3d8] sm:$0xff]
      %v3630 = vld [vmem:[#allocation16 + $0x3e0] sm:$0xff]
      %v3631 = vld [vmem:[#allocation16 + $0x3e8] sm:$0xff]
      %v3632 = vld [vmem:[#allocation16 + $0x3f0] sm:$0xff]
      %v3633 = vld [vmem:[#allocation16 + $0x3f8] sm:$0xff]
      %v3634 = vld [vmem:[#allocation17] sm:$0x3]
      %v3636 = vlaneseq
      %v3637 = vshrl.u32 %v3636, 7
      %v3638 = vsub.s32 0, %v3637
      %v3639 = vrot.slane %v3634, %v3638
      %v3640 = vlaneseq
      %v3641 = vshrl.u32 %v3640, 7
      %v3642 = vsub.s32 1, %v3641
      %v3643 = vrot.slane %v3634, %v3642
      %3646 = vmatprep.subr.mxu0 %v3507
      %3647 = vmatpush1.msra.mxu0 %v3506
      %3648 = vmatprep.subr.mxu0 %v3509
      %3649 = vmatpush1.msra.mxu0 %v3508
      %3650 = vmatprep.subr.mxu0 %v3511
      %3651 = vmatpush1.msra.mxu0 %v3510
      %3652 = vmatprep.subr.mxu0 %v3513
      %3653 = vmatpush1.msra.mxu0 %v3512
      %3654 = vmatprep.subr.mxu0 %v3515
      %3655 = vmatpush1.msra.mxu0 %v3514
      %3656 = vmatprep.subr.mxu0 %v3517
      %3657 = vmatpush1.msra.mxu0 %v3516
      %3658 = vmatprep.subr.mxu0 %v3519
      %3659 = vmatpush1.msra.mxu0 %v3518
      %3660 = vmatprep.subr.mxu0 %v3521
      %3661 = vmatpush1.msra.mxu0 %v3520
      %3662 = vmatprep.subr.mxu0 %v3523
      %3663 = vmatpush1.msra.mxu0 %v3522
      %3664 = vmatprep.subr.mxu0 %v3525
      %3665 = vmatpush1.msra.mxu0 %v3524
      %3666 = vmatprep.subr.mxu0 %v3527
      %3667 = vmatpush1.msra.mxu0 %v3526
      %3668 = vmatprep.subr.mxu0 %v3529
      %3669 = vmatpush1.msra.mxu0 %v3528
      %3670 = vmatprep.subr.mxu0 %v3531
      %3671 = vmatpush1.msra.mxu0 %v3530
      %3672 = vmatprep.subr.mxu0 %v3533
      %3673 = vmatpush1.msra.mxu0 %v3532
      %3674 = vmatprep.subr.mxu0 %v3535
      %3675 = vmatpush1.msra.mxu0 %v3534
      %3676 = vmatprep.subr.mxu0 %v3537
      %3677 = vmatpush1.msra.mxu0 %v3536
      %3678 = vmatprep.subr.mxu0 %v3539
      %3679 = vmatpush1.msra.mxu0 %v3538
      %3680 = vmatprep.subr.mxu0 %v3541
      %3681 = vmatpush1.msra.mxu0 %v3540
      %3682 = vmatprep.subr.mxu0 %v3543
      %3683 = vmatpush1.msra.mxu0 %v3542
      %3684 = vmatprep.subr.mxu0 %v3545
      %3685 = vmatpush1.msra.mxu0 %v3544
      %3686 = vmatprep.subr.mxu0 %v3547
      %3687 = vmatpush1.msra.mxu0 %v3546
      %3688 = vmatprep.subr.mxu0 %v3549
      %3689 = vmatpush1.msra.mxu0 %v3548
      %3690 = vmatprep.subr.mxu0 %v3551
      %3691 = vmatpush1.msra.mxu0 %v3550
      %3692 = vmatprep.subr.mxu0 %v3553
      %3693 = vmatpush1.msra.mxu0 %v3552
      %3694 = vmatprep.subr.mxu0 %v3555
      %3695 = vmatpush1.msra.mxu0 %v3554
      %3696 = vmatprep.subr.mxu0 %v3557
      %3697 = vmatpush1.msra.mxu0 %v3556
      %3698 = vmatprep.subr.mxu0 %v3559
      %3699 = vmatpush1.msra.mxu0 %v3558
      %3700 = vmatprep.subr.mxu0 %v3561
      %3701 = vmatpush1.msra.mxu0 %v3560
      %3702 = vmatprep.subr.mxu0 %v3563
      %3703 = vmatpush1.msra.mxu0 %v3562
      %3704 = vmatprep.subr.mxu0 %v3565
      %3705 = vmatpush1.msra.mxu0 %v3564
      %3706 = vmatprep.subr.mxu0 %v3567
      %3707 = vmatpush1.msra.mxu0 %v3566
      %3708 = vmatprep.subr.mxu0 %v3569
      %3709 = vmatpush1.msra.mxu0 %v3568
      %3710 = vmatprep.mubr.f32.mxu0 %v3503
      %3711 = vmatmul.mubr.f32.gmra.mrb[0].mxu0 %v3502
      %v3712 = vpop.f32.mrb[0].mxu0
      %v3713 = vadd.f32 %v3639, %v3712
      %v3714 = vpop.f32.mrb[0].mxu0
      %v3715 = vadd.f32 %v3643, %v3714
      %3716 = vdwg.mxu0
      %3717 = vmatprep.subr.mxu0 %v3571
      %3718 = vmatpush1.msra.mxu0 %v3570
      %3719 = vmatprep.subr.mxu0 %v3573
      %3720 = vmatpush1.msra.mxu0 %v3572
      %3721 = vmatprep.subr.mxu0 %v3575
      %3722 = vmatpush1.msra.mxu0 %v3574
      %3723 = vmatprep.subr.mxu0 %v3577
      %3724 = vmatpush1.msra.mxu0 %v3576
      %3725 = vmatprep.subr.mxu0 %v3579
      %3726 = vmatpush1.msra.mxu0 %v3578
      %3727 = vmatprep.subr.mxu0 %v3581
      %3728 = vmatpush1.msra.mxu0 %v3580
      %3729 = vmatprep.subr.mxu0 %v3583
      %3730 = vmatpush1.msra.mxu0 %v3582
      %3731 = vmatprep.subr.mxu0 %v3585
      %3732 = vmatpush1.msra.mxu0 %v3584
      %3733 = vmatprep.subr.mxu0 %v3587
      %3734 = vmatpush1.msra.mxu0 %v3586
      %3735 = vmatprep.subr.mxu0 %v3589
      %3736 = vmatpush1.msra.mxu0 %v3588
      %3737 = vmatprep.subr.mxu0 %v3591
      %3738 = vmatpush1.msra.mxu0 %v3590
      %3739 = vmatprep.subr.mxu0 %v3593
      %3740 = vmatpush1.msra.mxu0 %v3592
      %3741 = vmatprep.subr.mxu0 %v3595
      %3742 = vmatpush1.msra.mxu0 %v3594
      %3743 = vmatprep.subr.mxu0 %v3597
      %3744 = vmatpush1.msra.mxu0 %v3596
      %3745 = vmatprep.subr.mxu0 %v3599
      %3746 = vmatpush1.msra.mxu0 %v3598
      %3747 = vmatprep.subr.mxu0 %v3601
      %3748 = vmatpush1.msra.mxu0 %v3600
      %3749 = vmatprep.subr.mxu0 %v3603
      %3750 = vmatpush1.msra.mxu0 %v3602
      %3751 = vmatprep.subr.mxu0 %v3605
      %3752 = vmatpush1.msra.mxu0 %v3604
      %3753 = vmatprep.subr.mxu0 %v3607
      %3754 = vmatpush1.msra.mxu0 %v3606
      %3755 = vmatprep.subr.mxu0 %v3609
      %3756 = vmatpush1.msra.mxu0 %v3608
      %3757 = vmatprep.subr.mxu0 %v3611
      %3758 = vmatpush1.msra.mxu0 %v3610
      %3759 = vmatprep.subr.mxu0 %v3613
      %3760 = vmatpush1.msra.mxu0 %v3612
      %3761 = vmatprep.subr.mxu0 %v3615
      %3762 = vmatpush1.msra.mxu0 %v3614
      %3763 = vmatprep.subr.mxu0 %v3617
      %3764 = vmatpush1.msra.mxu0 %v3616
      %3765 = vmatprep.subr.mxu0 %v3619
      %3766 = vmatpush1.msra.mxu0 %v3618
      %3767 = vmatprep.subr.mxu0 %v3621
      %3768 = vmatpush1.msra.mxu0 %v3620
      %3769 = vmatprep.subr.mxu0 %v3623
      %3770 = vmatpush1.msra.mxu0 %v3622
      %3771 = vmatprep.subr.mxu0 %v3625
      %3772 = vmatpush1.msra.mxu0 %v3624
      %3773 = vmatprep.subr.mxu0 %v3627
      %3774 = vmatpush1.msra.mxu0 %v3626
      %3775 = vmatprep.subr.mxu0 %v3629
      %3776 = vmatpush1.msra.mxu0 %v3628
      %3777 = vmatprep.subr.mxu0 %v3631
      %3778 = vmatpush1.msra.mxu0 %v3630
      %3779 = vmatprep.subr.mxu0 %v3633
      %3780 = vmatpush1.msra.mxu0 %v3632
      %3781 = vmatprep.mubr.f32.mxu0 %v3505
      %3782 = vmatmul.mubr.f32.gmra.mrb[0].mxu0 %v3504
      %v3783 = vpop.f32.mrb[0].mxu0
      %v3784 = vadd.f32 %v3713, %v3783
      %v3785 = vpop.f32.mrb[0].mxu0
      %v3786 = vadd.f32 %v3715, %v3785
      %3787 = vdwg.mxu0
      %v3788 = vmax.f32 %v3784, 0.0
      %v3789 = vmax.f32 %v3786, 0.0
      %v3790 = vld [vmem:[#allocation19] sm:$0xff]
      %v3791 = vld [vmem:[#allocation19 + $0x8] sm:$0xff]
      %v3792 = vld [vmem:[#allocation19 + $0x10] sm:$0xff]
      %v3793 = vld [vmem:[#allocation19 + $0x18] sm:$0xff]
      %v3794 = vld [vmem:[#allocation19 + $0x20] sm:$0xff]
      %v3795 = vld [vmem:[#allocation19 + $0x28] sm:$0xff]
      %v3796 = vld [vmem:[#allocation19 + $0x30] sm:$0xff]
      %v3797 = vld [vmem:[#allocation19 + $0x38] sm:$0xff]
      %v3798 = vld [vmem:[#allocation19 + $0x40] sm:$0xff]
      %v3799 = vld [vmem:[#allocation19 + $0x48] sm:$0xff]
      %v3800 = vld [vmem:[#allocation19 + $0x50] sm:$0xff]
      %v3801 = vld [vmem:[#allocation19 + $0x58] sm:$0xff]
      %v3802 = vld [vmem:[#allocation19 + $0x60] sm:$0xff]
      %v3803 = vld [vmem:[#allocation19 + $0x68] sm:$0xff]
      %v3804 = vld [vmem:[#allocation19 + $0x70] sm:$0xff]
      %v3805 = vld [vmem:[#allocation19 + $0x78] sm:$0xff]
      %v3806 = vld [vmem:[#allocation19 + $0x80] sm:$0xff]
      %v3807 = vld [vmem:[#allocation19 + $0x88] sm:$0xff]
      %v3808 = vld [vmem:[#allocation19 + $0x90] sm:$0xff]
      %v3809 = vld [vmem:[#allocation19 + $0x98] sm:$0xff]
      %v3810 = vld [vmem:[#allocation19 + $0xa0] sm:$0xff]
      %v3811 = vld [vmem:[#allocation19 + $0xa8] sm:$0xff]
      %v3812 = vld [vmem:[#allocation19 + $0xb0] sm:$0xff]
      %v3813 = vld [vmem:[#allocation19 + $0xb8] sm:$0xff]
      %v3814 = vld [vmem:[#allocation19 + $0xc0] sm:$0xff]
      %v3815 = vld [vmem:[#allocation19 + $0xc8] sm:$0xff]
      %v3816 = vld [vmem:[#allocation19 + $0xd0] sm:$0xff]
      %v3817 = vld [vmem:[#allocation19 + $0xd8] sm:$0xff]
      %v3818 = vld [vmem:[#allocation19 + $0xe0] sm:$0xff]
      %v3819 = vld [vmem:[#allocation19 + $0xe8] sm:$0xff]
      %v3820 = vld [vmem:[#allocation19 + $0xf0] sm:$0xff]
      %v3821 = vld [vmem:[#allocation19 + $0xf8] sm:$0xff]
      %v3822 = vld [vmem:[#allocation20] sm:$0x1]
      %v3824 = vlaneseq
      %v3825 = vshrl.u32 %v3824, 7
      %v3826 = vsub.s32 0, %v3825
      %v3827 = vrot.slane %v3822, %v3826
      %3829 = vmatprep.subr.mxu0 0.0
      %3830 = vmatpush1.msra.mxu0 %v3790
      %3831 = vmatprep.subr.mxu0 0.0
      %3832 = vmatpush1.msra.mxu0 %v3791
      %3833 = vmatprep.subr.mxu0 0.0
      %3834 = vmatpush1.msra.mxu0 %v3792
      %3835 = vmatprep.subr.mxu0 0.0
      %3836 = vmatpush1.msra.mxu0 %v3793
      %3837 = vmatprep.subr.mxu0 0.0
      %3838 = vmatpush1.msra.mxu0 %v3794
      %3839 = vmatprep.subr.mxu0 0.0
      %3840 = vmatpush1.msra.mxu0 %v3795
      %3841 = vmatprep.subr.mxu0 0.0
      %3842 = vmatpush1.msra.mxu0 %v3796
      %3843 = vmatprep.subr.mxu0 0.0
      %3844 = vmatpush1.msra.mxu0 %v3797
      %3845 = vmatprep.subr.mxu0 0.0
      %3846 = vmatpush1.msra.mxu0 %v3798
      %3847 = vmatprep.subr.mxu0 0.0
      %3848 = vmatpush1.msra.mxu0 %v3799
      %3849 = vmatprep.subr.mxu0 0.0
      %3850 = vmatpush1.msra.mxu0 %v3800
      %3851 = vmatprep.subr.mxu0 0.0
      %3852 = vmatpush1.msra.mxu0 %v3801
      %3853 = vmatprep.subr.mxu0 0.0
      %3854 = vmatpush1.msra.mxu0 %v3802
      %3855 = vmatprep.subr.mxu0 0.0
      %3856 = vmatpush1.msra.mxu0 %v3803
      %3857 = vmatprep.subr.mxu0 0.0
      %3858 = vmatpush1.msra.mxu0 %v3804
      %3859 = vmatprep.subr.mxu0 0.0
      %3860 = vmatpush1.msra.mxu0 %v3805
      %3861 = vmatprep.subr.mxu0 0.0
      %3862 = vmatpush1.msra.mxu0 %v3806
      %3863 = vmatprep.subr.mxu0 0.0
      %3864 = vmatpush1.msra.mxu0 %v3807
      %3865 = vmatprep.subr.mxu0 0.0
      %3866 = vmatpush1.msra.mxu0 %v3808
      %3867 = vmatprep.subr.mxu0 0.0
      %3868 = vmatpush1.msra.mxu0 %v3809
      %3869 = vmatprep.subr.mxu0 0.0
      %3870 = vmatpush1.msra.mxu0 %v3810
      %3871 = vmatprep.subr.mxu0 0.0
      %3872 = vmatpush1.msra.mxu0 %v3811
      %3873 = vmatprep.subr.mxu0 0.0
      %3874 = vmatpush1.msra.mxu0 %v3812
      %3875 = vmatprep.subr.mxu0 0.0
      %3876 = vmatpush1.msra.mxu0 %v3813
      %3877 = vmatprep.subr.mxu0 0.0
      %3878 = vmatpush1.msra.mxu0 %v3814
      %3879 = vmatprep.subr.mxu0 0.0
      %3880 = vmatpush1.msra.mxu0 %v3815
      %3881 = vmatprep.subr.mxu0 0.0
      %3882 = vmatpush1.msra.mxu0 %v3816
      %3883 = vmatprep.subr.mxu0 0.0
      %3884 = vmatpush1.msra.mxu0 %v3817
      %3885 = vmatprep.subr.mxu0 0.0
      %3886 = vmatpush1.msra.mxu0 %v3818
      %3887 = vmatprep.subr.mxu0 0.0
      %3888 = vmatpush1.msra.mxu0 %v3819
      %3889 = vmatprep.subr.mxu0 0.0
      %3890 = vmatpush1.msra.mxu0 %v3820
      %3891 = vmatprep.subr.mxu0 0.0
      %3892 = vmatpush1.msra.mxu0 %v3821
      %3893 = vmatprep.mubr.f32.mxu0 %v3789
      %3894 = vmatmul.mubr.f32.gmra.mrb[0].mxu0 %v3788
      %v3895 = vpop.f32.mrb[0].mxu0
      %v3896 = vadd.f32 %v3827, %v3895
      %v3897 = vpop.f32.mrb[0].mxu0
      %3898 = vdwg.mxu0
      %3899 = vst [vmem:[%s13] sm:$0xff] %v3896
    $region113: #{pointnet_cls_forward.2} parent=1 // pred_fallthru
      _
    // Predicated region
    $region114: #{pointnet_cls_forward.2} parent=1 // pred_check
      _
    $region115: #{pointnet_cls_forward.2} parent=1 // pred_check_branch
      %3901 = sbr.rel (0) target = $region117
    $region116: #{pointnet_cls_forward.2} parent=1 // pred_region
      _
    $region117: #{pointnet_cls_forward.2} parent=1 // pred_fallthru
      _
    // Predicated region
    $region118: #{pointnet_cls_forward.2} parent=1 // pred_check
      _
    $region119: #{pointnet_cls_forward.2} parent=1 // pred_check_branch
      %3903 = sbr.rel (0) target = $region121
    $region120: #{pointnet_cls_forward.2} parent=1 // pred_region
      _
    $region121: #{pointnet_cls_forward.2} parent=1 // pred_fallthru
      _
    %3904 = vsyncpa [#allocation4], 1
    %3905 = vsyncpa [#allocation6], 1
    %3906 = vsyncpa [#allocation9], 1
    %3907 = vsyncpa [#allocation12], 1
    %3908 = vsyncpa [#allocation15], 1
    %3909 = vsyncpa [#allocation18], 1
    %3910 = vsyncpa [#allocation21], 1

// kernel: pointnet_cls_forward.3
$region0: #{pointnet_cls_forward.3}
  #allocation0 [shape = 'u32[]', space=smem, size = 0x4, offset = 0x4, fixed_abs, tag = 'smem constant byte address 0x4 - core index']
  #allocation1 [shape = 'u32[144,128]{1,0:T(1,128)}', space=vmem, size = 0x12000, scoped, tag = 'internal scratch']
  %s0 = inlined_call_operand.vmem [shape: f32[8,16,3], index: 0, kind: input, shape index: {}]
  %s1 = inlined_call_operand.vmem [shape: f32[8,3,3], index: 1, kind: input, shape index: {}]
  %s2 = inlined_call_operand.vmem [shape: f32[3,64], index: 2, kind: input, shape index: {}]
  %s3 = inlined_call_operand.vmem [shape: f32[1,64], index: 3, kind: input, shape index: {}]
  %s4 = inlined_call_operand.vmem [shape: bf16[64,128], index: 4, kind: input, shape index: {}]
  %s5 = inlined_call_operand.vmem [shape: f32[1,128], index: 5, kind: input, shape index: {}]
  %s6 = inlined_call_operand.vmem [shape: bf16[128,1024], index: 6, kind: input, shape index: {}]
  %s7 = inlined_call_operand.vmem [shape: f32[1,1024], index: 7, kind: input, shape index: {}]
  %s8 = inlined_call_operand.vmem [shape: f32[1024,512], index: 8, kind: input, shape index: {}]
  %s9 = inlined_call_operand.vmem [shape: f32[1,512], index: 9, kind: input, shape index: {}]
  %s10 = inlined_call_operand.vmem [shape: f32[512,256], index: 10, kind: input, shape index: {}]
  %s11 = inlined_call_operand.vmem [shape: f32[1,256], index: 11, kind: input, shape index: {}]
  %s12 = inlined_call_operand.vmem [shape: f32[256,128], index: 12, kind: input, shape index: {}]
  %s13 = inlined_call_operand.vmem [shape: f32[1,128], index: 13, kind: input, shape index: {}]
  %s14 = inlined_call_operand.vmem [shape: f32[8,1024], index: 14, kind: output, shape index: {0}]
  %s15 = inlined_call_operand.vmem [shape: f32[8,128], index: 15, kind: output, shape index: {1}]
  %16 = xla_tuple %s14, %s15
  %s17 = sld [smem:[#allocation0]]
  $region86: #{pointnet_cls_forward.3} parent=0
    _
  %s19 = ssub.s32 1, %s17
  %s20 = scalar_select 0, %s19, %s17
  // Predicated region
  $region2: #{pointnet_cls_forward.3} parent=0 // pred_check
    _
  $region3: #{pointnet_cls_forward.3} parent=0 // pred_check_branch
    %22 = sbr.rel (0) target = $region5
  $region4: #{pointnet_cls_forward.3} parent=0 // pred_region
    _
  $region5: #{pointnet_cls_forward.3} parent=0 // pred_fallthru
    _
  // Predicated region
  $region6: #{pointnet_cls_forward.3} parent=0 // pred_check
    _
  $region7: #{pointnet_cls_forward.3} parent=0 // pred_check_branch
    %24 = sbr.rel (0) target = $region9
  $region8: #{pointnet_cls_forward.3} parent=0 // pred_region
    _
  $region9: #{pointnet_cls_forward.3} parent=0 // pred_fallthru
    _
  // Predicated region
  $region10: #{pointnet_cls_forward.3} parent=0 // pred_check
    _
  $region11: #{pointnet_cls_forward.3} parent=0 // pred_check_branch
    %26 = sbr.rel (0) target = $region13
  $region12: #{pointnet_cls_forward.3} parent=0 // pred_region
    _
  $region13: #{pointnet_cls_forward.3} parent=0 // pred_fallthru
    _
  // Predicated region
  $region14: #{pointnet_cls_forward.3} parent=0 // pred_check
    _
  $region15: #{pointnet_cls_forward.3} parent=0 // pred_check_branch
    %28 = sbr.rel (0) target = $region17
  $region16: #{pointnet_cls_forward.3} parent=0 // pred_region
    _
  $region17: #{pointnet_cls_forward.3} parent=0 // pred_fallthru
    _
  // Predicated region
  $region18: #{pointnet_cls_forward.3} parent=0 // pred_check
    _
  $region19: #{pointnet_cls_forward.3} parent=0 // pred_check_branch
    %30 = sbr.rel (0) target = $region21
  $region20: #{pointnet_cls_forward.3} parent=0 // pred_region
    _
  $region21: #{pointnet_cls_forward.3} parent=0 // pred_fallthru
    _
  // Predicated region
  $region22: #{pointnet_cls_forward.3} parent=0 // pred_check
    _
  $region23: #{pointnet_cls_forward.3} parent=0 // pred_check_branch
    %32 = sbr.rel (0) target = $region25
  $region24: #{pointnet_cls_forward.3} parent=0 // pred_region
    _
  $region25: #{pointnet_cls_forward.3} parent=0 // pred_fallthru
    _
  // Predicated region
  $region26: #{pointnet_cls_forward.3} parent=0 // pred_check
    _
  $region27: #{pointnet_cls_forward.3} parent=0 // pred_check_branch
    %34 = sbr.rel (0) target = $region29
  $region28: #{pointnet_cls_forward.3} parent=0 // pred_region
    _
  $region29: #{pointnet_cls_forward.3} parent=0 // pred_fallthru
    _
  // Predicated region
  $region30: #{pointnet_cls_forward.3} parent=0 // pred_check
    _
  $region31: #{pointnet_cls_forward.3} parent=0 // pred_check_branch
    %36 = sbr.rel (0) target = $region33
  $region32: #{pointnet_cls_forward.3} parent=0 // pred_region
    _
  $region33: #{pointnet_cls_forward.3} parent=0 // pred_fallthru
    _
  // Predicated region
  $region34: #{pointnet_cls_forward.3} parent=0 // pred_check
    _
  $region35: #{pointnet_cls_forward.3} parent=0 // pred_check_branch
    %38 = sbr.rel (0) target = $region37
  $region36: #{pointnet_cls_forward.3} parent=0 // pred_region
    _
  $region37: #{pointnet_cls_forward.3} parent=0 // pred_fallthru
    _
  // Predicated region
  $region38: #{pointnet_cls_forward.3} parent=0 // pred_check
    _
  $region39: #{pointnet_cls_forward.3} parent=0 // pred_check_branch
    %40 = sbr.rel (0) target = $region41
  $region40: #{pointnet_cls_forward.3} parent=0 // pred_region
    _
  $region41: #{pointnet_cls_forward.3} parent=0 // pred_fallthru
    _
  // Predicated region
  $region42: #{pointnet_cls_forward.3} parent=0 // pred_check
    _
  $region43: #{pointnet_cls_forward.3} parent=0 // pred_check_branch
    %42 = sbr.rel (0) target = $region45
  $region44: #{pointnet_cls_forward.3} parent=0 // pred_region
    _
  $region45: #{pointnet_cls_forward.3} parent=0 // pred_fallthru
    _
  // Predicated region
  $region46: #{pointnet_cls_forward.3} parent=0 // pred_check
    _
  $region47: #{pointnet_cls_forward.3} parent=0 // pred_check_branch
    %44 = sbr.rel (0) target = $region49
  $region48: #{pointnet_cls_forward.3} parent=0 // pred_region
    _
  $region49: #{pointnet_cls_forward.3} parent=0 // pred_fallthru
    _
  // Predicated region
  $region50: #{pointnet_cls_forward.3} parent=0 // pred_check
    _
  $region51: #{pointnet_cls_forward.3} parent=0 // pred_check_branch
    %46 = sbr.rel (0) target = $region53
  $region52: #{pointnet_cls_forward.3} parent=0 // pred_region
    _
  $region53: #{pointnet_cls_forward.3} parent=0 // pred_fallthru
    _
  // Predicated region
  $region54: #{pointnet_cls_forward.3} parent=0 // pred_check
    _
  $region55: #{pointnet_cls_forward.3} parent=0 // pred_check_branch
    %48 = sbr.rel (0) target = $region57
  $region56: #{pointnet_cls_forward.3} parent=0 // pred_region
    _
  $region57: #{pointnet_cls_forward.3} parent=0 // pred_fallthru
    _
  %v50 = vld [vmem:[%s2] sm:$0x7]
  %v51 = vld [vmem:[%s1] sm:$0x7]
  %v52 = vld [vmem:[%s1 + $0x4] sm:$0x7]
  %v53 = vld [vmem:[%s1 + $0x8] sm:$0x7]
  %v54 = vld [vmem:[%s1 + $0xc] sm:$0x7]
  %v55 = vld [vmem:[%s1 + $0x10] sm:$0x7]
  %v56 = vld [vmem:[%s1 + $0x14] sm:$0x7]
  %v57 = vld [vmem:[%s1 + $0x18] sm:$0x7]
  %v58 = vld [vmem:[%s1 + $0x1c] sm:$0x7]
  %vm59 = vcmask 23552
  %v61 = vsel %vm59, %v51, 0
  %vm63 = vcmask 1042432
  %v65 = vsel %vm63, %v50, 0
  %67 = vmatprep.subr.mxu0 0.0
  %68 = vmatpush1.msra.mxu0 %v65
  %69 = vmatprep.subr.mxu0 0.0
  %70 = vmatpush1.msra.mxu0 0.0
  %71 = vmatprep.subr.mxu0 0.0
  %72 = vmatpush1.msra.mxu0 0.0
  %73 = vmatprep.subr.mxu0 0.0
  %74 = vmatpush1.msra.mxu0 0.0
  %75 = vmatprep.subr.mxu0 0.0
  %76 = vmatpush1.msra.mxu0 0.0
  %77 = vmatprep.subr.mxu0 0.0
  %78 = vmatpush1.msra.mxu0 0.0
  %79 = vmatprep.subr.mxu0 0.0
  %80 = vmatpush1.msra.mxu0 0.0
  %81 = vmatprep.subr.mxu0 0.0
  %82 = vmatpush1.msra.mxu0 0.0
  %83 = vmatprep.subr.mxu0 0.0
  %84 = vmatpush1.msra.mxu0 0.0
  %85 = vmatprep.subr.mxu0 0.0
  %86 = vmatpush1.msra.mxu0 0.0
  %87 = vmatprep.subr.mxu0 0.0
  %88 = vmatpush1.msra.mxu0 0.0
  %89 = vmatprep.subr.mxu0 0.0
  %90 = vmatpush1.msra.mxu0 0.0
  %91 = vmatprep.subr.mxu0 0.0
  %92 = vmatpush1.msra.mxu0 0.0
  %93 = vmatprep.subr.mxu0 0.0
  %94 = vmatpush1.msra.mxu0 0.0
  %95 = vmatprep.subr.mxu0 0.0
  %96 = vmatpush1.msra.mxu0 0.0
  %97 = vmatprep.subr.mxu0 0.0
  %98 = vmatpush1.msra.mxu0 0.0
  %99 = vmatprep.subr.mxu0 0.0
  %100 = vmatpush1.msra.mxu0 0.0
  %101 = vmatprep.subr.mxu0 0.0
  %102 = vmatpush1.msra.mxu0 0.0
  %103 = vmatprep.subr.mxu0 0.0
  %104 = vmatpush1.msra.mxu0 0.0
  %105 = vmatprep.subr.mxu0 0.0
  %106 = vmatpush1.msra.mxu0 0.0
  %107 = vmatprep.subr.mxu0 0.0
  %108 = vmatpush1.msra.mxu0 0.0
  %109 = vmatprep.subr.mxu0 0.0
  %110 = vmatpush1.msra.mxu0 0.0
  %111 = vmatprep.subr.mxu0 0.0
  %112 = vmatpush1.msra.mxu0 0.0
  %113 = vmatprep.subr.mxu0 0.0
  %114 = vmatpush1.msra.mxu0 0.0
  %115 = vmatprep.subr.mxu0 0.0
  %116 = vmatpush1.msra.mxu0 0.0
  %117 = vmatprep.subr.mxu0 0.0
  %118 = vmatpush1.msra.mxu0 0.0
  %119 = vmatprep.subr.mxu0 0.0
  %120 = vmatpush1.msra.mxu0 0.0
  %121 = vmatprep.subr.mxu0 0.0
  %122 = vmatpush1.msra.mxu0 0.0
  %123 = vmatprep.subr.mxu0 0.0
  %124 = vmatpush1.msra.mxu0 0.0
  %125 = vmatprep.subr.mxu0 0.0
  %126 = vmatpush1.msra.mxu0 0.0
  %127 = vmatprep.subr.mxu0 0.0
  %128 = vmatpush1.msra.mxu0 0.0
  %129 = vmatprep.subr.mxu0 0.0
  %130 = vmatpush1.msra.mxu0 0.0
  %131 = vmatprep.mubr.f32.mxu0 0.0
  %132 = vmatmul.mubr.f32.gmra.mrb[0].mxu0 %v61
  %v133 = vpop.f32.mrb[0].mxu0
  %v134 = vadd.f32 0.0, %v133
  %v135 = vpop.f32.mrb[0].mxu0
  %136 = vdwg.mxu0
  %v138 = vsel %vm59, %v52, 0
  %140 = vmatprep.subr.mxu0 0.0
  %141 = vmatpush1.msra.mxu0 %v65
  %142 = vmatprep.subr.mxu0 0.0
  %143 = vmatpush1.msra.mxu0 0.0
  %144 = vmatprep.subr.mxu0 0.0
  %145 = vmatpush1.msra.mxu0 0.0
  %146 = vmatprep.subr.mxu0 0.0
  %147 = vmatpush1.msra.mxu0 0.0
  %148 = vmatprep.subr.mxu0 0.0
  %149 = vmatpush1.msra.mxu0 0.0
  %150 = vmatprep.subr.mxu0 0.0
  %151 = vmatpush1.msra.mxu0 0.0
  %152 = vmatprep.subr.mxu0 0.0
  %153 = vmatpush1.msra.mxu0 0.0
  %154 = vmatprep.subr.mxu0 0.0
  %155 = vmatpush1.msra.mxu0 0.0
  %156 = vmatprep.subr.mxu0 0.0
  %157 = vmatpush1.msra.mxu0 0.0
  %158 = vmatprep.subr.mxu0 0.0
  %159 = vmatpush1.msra.mxu0 0.0
  %160 = vmatprep.subr.mxu0 0.0
  %161 = vmatpush1.msra.mxu0 0.0
  %162 = vmatprep.subr.mxu0 0.0
  %163 = vmatpush1.msra.mxu0 0.0
  %164 = vmatprep.subr.mxu0 0.0
  %165 = vmatpush1.msra.mxu0 0.0
  %166 = vmatprep.subr.mxu0 0.0
  %167 = vmatpush1.msra.mxu0 0.0
  %168 = vmatprep.subr.mxu0 0.0
  %169 = vmatpush1.msra.mxu0 0.0
  %170 = vmatprep.subr.mxu0 0.0
  %171 = vmatpush1.msra.mxu0 0.0
  %172 = vmatprep.subr.mxu0 0.0
  %173 = vmatpush1.msra.mxu0 0.0
  %174 = vmatprep.subr.mxu0 0.0
  %175 = vmatpush1.msra.mxu0 0.0
  %176 = vmatprep.subr.mxu0 0.0
  %177 = vmatpush1.msra.mxu0 0.0
  %178 = vmatprep.subr.mxu0 0.0
  %179 = vmatpush1.msra.mxu0 0.0
  %180 = vmatprep.subr.mxu0 0.0
  %181 = vmatpush1.msra.mxu0 0.0
  %182 = vmatprep.subr.mxu0 0.0
  %183 = vmatpush1.msra.mxu0 0.0
  %184 = vmatprep.subr.mxu0 0.0
  %185 = vmatpush1.msra.mxu0 0.0
  %186 = vmatprep.subr.mxu0 0.0
  %187 = vmatpush1.msra.mxu0 0.0
  %188 = vmatprep.subr.mxu0 0.0
  %189 = vmatpush1.msra.mxu0 0.0
  %190 = vmatprep.subr.mxu0 0.0
  %191 = vmatpush1.msra.mxu0 0.0
  %192 = vmatprep.subr.mxu0 0.0
  %193 = vmatpush1.msra.mxu0 0.0
  %194 = vmatprep.subr.mxu0 0.0
  %195 = vmatpush1.msra.mxu0 0.0
  %196 = vmatprep.subr.mxu0 0.0
  %197 = vmatpush1.msra.mxu0 0.0
  %198 = vmatprep.subr.mxu0 0.0
  %199 = vmatpush1.msra.mxu0 0.0
  %200 = vmatprep.subr.mxu0 0.0
  %201 = vmatpush1.msra.mxu0 0.0
  %202 = vmatprep.subr.mxu0 0.0
  %203 = vmatpush1.msra.mxu0 0.0
  %204 = vmatprep.mubr.f32.mxu0 0.0
  %205 = vmatmul.mubr.f32.gmra.mrb[0].mxu0 %v138
  %v206 = vpop.f32.mrb[0].mxu0
  %v207 = vadd.f32 0.0, %v206
  %v208 = vpop.f32.mrb[0].mxu0
  %209 = vdwg.mxu0
  %v211 = vsel %vm59, %v53, 0
  %213 = vmatprep.subr.mxu0 0.0
  %214 = vmatpush1.msra.mxu0 %v65
  %215 = vmatprep.subr.mxu0 0.0
  %216 = vmatpush1.msra.mxu0 0.0
  %217 = vmatprep.subr.mxu0 0.0
  %218 = vmatpush1.msra.mxu0 0.0
  %219 = vmatprep.subr.mxu0 0.0
  %220 = vmatpush1.msra.mxu0 0.0
  %221 = vmatprep.subr.mxu0 0.0
  %222 = vmatpush1.msra.mxu0 0.0
  %223 = vmatprep.subr.mxu0 0.0
  %224 = vmatpush1.msra.mxu0 0.0
  %225 = vmatprep.subr.mxu0 0.0
  %226 = vmatpush1.msra.mxu0 0.0
  %227 = vmatprep.subr.mxu0 0.0
  %228 = vmatpush1.msra.mxu0 0.0
  %229 = vmatprep.subr.mxu0 0.0
  %230 = vmatpush1.msra.mxu0 0.0
  %231 = vmatprep.subr.mxu0 0.0
  %232 = vmatpush1.msra.mxu0 0.0
  %233 = vmatprep.subr.mxu0 0.0
  %234 = vmatpush1.msra.mxu0 0.0
  %235 = vmatprep.subr.mxu0 0.0
  %236 = vmatpush1.msra.mxu0 0.0
  %237 = vmatprep.subr.mxu0 0.0
  %238 = vmatpush1.msra.mxu0 0.0
  %239 = vmatprep.subr.mxu0 0.0
  %240 = vmatpush1.msra.mxu0 0.0
  %241 = vmatprep.subr.mxu0 0.0
  %242 = vmatpush1.msra.mxu0 0.0
  %243 = vmatprep.subr.mxu0 0.0
  %244 = vmatpush1.msra.mxu0 0.0
  %245 = vmatprep.subr.mxu0 0.0
  %246 = vmatpush1.msra.mxu0 0.0
  %247 = vmatprep.subr.mxu0 0.0
  %248 = vmatpush1.msra.mxu0 0.0
  %249 = vmatprep.subr.mxu0 0.0
  %250 = vmatpush1.msra.mxu0 0.0
  %251 = vmatprep.subr.mxu0 0.0
  %252 = vmatpush1.msra.mxu0 0.0
  %253 = vmatprep.subr.mxu0 0.0
  %254 = vmatpush1.msra.mxu0 0.0
  %255 = vmatprep.subr.mxu0 0.0
  %256 = vmatpush1.msra.mxu0 0.0
  %257 = vmatprep.subr.mxu0 0.0
  %258 = vmatpush1.msra.mxu0 0.0
  %259 = vmatprep.subr.mxu0 0.0
  %260 = vmatpush1.msra.mxu0 0.0
  %261 = vmatprep.subr.mxu0 0.0
  %262 = vmatpush1.msra.mxu0 0.0
  %263 = vmatprep.subr.mxu0 0.0
  %264 = vmatpush1.msra.mxu0 0.0
  %265 = vmatprep.subr.mxu0 0.0
  %266 = vmatpush1.msra.mxu0 0.0
  %267 = vmatprep.subr.mxu0 0.0
  %268 = vmatpush1.msra.mxu0 0.0
  %269 = vmatprep.subr.mxu0 0.0
  %270 = vmatpush1.msra.mxu0 0.0
  %271 = vmatprep.subr.mxu0 0.0
  %272 = vmatpush1.msra.mxu0 0.0
  %273 = vmatprep.subr.mxu0 0.0
  %274 = vmatpush1.msra.mxu0 0.0
  %275 = vmatprep.subr.mxu0 0.0
  %276 = vmatpush1.msra.mxu0 0.0
  %277 = vmatprep.mubr.f32.mxu0 0.0
  %278 = vmatmul.mubr.f32.gmra.mrb[0].mxu0 %v211
  %v279 = vpop.f32.mrb[0].mxu0
  %v280 = vadd.f32 0.0, %v279
  %v281 = vpop.f32.mrb[0].mxu0
  %282 = vdwg.mxu0
  %v284 = vsel %vm59, %v54, 0
  %286 = vmatprep.subr.mxu0 0.0
  %287 = vmatpush1.msra.mxu0 %v65
  %288 = vmatprep.subr.mxu0 0.0
  %289 = vmatpush1.msra.mxu0 0.0
  %290 = vmatprep.subr.mxu0 0.0
  %291 = vmatpush1.msra.mxu0 0.0
  %292 = vmatprep.subr.mxu0 0.0
  %293 = vmatpush1.msra.mxu0 0.0
  %294 = vmatprep.subr.mxu0 0.0
  %295 = vmatpush1.msra.mxu0 0.0
  %296 = vmatprep.subr.mxu0 0.0
  %297 = vmatpush1.msra.mxu0 0.0
  %298 = vmatprep.subr.mxu0 0.0
  %299 = vmatpush1.msra.mxu0 0.0
  %300 = vmatprep.subr.mxu0 0.0
  %301 = vmatpush1.msra.mxu0 0.0
  %302 = vmatprep.subr.mxu0 0.0
  %303 = vmatpush1.msra.mxu0 0.0
  %304 = vmatprep.subr.mxu0 0.0
  %305 = vmatpush1.msra.mxu0 0.0
  %306 = vmatprep.subr.mxu0 0.0
  %307 = vmatpush1.msra.mxu0 0.0
  %308 = vmatprep.subr.mxu0 0.0
  %309 = vmatpush1.msra.mxu0 0.0
  %310 = vmatprep.subr.mxu0 0.0
  %311 = vmatpush1.msra.mxu0 0.0
  %312 = vmatprep.subr.mxu0 0.0
  %313 = vmatpush1.msra.mxu0 0.0
  %314 = vmatprep.subr.mxu0 0.0
  %315 = vmatpush1.msra.mxu0 0.0
  %316 = vmatprep.subr.mxu0 0.0
  %317 = vmatpush1.msra.mxu0 0.0
  %318 = vmatprep.subr.mxu0 0.0
  %319 = vmatpush1.msra.mxu0 0.0
  %320 = vmatprep.subr.mxu0 0.0
  %321 = vmatpush1.msra.mxu0 0.0
  %322 = vmatprep.subr.mxu0 0.0
  %323 = vmatpush1.msra.mxu0 0.0
  %324 = vmatprep.subr.mxu0 0.0
  %325 = vmatpush1.msra.mxu0 0.0
  %326 = vmatprep.subr.mxu0 0.0
  %327 = vmatpush1.msra.mxu0 0.0
  %328 = vmatprep.subr.mxu0 0.0
  %329 = vmatpush1.msra.mxu0 0.0
  %330 = vmatprep.subr.mxu0 0.0
  %331 = vmatpush1.msra.mxu0 0.0
  %332 = vmatprep.subr.mxu0 0.0
  %333 = vmatpush1.msra.mxu0 0.0
  %334 = vmatprep.subr.mxu0 0.0
  %335 = vmatpush1.msra.mxu0 0.0
  %336 = vmatprep.subr.mxu0 0.0
  %337 = vmatpush1.msra.mxu0 0.0
  %338 = vmatprep.subr.mxu0 0.0
  %339 = vmatpush1.msra.mxu0 0.0
  %340 = vmatprep.subr.mxu0 0.0
  %341 = vmatpush1.msra.mxu0 0.0
  %342 = vmatprep.subr.mxu0 0.0
  %343 = vmatpush1.msra.mxu0 0.0
  %344 = vmatprep.subr.mxu0 0.0
  %345 = vmatpush1.msra.mxu0 0.0
  %346 = vmatprep.subr.mxu0 0.0
  %347 = vmatpush1.msra.mxu0 0.0
  %348 = vmatprep.subr.mxu0 0.0
  %349 = vmatpush1.msra.mxu0 0.0
  %350 = vmatprep.mubr.f32.mxu0 0.0
  %351 = vmatmul.mubr.f32.gmra.mrb[0].mxu0 %v284
  %v352 = vpop.f32.mrb[0].mxu0
  %v353 = vadd.f32 0.0, %v352
  %v354 = vpop.f32.mrb[0].mxu0
  %355 = vdwg.mxu0
  %v357 = vsel %vm59, %v55, 0
  %359 = vmatprep.subr.mxu0 0.0
  %360 = vmatpush1.msra.mxu0 %v65
  %361 = vmatprep.subr.mxu0 0.0
  %362 = vmatpush1.msra.mxu0 0.0
  %363 = vmatprep.subr.mxu0 0.0
  %364 = vmatpush1.msra.mxu0 0.0
  %365 = vmatprep.subr.mxu0 0.0
  %366 = vmatpush1.msra.mxu0 0.0
  %367 = vmatprep.subr.mxu0 0.0
  %368 = vmatpush1.msra.mxu0 0.0
  %369 = vmatprep.subr.mxu0 0.0
  %370 = vmatpush1.msra.mxu0 0.0
  %371 = vmatprep.subr.mxu0 0.0
  %372 = vmatpush1.msra.mxu0 0.0
  %373 = vmatprep.subr.mxu0 0.0
  %374 = vmatpush1.msra.mxu0 0.0
  %375 = vmatprep.subr.mxu0 0.0
  %376 = vmatpush1.msra.mxu0 0.0
  %377 = vmatprep.subr.mxu0 0.0
  %378 = vmatpush1.msra.mxu0 0.0
  %379 = vmatprep.subr.mxu0 0.0
  %380 = vmatpush1.msra.mxu0 0.0
  %381 = vmatprep.subr.mxu0 0.0
  %382 = vmatpush1.msra.mxu0 0.0
  %383 = vmatprep.subr.mxu0 0.0
  %384 = vmatpush1.msra.mxu0 0.0
  %385 = vmatprep.subr.mxu0 0.0
  %386 = vmatpush1.msra.mxu0 0.0
  %387 = vmatprep.subr.mxu0 0.0
  %388 = vmatpush1.msra.mxu0 0.0
  %389 = vmatprep.subr.mxu0 0.0
  %390 = vmatpush1.msra.mxu0 0.0
  %391 = vmatprep.subr.mxu0 0.0
  %392 = vmatpush1.msra.mxu0 0.0
  %393 = vmatprep.subr.mxu0 0.0
  %394 = vmatpush1.msra.mxu0 0.0
  %395 = vmatprep.subr.mxu0 0.0
  %396 = vmatpush1.msra.mxu0 0.0
  %397 = vmatprep.subr.mxu0 0.0
  %398 = vmatpush1.msra.mxu0 0.0
  %399 = vmatprep.subr.mxu0 0.0
  %400 = vmatpush1.msra.mxu0 0.0
  %401 = vmatprep.subr.mxu0 0.0
  %402 = vmatpush1.msra.mxu0 0.0
  %403 = vmatprep.subr.mxu0 0.0
  %404 = vmatpush1.msra.mxu0 0.0
  %405 = vmatprep.subr.mxu0 0.0
  %406 = vmatpush1.msra.mxu0 0.0
  %407 = vmatprep.subr.mxu0 0.0
  %408 = vmatpush1.msra.mxu0 0.0
  %409 = vmatprep.subr.mxu0 0.0
  %410 = vmatpush1.msra.mxu0 0.0
  %411 = vmatprep.subr.mxu0 0.0
  %412 = vmatpush1.msra.mxu0 0.0
  %413 = vmatprep.subr.mxu0 0.0
  %414 = vmatpush1.msra.mxu0 0.0
  %415 = vmatprep.subr.mxu0 0.0
  %416 = vmatpush1.msra.mxu0 0.0
  %417 = vmatprep.subr.mxu0 0.0
  %418 = vmatpush1.msra.mxu0 0.0
  %419 = vmatprep.subr.mxu0 0.0
  %420 = vmatpush1.msra.mxu0 0.0
  %421 = vmatprep.subr.mxu0 0.0
  %422 = vmatpush1.msra.mxu0 0.0
  %423 = vmatprep.mubr.f32.mxu0 0.0
  %424 = vmatmul.mubr.f32.gmra.mrb[0].mxu0 %v357
  %v425 = vpop.f32.mrb[0].mxu0
  %v426 = vadd.f32 0.0, %v425
  %v427 = vpop.f32.mrb[0].mxu0
  %428 = vdwg.mxu0
  %v430 = vsel %vm59, %v56, 0
  %432 = vmatprep.subr.mxu0 0.0
  %433 = vmatpush1.msra.mxu0 %v65
  %434 = vmatprep.subr.mxu0 0.0
  %435 = vmatpush1.msra.mxu0 0.0
  %436 = vmatprep.subr.mxu0 0.0
  %437 = vmatpush1.msra.mxu0 0.0
  %438 = vmatprep.subr.mxu0 0.0
  %439 = vmatpush1.msra.mxu0 0.0
  %440 = vmatprep.subr.mxu0 0.0
  %441 = vmatpush1.msra.mxu0 0.0
  %442 = vmatprep.subr.mxu0 0.0
  %443 = vmatpush1.msra.mxu0 0.0
  %444 = vmatprep.subr.mxu0 0.0
  %445 = vmatpush1.msra.mxu0 0.0
  %446 = vmatprep.subr.mxu0 0.0
  %447 = vmatpush1.msra.mxu0 0.0
  %448 = vmatprep.subr.mxu0 0.0
  %449 = vmatpush1.msra.mxu0 0.0
  %450 = vmatprep.subr.mxu0 0.0
  %451 = vmatpush1.msra.mxu0 0.0
  %452 = vmatprep.subr.mxu0 0.0
  %453 = vmatpush1.msra.mxu0 0.0
  %454 = vmatprep.subr.mxu0 0.0
  %455 = vmatpush1.msra.mxu0 0.0
  %456 = vmatprep.subr.mxu0 0.0
  %457 = vmatpush1.msra.mxu0 0.0
  %458 = vmatprep.subr.mxu0 0.0
  %459 = vmatpush1.msra.mxu0 0.0
  %460 = vmatprep.subr.mxu0 0.0
  %461 = vmatpush1.msra.mxu0 0.0
  %462 = vmatprep.subr.mxu0 0.0
  %463 = vmatpush1.msra.mxu0 0.0
  %464 = vmatprep.subr.mxu0 0.0
  %465 = vmatpush1.msra.mxu0 0.0
  %466 = vmatprep.subr.mxu0 0.0
  %467 = vmatpush1.msra.mxu0 0.0
  %468 = vmatprep.subr.mxu0 0.0
  %469 = vmatpush1.msra.mxu0 0.0
  %470 = vmatprep.subr.mxu0 0.0
  %471 = vmatpush1.msra.mxu0 0.0
  %472 = vmatprep.subr.mxu0 0.0
  %473 = vmatpush1.msra.mxu0 0.0
  %474 = vmatprep.subr.mxu0 0.0
  %475 = vmatpush1.msra.mxu0 0.0
  %476 = vmatprep.subr.mxu0 0.0
  %477 = vmatpush1.msra.mxu0 0.0
  %478 = vmatprep.subr.mxu0 0.0
  %479 = vmatpush1.msra.mxu0 0.0
  %480 = vmatprep.subr.mxu0 0.0
  %481 = vmatpush1.msra.mxu0 0.0
  %482 = vmatprep.subr.mxu0 0.0
  %483 = vmatpush1.msra.mxu0 0.0
  %484 = vmatprep.subr.mxu0 0.0
  %485 = vmatpush1.msra.mxu0 0.0
  %486 = vmatprep.subr.mxu0 0.0
  %487 = vmatpush1.msra.mxu0 0.0
  %488 = vmatprep.subr.mxu0 0.0
  %489 = vmatpush1.msra.mxu0 0.0
  %490 = vmatprep.subr.mxu0 0.0
  %491 = vmatpush1.msra.mxu0 0.0
  %492 = vmatprep.subr.mxu0 0.0
  %493 = vmatpush1.msra.mxu0 0.0
  %494 = vmatprep.subr.mxu0 0.0
  %495 = vmatpush1.msra.mxu0 0.0
  %496 = vmatprep.mubr.f32.mxu0 0.0
  %497 = vmatmul.mubr.f32.gmra.mrb[0].mxu0 %v430
  %v498 = vpop.f32.mrb[0].mxu0
  %v499 = vadd.f32 0.0, %v498
  %v500 = vpop.f32.mrb[0].mxu0
  %501 = vdwg.mxu0
  %v503 = vsel %vm59, %v57, 0
  %505 = vmatprep.subr.mxu0 0.0
  %506 = vmatpush1.msra.mxu0 %v65
  %507 = vmatprep.subr.mxu0 0.0
  %508 = vmatpush1.msra.mxu0 0.0
  %509 = vmatprep.subr.mxu0 0.0
  %510 = vmatpush1.msra.mxu0 0.0
  %511 = vmatprep.subr.mxu0 0.0
  %512 = vmatpush1.msra.mxu0 0.0
  %513 = vmatprep.subr.mxu0 0.0
  %514 = vmatpush1.msra.mxu0 0.0
  %515 = vmatprep.subr.mxu0 0.0
  %516 = vmatpush1.msra.mxu0 0.0
  %517 = vmatprep.subr.mxu0 0.0
  %518 = vmatpush1.msra.mxu0 0.0
  %519 = vmatprep.subr.mxu0 0.0
  %520 = vmatpush1.msra.mxu0 0.0
  %521 = vmatprep.subr.mxu0 0.0
  %522 = vmatpush1.msra.mxu0 0.0
  %523 = vmatprep.subr.mxu0 0.0
  %524 = vmatpush1.msra.mxu0 0.0
  %525 = vmatprep.subr.mxu0 0.0
  %526 = vmatpush1.msra.mxu0 0.0
  %527 = vmatprep.subr.mxu0 0.0
  %528 = vmatpush1.msra.mxu0 0.0
  %529 = vmatprep.subr.mxu0 0.0
  %530 = vmatpush1.msra.mxu0 0.0
  %531 = vmatprep.subr.mxu0 0.0
  %532 = vmatpush1.msra.mxu0 0.0
  %533 = vmatprep.subr.mxu0 0.0
  %534 = vmatpush1.msra.mxu0 0.0
  %535 = vmatprep.subr.mxu0 0.0
  %536 = vmatpush1.msra.mxu0 0.0
  %537 = vmatprep.subr.mxu0 0.0
  %538 = vmatpush1.msra.mxu0 0.0
  %539 = vmatprep.subr.mxu0 0.0
  %540 = vmatpush1.msra.mxu0 0.0
  %541 = vmatprep.subr.mxu0 0.0
  %542 = vmatpush1.msra.mxu0 0.0
  %543 = vmatprep.subr.mxu0 0.0
  %544 = vmatpush1.msra.mxu0 0.0
  %545 = vmatprep.subr.mxu0 0.0
  %546 = vmatpush1.msra.mxu0 0.0
  %547 = vmatprep.subr.mxu0 0.0
  %548 = vmatpush1.msra.mxu0 0.0
  %549 = vmatprep.subr.mxu0 0.0
  %550 = vmatpush1.msra.mxu0 0.0
  %551 = vmatprep.subr.mxu0 0.0
  %552 = vmatpush1.msra.mxu0 0.0
  %553 = vmatprep.subr.mxu0 0.0
  %554 = vmatpush1.msra.mxu0 0.0
  %555 = vmatprep.subr.mxu0 0.0
  %556 = vmatpush1.msra.mxu0 0.0
  %557 = vmatprep.subr.mxu0 0.0
  %558 = vmatpush1.msra.mxu0 0.0
  %559 = vmatprep.subr.mxu0 0.0
  %560 = vmatpush1.msra.mxu0 0.0
  %561 = vmatprep.subr.mxu0 0.0
  %562 = vmatpush1.msra.mxu0 0.0
  %563 = vmatprep.subr.mxu0 0.0
  %564 = vmatpush1.msra.mxu0 0.0
  %565 = vmatprep.subr.mxu0 0.0
  %566 = vmatpush1.msra.mxu0 0.0
  %567 = vmatprep.subr.mxu0 0.0
  %568 = vmatpush1.msra.mxu0 0.0
  %569 = vmatprep.mubr.f32.mxu0 0.0
  %570 = vmatmul.mubr.f32.gmra.mrb[0].mxu0 %v503
  %v571 = vpop.f32.mrb[0].mxu0
  %v572 = vadd.f32 0.0, %v571
  %v573 = vpop.f32.mrb[0].mxu0
  %574 = vdwg.mxu0
  %v576 = vsel %vm59, %v58, 0
  %578 = vmatprep.subr.mxu0 0.0
  %579 = vmatpush1.msra.mxu0 %v65
  %580 = vmatprep.subr.mxu0 0.0
  %581 = vmatpush1.msra.mxu0 0.0
  %582 = vmatprep.subr.mxu0 0.0
  %583 = vmatpush1.msra.mxu0 0.0
  %584 = vmatprep.subr.mxu0 0.0
  %585 = vmatpush1.msra.mxu0 0.0
  %586 = vmatprep.subr.mxu0 0.0
  %587 = vmatpush1.msra.mxu0 0.0
  %588 = vmatprep.subr.mxu0 0.0
  %589 = vmatpush1.msra.mxu0 0.0
  %590 = vmatprep.subr.mxu0 0.0
  %591 = vmatpush1.msra.mxu0 0.0
  %592 = vmatprep.subr.mxu0 0.0
  %593 = vmatpush1.msra.mxu0 0.0
  %594 = vmatprep.subr.mxu0 0.0
  %595 = vmatpush1.msra.mxu0 0.0
  %596 = vmatprep.subr.mxu0 0.0
  %597 = vmatpush1.msra.mxu0 0.0
  %598 = vmatprep.subr.mxu0 0.0
  %599 = vmatpush1.msra.mxu0 0.0
  %600 = vmatprep.subr.mxu0 0.0
  %601 = vmatpush1.msra.mxu0 0.0
  %602 = vmatprep.subr.mxu0 0.0
  %603 = vmatpush1.msra.mxu0 0.0
  %604 = vmatprep.subr.mxu0 0.0
  %605 = vmatpush1.msra.mxu0 0.0
  %606 = vmatprep.subr.mxu0 0.0
  %607 = vmatpush1.msra.mxu0 0.0
  %608 = vmatprep.subr.mxu0 0.0
  %609 = vmatpush1.msra.mxu0 0.0
  %610 = vmatprep.subr.mxu0 0.0
  %611 = vmatpush1.msra.mxu0 0.0
  %612 = vmatprep.subr.mxu0 0.0
  %613 = vmatpush1.msra.mxu0 0.0
  %614 = vmatprep.subr.mxu0 0.0
  %615 = vmatpush1.msra.mxu0 0.0
  %616 = vmatprep.subr.mxu0 0.0
  %617 = vmatpush1.msra.mxu0 0.0
  %618 = vmatprep.subr.mxu0 0.0
  %619 = vmatpush1.msra.mxu0 0.0
  %620 = vmatprep.subr.mxu0 0.0
  %621 = vmatpush1.msra.mxu0 0.0
  %622 = vmatprep.subr.mxu0 0.0
  %623 = vmatpush1.msra.mxu0 0.0
  %624 = vmatprep.subr.mxu0 0.0
  %625 = vmatpush1.msra.mxu0 0.0
  %626 = vmatprep.subr.mxu0 0.0
  %627 = vmatpush1.msra.mxu0 0.0
  %628 = vmatprep.subr.mxu0 0.0
  %629 = vmatpush1.msra.mxu0 0.0
  %630 = vmatprep.subr.mxu0 0.0
  %631 = vmatpush1.msra.mxu0 0.0
  %632 = vmatprep.subr.mxu0 0.0
  %633 = vmatpush1.msra.mxu0 0.0
  %634 = vmatprep.subr.mxu0 0.0
  %635 = vmatpush1.msra.mxu0 0.0
  %636 = vmatprep.subr.mxu0 0.0
  %637 = vmatpush1.msra.mxu0 0.0
  %638 = vmatprep.subr.mxu0 0.0
  %639 = vmatpush1.msra.mxu0 0.0
  %640 = vmatprep.subr.mxu0 0.0
  %641 = vmatpush1.msra.mxu0 0.0
  %642 = vmatprep.mubr.f32.mxu0 0.0
  %643 = vmatmul.mubr.f32.gmra.mrb[0].mxu0 %v576
  %v644 = vpop.f32.mrb[0].mxu0
  %v645 = vadd.f32 0.0, %v644
  %v646 = vpop.f32.mrb[0].mxu0
  %647 = vdwg.mxu0
  %v648 = vld [vmem:[%s0] sm:$0xff]
  %v649 = vld [vmem:[%s0 + $0x8] sm:$0xff]
  %v650 = vld [vmem:[%s0 + $0x10] sm:$0xff]
  %v651 = vld [vmem:[%s0 + $0x18] sm:$0xff]
  %v652 = vld [vmem:[%s0 + $0x20] sm:$0xff]
  %v653 = vld [vmem:[%s0 + $0x28] sm:$0xff]
  %v654 = vld [vmem:[%s0 + $0x30] sm:$0xff]
  %v655 = vld [vmem:[%s0 + $0x38] sm:$0xff]
  %v656 = vld [vmem:[%s0 + $0x40] sm:$0xff]
  %v657 = vld [vmem:[%s0 + $0x48] sm:$0xff]
  %v658 = vld [vmem:[%s0 + $0x50] sm:$0xff]
  %v659 = vld [vmem:[%s0 + $0x58] sm:$0xff]
  %v660 = vld [vmem:[%s0 + $0x60] sm:$0xff]
  %v661 = vld [vmem:[%s0 + $0x68] sm:$0xff]
  %v662 = vld [vmem:[%s0 + $0x70] sm:$0xff]
  %v663 = vld [vmem:[%s0 + $0x78] sm:$0xff]
  %v665 = vsel %vm59, %v648, 0
  %v668 = vsel %vm59, %v649, 0
  %v671 = vsel %vm63, %v134, 0
  %673 = vmatprep.subr.mxu0 0.0
  %674 = vmatpush1.msra.mxu0 %v671
  %675 = vmatprep.subr.mxu0 0.0
  %676 = vmatpush1.msra.mxu0 0.0
  %677 = vmatprep.subr.mxu0 0.0
  %678 = vmatpush1.msra.mxu0 0.0
  %679 = vmatprep.subr.mxu0 0.0
  %680 = vmatpush1.msra.mxu0 0.0
  %681 = vmatprep.subr.mxu0 0.0
  %682 = vmatpush1.msra.mxu0 0.0
  %683 = vmatprep.subr.mxu0 0.0
  %684 = vmatpush1.msra.mxu0 0.0
  %685 = vmatprep.subr.mxu0 0.0
  %686 = vmatpush1.msra.mxu0 0.0
  %687 = vmatprep.subr.mxu0 0.0
  %688 = vmatpush1.msra.mxu0 0.0
  %689 = vmatprep.subr.mxu0 0.0
  %690 = vmatpush1.msra.mxu0 0.0
  %691 = vmatprep.subr.mxu0 0.0
  %692 = vmatpush1.msra.mxu0 0.0
  %693 = vmatprep.subr.mxu0 0.0
  %694 = vmatpush1.msra.mxu0 0.0
  %695 = vmatprep.subr.mxu0 0.0
  %696 = vmatpush1.msra.mxu0 0.0
  %697 = vmatprep.subr.mxu0 0.0
  %698 = vmatpush1.msra.mxu0 0.0
  %699 = vmatprep.subr.mxu0 0.0
  %700 = vmatpush1.msra.mxu0 0.0
  %701 = vmatprep.subr.mxu0 0.0
  %702 = vmatpush1.msra.mxu0 0.0
  %703 = vmatprep.subr.mxu0 0.0
  %704 = vmatpush1.msra.mxu0 0.0
  %705 = vmatprep.subr.mxu0 0.0
  %706 = vmatpush1.msra.mxu0 0.0
  %707 = vmatprep.subr.mxu0 0.0
  %708 = vmatpush1.msra.mxu0 0.0
  %709 = vmatprep.subr.mxu0 0.0
  %710 = vmatpush1.msra.mxu0 0.0
  %711 = vmatprep.subr.mxu0 0.0
  %712 = vmatpush1.msra.mxu0 0.0
  %713 = vmatprep.subr.mxu0 0.0
  %714 = vmatpush1.msra.mxu0 0.0
  %715 = vmatprep.subr.mxu0 0.0
  %716 = vmatpush1.msra.mxu0 0.0
  %717 = vmatprep.subr.mxu0 0.0
  %718 = vmatpush1.msra.mxu0 0.0
  %719 = vmatprep.subr.mxu0 0.0
  %720 = vmatpush1.msra.mxu0 0.0
  %721 = vmatprep.subr.mxu0 0.0
  %722 = vmatpush1.msra.mxu0 0.0
  %723 = vmatprep.subr.mxu0 0.0
  %724 = vmatpush1.msra.mxu0 0.0
  %725 = vmatprep.subr.mxu0 0.0
  %726 = vmatpush1.msra.mxu0 0.0
  %727 = vmatprep.subr.mxu0 0.0
  %728 = vmatpush1.msra.mxu0 0.0
  %729 = vmatprep.subr.mxu0 0.0
  %730 = vmatpush1.msra.mxu0 0.0
  %731 = vmatprep.subr.mxu0 0.0
  %732 = vmatpush1.msra.mxu0 0.0
  %733 = vmatprep.subr.mxu0 0.0
  %734 = vmatpush1.msra.mxu0 0.0
  %735 = vmatprep.subr.mxu0 0.0
  %736 = vmatpush1.msra.mxu0 0.0
  %737 = vmatprep.mubr.f32.mxu0 0.0
  %738 = vmatmul.mubr.f32.gmra.mrb[0].mxu0 %v665
  %v739 = vpop.f32.mrb[0].mxu0
  %v740 = vadd.f32 0.0, %v739
  %v741 = vpop.f32.mrb[0].mxu0
  %742 = vmatprep.mubr.f32.mxu0 0.0
  %743 = vmatmul.mubr.f32.gmra.mrb[0].mxu0 %v668
  %v744 = vpop.f32.mrb[0].mxu0
  %v745 = vadd.f32 0.0, %v744
  %v746 = vpop.f32.mrb[0].mxu0
  %747 = vdwg.mxu0
  %v749 = vsel %vm59, %v650, 0
  %v752 = vsel %vm59, %v651, 0
  %v755 = vsel %vm63, %v207, 0
  %757 = vmatprep.subr.mxu0 0.0
  %758 = vmatpush1.msra.mxu0 %v755
  %759 = vmatprep.subr.mxu0 0.0
  %760 = vmatpush1.msra.mxu0 0.0
  %761 = vmatprep.subr.mxu0 0.0
  %762 = vmatpush1.msra.mxu0 0.0
  %763 = vmatprep.subr.mxu0 0.0
  %764 = vmatpush1.msra.mxu0 0.0
  %765 = vmatprep.subr.mxu0 0.0
  %766 = vmatpush1.msra.mxu0 0.0
  %767 = vmatprep.subr.mxu0 0.0
  %768 = vmatpush1.msra.mxu0 0.0
  %769 = vmatprep.subr.mxu0 0.0
  %770 = vmatpush1.msra.mxu0 0.0
  %771 = vmatprep.subr.mxu0 0.0
  %772 = vmatpush1.msra.mxu0 0.0
  %773 = vmatprep.subr.mxu0 0.0
  %774 = vmatpush1.msra.mxu0 0.0
  %775 = vmatprep.subr.mxu0 0.0
  %776 = vmatpush1.msra.mxu0 0.0
  %777 = vmatprep.subr.mxu0 0.0
  %778 = vmatpush1.msra.mxu0 0.0
  %779 = vmatprep.subr.mxu0 0.0
  %780 = vmatpush1.msra.mxu0 0.0
  %781 = vmatprep.subr.mxu0 0.0
  %782 = vmatpush1.msra.mxu0 0.0
  %783 = vmatprep.subr.mxu0 0.0
  %784 = vmatpush1.msra.mxu0 0.0
  %785 = vmatprep.subr.mxu0 0.0
  %786 = vmatpush1.msra.mxu0 0.0
  %787 = vmatprep.subr.mxu0 0.0
  %788 = vmatpush1.msra.mxu0 0.0
  %789 = vmatprep.subr.mxu0 0.0
  %790 = vmatpush1.msra.mxu0 0.0
  %791 = vmatprep.subr.mxu0 0.0
  %792 = vmatpush1.msra.mxu0 0.0
  %793 = vmatprep.subr.mxu0 0.0
  %794 = vmatpush1.msra.mxu0 0.0
  %795 = vmatprep.subr.mxu0 0.0
  %796 = vmatpush1.msra.mxu0 0.0
  %797 = vmatprep.subr.mxu0 0.0
  %798 = vmatpush1.msra.mxu0 0.0
  %799 = vmatprep.subr.mxu0 0.0
  %800 = vmatpush1.msra.mxu0 0.0
  %801 = vmatprep.subr.mxu0 0.0
  %802 = vmatpush1.msra.mxu0 0.0
  %803 = vmatprep.subr.mxu0 0.0
  %804 = vmatpush1.msra.mxu0 0.0
  %805 = vmatprep.subr.mxu0 0.0
  %806 = vmatpush1.msra.mxu0 0.0
  %807 = vmatprep.subr.mxu0 0.0
  %808 = vmatpush1.msra.mxu0 0.0
  %809 = vmatprep.subr.mxu0 0.0
  %810 = vmatpush1.msra.mxu0 0.0
  %811 = vmatprep.subr.mxu0 0.0
  %812 = vmatpush1.msra.mxu0 0.0
  %813 = vmatprep.subr.mxu0 0.0
  %814 = vmatpush1.msra.mxu0 0.0
  %815 = vmatprep.subr.mxu0 0.0
  %816 = vmatpush1.msra.mxu0 0.0
  %817 = vmatprep.subr.mxu0 0.0
  %818 = vmatpush1.msra.mxu0 0.0
  %819 = vmatprep.subr.mxu0 0.0
  %820 = vmatpush1.msra.mxu0 0.0
  %821 = vmatprep.mubr.f32.mxu0 0.0
  %822 = vmatmul.mubr.f32.gmra.mrb[0].mxu0 %v749
  %v823 = vpop.f32.mrb[0].mxu0
  %v824 = vadd.f32 0.0, %v823
  %v825 = vpop.f32.mrb[0].mxu0
  %826 = vmatprep.mubr.f32.mxu0 0.0
  %827 = vmatmul.mubr.f32.gmra.mrb[0].mxu0 %v752
  %v828 = vpop.f32.mrb[0].mxu0
  %v829 = vadd.f32 0.0, %v828
  %v830 = vpop.f32.mrb[0].mxu0
  %831 = vdwg.mxu0
  %v833 = vsel %vm59, %v652, 0
  %v836 = vsel %vm59, %v653, 0
  %v839 = vsel %vm63, %v280, 0
  %841 = vmatprep.subr.mxu0 0.0
  %842 = vmatpush1.msra.mxu0 %v839
  %843 = vmatprep.subr.mxu0 0.0
  %844 = vmatpush1.msra.mxu0 0.0
  %845 = vmatprep.subr.mxu0 0.0
  %846 = vmatpush1.msra.mxu0 0.0
  %847 = vmatprep.subr.mxu0 0.0
  %848 = vmatpush1.msra.mxu0 0.0
  %849 = vmatprep.subr.mxu0 0.0
  %850 = vmatpush1.msra.mxu0 0.0
  %851 = vmatprep.subr.mxu0 0.0
  %852 = vmatpush1.msra.mxu0 0.0
  %853 = vmatprep.subr.mxu0 0.0
  %854 = vmatpush1.msra.mxu0 0.0
  %855 = vmatprep.subr.mxu0 0.0
  %856 = vmatpush1.msra.mxu0 0.0
  %857 = vmatprep.subr.mxu0 0.0
  %858 = vmatpush1.msra.mxu0 0.0
  %859 = vmatprep.subr.mxu0 0.0
  %860 = vmatpush1.msra.mxu0 0.0
  %861 = vmatprep.subr.mxu0 0.0
  %862 = vmatpush1.msra.mxu0 0.0
  %863 = vmatprep.subr.mxu0 0.0
  %864 = vmatpush1.msra.mxu0 0.0
  %865 = vmatprep.subr.mxu0 0.0
  %866 = vmatpush1.msra.mxu0 0.0
  %867 = vmatprep.subr.mxu0 0.0
  %868 = vmatpush1.msra.mxu0 0.0
  %869 = vmatprep.subr.mxu0 0.0
  %870 = vmatpush1.msra.mxu0 0.0
  %871 = vmatprep.subr.mxu0 0.0
  %872 = vmatpush1.msra.mxu0 0.0
  %873 = vmatprep.subr.mxu0 0.0
  %874 = vmatpush1.msra.mxu0 0.0
  %875 = vmatprep.subr.mxu0 0.0
  %876 = vmatpush1.msra.mxu0 0.0
  %877 = vmatprep.subr.mxu0 0.0
  %878 = vmatpush1.msra.mxu0 0.0
  %879 = vmatprep.subr.mxu0 0.0
  %880 = vmatpush1.msra.mxu0 0.0
  %881 = vmatprep.subr.mxu0 0.0
  %882 = vmatpush1.msra.mxu0 0.0
  %883 = vmatprep.subr.mxu0 0.0
  %884 = vmatpush1.msra.mxu0 0.0
  %885 = vmatprep.subr.mxu0 0.0
  %886 = vmatpush1.msra.mxu0 0.0
  %887 = vmatprep.subr.mxu0 0.0
  %888 = vmatpush1.msra.mxu0 0.0
  %889 = vmatprep.subr.mxu0 0.0
  %890 = vmatpush1.msra.mxu0 0.0
  %891 = vmatprep.subr.mxu0 0.0
  %892 = vmatpush1.msra.mxu0 0.0
  %893 = vmatprep.subr.mxu0 0.0
  %894 = vmatpush1.msra.mxu0 0.0
  %895 = vmatprep.subr.mxu0 0.0
  %896 = vmatpush1.msra.mxu0 0.0
  %897 = vmatprep.subr.mxu0 0.0
  %898 = vmatpush1.msra.mxu0 0.0
  %899 = vmatprep.subr.mxu0 0.0
  %900 = vmatpush1.msra.mxu0 0.0
  %901 = vmatprep.subr.mxu0 0.0
  %902 = vmatpush1.msra.mxu0 0.0
  %903 = vmatprep.subr.mxu0 0.0
  %904 = vmatpush1.msra.mxu0 0.0
  %905 = vmatprep.mubr.f32.mxu0 0.0
  %906 = vmatmul.mubr.f32.gmra.mrb[0].mxu0 %v833
  %v907 = vpop.f32.mrb[0].mxu0
  %v908 = vadd.f32 0.0, %v907
  %v909 = vpop.f32.mrb[0].mxu0
  %910 = vmatprep.mubr.f32.mxu0 0.0
  %911 = vmatmul.mubr.f32.gmra.mrb[0].mxu0 %v836
  %v912 = vpop.f32.mrb[0].mxu0
  %v913 = vadd.f32 0.0, %v912
  %v914 = vpop.f32.mrb[0].mxu0
  %915 = vdwg.mxu0
  %v917 = vsel %vm59, %v654, 0
  %v920 = vsel %vm59, %v655, 0
  %v923 = vsel %vm63, %v353, 0
  %925 = vmatprep.subr.mxu0 0.0
  %926 = vmatpush1.msra.mxu0 %v923
  %927 = vmatprep.subr.mxu0 0.0
  %928 = vmatpush1.msra.mxu0 0.0
  %929 = vmatprep.subr.mxu0 0.0
  %930 = vmatpush1.msra.mxu0 0.0
  %931 = vmatprep.subr.mxu0 0.0
  %932 = vmatpush1.msra.mxu0 0.0
  %933 = vmatprep.subr.mxu0 0.0
  %934 = vmatpush1.msra.mxu0 0.0
  %935 = vmatprep.subr.mxu0 0.0
  %936 = vmatpush1.msra.mxu0 0.0
  %937 = vmatprep.subr.mxu0 0.0
  %938 = vmatpush1.msra.mxu0 0.0
  %939 = vmatprep.subr.mxu0 0.0
  %940 = vmatpush1.msra.mxu0 0.0
  %941 = vmatprep.subr.mxu0 0.0
  %942 = vmatpush1.msra.mxu0 0.0
  %943 = vmatprep.subr.mxu0 0.0
  %944 = vmatpush1.msra.mxu0 0.0
  %945 = vmatprep.subr.mxu0 0.0
  %946 = vmatpush1.msra.mxu0 0.0
  %947 = vmatprep.subr.mxu0 0.0
  %948 = vmatpush1.msra.mxu0 0.0
  %949 = vmatprep.subr.mxu0 0.0
  %950 = vmatpush1.msra.mxu0 0.0
  %951 = vmatprep.subr.mxu0 0.0
  %952 = vmatpush1.msra.mxu0 0.0
  %953 = vmatprep.subr.mxu0 0.0
  %954 = vmatpush1.msra.mxu0 0.0
  %955 = vmatprep.subr.mxu0 0.0
  %956 = vmatpush1.msra.mxu0 0.0
  %957 = vmatprep.subr.mxu0 0.0
  %958 = vmatpush1.msra.mxu0 0.0
  %959 = vmatprep.subr.mxu0 0.0
  %960 = vmatpush1.msra.mxu0 0.0
  %961 = vmatprep.subr.mxu0 0.0
  %962 = vmatpush1.msra.mxu0 0.0
  %963 = vmatprep.subr.mxu0 0.0
  %964 = vmatpush1.msra.mxu0 0.0
  %965 = vmatprep.subr.mxu0 0.0
  %966 = vmatpush1.msra.mxu0 0.0
  %967 = vmatprep.subr.mxu0 0.0
  %968 = vmatpush1.msra.mxu0 0.0
  %969 = vmatprep.subr.mxu0 0.0
  %970 = vmatpush1.msra.mxu0 0.0
  %971 = vmatprep.subr.mxu0 0.0
  %972 = vmatpush1.msra.mxu0 0.0
  %973 = vmatprep.subr.mxu0 0.0
  %974 = vmatpush1.msra.mxu0 0.0
  %975 = vmatprep.subr.mxu0 0.0
  %976 = vmatpush1.msra.mxu0 0.0
  %977 = vmatprep.subr.mxu0 0.0
  %978 = vmatpush1.msra.mxu0 0.0
  %979 = vmatprep.subr.mxu0 0.0
  %980 = vmatpush1.msra.mxu0 0.0
  %981 = vmatprep.subr.mxu0 0.0
  %982 = vmatpush1.msra.mxu0 0.0
  %983 = vmatprep.subr.mxu0 0.0
  %984 = vmatpush1.msra.mxu0 0.0
  %985 = vmatprep.subr.mxu0 0.0
  %986 = vmatpush1.msra.mxu0 0.0
  %987 = vmatprep.subr.mxu0 0.0
  %988 = vmatpush1.msra.mxu0 0.0
  %989 = vmatprep.mubr.f32.mxu0 0.0
  %990 = vmatmul.mubr.f32.gmra.mrb[0].mxu0 %v917
  %v991 = vpop.f32.mrb[0].mxu0
  %v992 = vadd.f32 0.0, %v991
  %v993 = vpop.f32.mrb[0].mxu0
  %994 = vmatprep.mubr.f32.mxu0 0.0
  %995 = vmatmul.mubr.f32.gmra.mrb[0].mxu0 %v920
  %v996 = vpop.f32.mrb[0].mxu0
  %v997 = vadd.f32 0.0, %v996
  %v998 = vpop.f32.mrb[0].mxu0
  %999 = vdwg.mxu0
  %v1001 = vsel %vm59, %v656, 0
  %v1004 = vsel %vm59, %v657, 0
  %v1007 = vsel %vm63, %v426, 0
  %1009 = vmatprep.subr.mxu0 0.0
  %1010 = vmatpush1.msra.mxu0 %v1007
  %1011 = vmatprep.subr.mxu0 0.0
  %1012 = vmatpush1.msra.mxu0 0.0
  %1013 = vmatprep.subr.mxu0 0.0
  %1014 = vmatpush1.msra.mxu0 0.0
  %1015 = vmatprep.subr.mxu0 0.0
  %1016 = vmatpush1.msra.mxu0 0.0
  %1017 = vmatprep.subr.mxu0 0.0
  %1018 = vmatpush1.msra.mxu0 0.0
  %1019 = vmatprep.subr.mxu0 0.0
  %1020 = vmatpush1.msra.mxu0 0.0
  %1021 = vmatprep.subr.mxu0 0.0
  %1022 = vmatpush1.msra.mxu0 0.0
  %1023 = vmatprep.subr.mxu0 0.0
  %1024 = vmatpush1.msra.mxu0 0.0
  %1025 = vmatprep.subr.mxu0 0.0
  %1026 = vmatpush1.msra.mxu0 0.0
  %1027 = vmatprep.subr.mxu0 0.0
  %1028 = vmatpush1.msra.mxu0 0.0
  %1029 = vmatprep.subr.mxu0 0.0
  %1030 = vmatpush1.msra.mxu0 0.0
  %1031 = vmatprep.subr.mxu0 0.0
  %1032 = vmatpush1.msra.mxu0 0.0
  %1033 = vmatprep.subr.mxu0 0.0
  %1034 = vmatpush1.msra.mxu0 0.0
  %1035 = vmatprep.subr.mxu0 0.0
  %1036 = vmatpush1.msra.mxu0 0.0
  %1037 = vmatprep.subr.mxu0 0.0
  %1038 = vmatpush1.msra.mxu0 0.0
  %1039 = vmatprep.subr.mxu0 0.0
  %1040 = vmatpush1.msra.mxu0 0.0
  %1041 = vmatprep.subr.mxu0 0.0
  %1042 = vmatpush1.msra.mxu0 0.0
  %1043 = vmatprep.subr.mxu0 0.0
  %1044 = vmatpush1.msra.mxu0 0.0
  %1045 = vmatprep.subr.mxu0 0.0
  %1046 = vmatpush1.msra.mxu0 0.0
  %1047 = vmatprep.subr.mxu0 0.0
  %1048 = vmatpush1.msra.mxu0 0.0
  %1049 = vmatprep.subr.mxu0 0.0
  %1050 = vmatpush1.msra.mxu0 0.0
  %1051 = vmatprep.subr.mxu0 0.0
  %1052 = vmatpush1.msra.mxu0 0.0
  %1053 = vmatprep.subr.mxu0 0.0
  %1054 = vmatpush1.msra.mxu0 0.0
  %1055 = vmatprep.subr.mxu0 0.0
  %1056 = vmatpush1.msra.mxu0 0.0
  %1057 = vmatprep.subr.mxu0 0.0
  %1058 = vmatpush1.msra.mxu0 0.0
  %1059 = vmatprep.subr.mxu0 0.0
  %1060 = vmatpush1.msra.mxu0 0.0
  %1061 = vmatprep.subr.mxu0 0.0
  %1062 = vmatpush1.msra.mxu0 0.0
  %1063 = vmatprep.subr.mxu0 0.0
  %1064 = vmatpush1.msra.mxu0 0.0
  %1065 = vmatprep.subr.mxu0 0.0
  %1066 = vmatpush1.msra.mxu0 0.0
  %1067 = vmatprep.subr.mxu0 0.0
  %1068 = vmatpush1.msra.mxu0 0.0
  %1069 = vmatprep.subr.mxu0 0.0
  %1070 = vmatpush1.msra.mxu0 0.0
  %1071 = vmatprep.subr.mxu0 0.0
  %1072 = vmatpush1.msra.mxu0 0.0
  %1073 = vmatprep.mubr.f32.mxu0 0.0
  %1074 = vmatmul.mubr.f32.gmra.mrb[0].mxu0 %v1001
  %v1075 = vpop.f32.mrb[0].mxu0
  %v1076 = vadd.f32 0.0, %v1075
  %v1077 = vpop.f32.mrb[0].mxu0
  %1078 = vmatprep.mubr.f32.mxu0 0.0
  %1079 = vmatmul.mubr.f32.gmra.mrb[0].mxu0 %v1004
  %v1080 = vpop.f32.mrb[0].mxu0
  %v1081 = vadd.f32 0.0, %v1080
  %v1082 = vpop.f32.mrb[0].mxu0
  %1083 = vdwg.mxu0
  %v1085 = vsel %vm59, %v658, 0
  %v1088 = vsel %vm59, %v659, 0
  %v1091 = vsel %vm63, %v499, 0
  %1093 = vmatprep.subr.mxu0 0.0
  %1094 = vmatpush1.msra.mxu0 %v1091
  %1095 = vmatprep.subr.mxu0 0.0
  %1096 = vmatpush1.msra.mxu0 0.0
  %1097 = vmatprep.subr.mxu0 0.0
  %1098 = vmatpush1.msra.mxu0 0.0
  %1099 = vmatprep.subr.mxu0 0.0
  %1100 = vmatpush1.msra.mxu0 0.0
  %1101 = vmatprep.subr.mxu0 0.0
  %1102 = vmatpush1.msra.mxu0 0.0
  %1103 = vmatprep.subr.mxu0 0.0
  %1104 = vmatpush1.msra.mxu0 0.0
  %1105 = vmatprep.subr.mxu0 0.0
  %1106 = vmatpush1.msra.mxu0 0.0
  %1107 = vmatprep.subr.mxu0 0.0
  %1108 = vmatpush1.msra.mxu0 0.0
  %1109 = vmatprep.subr.mxu0 0.0
  %1110 = vmatpush1.msra.mxu0 0.0
  %1111 = vmatprep.subr.mxu0 0.0
  %1112 = vmatpush1.msra.mxu0 0.0
  %1113 = vmatprep.subr.mxu0 0.0
  %1114 = vmatpush1.msra.mxu0 0.0
  %1115 = vmatprep.subr.mxu0 0.0
  %1116 = vmatpush1.msra.mxu0 0.0
  %1117 = vmatprep.subr.mxu0 0.0
  %1118 = vmatpush1.msra.mxu0 0.0
  %1119 = vmatprep.subr.mxu0 0.0
  %1120 = vmatpush1.msra.mxu0 0.0
  %1121 = vmatprep.subr.mxu0 0.0
  %1122 = vmatpush1.msra.mxu0 0.0
  %1123 = vmatprep.subr.mxu0 0.0
  %1124 = vmatpush1.msra.mxu0 0.0
  %1125 = vmatprep.subr.mxu0 0.0
  %1126 = vmatpush1.msra.mxu0 0.0
  %1127 = vmatprep.subr.mxu0 0.0
  %1128 = vmatpush1.msra.mxu0 0.0
  %1129 = vmatprep.subr.mxu0 0.0
  %1130 = vmatpush1.msra.mxu0 0.0
  %1131 = vmatprep.subr.mxu0 0.0
  %1132 = vmatpush1.msra.mxu0 0.0
  %1133 = vmatprep.subr.mxu0 0.0
  %1134 = vmatpush1.msra.mxu0 0.0
  %1135 = vmatprep.subr.mxu0 0.0
  %1136 = vmatpush1.msra.mxu0 0.0
  %1137 = vmatprep.subr.mxu0 0.0
  %1138 = vmatpush1.msra.mxu0 0.0
  %1139 = vmatprep.subr.mxu0 0.0
  %1140 = vmatpush1.msra.mxu0 0.0
  %1141 = vmatprep.subr.mxu0 0.0
  %1142 = vmatpush1.msra.mxu0 0.0
  %1143 = vmatprep.subr.mxu0 0.0
  %1144 = vmatpush1.msra.mxu0 0.0
  %1145 = vmatprep.subr.mxu0 0.0
  %1146 = vmatpush1.msra.mxu0 0.0
  %1147 = vmatprep.subr.mxu0 0.0
  %1148 = vmatpush1.msra.mxu0 0.0
  %1149 = vmatprep.subr.mxu0 0.0
  %1150 = vmatpush1.msra.mxu0 0.0
  %1151 = vmatprep.subr.mxu0 0.0
  %1152 = vmatpush1.msra.mxu0 0.0
  %1153 = vmatprep.subr.mxu0 0.0
  %1154 = vmatpush1.msra.mxu0 0.0
  %1155 = vmatprep.subr.mxu0 0.0
  %1156 = vmatpush1.msra.mxu0 0.0
  %1157 = vmatprep.mubr.f32.mxu0 0.0
  %1158 = vmatmul.mubr.f32.gmra.mrb[0].mxu0 %v1085
  %v1159 = vpop.f32.mrb[0].mxu0
  %v1160 = vadd.f32 0.0, %v1159
  %v1161 = vpop.f32.mrb[0].mxu0
  %1162 = vmatprep.mubr.f32.mxu0 0.0
  %1163 = vmatmul.mubr.f32.gmra.mrb[0].mxu0 %v1088
  %v1164 = vpop.f32.mrb[0].mxu0
  %v1165 = vadd.f32 0.0, %v1164
  %v1166 = vpop.f32.mrb[0].mxu0
  %1167 = vdwg.mxu0
  %v1169 = vsel %vm59, %v660, 0
  %v1172 = vsel %vm59, %v661, 0
  %v1175 = vsel %vm63, %v572, 0
  %1177 = vmatprep.subr.mxu0 0.0
  %1178 = vmatpush1.msra.mxu0 %v1175
  %1179 = vmatprep.subr.mxu0 0.0
  %1180 = vmatpush1.msra.mxu0 0.0
  %1181 = vmatprep.subr.mxu0 0.0
  %1182 = vmatpush1.msra.mxu0 0.0
  %1183 = vmatprep.subr.mxu0 0.0
  %1184 = vmatpush1.msra.mxu0 0.0
  %1185 = vmatprep.subr.mxu0 0.0
  %1186 = vmatpush1.msra.mxu0 0.0
  %1187 = vmatprep.subr.mxu0 0.0
  %1188 = vmatpush1.msra.mxu0 0.0
  %1189 = vmatprep.subr.mxu0 0.0
  %1190 = vmatpush1.msra.mxu0 0.0
  %1191 = vmatprep.subr.mxu0 0.0
  %1192 = vmatpush1.msra.mxu0 0.0
  %1193 = vmatprep.subr.mxu0 0.0
  %1194 = vmatpush1.msra.mxu0 0.0
  %1195 = vmatprep.subr.mxu0 0.0
  %1196 = vmatpush1.msra.mxu0 0.0
  %1197 = vmatprep.subr.mxu0 0.0
  %1198 = vmatpush1.msra.mxu0 0.0
  %1199 = vmatprep.subr.mxu0 0.0
  %1200 = vmatpush1.msra.mxu0 0.0
  %1201 = vmatprep.subr.mxu0 0.0
  %1202 = vmatpush1.msra.mxu0 0.0
  %1203 = vmatprep.subr.mxu0 0.0
  %1204 = vmatpush1.msra.mxu0 0.0
  %1205 = vmatprep.subr.mxu0 0.0
  %1206 = vmatpush1.msra.mxu0 0.0
  %1207 = vmatprep.subr.mxu0 0.0
  %1208 = vmatpush1.msra.mxu0 0.0
  %1209 = vmatprep.subr.mxu0 0.0
  %1210 = vmatpush1.msra.mxu0 0.0
  %1211 = vmatprep.subr.mxu0 0.0
  %1212 = vmatpush1.msra.mxu0 0.0
  %1213 = vmatprep.subr.mxu0 0.0
  %1214 = vmatpush1.msra.mxu0 0.0
  %1215 = vmatprep.subr.mxu0 0.0
  %1216 = vmatpush1.msra.mxu0 0.0
  %1217 = vmatprep.subr.mxu0 0.0
  %1218 = vmatpush1.msra.mxu0 0.0
  %1219 = vmatprep.subr.mxu0 0.0
  %1220 = vmatpush1.msra.mxu0 0.0
  %1221 = vmatprep.subr.mxu0 0.0
  %1222 = vmatpush1.msra.mxu0 0.0
  %1223 = vmatprep.subr.mxu0 0.0
  %1224 = vmatpush1.msra.mxu0 0.0
  %1225 = vmatprep.subr.mxu0 0.0
  %1226 = vmatpush1.msra.mxu0 0.0
  %1227 = vmatprep.subr.mxu0 0.0
  %1228 = vmatpush1.msra.mxu0 0.0
  %1229 = vmatprep.subr.mxu0 0.0
  %1230 = vmatpush1.msra.mxu0 0.0
  %1231 = vmatprep.subr.mxu0 0.0
  %1232 = vmatpush1.msra.mxu0 0.0
  %1233 = vmatprep.subr.mxu0 0.0
  %1234 = vmatpush1.msra.mxu0 0.0
  %1235 = vmatprep.subr.mxu0 0.0
  %1236 = vmatpush1.msra.mxu0 0.0
  %1237 = vmatprep.subr.mxu0 0.0
  %1238 = vmatpush1.msra.mxu0 0.0
  %1239 = vmatprep.subr.mxu0 0.0
  %1240 = vmatpush1.msra.mxu0 0.0
  %1241 = vmatprep.mubr.f32.mxu0 0.0
  %1242 = vmatmul.mubr.f32.gmra.mrb[0].mxu0 %v1169
  %v1243 = vpop.f32.mrb[0].mxu0
  %v1244 = vadd.f32 0.0, %v1243
  %v1245 = vpop.f32.mrb[0].mxu0
  %1246 = vmatprep.mubr.f32.mxu0 0.0
  %1247 = vmatmul.mubr.f32.gmra.mrb[0].mxu0 %v1172
  %v1248 = vpop.f32.mrb[0].mxu0
  %v1249 = vadd.f32 0.0, %v1248
  %v1250 = vpop.f32.mrb[0].mxu0
  %1251 = vdwg.mxu0
  %v1253 = vsel %vm59, %v662, 0
  %v1256 = vsel %vm59, %v663, 0
  %v1259 = vsel %vm63, %v645, 0
  %1261 = vmatprep.subr.mxu0 0.0
  %1262 = vmatpush1.msra.mxu0 %v1259
  %1263 = vmatprep.subr.mxu0 0.0
  %1264 = vmatpush1.msra.mxu0 0.0
  %1265 = vmatprep.subr.mxu0 0.0
  %1266 = vmatpush1.msra.mxu0 0.0
  %1267 = vmatprep.subr.mxu0 0.0
  %1268 = vmatpush1.msra.mxu0 0.0
  %1269 = vmatprep.subr.mxu0 0.0
  %1270 = vmatpush1.msra.mxu0 0.0
  %1271 = vmatprep.subr.mxu0 0.0
  %1272 = vmatpush1.msra.mxu0 0.0
  %1273 = vmatprep.subr.mxu0 0.0
  %1274 = vmatpush1.msra.mxu0 0.0
  %1275 = vmatprep.subr.mxu0 0.0
  %1276 = vmatpush1.msra.mxu0 0.0
  %1277 = vmatprep.subr.mxu0 0.0
  %1278 = vmatpush1.msra.mxu0 0.0
  %1279 = vmatprep.subr.mxu0 0.0
  %1280 = vmatpush1.msra.mxu0 0.0
  %1281 = vmatprep.subr.mxu0 0.0
  %1282 = vmatpush1.msra.mxu0 0.0
  %1283 = vmatprep.subr.mxu0 0.0
  %1284 = vmatpush1.msra.mxu0 0.0
  %1285 = vmatprep.subr.mxu0 0.0
  %1286 = vmatpush1.msra.mxu0 0.0
  %1287 = vmatprep.subr.mxu0 0.0
  %1288 = vmatpush1.msra.mxu0 0.0
  %1289 = vmatprep.subr.mxu0 0.0
  %1290 = vmatpush1.msra.mxu0 0.0
  %1291 = vmatprep.subr.mxu0 0.0
  %1292 = vmatpush1.msra.mxu0 0.0
  %1293 = vmatprep.subr.mxu0 0.0
  %1294 = vmatpush1.msra.mxu0 0.0
  %1295 = vmatprep.subr.mxu0 0.0
  %1296 = vmatpush1.msra.mxu0 0.0
  %1297 = vmatprep.subr.mxu0 0.0
  %1298 = vmatpush1.msra.mxu0 0.0
  %1299 = vmatprep.subr.mxu0 0.0
  %1300 = vmatpush1.msra.mxu0 0.0
  %1301 = vmatprep.subr.mxu0 0.0
  %1302 = vmatpush1.msra.mxu0 0.0
  %1303 = vmatprep.subr.mxu0 0.0
  %1304 = vmatpush1.msra.mxu0 0.0
  %1305 = vmatprep.subr.mxu0 0.0
  %1306 = vmatpush1.msra.mxu0 0.0
  %1307 = vmatprep.subr.mxu0 0.0
  %1308 = vmatpush1.msra.mxu0 0.0
  %1309 = vmatprep.subr.mxu0 0.0
  %1310 = vmatpush1.msra.mxu0 0.0
  %1311 = vmatprep.subr.mxu0 0.0
  %1312 = vmatpush1.msra.mxu0 0.0
  %1313 = vmatprep.subr.mxu0 0.0
  %1314 = vmatpush1.msra.mxu0 0.0
  %1315 = vmatprep.subr.mxu0 0.0
  %1316 = vmatpush1.msra.mxu0 0.0
  %1317 = vmatprep.subr.mxu0 0.0
  %1318 = vmatpush1.msra.mxu0 0.0
  %1319 = vmatprep.subr.mxu0 0.0
  %1320 = vmatpush1.msra.mxu0 0.0
  %1321 = vmatprep.subr.mxu0 0.0
  %1322 = vmatpush1.msra.mxu0 0.0
  %1323 = vmatprep.subr.mxu0 0.0
  %1324 = vmatpush1.msra.mxu0 0.0
  %1325 = vmatprep.mubr.f32.mxu0 0.0
  %1326 = vmatmul.mubr.f32.gmra.mrb[0].mxu0 %v1253
  %v1327 = vpop.f32.mrb[0].mxu0
  %v1328 = vadd.f32 0.0, %v1327
  %v1329 = vpop.f32.mrb[0].mxu0
  %1330 = vmatprep.mubr.f32.mxu0 0.0
  %1331 = vmatmul.mubr.f32.gmra.mrb[0].mxu0 %v1256
  %v1332 = vpop.f32.mrb[0].mxu0
  %v1333 = vadd.f32 0.0, %v1332
  %v1334 = vpop.f32.mrb[0].mxu0
  %1335 = vdwg.mxu0
  %v1336 = vld [vmem:[%s3] sm:$0x1]
  %v1338 = vlaneseq
  %v1339 = vshrl.u32 %v1338, 7
  %v1340 = vsub.s32 0, %v1339
  %v1341 = vrot.slane %v1336, %v1340
  %v1343 = vadd.f32 %v740, %v1341
  %v1344 = vadd.f32 %v745, %v1341
  %v1345 = vadd.f32 %v824, %v1341
  %v1346 = vadd.f32 %v829, %v1341
  %v1347 = vadd.f32 %v908, %v1341
  %v1348 = vadd.f32 %v913, %v1341
  %v1349 = vadd.f32 %v992, %v1341
  %v1350 = vadd.f32 %v997, %v1341
  %v1351 = vadd.f32 %v1076, %v1341
  %v1352 = vadd.f32 %v1081, %v1341
  %v1353 = vadd.f32 %v1160, %v1341
  %v1354 = vadd.f32 %v1165, %v1341
  %v1355 = vadd.f32 %v1244, %v1341
  %v1356 = vadd.f32 %v1249, %v1341
  %v1357 = vadd.f32 %v1328, %v1341
  %v1358 = vadd.f32 %v1333, %v1341
  %v1359 = vmax.f32 %v1343, 0.0
  %v1360 = vmax.f32 %v1344, 0.0
  %v1361 = vmax.f32 %v1345, 0.0
  %v1362 = vmax.f32 %v1346, 0.0
  %v1363 = vmax.f32 %v1347, 0.0
  %v1364 = vmax.f32 %v1348, 0.0
  %v1365 = vmax.f32 %v1349, 0.0
  %v1366 = vmax.f32 %v1350, 0.0
  %v1367 = vmax.f32 %v1351, 0.0
  %v1368 = vmax.f32 %v1352, 0.0
  %v1369 = vmax.f32 %v1353, 0.0
  %v1370 = vmax.f32 %v1354, 0.0
  %v1371 = vmax.f32 %v1355, 0.0
  %v1372 = vmax.f32 %v1356, 0.0
  %v1373 = vmax.f32 %v1357, 0.0
  %v1374 = vmax.f32 %v1358, 0.0
  %v1375 = vpack.c.bf16 %v1360, %v1359
  %v1376 = vpack.c.bf16 %v1362, %v1361
  %v1377 = vpack.c.bf16 %v1364, %v1363
  %v1378 = vpack.c.bf16 %v1366, %v1365
  %v1379 = vpack.c.bf16 %v1368, %v1367
  %v1380 = vpack.c.bf16 %v1370, %v1369
  %v1381 = vpack.c.bf16 %v1372, %v1371
  %v1382 = vpack.c.bf16 %v1374, %v1373
  %v1383 = vld [vmem:[%s4] sm:$0xf]
  %v1384 = vld [vmem:[%s4 + $0x4] sm:$0xf]
  %v1385 = vld [vmem:[%s4 + $0x8] sm:$0xf]
  %v1386 = vld [vmem:[%s4 + $0xc] sm:$0xf]
  %v1387 = vld [vmem:[%s4 + $0x10] sm:$0xf]
  %v1388 = vld [vmem:[%s4 + $0x14] sm:$0xf]
  %v1389 = vld [vmem:[%s4 + $0x18] sm:$0xf]
  %v1390 = vld [vmem:[%s4 + $0x1c] sm:$0xf]
  %v1391 = vld [vmem:[%s5] sm:$0x1]
  %v1393 = vlaneseq
  %v1394 = vshrl.u32 %v1393, 7
  %v1395 = vsub.s32 0, %v1394
  %v1396 = vrot.slane %v1391, %v1395
  %v1406 = vunpack.c.l.b16 %v1383
  %v1407 = vunpack.c.l.b16 %v1384
  %v1408 = vunpack.c.l.b16 %v1385
  %v1409 = vunpack.c.l.b16 %v1386
  %v1410 = vunpack.c.l.b16 %v1387
  %v1411 = vunpack.c.l.b16 %v1388
  %v1412 = vunpack.c.l.b16 %v1389
  %v1413 = vunpack.c.l.b16 %v1390
  %v1414 = vpack.c.b16 %v1407, %v1406
  %v1415 = vpack.c.b16 %v1409, %v1408
  %v1416 = vpack.c.b16 %v1411, %v1410
  %v1417 = vpack.c.b16 %v1413, %v1412
  %vm1422 = vcmask 523264
  %v1424 = vsel %vm1422, %v1375, 0
  %v1427 = vsel %vm1422, %v1376, 0
  %v1430 = vsel %vm1422, %v1377, 0
  %v1433 = vsel %vm1422, %v1378, 0
  %v1436 = vsel %vm1422, %v1379, 0
  %v1439 = vsel %vm1422, %v1380, 0
  %v1442 = vsel %vm1422, %v1381, 0
  %v1445 = vsel %vm1422, %v1382, 0
  %1447 = vmatprep.subr.bf16.mxu0 0
  %1448 = vmatpush1.bf16.msra.mxu0 %v1414
  %1449 = vmatprep.subr.bf16.mxu0 0
  %1450 = vmatpush1.bf16.msra.mxu0 %v1415
  %1451 = vmatprep.subr.bf16.mxu0 0
  %1452 = vmatpush1.bf16.msra.mxu0 %v1416
  %1453 = vmatprep.subr.bf16.mxu0 0
  %1454 = vmatpush1.bf16.msra.mxu0 %v1417
  %1455 = vmatprep.subr.bf16.mxu0 0
  %1456 = vmatpush1.bf16.msra.mxu0 0
  %1457 = vmatprep.subr.bf16.mxu0 0
  %1458 = vmatpush1.bf16.msra.mxu0 0
  %1459 = vmatprep.subr.bf16.mxu0 0
  %1460 = vmatpush1.bf16.msra.mxu0 0
  %1461 = vmatprep.subr.bf16.mxu0 0
  %1462 = vmatpush1.bf16.msra.mxu0 0
  %1463 = vmatprep.subr.bf16.mxu0 0
  %1464 = vmatpush1.bf16.msra.mxu0 0
  %1465 = vmatprep.subr.bf16.mxu0 0
  %1466 = vmatpush1.bf16.msra.mxu0 0
  %1467 = vmatprep.subr.bf16.mxu0 0
  %1468 = vmatpush1.bf16.msra.mxu0 0
  %1469 = vmatprep.subr.bf16.mxu0 0
  %1470 = vmatpush1.bf16.msra.mxu0 0
  %1471 = vmatprep.subr.bf16.mxu0 0
  %1472 = vmatpush1.bf16.msra.mxu0 0
  %1473 = vmatprep.subr.bf16.mxu0 0
  %1474 = vmatpush1.bf16.msra.mxu0 0
  %1475 = vmatprep.subr.bf16.mxu0 0
  %1476 = vmatpush1.bf16.msra.mxu0 0
  %1477 = vmatprep.subr.bf16.mxu0 0
  %1478 = vmatpush1.bf16.msra.mxu0 0
  %1479 = vmatprep.mubr.bf16.mxu0 0
  %1480 = vmatmul.mubr.bf16.gmra.mrb[0].mxu0 %v1424
  %v1481 = vpop.f32.mrb[0].mxu0
  %v1482 = vadd.f32 %v1396, %v1481
  %v1483 = vpop.f32.mrb[0].mxu0
  %v1484 = vpop.f32.mrb[0].mxu0
  %v1485 = vadd.f32 %v1396, %v1484
  %v1486 = vpop.f32.mrb[0].mxu0
  %1487 = vmatprep.mubr.bf16.mxu0 0
  %1488 = vmatmul.mubr.bf16.gmra.mrb[0].mxu0 %v1427
  %v1489 = vpop.f32.mrb[0].mxu0
  %v1490 = vadd.f32 %v1396, %v1489
  %v1491 = vpop.f32.mrb[0].mxu0
  %v1492 = vpop.f32.mrb[0].mxu0
  %v1493 = vadd.f32 %v1396, %v1492
  %v1494 = vpop.f32.mrb[0].mxu0
  %1495 = vmatprep.mubr.bf16.mxu0 0
  %1496 = vmatmul.mubr.bf16.gmra.mrb[0].mxu0 %v1430
  %v1497 = vpop.f32.mrb[0].mxu0
  %v1498 = vadd.f32 %v1396, %v1497
  %v1499 = vpop.f32.mrb[0].mxu0
  %v1500 = vpop.f32.mrb[0].mxu0
  %v1501 = vadd.f32 %v1396, %v1500
  %v1502 = vpop.f32.mrb[0].mxu0
  %1503 = vmatprep.mubr.bf16.mxu0 0
  %1504 = vmatmul.mubr.bf16.gmra.mrb[0].mxu0 %v1433
  %v1505 = vpop.f32.mrb[0].mxu0
  %v1506 = vadd.f32 %v1396, %v1505
  %v1507 = vpop.f32.mrb[0].mxu0
  %v1508 = vpop.f32.mrb[0].mxu0
  %v1509 = vadd.f32 %v1396, %v1508
  %v1510 = vpop.f32.mrb[0].mxu0
  %1511 = vmatprep.mubr.bf16.mxu0 0
  %1512 = vmatmul.mubr.bf16.gmra.mrb[0].mxu0 %v1436
  %v1513 = vpop.f32.mrb[0].mxu0
  %v1514 = vadd.f32 %v1396, %v1513
  %v1515 = vpop.f32.mrb[0].mxu0
  %v1516 = vpop.f32.mrb[0].mxu0
  %v1517 = vadd.f32 %v1396, %v1516
  %v1518 = vpop.f32.mrb[0].mxu0
  %1519 = vmatprep.mubr.bf16.mxu0 0
  %1520 = vmatmul.mubr.bf16.gmra.mrb[0].mxu0 %v1439
  %v1521 = vpop.f32.mrb[0].mxu0
  %v1522 = vadd.f32 %v1396, %v1521
  %v1523 = vpop.f32.mrb[0].mxu0
  %v1524 = vpop.f32.mrb[0].mxu0
  %v1525 = vadd.f32 %v1396, %v1524
  %v1526 = vpop.f32.mrb[0].mxu0
  %1527 = vmatprep.mubr.bf16.mxu0 0
  %1528 = vmatmul.mubr.bf16.gmra.mrb[0].mxu0 %v1442
  %v1529 = vpop.f32.mrb[0].mxu0
  %v1530 = vadd.f32 %v1396, %v1529
  %v1531 = vpop.f32.mrb[0].mxu0
  %v1532 = vpop.f32.mrb[0].mxu0
  %v1533 = vadd.f32 %v1396, %v1532
  %v1534 = vpop.f32.mrb[0].mxu0
  %1535 = vmatprep.mubr.bf16.mxu0 0
  %1536 = vmatmul.mubr.bf16.gmra.mrb[0].mxu0 %v1445
  %v1537 = vpop.f32.mrb[0].mxu0
  %v1538 = vadd.f32 %v1396, %v1537
  %v1539 = vpop.f32.mrb[0].mxu0
  %v1540 = vpop.f32.mrb[0].mxu0
  %v1541 = vadd.f32 %v1396, %v1540
  %v1542 = vpop.f32.mrb[0].mxu0
  %1543 = vdwg.mxu0
  %v1544 = vmax.f32 %v1482, 0.0
  %v1545 = vmax.f32 %v1485, 0.0
  %v1546 = vmax.f32 %v1490, 0.0
  %v1547 = vmax.f32 %v1493, 0.0
  %v1548 = vmax.f32 %v1498, 0.0
  %v1549 = vmax.f32 %v1501, 0.0
  %v1550 = vmax.f32 %v1506, 0.0
  %v1551 = vmax.f32 %v1509, 0.0
  %v1552 = vmax.f32 %v1514, 0.0
  %v1553 = vmax.f32 %v1517, 0.0
  %v1554 = vmax.f32 %v1522, 0.0
  %v1555 = vmax.f32 %v1525, 0.0
  %v1556 = vmax.f32 %v1530, 0.0
  %v1557 = vmax.f32 %v1533, 0.0
  %v1558 = vmax.f32 %v1538, 0.0
  %v1559 = vmax.f32 %v1541, 0.0
  %v1560 = vpack.c.bf16 %v1545, %v1544
  %v1561 = vpack.c.bf16 %v1547, %v1546
  %v1562 = vpack.c.bf16 %v1549, %v1548
  %v1563 = vpack.c.bf16 %v1551, %v1550
  %v1564 = vpack.c.bf16 %v1553, %v1552
  %v1565 = vpack.c.bf16 %v1555, %v1554
  %v1566 = vpack.c.bf16 %v1557, %v1556
  %v1567 = vpack.c.bf16 %v1559, %v1558
  %v1568 = vld [vmem:[%s6] sm:$0xff]
  %v1569 = vld [vmem:[%s6 + $0x8] sm:$0xff]
  %v1570 = vld [vmem:[%s6 + $0x10] sm:$0xff]
  %v1571 = vld [vmem:[%s6 + $0x18] sm:$0xff]
  %v1572 = vld [vmem:[%s6 + $0x20] sm:$0xff]
  %v1573 = vld [vmem:[%s6 + $0x28] sm:$0xff]
  %v1574 = vld [vmem:[%s6 + $0x30] sm:$0xff]
  %v1575 = vld [vmem:[%s6 + $0x38] sm:$0xff]
  %v1576 = vld [vmem:[%s6 + $0x40] sm:$0xff]
  %v1577 = vld [vmem:[%s6 + $0x48] sm:$0xff]
  %v1578 = vld [vmem:[%s6 + $0x50] sm:$0xff]
  %v1579 = vld [vmem:[%s6 + $0x58] sm:$0xff]
  %v1580 = vld [vmem:[%s6 + $0x60] sm:$0xff]
  %v1581 = vld [vmem:[%s6 + $0x68] sm:$0xff]
  %v1582 = vld [vmem:[%s6 + $0x70] sm:$0xff]
  %v1583 = vld [vmem:[%s6 + $0x78] sm:$0xff]
  %v1584 = vld [vmem:[%s6 + $0x80] sm:$0xff]
  %v1585 = vld [vmem:[%s6 + $0x88] sm:$0xff]
  %v1586 = vld [vmem:[%s6 + $0x90] sm:$0xff]
  %v1587 = vld [vmem:[%s6 + $0x98] sm:$0xff]
  %v1588 = vld [vmem:[%s6 + $0xa0] sm:$0xff]
  %v1589 = vld [vmem:[%s6 + $0xa8] sm:$0xff]
  %v1590 = vld [vmem:[%s6 + $0xb0] sm:$0xff]
  %v1591 = vld [vmem:[%s6 + $0xb8] sm:$0xff]
  %v1592 = vld [vmem:[%s6 + $0xc0] sm:$0xff]
  %v1593 = vld [vmem:[%s6 + $0xc8] sm:$0xff]
  %v1594 = vld [vmem:[%s6 + $0xd0] sm:$0xff]
  %v1595 = vld [vmem:[%s6 + $0xd8] sm:$0xff]
  %v1596 = vld [vmem:[%s6 + $0xe0] sm:$0xff]
  %v1597 = vld [vmem:[%s6 + $0xe8] sm:$0xff]
  %v1598 = vld [vmem:[%s6 + $0xf0] sm:$0xff]
  %v1599 = vld [vmem:[%s6 + $0xf8] sm:$0xff]
  %v1600 = vld [vmem:[%s6 + $0x100] sm:$0xff]
  %v1601 = vld [vmem:[%s6 + $0x108] sm:$0xff]
  %v1602 = vld [vmem:[%s6 + $0x110] sm:$0xff]
  %v1603 = vld [vmem:[%s6 + $0x118] sm:$0xff]
  %v1604 = vld [vmem:[%s6 + $0x120] sm:$0xff]
  %v1605 = vld [vmem:[%s6 + $0x128] sm:$0xff]
  %v1606 = vld [vmem:[%s6 + $0x130] sm:$0xff]
  %v1607 = vld [vmem:[%s6 + $0x138] sm:$0xff]
  %v1608 = vld [vmem:[%s6 + $0x140] sm:$0xff]
  %v1609 = vld [vmem:[%s6 + $0x148] sm:$0xff]
  %v1610 = vld [vmem:[%s6 + $0x150] sm:$0xff]
  %v1611 = vld [vmem:[%s6 + $0x158] sm:$0xff]
  %v1612 = vld [vmem:[%s6 + $0x160] sm:$0xff]
  %v1613 = vld [vmem:[%s6 + $0x168] sm:$0xff]
  %v1614 = vld [vmem:[%s6 + $0x170] sm:$0xff]
  %v1615 = vld [vmem:[%s6 + $0x178] sm:$0xff]
  %v1616 = vld [vmem:[%s6 + $0x180] sm:$0xff]
  %v1617 = vld [vmem:[%s6 + $0x188] sm:$0xff]
  %v1618 = vld [vmem:[%s6 + $0x190] sm:$0xff]
  %v1619 = vld [vmem:[%s6 + $0x198] sm:$0xff]
  %v1620 = vld [vmem:[%s6 + $0x1a0] sm:$0xff]
  %v1621 = vld [vmem:[%s6 + $0x1a8] sm:$0xff]
  %v1622 = vld [vmem:[%s6 + $0x1b0] sm:$0xff]
  %v1623 = vld [vmem:[%s6 + $0x1b8] sm:$0xff]
  %v1624 = vld [vmem:[%s6 + $0x1c0] sm:$0xff]
  %v1625 = vld [vmem:[%s6 + $0x1c8] sm:$0xff]
  %v1626 = vld [vmem:[%s6 + $0x1d0] sm:$0xff]
  %v1627 = vld [vmem:[%s6 + $0x1d8] sm:$0xff]
  %v1628 = vld [vmem:[%s6 + $0x1e0] sm:$0xff]
  %v1629 = vld [vmem:[%s6 + $0x1e8] sm:$0xff]
  %v1630 = vld [vmem:[%s6 + $0x1f0] sm:$0xff]
  %v1631 = vld [vmem:[%s6 + $0x1f8] sm:$0xff]
  %v1632 = vld [vmem:[%s7] sm:$0xff]
  %v1634 = vlaneseq
  %v1635 = vshrl.u32 %v1634, 7
  %v1636 = vsub.s32 0, %v1635
  %v1637 = vrot.slane %v1632, %v1636
  %v1638 = vlaneseq
  %v1639 = vshrl.u32 %v1638, 7
  %v1640 = vsub.s32 1, %v1639
  %v1641 = vrot.slane %v1632, %v1640
  %v1642 = vlaneseq
  %v1643 = vshrl.u32 %v1642, 7
  %v1644 = vsub.s32 2, %v1643
  %v1645 = vrot.slane %v1632, %v1644
  %v1646 = vlaneseq
  %v1647 = vshrl.u32 %v1646, 7
  %v1648 = vsub.s32 3, %v1647
  %v1649 = vrot.slane %v1632, %v1648
  %v1650 = vlaneseq
  %v1651 = vshrl.u32 %v1650, 7
  %v1652 = vsub.s32 4, %v1651
  %v1653 = vrot.slane %v1632, %v1652
  %v1654 = vlaneseq
  %v1655 = vshrl.u32 %v1654, 7
  %v1656 = vsub.s32 5, %v1655
  %v1657 = vrot.slane %v1632, %v1656
  %v1658 = vlaneseq
  %v1659 = vshrl.u32 %v1658, 7
  %v1660 = vsub.s32 6, %v1659
  %v1661 = vrot.slane %v1632, %v1660
  %v1662 = vlaneseq
  %v1663 = vshrl.u32 %v1662, 7
  %v1664 = vsub.s32 7, %v1663
  %v1665 = vrot.slane %v1632, %v1664
  %v1738 = vunpack.c.l.b16 %v1568
  %v1739 = vunpack.c.h.b16 %v1568
  %v1740 = vunpack.c.l.b16 %v1569
  %v1741 = vunpack.c.h.b16 %v1569
  %v1742 = vunpack.c.l.b16 %v1570
  %v1743 = vunpack.c.h.b16 %v1570
  %v1744 = vunpack.c.l.b16 %v1571
  %v1745 = vunpack.c.h.b16 %v1571
  %v1746 = vunpack.c.l.b16 %v1572
  %v1747 = vunpack.c.h.b16 %v1572
  %v1748 = vunpack.c.l.b16 %v1573
  %v1749 = vunpack.c.h.b16 %v1573
  %v1750 = vunpack.c.l.b16 %v1574
  %v1751 = vunpack.c.h.b16 %v1574
  %v1752 = vunpack.c.l.b16 %v1575
  %v1753 = vunpack.c.h.b16 %v1575
  %v1754 = vunpack.c.l.b16 %v1576
  %v1755 = vunpack.c.h.b16 %v1576
  %v1756 = vunpack.c.l.b16 %v1577
  %v1757 = vunpack.c.h.b16 %v1577
  %v1758 = vunpack.c.l.b16 %v1578
  %v1759 = vunpack.c.h.b16 %v1578
  %v1760 = vunpack.c.l.b16 %v1579
  %v1761 = vunpack.c.h.b16 %v1579
  %v1762 = vunpack.c.l.b16 %v1580
  %v1763 = vunpack.c.h.b16 %v1580
  %v1764 = vunpack.c.l.b16 %v1581
  %v1765 = vunpack.c.h.b16 %v1581
  %v1766 = vunpack.c.l.b16 %v1582
  %v1767 = vunpack.c.h.b16 %v1582
  %v1768 = vunpack.c.l.b16 %v1583
  %v1769 = vunpack.c.h.b16 %v1583
  %v1770 = vunpack.c.l.b16 %v1584
  %v1771 = vunpack.c.h.b16 %v1584
  %v1772 = vunpack.c.l.b16 %v1585
  %v1773 = vunpack.c.h.b16 %v1585
  %v1774 = vunpack.c.l.b16 %v1586
  %v1775 = vunpack.c.h.b16 %v1586
  %v1776 = vunpack.c.l.b16 %v1587
  %v1777 = vunpack.c.h.b16 %v1587
  %v1778 = vunpack.c.l.b16 %v1588
  %v1779 = vunpack.c.h.b16 %v1588
  %v1780 = vunpack.c.l.b16 %v1589
  %v1781 = vunpack.c.h.b16 %v1589
  %v1782 = vunpack.c.l.b16 %v1590
  %v1783 = vunpack.c.h.b16 %v1590
  %v1784 = vunpack.c.l.b16 %v1591
  %v1785 = vunpack.c.h.b16 %v1591
  %v1786 = vunpack.c.l.b16 %v1592
  %v1787 = vunpack.c.h.b16 %v1592
  %v1788 = vunpack.c.l.b16 %v1593
  %v1789 = vunpack.c.h.b16 %v1593
  %v1790 = vunpack.c.l.b16 %v1594
  %v1791 = vunpack.c.h.b16 %v1594
  %v1792 = vunpack.c.l.b16 %v1595
  %v1793 = vunpack.c.h.b16 %v1595
  %v1794 = vunpack.c.l.b16 %v1596
  %v1795 = vunpack.c.h.b16 %v1596
  %v1796 = vunpack.c.l.b16 %v1597
  %v1797 = vunpack.c.h.b16 %v1597
  %v1798 = vunpack.c.l.b16 %v1598
  %v1799 = vunpack.c.h.b16 %v1598
  %v1800 = vunpack.c.l.b16 %v1599
  %v1801 = vunpack.c.h.b16 %v1599
  %v1802 = vunpack.c.l.b16 %v1600
  %v1803 = vunpack.c.h.b16 %v1600
  %v1804 = vunpack.c.l.b16 %v1601
  %v1805 = vunpack.c.h.b16 %v1601
  %v1806 = vunpack.c.l.b16 %v1602
  %v1807 = vunpack.c.h.b16 %v1602
  %v1808 = vunpack.c.l.b16 %v1603
  %v1809 = vunpack.c.h.b16 %v1603
  %v1810 = vunpack.c.l.b16 %v1604
  %v1811 = vunpack.c.h.b16 %v1604
  %v1812 = vunpack.c.l.b16 %v1605
  %v1813 = vunpack.c.h.b16 %v1605
  %v1814 = vunpack.c.l.b16 %v1606
  %v1815 = vunpack.c.h.b16 %v1606
  %v1816 = vunpack.c.l.b16 %v1607
  %v1817 = vunpack.c.h.b16 %v1607
  %v1818 = vunpack.c.l.b16 %v1608
  %v1819 = vunpack.c.h.b16 %v1608
  %v1820 = vunpack.c.l.b16 %v1609
  %v1821 = vunpack.c.h.b16 %v1609
  %v1822 = vunpack.c.l.b16 %v1610
  %v1823 = vunpack.c.h.b16 %v1610
  %v1824 = vunpack.c.l.b16 %v1611
  %v1825 = vunpack.c.h.b16 %v1611
  %v1826 = vunpack.c.l.b16 %v1612
  %v1827 = vunpack.c.h.b16 %v1612
  %v1828 = vunpack.c.l.b16 %v1613
  %v1829 = vunpack.c.h.b16 %v1613
  %v1830 = vunpack.c.l.b16 %v1614
  %v1831 = vunpack.c.h.b16 %v1614
  %v1832 = vunpack.c.l.b16 %v1615
  %v1833 = vunpack.c.h.b16 %v1615
  %v1834 = vunpack.c.l.b16 %v1616
  %v1835 = vunpack.c.h.b16 %v1616
  %v1836 = vunpack.c.l.b16 %v1617
  %v1837 = vunpack.c.h.b16 %v1617
  %v1838 = vunpack.c.l.b16 %v1618
  %v1839 = vunpack.c.h.b16 %v1618
  %v1840 = vunpack.c.l.b16 %v1619
  %v1841 = vunpack.c.h.b16 %v1619
  %v1842 = vunpack.c.l.b16 %v1620
  %v1843 = vunpack.c.h.b16 %v1620
  %v1844 = vunpack.c.l.b16 %v1621
  %v1845 = vunpack.c.h.b16 %v1621
  %v1846 = vunpack.c.l.b16 %v1622
  %v1847 = vunpack.c.h.b16 %v1622
  %v1848 = vunpack.c.l.b16 %v1623
  %v1849 = vunpack.c.h.b16 %v1623
  %v1850 = vunpack.c.l.b16 %v1624
  %v1851 = vunpack.c.h.b16 %v1624
  %v1852 = vunpack.c.l.b16 %v1625
  %v1853 = vunpack.c.h.b16 %v1625
  %v1854 = vunpack.c.l.b16 %v1626
  %v1855 = vunpack.c.h.b16 %v1626
  %v1856 = vunpack.c.l.b16 %v1627
  %v1857 = vunpack.c.h.b16 %v1627
  %v1858 = vunpack.c.l.b16 %v1628
  %v1859 = vunpack.c.h.b16 %v1628
  %v1860 = vunpack.c.l.b16 %v1629
  %v1861 = vunpack.c.h.b16 %v1629
  %v1862 = vunpack.c.l.b16 %v1630
  %v1863 = vunpack.c.h.b16 %v1630
  %v1864 = vunpack.c.l.b16 %v1631
  %v1865 = vunpack.c.h.b16 %v1631
  %v1866 = vpack.c.b16 %v1746, %v1738
  %v1867 = vpack.c.b16 %v1747, %v1739
  %v1868 = vpack.c.b16 %v1748, %v1740
  %v1869 = vpack.c.b16 %v1749, %v1741
  %v1870 = vpack.c.b16 %v1750, %v1742
  %v1871 = vpack.c.b16 %v1751, %v1743
  %v1872 = vpack.c.b16 %v1752, %v1744
  %v1873 = vpack.c.b16 %v1753, %v1745
  %v1874 = vpack.c.b16 %v1762, %v1754
  %v1875 = vpack.c.b16 %v1763, %v1755
  %v1876 = vpack.c.b16 %v1764, %v1756
  %v1877 = vpack.c.b16 %v1765, %v1757
  %v1878 = vpack.c.b16 %v1766, %v1758
  %v1879 = vpack.c.b16 %v1767, %v1759
  %v1880 = vpack.c.b16 %v1768, %v1760
  %v1881 = vpack.c.b16 %v1769, %v1761
  %v1882 = vpack.c.b16 %v1778, %v1770
  %v1883 = vpack.c.b16 %v1779, %v1771
  %v1884 = vpack.c.b16 %v1780, %v1772
  %v1885 = vpack.c.b16 %v1781, %v1773
  %v1886 = vpack.c.b16 %v1782, %v1774
  %v1887 = vpack.c.b16 %v1783, %v1775
  %v1888 = vpack.c.b16 %v1784, %v1776
  %v1889 = vpack.c.b16 %v1785, %v1777
  %v1890 = vpack.c.b16 %v1794, %v1786
  %v1891 = vpack.c.b16 %v1795, %v1787
  %v1892 = vpack.c.b16 %v1796, %v1788
  %v1893 = vpack.c.b16 %v1797, %v1789
  %v1894 = vpack.c.b16 %v1798, %v1790
  %v1895 = vpack.c.b16 %v1799, %v1791
  %v1896 = vpack.c.b16 %v1800, %v1792
  %v1897 = vpack.c.b16 %v1801, %v1793
  %v1898 = vpack.c.b16 %v1810, %v1802
  %v1899 = vpack.c.b16 %v1811, %v1803
  %v1900 = vpack.c.b16 %v1812, %v1804
  %v1901 = vpack.c.b16 %v1813, %v1805
  %v1902 = vpack.c.b16 %v1814, %v1806
  %v1903 = vpack.c.b16 %v1815, %v1807
  %v1904 = vpack.c.b16 %v1816, %v1808
  %v1905 = vpack.c.b16 %v1817, %v1809
  %v1906 = vpack.c.b16 %v1826, %v1818
  %v1907 = vpack.c.b16 %v1827, %v1819
  %v1908 = vpack.c.b16 %v1828, %v1820
  %v1909 = vpack.c.b16 %v1829, %v1821
  %v1910 = vpack.c.b16 %v1830, %v1822
  %v1911 = vpack.c.b16 %v1831, %v1823
  %v1912 = vpack.c.b16 %v1832, %v1824
  %v1913 = vpack.c.b16 %v1833, %v1825
  %v1914 = vpack.c.b16 %v1842, %v1834
  %v1915 = vpack.c.b16 %v1843, %v1835
  %v1916 = vpack.c.b16 %v1844, %v1836
  %v1917 = vpack.c.b16 %v1845, %v1837
  %v1918 = vpack.c.b16 %v1846, %v1838
  %v1919 = vpack.c.b16 %v1847, %v1839
  %v1920 = vpack.c.b16 %v1848, %v1840
  %v1921 = vpack.c.b16 %v1849, %v1841
  %v1922 = vpack.c.b16 %v1858, %v1850
  %v1923 = vpack.c.b16 %v1859, %v1851
  %v1924 = vpack.c.b16 %v1860, %v1852
  %v1925 = vpack.c.b16 %v1861, %v1853
  %v1926 = vpack.c.b16 %v1862, %v1854
  %v1927 = vpack.c.b16 %v1863, %v1855
  %v1928 = vpack.c.b16 %v1864, %v1856
  %v1929 = vpack.c.b16 %v1865, %v1857
  %1994 = vmatprep.subr.bf16.mxu0 %v1867
  %1995 = vmatpush1.bf16.msra.mxu0 %v1866
  %1996 = vmatprep.subr.bf16.mxu0 %v1875
  %1997 = vmatpush1.bf16.msra.mxu0 %v1874
  %1998 = vmatprep.subr.bf16.mxu0 %v1883
  %1999 = vmatpush1.bf16.msra.mxu0 %v1882
  %2000 = vmatprep.subr.bf16.mxu0 %v1891
  %2001 = vmatpush1.bf16.msra.mxu0 %v1890
  %2002 = vmatprep.subr.bf16.mxu0 %v1899
  %2003 = vmatpush1.bf16.msra.mxu0 %v1898
  %2004 = vmatprep.subr.bf16.mxu0 %v1907
  %2005 = vmatpush1.bf16.msra.mxu0 %v1906
  %2006 = vmatprep.subr.bf16.mxu0 %v1915
  %2007 = vmatpush1.bf16.msra.mxu0 %v1914
  %2008 = vmatprep.subr.bf16.mxu0 %v1923
  %2009 = vmatpush1.bf16.msra.mxu0 %v1922
  %2010 = vmatprep.subr.bf16.mxu0 0
  %2011 = vmatpush1.bf16.msra.mxu0 0
  %2012 = vmatprep.subr.bf16.mxu0 0
  %2013 = vmatpush1.bf16.msra.mxu0 0
  %2014 = vmatprep.subr.bf16.mxu0 0
  %2015 = vmatpush1.bf16.msra.mxu0 0
  %2016 = vmatprep.subr.bf16.mxu0 0
  %2017 = vmatpush1.bf16.msra.mxu0 0
  %2018 = vmatprep.subr.bf16.mxu0 0
  %2019 = vmatpush1.bf16.msra.mxu0 0
  %2020 = vmatprep.subr.bf16.mxu0 0
  %2021 = vmatpush1.bf16.msra.mxu0 0
  %2022 = vmatprep.subr.bf16.mxu0 0
  %2023 = vmatpush1.bf16.msra.mxu0 0
  %2024 = vmatprep.subr.bf16.mxu0 0
  %2025 = vmatpush1.bf16.msra.mxu0 0
  %2026 = vmatprep.mubr.bf16.mxu0 0
  %2027 = vmatmul.mubr.bf16.gmra.mrb[0].mxu0 %v1560
  %v2028 = vpop.f32.mrb[0].mxu0
  %v2029 = vadd.f32 %v1637, %v2028
  %v2030 = vpop.f32.mrb[0].mxu0
  %v2031 = vadd.f32 %v1641, %v2030
  %v2032 = vpop.f32.mrb[0].mxu0
  %v2033 = vadd.f32 %v1637, %v2032
  %v2034 = vpop.f32.mrb[0].mxu0
  %v2035 = vadd.f32 %v1641, %v2034
  %2036 = vmatprep.mubr.bf16.mxu0 0
  %2037 = vmatmul.mubr.bf16.gmra.mrb[0].mxu0 %v1561
  %v2038 = vpop.f32.mrb[0].mxu0
  %v2039 = vadd.f32 %v1637, %v2038
  %v2040 = vpop.f32.mrb[0].mxu0
  %v2041 = vadd.f32 %v1641, %v2040
  %v2042 = vpop.f32.mrb[0].mxu0
  %v2043 = vadd.f32 %v1637, %v2042
  %v2044 = vpop.f32.mrb[0].mxu0
  %v2045 = vadd.f32 %v1641, %v2044
  %2046 = vmatprep.mubr.bf16.mxu0 0
  %2047 = vmatmul.mubr.bf16.gmra.mrb[0].mxu0 %v1562
  %v2048 = vpop.f32.mrb[0].mxu0
  %v2049 = vadd.f32 %v1637, %v2048
  %v2050 = vpop.f32.mrb[0].mxu0
  %v2051 = vadd.f32 %v1641, %v2050
  %v2052 = vpop.f32.mrb[0].mxu0
  %v2053 = vadd.f32 %v1637, %v2052
  %v2054 = vpop.f32.mrb[0].mxu0
  %v2055 = vadd.f32 %v1641, %v2054
  %2056 = vmatprep.mubr.bf16.mxu0 0
  %2057 = vmatmul.mubr.bf16.gmra.mrb[0].mxu0 %v1563
  %v2058 = vpop.f32.mrb[0].mxu0
  %v2059 = vadd.f32 %v1637, %v2058
  %v2060 = vpop.f32.mrb[0].mxu0
  %v2061 = vadd.f32 %v1641, %v2060
  %v2062 = vpop.f32.mrb[0].mxu0
  %v2063 = vadd.f32 %v1637, %v2062
  %v2064 = vpop.f32.mrb[0].mxu0
  %v2065 = vadd.f32 %v1641, %v2064
  %2066 = vmatprep.mubr.bf16.mxu0 0
  %2067 = vmatmul.mubr.bf16.gmra.mrb[0].mxu0 %v1564
  %v2068 = vpop.f32.mrb[0].mxu0
  %v2069 = vadd.f32 %v1637, %v2068
  %v2070 = vpop.f32.mrb[0].mxu0
  %v2071 = vadd.f32 %v1641, %v2070
  %v2072 = vpop.f32.mrb[0].mxu0
  %v2073 = vadd.f32 %v1637, %v2072
  %v2074 = vpop.f32.mrb[0].mxu0
  %v2075 = vadd.f32 %v1641, %v2074
  %2076 = vmatprep.mubr.bf16.mxu0 0
  %2077 = vmatmul.mubr.bf16.gmra.mrb[0].mxu0 %v1565
  %v2078 = vpop.f32.mrb[0].mxu0
  %v2079 = vadd.f32 %v1637, %v2078
  %v2080 = vpop.f32.mrb[0].mxu0
  %v2081 = vadd.f32 %v1641, %v2080
  %v2082 = vpop.f32.mrb[0].mxu0
  %v2083 = vadd.f32 %v1637, %v2082
  %v2084 = vpop.f32.mrb[0].mxu0
  %v2085 = vadd.f32 %v1641, %v2084
  %2086 = vmatprep.mubr.bf16.mxu0 0
  %2087 = vmatmul.mubr.bf16.gmra.mrb[0].mxu0 %v1566
  %v2088 = vpop.f32.mrb[0].mxu0
  %v2089 = vadd.f32 %v1637, %v2088
  %v2090 = vpop.f32.mrb[0].mxu0
  %v2091 = vadd.f32 %v1641, %v2090
  %v2092 = vpop.f32.mrb[0].mxu0
  %v2093 = vadd.f32 %v1637, %v2092
  %v2094 = vpop.f32.mrb[0].mxu0
  %v2095 = vadd.f32 %v1641, %v2094
  %2096 = vmatprep.mubr.bf16.mxu0 0
  %2097 = vmatmul.mubr.bf16.gmra.mrb[0].mxu0 %v1567
  %v2098 = vpop.f32.mrb[0].mxu0
  %v2099 = vadd.f32 %v1637, %v2098
  %v2100 = vpop.f32.mrb[0].mxu0
  %v2101 = vadd.f32 %v1641, %v2100
  %v2102 = vpop.f32.mrb[0].mxu0
  %v2103 = vadd.f32 %v1637, %v2102
  %v2104 = vpop.f32.mrb[0].mxu0
  %v2105 = vadd.f32 %v1641, %v2104
  %2106 = vdwg.mxu0
  %2107 = vmatprep.subr.bf16.mxu0 %v1869
  %2108 = vmatpush1.bf16.msra.mxu0 %v1868
  %2109 = vmatprep.subr.bf16.mxu0 %v1877
  %2110 = vmatpush1.bf16.msra.mxu0 %v1876
  %2111 = vmatprep.subr.bf16.mxu0 %v1885
  %2112 = vmatpush1.bf16.msra.mxu0 %v1884
  %2113 = vmatprep.subr.bf16.mxu0 %v1893
  %2114 = vmatpush1.bf16.msra.mxu0 %v1892
  %2115 = vmatprep.subr.bf16.mxu0 %v1901
  %2116 = vmatpush1.bf16.msra.mxu0 %v1900
  %2117 = vmatprep.subr.bf16.mxu0 %v1909
  %2118 = vmatpush1.bf16.msra.mxu0 %v1908
  %2119 = vmatprep.subr.bf16.mxu0 %v1917
  %2120 = vmatpush1.bf16.msra.mxu0 %v1916
  %2121 = vmatprep.subr.bf16.mxu0 %v1925
  %2122 = vmatpush1.bf16.msra.mxu0 %v1924
  %2123 = vmatprep.subr.bf16.mxu0 0
  %2124 = vmatpush1.bf16.msra.mxu0 0
  %2125 = vmatprep.subr.bf16.mxu0 0
  %2126 = vmatpush1.bf16.msra.mxu0 0
  %2127 = vmatprep.subr.bf16.mxu0 0
  %2128 = vmatpush1.bf16.msra.mxu0 0
  %2129 = vmatprep.subr.bf16.mxu0 0
  %2130 = vmatpush1.bf16.msra.mxu0 0
  %2131 = vmatprep.subr.bf16.mxu0 0
  %2132 = vmatpush1.bf16.msra.mxu0 0
  %2133 = vmatprep.subr.bf16.mxu0 0
  %2134 = vmatpush1.bf16.msra.mxu0 0
  %2135 = vmatprep.subr.bf16.mxu0 0
  %2136 = vmatpush1.bf16.msra.mxu0 0
  %2137 = vmatprep.subr.bf16.mxu0 0
  %2138 = vmatpush1.bf16.msra.mxu0 0
  %2139 = vmatprep.mubr.bf16.mxu0 0
  %2140 = vmatmul.mubr.bf16.gmra.mrb[0].mxu0 %v1560
  %v2141 = vpop.f32.mrb[0].mxu0
  %v2142 = vadd.f32 %v1645, %v2141
  %v2143 = vpop.f32.mrb[0].mxu0
  %v2144 = vadd.f32 %v1649, %v2143
  %v2145 = vpop.f32.mrb[0].mxu0
  %v2146 = vadd.f32 %v1645, %v2145
  %v2147 = vpop.f32.mrb[0].mxu0
  %v2148 = vadd.f32 %v1649, %v2147
  %2149 = vmatprep.mubr.bf16.mxu0 0
  %2150 = vmatmul.mubr.bf16.gmra.mrb[0].mxu0 %v1561
  %v2151 = vpop.f32.mrb[0].mxu0
  %v2152 = vadd.f32 %v1645, %v2151
  %v2153 = vpop.f32.mrb[0].mxu0
  %v2154 = vadd.f32 %v1649, %v2153
  %v2155 = vpop.f32.mrb[0].mxu0
  %v2156 = vadd.f32 %v1645, %v2155
  %v2157 = vpop.f32.mrb[0].mxu0
  %v2158 = vadd.f32 %v1649, %v2157
  %2159 = vmatprep.mubr.bf16.mxu0 0
  %2160 = vmatmul.mubr.bf16.gmra.mrb[0].mxu0 %v1562
  %v2161 = vpop.f32.mrb[0].mxu0
  %v2162 = vadd.f32 %v1645, %v2161
  %v2163 = vpop.f32.mrb[0].mxu0
  %v2164 = vadd.f32 %v1649, %v2163
  %v2165 = vpop.f32.mrb[0].mxu0
  %v2166 = vadd.f32 %v1645, %v2165
  %v2167 = vpop.f32.mrb[0].mxu0
  %v2168 = vadd.f32 %v1649, %v2167
  %2169 = vmatprep.mubr.bf16.mxu0 0
  %2170 = vmatmul.mubr.bf16.gmra.mrb[0].mxu0 %v1563
  %v2171 = vpop.f32.mrb[0].mxu0
  %v2172 = vadd.f32 %v1645, %v2171
  %v2173 = vpop.f32.mrb[0].mxu0
  %v2174 = vadd.f32 %v1649, %v2173
  %v2175 = vpop.f32.mrb[0].mxu0
  %v2176 = vadd.f32 %v1645, %v2175
  %v2177 = vpop.f32.mrb[0].mxu0
  %v2178 = vadd.f32 %v1649, %v2177
  %2179 = vmatprep.mubr.bf16.mxu0 0
  %2180 = vmatmul.mubr.bf16.gmra.mrb[0].mxu0 %v1564
  %v2181 = vpop.f32.mrb[0].mxu0
  %v2182 = vadd.f32 %v1645, %v2181
  %v2183 = vpop.f32.mrb[0].mxu0
  %v2184 = vadd.f32 %v1649, %v2183
  %v2185 = vpop.f32.mrb[0].mxu0
  %v2186 = vadd.f32 %v1645, %v2185
  %v2187 = vpop.f32.mrb[0].mxu0
  %v2188 = vadd.f32 %v1649, %v2187
  %2189 = vmatprep.mubr.bf16.mxu0 0
  %2190 = vmatmul.mubr.bf16.gmra.mrb[0].mxu0 %v1565
  %v2191 = vpop.f32.mrb[0].mxu0
  %v2192 = vadd.f32 %v1645, %v2191
  %v2193 = vpop.f32.mrb[0].mxu0
  %v2194 = vadd.f32 %v1649, %v2193
  %v2195 = vpop.f32.mrb[0].mxu0
  %v2196 = vadd.f32 %v1645, %v2195
  %v2197 = vpop.f32.mrb[0].mxu0
  %v2198 = vadd.f32 %v1649, %v2197
  %2199 = vmatprep.mubr.bf16.mxu0 0
  %2200 = vmatmul.mubr.bf16.gmra.mrb[0].mxu0 %v1566
  %v2201 = vpop.f32.mrb[0].mxu0
  %v2202 = vadd.f32 %v1645, %v2201
  %v2203 = vpop.f32.mrb[0].mxu0
  %v2204 = vadd.f32 %v1649, %v2203
  %v2205 = vpop.f32.mrb[0].mxu0
  %v2206 = vadd.f32 %v1645, %v2205
  %v2207 = vpop.f32.mrb[0].mxu0
  %v2208 = vadd.f32 %v1649, %v2207
  %2209 = vmatprep.mubr.bf16.mxu0 0
  %2210 = vmatmul.mubr.bf16.gmra.mrb[0].mxu0 %v1567
  %v2211 = vpop.f32.mrb[0].mxu0
  %v2212 = vadd.f32 %v1645, %v2211
  %v2213 = vpop.f32.mrb[0].mxu0
  %v2214 = vadd.f32 %v1649, %v2213
  %v2215 = vpop.f32.mrb[0].mxu0
  %v2216 = vadd.f32 %v1645, %v2215
  %v2217 = vpop.f32.mrb[0].mxu0
  %v2218 = vadd.f32 %v1649, %v2217
  %2219 = vdwg.mxu0
  %2220 = vmatprep.subr.bf16.mxu0 %v1871
  %2221 = vmatpush1.bf16.msra.mxu0 %v1870
  %2222 = vmatprep.subr.bf16.mxu0 %v1879
  %2223 = vmatpush1.bf16.msra.mxu0 %v1878
  %2224 = vmatprep.subr.bf16.mxu0 %v1887
  %2225 = vmatpush1.bf16.msra.mxu0 %v1886
  %2226 = vmatprep.subr.bf16.mxu0 %v1895
  %2227 = vmatpush1.bf16.msra.mxu0 %v1894
  %2228 = vmatprep.subr.bf16.mxu0 %v1903
  %2229 = vmatpush1.bf16.msra.mxu0 %v1902
  %2230 = vmatprep.subr.bf16.mxu0 %v1911
  %2231 = vmatpush1.bf16.msra.mxu0 %v1910
  %2232 = vmatprep.subr.bf16.mxu0 %v1919
  %2233 = vmatpush1.bf16.msra.mxu0 %v1918
  %2234 = vmatprep.subr.bf16.mxu0 %v1927
  %2235 = vmatpush1.bf16.msra.mxu0 %v1926
  %2236 = vmatprep.subr.bf16.mxu0 0
  %2237 = vmatpush1.bf16.msra.mxu0 0
  %2238 = vmatprep.subr.bf16.mxu0 0
  %2239 = vmatpush1.bf16.msra.mxu0 0
  %2240 = vmatprep.subr.bf16.mxu0 0
  %2241 = vmatpush1.bf16.msra.mxu0 0
  %2242 = vmatprep.subr.bf16.mxu0 0
  %2243 = vmatpush1.bf16.msra.mxu0 0
  %2244 = vmatprep.subr.bf16.mxu0 0
  %2245 = vmatpush1.bf16.msra.mxu0 0
  %2246 = vmatprep.subr.bf16.mxu0 0
  %2247 = vmatpush1.bf16.msra.mxu0 0
  %2248 = vmatprep.subr.bf16.mxu0 0
  %2249 = vmatpush1.bf16.msra.mxu0 0
  %2250 = vmatprep.subr.bf16.mxu0 0
  %2251 = vmatpush1.bf16.msra.mxu0 0
  %2252 = vmatprep.mubr.bf16.mxu0 0
  %2253 = vmatmul.mubr.bf16.gmra.mrb[0].mxu0 %v1560
  %v2254 = vpop.f32.mrb[0].mxu0
  %v2255 = vadd.f32 %v1653, %v2254
  %v2256 = vpop.f32.mrb[0].mxu0
  %v2257 = vadd.f32 %v1657, %v2256
  %v2258 = vpop.f32.mrb[0].mxu0
  %v2259 = vadd.f32 %v1653, %v2258
  %v2260 = vpop.f32.mrb[0].mxu0
  %v2261 = vadd.f32 %v1657, %v2260
  %2262 = vmatprep.mubr.bf16.mxu0 0
  %2263 = vmatmul.mubr.bf16.gmra.mrb[0].mxu0 %v1561
  %v2264 = vpop.f32.mrb[0].mxu0
  %v2265 = vadd.f32 %v1653, %v2264
  %v2266 = vpop.f32.mrb[0].mxu0
  %v2267 = vadd.f32 %v1657, %v2266
  %v2268 = vpop.f32.mrb[0].mxu0
  %v2269 = vadd.f32 %v1653, %v2268
  %v2270 = vpop.f32.mrb[0].mxu0
  %v2271 = vadd.f32 %v1657, %v2270
  %2272 = vmatprep.mubr.bf16.mxu0 0
  %2273 = vmatmul.mubr.bf16.gmra.mrb[0].mxu0 %v1562
  %v2274 = vpop.f32.mrb[0].mxu0
  %v2275 = vadd.f32 %v1653, %v2274
  %v2276 = vpop.f32.mrb[0].mxu0
  %v2277 = vadd.f32 %v1657, %v2276
  %v2278 = vpop.f32.mrb[0].mxu0
  %v2279 = vadd.f32 %v1653, %v2278
  %v2280 = vpop.f32.mrb[0].mxu0
  %v2281 = vadd.f32 %v1657, %v2280
  %2282 = vmatprep.mubr.bf16.mxu0 0
  %2283 = vmatmul.mubr.bf16.gmra.mrb[0].mxu0 %v1563
  %v2284 = vpop.f32.mrb[0].mxu0
  %v2285 = vadd.f32 %v1653, %v2284
  %v2286 = vpop.f32.mrb[0].mxu0
  %v2287 = vadd.f32 %v1657, %v2286
  %v2288 = vpop.f32.mrb[0].mxu0
  %v2289 = vadd.f32 %v1653, %v2288
  %v2290 = vpop.f32.mrb[0].mxu0
  %v2291 = vadd.f32 %v1657, %v2290
  %2292 = vmatprep.mubr.bf16.mxu0 0
  %2293 = vmatmul.mubr.bf16.gmra.mrb[0].mxu0 %v1564
  %v2294 = vpop.f32.mrb[0].mxu0
  %v2295 = vadd.f32 %v1653, %v2294
  %v2296 = vpop.f32.mrb[0].mxu0
  %v2297 = vadd.f32 %v1657, %v2296
  %v2298 = vpop.f32.mrb[0].mxu0
  %v2299 = vadd.f32 %v1653, %v2298
  %v2300 = vpop.f32.mrb[0].mxu0
  %v2301 = vadd.f32 %v1657, %v2300
  %2302 = vmatprep.mubr.bf16.mxu0 0
  %2303 = vmatmul.mubr.bf16.gmra.mrb[0].mxu0 %v1565
  %v2304 = vpop.f32.mrb[0].mxu0
  %v2305 = vadd.f32 %v1653, %v2304
  %v2306 = vpop.f32.mrb[0].mxu0
  %v2307 = vadd.f32 %v1657, %v2306
  %v2308 = vpop.f32.mrb[0].mxu0
  %v2309 = vadd.f32 %v1653, %v2308
  %v2310 = vpop.f32.mrb[0].mxu0
  %v2311 = vadd.f32 %v1657, %v2310
  %2312 = vmatprep.mubr.bf16.mxu0 0
  %2313 = vmatmul.mubr.bf16.gmra.mrb[0].mxu0 %v1566
  %v2314 = vpop.f32.mrb[0].mxu0
  %v2315 = vadd.f32 %v1653, %v2314
  %v2316 = vpop.f32.mrb[0].mxu0
  %v2317 = vadd.f32 %v1657, %v2316
  %v2318 = vpop.f32.mrb[0].mxu0
  %v2319 = vadd.f32 %v1653, %v2318
  %v2320 = vpop.f32.mrb[0].mxu0
  %v2321 = vadd.f32 %v1657, %v2320
  %2322 = vmatprep.mubr.bf16.mxu0 0
  %2323 = vmatmul.mubr.bf16.gmra.mrb[0].mxu0 %v1567
  %v2324 = vpop.f32.mrb[0].mxu0
  %v2325 = vadd.f32 %v1653, %v2324
  %v2326 = vpop.f32.mrb[0].mxu0
  %v2327 = vadd.f32 %v1657, %v2326
  %v2328 = vpop.f32.mrb[0].mxu0
  %v2329 = vadd.f32 %v1653, %v2328
  %v2330 = vpop.f32.mrb[0].mxu0
  %v2331 = vadd.f32 %v1657, %v2330
  %2332 = vdwg.mxu0
  %2333 = vmatprep.subr.bf16.mxu0 %v1873
  %2334 = vmatpush1.bf16.msra.mxu0 %v1872
  %2335 = vmatprep.subr.bf16.mxu0 %v1881
  %2336 = vmatpush1.bf16.msra.mxu0 %v1880
  %2337 = vmatprep.subr.bf16.mxu0 %v1889
  %2338 = vmatpush1.bf16.msra.mxu0 %v1888
  %2339 = vmatprep.subr.bf16.mxu0 %v1897
  %2340 = vmatpush1.bf16.msra.mxu0 %v1896
  %2341 = vmatprep.subr.bf16.mxu0 %v1905
  %2342 = vmatpush1.bf16.msra.mxu0 %v1904
  %2343 = vmatprep.subr.bf16.mxu0 %v1913
  %2344 = vmatpush1.bf16.msra.mxu0 %v1912
  %2345 = vmatprep.subr.bf16.mxu0 %v1921
  %2346 = vmatpush1.bf16.msra.mxu0 %v1920
  %2347 = vmatprep.subr.bf16.mxu0 %v1929
  %2348 = vmatpush1.bf16.msra.mxu0 %v1928
  %2349 = vmatprep.subr.bf16.mxu0 0
  %2350 = vmatpush1.bf16.msra.mxu0 0
  %2351 = vmatprep.subr.bf16.mxu0 0
  %2352 = vmatpush1.bf16.msra.mxu0 0
  %2353 = vmatprep.subr.bf16.mxu0 0
  %2354 = vmatpush1.bf16.msra.mxu0 0
  %2355 = vmatprep.subr.bf16.mxu0 0
  %2356 = vmatpush1.bf16.msra.mxu0 0
  %2357 = vmatprep.subr.bf16.mxu0 0
  %2358 = vmatpush1.bf16.msra.mxu0 0
  %2359 = vmatprep.subr.bf16.mxu0 0
  %2360 = vmatpush1.bf16.msra.mxu0 0
  %2361 = vmatprep.subr.bf16.mxu0 0
  %2362 = vmatpush1.bf16.msra.mxu0 0
  %2363 = vmatprep.subr.bf16.mxu0 0
  %2364 = vmatpush1.bf16.msra.mxu0 0
  %2365 = vmatprep.mubr.bf16.mxu0 0
  %2366 = vmatmul.mubr.bf16.gmra.mrb[0].mxu0 %v1560
  %v2367 = vpop.f32.mrb[0].mxu0
  %v2368 = vadd.f32 %v1661, %v2367
  %v2369 = vpop.f32.mrb[0].mxu0
  %v2370 = vadd.f32 %v1665, %v2369
  %v2371 = vpop.f32.mrb[0].mxu0
  %v2372 = vadd.f32 %v1661, %v2371
  %v2373 = vpop.f32.mrb[0].mxu0
  %v2374 = vadd.f32 %v1665, %v2373
  %2375 = vmatprep.mubr.bf16.mxu0 0
  %2376 = vmatmul.mubr.bf16.gmra.mrb[0].mxu0 %v1561
  %v2377 = vpop.f32.mrb[0].mxu0
  %v2378 = vadd.f32 %v1661, %v2377
  %v2379 = vpop.f32.mrb[0].mxu0
  %v2380 = vadd.f32 %v1665, %v2379
  %v2381 = vpop.f32.mrb[0].mxu0
  %v2382 = vadd.f32 %v1661, %v2381
  %v2383 = vpop.f32.mrb[0].mxu0
  %v2384 = vadd.f32 %v1665, %v2383
  %2385 = vmatprep.mubr.bf16.mxu0 0
  %2386 = vmatmul.mubr.bf16.gmra.mrb[0].mxu0 %v1562
  %v2387 = vpop.f32.mrb[0].mxu0
  %v2388 = vadd.f32 %v1661, %v2387
  %v2389 = vpop.f32.mrb[0].mxu0
  %v2390 = vadd.f32 %v1665, %v2389
  %v2391 = vpop.f32.mrb[0].mxu0
  %v2392 = vadd.f32 %v1661, %v2391
  %v2393 = vpop.f32.mrb[0].mxu0
  %v2394 = vadd.f32 %v1665, %v2393
  %2395 = vmatprep.mubr.bf16.mxu0 0
  %2396 = vmatmul.mubr.bf16.gmra.mrb[0].mxu0 %v1563
  %v2397 = vpop.f32.mrb[0].mxu0
  %v2398 = vadd.f32 %v1661, %v2397
  %v2399 = vpop.f32.mrb[0].mxu0
  %v2400 = vadd.f32 %v1665, %v2399
  %v2401 = vpop.f32.mrb[0].mxu0
  %v2402 = vadd.f32 %v1661, %v2401
  %v2403 = vpop.f32.mrb[0].mxu0
  %v2404 = vadd.f32 %v1665, %v2403
  %2405 = vmatprep.mubr.bf16.mxu0 0
  %2406 = vmatmul.mubr.bf16.gmra.mrb[0].mxu0 %v1564
  %v2407 = vpop.f32.mrb[0].mxu0
  %v2408 = vadd.f32 %v1661, %v2407
  %v2409 = vpop.f32.mrb[0].mxu0
  %v2410 = vadd.f32 %v1665, %v2409
  %v2411 = vpop.f32.mrb[0].mxu0
  %v2412 = vadd.f32 %v1661, %v2411
  %v2413 = vpop.f32.mrb[0].mxu0
  %v2414 = vadd.f32 %v1665, %v2413
  %2415 = vmatprep.mubr.bf16.mxu0 0
  %2416 = vmatmul.mubr.bf16.gmra.mrb[0].mxu0 %v1565
  %v2417 = vpop.f32.mrb[0].mxu0
  %v2418 = vadd.f32 %v1661, %v2417
  %v2419 = vpop.f32.mrb[0].mxu0
  %v2420 = vadd.f32 %v1665, %v2419
  %v2421 = vpop.f32.mrb[0].mxu0
  %v2422 = vadd.f32 %v1661, %v2421
  %v2423 = vpop.f32.mrb[0].mxu0
  %v2424 = vadd.f32 %v1665, %v2423
  %2425 = vmatprep.mubr.bf16.mxu0 0
  %2426 = vmatmul.mubr.bf16.gmra.mrb[0].mxu0 %v1566
  %v2427 = vpop.f32.mrb[0].mxu0
  %v2428 = vadd.f32 %v1661, %v2427
  %v2429 = vpop.f32.mrb[0].mxu0
  %v2430 = vadd.f32 %v1665, %v2429
  %v2431 = vpop.f32.mrb[0].mxu0
  %v2432 = vadd.f32 %v1661, %v2431
  %v2433 = vpop.f32.mrb[0].mxu0
  %v2434 = vadd.f32 %v1665, %v2433
  %2435 = vmatprep.mubr.bf16.mxu0 0
  %2436 = vmatmul.mubr.bf16.gmra.mrb[0].mxu0 %v1567
  %v2437 = vpop.f32.mrb[0].mxu0
  %v2438 = vadd.f32 %v1661, %v2437
  %v2439 = vpop.f32.mrb[0].mxu0
  %v2440 = vadd.f32 %v1665, %v2439
  %v2441 = vpop.f32.mrb[0].mxu0
  %v2442 = vadd.f32 %v1661, %v2441
  %v2443 = vpop.f32.mrb[0].mxu0
  %v2444 = vadd.f32 %v1665, %v2443
  %2445 = vdwg.mxu0
  %v2446 = vmax.f32 %v2029, %v2033
  %v2447 = vrot.slane %v2446, 4
  %v2448 = vmax.f32 %v2446, %v2447
  %v2449 = vrot.slane %v2448, 2
  %v2450 = vmax.f32 %v2448, %v2449
  %v2451 = vrot.slane %v2450, 1
  %v2452 = vmax.f32 %v2450, %v2451
  %v2453 = vmax.f32 %v2031, %v2035
  %v2454 = vrot.slane %v2453, 4
  %v2455 = vmax.f32 %v2453, %v2454
  %v2456 = vrot.slane %v2455, 2
  %v2457 = vmax.f32 %v2455, %v2456
  %v2458 = vrot.slane %v2457, 1
  %v2459 = vmax.f32 %v2457, %v2458
  %v2460 = vmax.f32 %v2142, %v2146
  %v2461 = vrot.slane %v2460, 4
  %v2462 = vmax.f32 %v2460, %v2461
  %v2463 = vrot.slane %v2462, 2
  %v2464 = vmax.f32 %v2462, %v2463
  %v2465 = vrot.slane %v2464, 1
  %v2466 = vmax.f32 %v2464, %v2465
  %v2467 = vmax.f32 %v2144, %v2148
  %v2468 = vrot.slane %v2467, 4
  %v2469 = vmax.f32 %v2467, %v2468
  %v2470 = vrot.slane %v2469, 2
  %v2471 = vmax.f32 %v2469, %v2470
  %v2472 = vrot.slane %v2471, 1
  %v2473 = vmax.f32 %v2471, %v2472
  %v2474 = vmax.f32 %v2255, %v2259
  %v2475 = vrot.slane %v2474, 4
  %v2476 = vmax.f32 %v2474, %v2475
  %v2477 = vrot.slane %v2476, 2
  %v2478 = vmax.f32 %v2476, %v2477
  %v2479 = vrot.slane %v2478, 1
  %v2480 = vmax.f32 %v2478, %v2479
  %v2481 = vmax.f32 %v2257, %v2261
  %v2482 = vrot.slane %v2481, 4
  %v2483 = vmax.f32 %v2481, %v2482
  %v2484 = vrot.slane %v2483, 2
  %v2485 = vmax.f32 %v2483, %v2484
  %v2486 = vrot.slane %v2485, 1
  %v2487 = vmax.f32 %v2485, %v2486
  %v2488 = vmax.f32 %v2368, %v2372
  %v2489 = vrot.slane %v2488, 4
  %v2490 = vmax.f32 %v2488, %v2489
  %v2491 = vrot.slane %v2490, 2
  %v2492 = vmax.f32 %v2490, %v2491
  %v2493 = vrot.slane %v2492, 1
  %v2494 = vmax.f32 %v2492, %v2493
  %v2495 = vmax.f32 %v2370, %v2374
  %v2496 = vrot.slane %v2495, 4
  %v2497 = vmax.f32 %v2495, %v2496
  %v2498 = vrot.slane %v2497, 2
  %v2499 = vmax.f32 %v2497, %v2498
  %v2500 = vrot.slane %v2499, 1
  %v2501 = vmax.f32 %v2499, %v2500
  %v2502 = vmax.f32 %v2039, %v2043
  %v2503 = vrot.slane %v2502, 4
  %v2504 = vmax.f32 %v2502, %v2503
  %v2505 = vrot.slane %v2504, 2
  %v2506 = vmax.f32 %v2504, %v2505
  %v2507 = vrot.slane %v2506, 1
  %v2508 = vmax.f32 %v2506, %v2507
  %v2509 = vmax.f32 %v2041, %v2045
  %v2510 = vrot.slane %v2509, 4
  %v2511 = vmax.f32 %v2509, %v2510
  %v2512 = vrot.slane %v2511, 2
  %v2513 = vmax.f32 %v2511, %v2512
  %v2514 = vrot.slane %v2513, 1
  %v2515 = vmax.f32 %v2513, %v2514
  %v2516 = vmax.f32 %v2152, %v2156
  %v2517 = vrot.slane %v2516, 4
  %v2518 = vmax.f32 %v2516, %v2517
  %v2519 = vrot.slane %v2518, 2
  %v2520 = vmax.f32 %v2518, %v2519
  %v2521 = vrot.slane %v2520, 1
  %v2522 = vmax.f32 %v2520, %v2521
  %v2523 = vmax.f32 %v2154, %v2158
  %v2524 = vrot.slane %v2523, 4
  %v2525 = vmax.f32 %v2523, %v2524
  %v2526 = vrot.slane %v2525, 2
  %v2527 = vmax.f32 %v2525, %v2526
  %v2528 = vrot.slane %v2527, 1
  %v2529 = vmax.f32 %v2527, %v2528
  %v2530 = vmax.f32 %v2265, %v2269
  %v2531 = vrot.slane %v2530, 4
  %v2532 = vmax.f32 %v2530, %v2531
  %v2533 = vrot.slane %v2532, 2
  %v2534 = vmax.f32 %v2532, %v2533
  %v2535 = vrot.slane %v2534, 1
  %v2536 = vmax.f32 %v2534, %v2535
  %v2537 = vmax.f32 %v2267, %v2271
  %v2538 = vrot.slane %v2537, 4
  %v2539 = vmax.f32 %v2537, %v2538
  %v2540 = vrot.slane %v2539, 2
  %v2541 = vmax.f32 %v2539, %v2540
  %v2542 = vrot.slane %v2541, 1
  %v2543 = vmax.f32 %v2541, %v2542
  %v2544 = vmax.f32 %v2378, %v2382
  %v2545 = vrot.slane %v2544, 4
  %v2546 = vmax.f32 %v2544, %v2545
  %v2547 = vrot.slane %v2546, 2
  %v2548 = vmax.f32 %v2546, %v2547
  %v2549 = vrot.slane %v2548, 1
  %v2550 = vmax.f32 %v2548, %v2549
  %v2551 = vmax.f32 %v2380, %v2384
  %v2552 = vrot.slane %v2551, 4
  %v2553 = vmax.f32 %v2551, %v2552
  %v2554 = vrot.slane %v2553, 2
  %v2555 = vmax.f32 %v2553, %v2554
  %v2556 = vrot.slane %v2555, 1
  %v2557 = vmax.f32 %v2555, %v2556
  %v2558 = vmax.f32 %v2049, %v2053
  %v2559 = vrot.slane %v2558, 4
  %v2560 = vmax.f32 %v2558, %v2559
  %v2561 = vrot.slane %v2560, 2
  %v2562 = vmax.f32 %v2560, %v2561
  %v2563 = vrot.slane %v2562, 1
  %v2564 = vmax.f32 %v2562, %v2563
  %v2565 = vmax.f32 %v2051, %v2055
  %v2566 = vrot.slane %v2565, 4
  %v2567 = vmax.f32 %v2565, %v2566
  %v2568 = vrot.slane %v2567, 2
  %v2569 = vmax.f32 %v2567, %v2568
  %v2570 = vrot.slane %v2569, 1
  %v2571 = vmax.f32 %v2569, %v2570
  %v2572 = vmax.f32 %v2162, %v2166
  %v2573 = vrot.slane %v2572, 4
  %v2574 = vmax.f32 %v2572, %v2573
  %v2575 = vrot.slane %v2574, 2
  %v2576 = vmax.f32 %v2574, %v2575
  %v2577 = vrot.slane %v2576, 1
  %v2578 = vmax.f32 %v2576, %v2577
  %v2579 = vmax.f32 %v2164, %v2168
  %v2580 = vrot.slane %v2579, 4
  %v2581 = vmax.f32 %v2579, %v2580
  %v2582 = vrot.slane %v2581, 2
  %v2583 = vmax.f32 %v2581, %v2582
  %v2584 = vrot.slane %v2583, 1
  %v2585 = vmax.f32 %v2583, %v2584
  %v2586 = vmax.f32 %v2275, %v2279
  %v2587 = vrot.slane %v2586, 4
  %v2588 = vmax.f32 %v2586, %v2587
  %v2589 = vrot.slane %v2588, 2
  %v2590 = vmax.f32 %v2588, %v2589
  %v2591 = vrot.slane %v2590, 1
  %v2592 = vmax.f32 %v2590, %v2591
  %v2593 = vmax.f32 %v2277, %v2281
  %v2594 = vrot.slane %v2593, 4
  %v2595 = vmax.f32 %v2593, %v2594
  %v2596 = vrot.slane %v2595, 2
  %v2597 = vmax.f32 %v2595, %v2596
  %v2598 = vrot.slane %v2597, 1
  %v2599 = vmax.f32 %v2597, %v2598
  %v2600 = vmax.f32 %v2388, %v2392
  %v2601 = vrot.slane %v2600, 4
  %v2602 = vmax.f32 %v2600, %v2601
  %v2603 = vrot.slane %v2602, 2
  %v2604 = vmax.f32 %v2602, %v2603
  %v2605 = vrot.slane %v2604, 1
  %v2606 = vmax.f32 %v2604, %v2605
  %v2607 = vmax.f32 %v2390, %v2394
  %v2608 = vrot.slane %v2607, 4
  %v2609 = vmax.f32 %v2607, %v2608
  %v2610 = vrot.slane %v2609, 2
  %v2611 = vmax.f32 %v2609, %v2610
  %v2612 = vrot.slane %v2611, 1
  %v2613 = vmax.f32 %v2611, %v2612
  %v2614 = vmax.f32 %v2059, %v2063
  %v2615 = vrot.slane %v2614, 4
  %v2616 = vmax.f32 %v2614, %v2615
  %v2617 = vrot.slane %v2616, 2
  %v2618 = vmax.f32 %v2616, %v2617
  %v2619 = vrot.slane %v2618, 1
  %v2620 = vmax.f32 %v2618, %v2619
  %v2621 = vmax.f32 %v2061, %v2065
  %v2622 = vrot.slane %v2621, 4
  %v2623 = vmax.f32 %v2621, %v2622
  %v2624 = vrot.slane %v2623, 2
  %v2625 = vmax.f32 %v2623, %v2624
  %v2626 = vrot.slane %v2625, 1
  %v2627 = vmax.f32 %v2625, %v2626
  %v2628 = vmax.f32 %v2172, %v2176
  %v2629 = vrot.slane %v2628, 4
  %v2630 = vmax.f32 %v2628, %v2629
  %v2631 = vrot.slane %v2630, 2
  %v2632 = vmax.f32 %v2630, %v2631
  %v2633 = vrot.slane %v2632, 1
  %v2634 = vmax.f32 %v2632, %v2633
  %v2635 = vmax.f32 %v2174, %v2178
  %v2636 = vrot.slane %v2635, 4
  %v2637 = vmax.f32 %v2635, %v2636
  %v2638 = vrot.slane %v2637, 2
  %v2639 = vmax.f32 %v2637, %v2638
  %v2640 = vrot.slane %v2639, 1
  %v2641 = vmax.f32 %v2639, %v2640
  %v2642 = vmax.f32 %v2285, %v2289
  %v2643 = vrot.slane %v2642, 4
  %v2644 = vmax.f32 %v2642, %v2643
  %v2645 = vrot.slane %v2644, 2
  %v2646 = vmax.f32 %v2644, %v2645
  %v2647 = vrot.slane %v2646, 1
  %v2648 = vmax.f32 %v2646, %v2647
  %v2649 = vmax.f32 %v2287, %v2291
  %v2650 = vrot.slane %v2649, 4
  %v2651 = vmax.f32 %v2649, %v2650
  %v2652 = vrot.slane %v2651, 2
  %v2653 = vmax.f32 %v2651, %v2652
  %v2654 = vrot.slane %v2653, 1
  %v2655 = vmax.f32 %v2653, %v2654
  %v2656 = vmax.f32 %v2398, %v2402
  %v2657 = vrot.slane %v2656, 4
  %v2658 = vmax.f32 %v2656, %v2657
  %v2659 = vrot.slane %v2658, 2
  %v2660 = vmax.f32 %v2658, %v2659
  %v2661 = vrot.slane %v2660, 1
  %v2662 = vmax.f32 %v2660, %v2661
  %v2663 = vmax.f32 %v2400, %v2404
  %v2664 = vrot.slane %v2663, 4
  %v2665 = vmax.f32 %v2663, %v2664
  %v2666 = vrot.slane %v2665, 2
  %v2667 = vmax.f32 %v2665, %v2666
  %v2668 = vrot.slane %v2667, 1
  %v2669 = vmax.f32 %v2667, %v2668
  %v2670 = vmax.f32 %v2069, %v2073
  %v2671 = vrot.slane %v2670, 4
  %v2672 = vmax.f32 %v2670, %v2671
  %v2673 = vrot.slane %v2672, 2
  %v2674 = vmax.f32 %v2672, %v2673
  %v2675 = vrot.slane %v2674, 1
  %v2676 = vmax.f32 %v2674, %v2675
  %v2677 = vmax.f32 %v2071, %v2075
  %v2678 = vrot.slane %v2677, 4
  %v2679 = vmax.f32 %v2677, %v2678
  %v2680 = vrot.slane %v2679, 2
  %v2681 = vmax.f32 %v2679, %v2680
  %v2682 = vrot.slane %v2681, 1
  %v2683 = vmax.f32 %v2681, %v2682
  %v2684 = vmax.f32 %v2182, %v2186
  %v2685 = vrot.slane %v2684, 4
  %v2686 = vmax.f32 %v2684, %v2685
  %v2687 = vrot.slane %v2686, 2
  %v2688 = vmax.f32 %v2686, %v2687
  %v2689 = vrot.slane %v2688, 1
  %v2690 = vmax.f32 %v2688, %v2689
  %v2691 = vmax.f32 %v2184, %v2188
  %v2692 = vrot.slane %v2691, 4
  %v2693 = vmax.f32 %v2691, %v2692
  %v2694 = vrot.slane %v2693, 2
  %v2695 = vmax.f32 %v2693, %v2694
  %v2696 = vrot.slane %v2695, 1
  %v2697 = vmax.f32 %v2695, %v2696
  %v2698 = vmax.f32 %v2295, %v2299
  %v2699 = vrot.slane %v2698, 4
  %v2700 = vmax.f32 %v2698, %v2699
  %v2701 = vrot.slane %v2700, 2
  %v2702 = vmax.f32 %v2700, %v2701
  %v2703 = vrot.slane %v2702, 1
  %v2704 = vmax.f32 %v2702, %v2703
  %v2705 = vmax.f32 %v2297, %v2301
  %v2706 = vrot.slane %v2705, 4
  %v2707 = vmax.f32 %v2705, %v2706
  %v2708 = vrot.slane %v2707, 2
  %v2709 = vmax.f32 %v2707, %v2708
  %v2710 = vrot.slane %v2709, 1
  %v2711 = vmax.f32 %v2709, %v2710
  %v2712 = vmax.f32 %v2408, %v2412
  %v2713 = vrot.slane %v2712, 4
  %v2714 = vmax.f32 %v2712, %v2713
  %v2715 = vrot.slane %v2714, 2
  %v2716 = vmax.f32 %v2714, %v2715
  %v2717 = vrot.slane %v2716, 1
  %v2718 = vmax.f32 %v2716, %v2717
  %v2719 = vmax.f32 %v2410, %v2414
  %v2720 = vrot.slane %v2719, 4
  %v2721 = vmax.f32 %v2719, %v2720
  %v2722 = vrot.slane %v2721, 2
  %v2723 = vmax.f32 %v2721, %v2722
  %v2724 = vrot.slane %v2723, 1
  %v2725 = vmax.f32 %v2723, %v2724
  %v2726 = vmax.f32 %v2079, %v2083
  %v2727 = vrot.slane %v2726, 4
  %v2728 = vmax.f32 %v2726, %v2727
  %v2729 = vrot.slane %v2728, 2
  %v2730 = vmax.f32 %v2728, %v2729
  %v2731 = vrot.slane %v2730, 1
  %v2732 = vmax.f32 %v2730, %v2731
  %v2733 = vmax.f32 %v2081, %v2085
  %v2734 = vrot.slane %v2733, 4
  %v2735 = vmax.f32 %v2733, %v2734
  %v2736 = vrot.slane %v2735, 2
  %v2737 = vmax.f32 %v2735, %v2736
  %v2738 = vrot.slane %v2737, 1
  %v2739 = vmax.f32 %v2737, %v2738
  %v2740 = vmax.f32 %v2192, %v2196
  %v2741 = vrot.slane %v2740, 4
  %v2742 = vmax.f32 %v2740, %v2741
  %v2743 = vrot.slane %v2742, 2
  %v2744 = vmax.f32 %v2742, %v2743
  %v2745 = vrot.slane %v2744, 1
  %v2746 = vmax.f32 %v2744, %v2745
  %v2747 = vmax.f32 %v2194, %v2198
  %v2748 = vrot.slane %v2747, 4
  %v2749 = vmax.f32 %v2747, %v2748
  %v2750 = vrot.slane %v2749, 2
  %v2751 = vmax.f32 %v2749, %v2750
  %v2752 = vrot.slane %v2751, 1
  %v2753 = vmax.f32 %v2751, %v2752
  %v2754 = vmax.f32 %v2305, %v2309
  %v2755 = vrot.slane %v2754, 4
  %v2756 = vmax.f32 %v2754, %v2755
  %v2757 = vrot.slane %v2756, 2
  %v2758 = vmax.f32 %v2756, %v2757
  %v2759 = vrot.slane %v2758, 1
  %v2760 = vmax.f32 %v2758, %v2759
  %v2761 = vmax.f32 %v2307, %v2311
  %v2762 = vrot.slane %v2761, 4
  %v2763 = vmax.f32 %v2761, %v2762
  %v2764 = vrot.slane %v2763, 2
  %v2765 = vmax.f32 %v2763, %v2764
  %v2766 = vrot.slane %v2765, 1
  %v2767 = vmax.f32 %v2765, %v2766
  %v2768 = vmax.f32 %v2418, %v2422
  %v2769 = vrot.slane %v2768, 4
  %v2770 = vmax.f32 %v2768, %v2769
  %v2771 = vrot.slane %v2770, 2
  %v2772 = vmax.f32 %v2770, %v2771
  %v2773 = vrot.slane %v2772, 1
  %v2774 = vmax.f32 %v2772, %v2773
  %v2775 = vmax.f32 %v2420, %v2424
  %v2776 = vrot.slane %v2775, 4
  %v2777 = vmax.f32 %v2775, %v2776
  %v2778 = vrot.slane %v2777, 2
  %v2779 = vmax.f32 %v2777, %v2778
  %v2780 = vrot.slane %v2779, 1
  %v2781 = vmax.f32 %v2779, %v2780
  %v2782 = vmax.f32 %v2089, %v2093
  %v2783 = vrot.slane %v2782, 4
  %v2784 = vmax.f32 %v2782, %v2783
  %v2785 = vrot.slane %v2784, 2
  %v2786 = vmax.f32 %v2784, %v2785
  %v2787 = vrot.slane %v2786, 1
  %v2788 = vmax.f32 %v2786, %v2787
  %v2789 = vmax.f32 %v2091, %v2095
  %v2790 = vrot.slane %v2789, 4
  %v2791 = vmax.f32 %v2789, %v2790
  %v2792 = vrot.slane %v2791, 2
  %v2793 = vmax.f32 %v2791, %v2792
  %v2794 = vrot.slane %v2793, 1
  %v2795 = vmax.f32 %v2793, %v2794
  %v2796 = vmax.f32 %v2202, %v2206
  %v2797 = vrot.slane %v2796, 4
  %v2798 = vmax.f32 %v2796, %v2797
  %v2799 = vrot.slane %v2798, 2
  %v2800 = vmax.f32 %v2798, %v2799
  %v2801 = vrot.slane %v2800, 1
  %v2802 = vmax.f32 %v2800, %v2801
  %v2803 = vmax.f32 %v2204, %v2208
  %v2804 = vrot.slane %v2803, 4
  %v2805 = vmax.f32 %v2803, %v2804
  %v2806 = vrot.slane %v2805, 2
  %v2807 = vmax.f32 %v2805, %v2806
  %v2808 = vrot.slane %v2807, 1
  %v2809 = vmax.f32 %v2807, %v2808
  %v2810 = vmax.f32 %v2315, %v2319
  %v2811 = vrot.slane %v2810, 4
  %v2812 = vmax.f32 %v2810, %v2811
  %v2813 = vrot.slane %v2812, 2
  %v2814 = vmax.f32 %v2812, %v2813
  %v2815 = vrot.slane %v2814, 1
  %v2816 = vmax.f32 %v2814, %v2815
  %v2817 = vmax.f32 %v2317, %v2321
  %v2818 = vrot.slane %v2817, 4
  %v2819 = vmax.f32 %v2817, %v2818
  %v2820 = vrot.slane %v2819, 2
  %v2821 = vmax.f32 %v2819, %v2820
  %v2822 = vrot.slane %v2821, 1
  %v2823 = vmax.f32 %v2821, %v2822
  %v2824 = vmax.f32 %v2428, %v2432
  %v2825 = vrot.slane %v2824, 4
  %v2826 = vmax.f32 %v2824, %v2825
  %v2827 = vrot.slane %v2826, 2
  %v2828 = vmax.f32 %v2826, %v2827
  %v2829 = vrot.slane %v2828, 1
  %v2830 = vmax.f32 %v2828, %v2829
  %v2831 = vmax.f32 %v2430, %v2434
  %v2832 = vrot.slane %v2831, 4
  %v2833 = vmax.f32 %v2831, %v2832
  %v2834 = vrot.slane %v2833, 2
  %v2835 = vmax.f32 %v2833, %v2834
  %v2836 = vrot.slane %v2835, 1
  %v2837 = vmax.f32 %v2835, %v2836
  %v2838 = vmax.f32 %v2099, %v2103
  %v2839 = vrot.slane %v2838, 4
  %v2840 = vmax.f32 %v2838, %v2839
  %v2841 = vrot.slane %v2840, 2
  %v2842 = vmax.f32 %v2840, %v2841
  %v2843 = vrot.slane %v2842, 1
  %v2844 = vmax.f32 %v2842, %v2843
  %v2845 = vmax.f32 %v2101, %v2105
  %v2846 = vrot.slane %v2845, 4
  %v2847 = vmax.f32 %v2845, %v2846
  %v2848 = vrot.slane %v2847, 2
  %v2849 = vmax.f32 %v2847, %v2848
  %v2850 = vrot.slane %v2849, 1
  %v2851 = vmax.f32 %v2849, %v2850
  %v2852 = vmax.f32 %v2212, %v2216
  %v2853 = vrot.slane %v2852, 4
  %v2854 = vmax.f32 %v2852, %v2853
  %v2855 = vrot.slane %v2854, 2
  %v2856 = vmax.f32 %v2854, %v2855
  %v2857 = vrot.slane %v2856, 1
  %v2858 = vmax.f32 %v2856, %v2857
  %v2859 = vmax.f32 %v2214, %v2218
  %v2860 = vrot.slane %v2859, 4
  %v2861 = vmax.f32 %v2859, %v2860
  %v2862 = vrot.slane %v2861, 2
  %v2863 = vmax.f32 %v2861, %v2862
  %v2864 = vrot.slane %v2863, 1
  %v2865 = vmax.f32 %v2863, %v2864
  %v2866 = vmax.f32 %v2325, %v2329
  %v2867 = vrot.slane %v2866, 4
  %v2868 = vmax.f32 %v2866, %v2867
  %v2869 = vrot.slane %v2868, 2
  %v2870 = vmax.f32 %v2868, %v2869
  %v2871 = vrot.slane %v2870, 1
  %v2872 = vmax.f32 %v2870, %v2871
  %v2873 = vmax.f32 %v2327, %v2331
  %v2874 = vrot.slane %v2873, 4
  %v2875 = vmax.f32 %v2873, %v2874
  %v2876 = vrot.slane %v2875, 2
  %v2877 = vmax.f32 %v2875, %v2876
  %v2878 = vrot.slane %v2877, 1
  %v2879 = vmax.f32 %v2877, %v2878
  %v2880 = vmax.f32 %v2438, %v2442
  %v2881 = vrot.slane %v2880, 4
  %v2882 = vmax.f32 %v2880, %v2881
  %v2883 = vrot.slane %v2882, 2
  %v2884 = vmax.f32 %v2882, %v2883
  %v2885 = vrot.slane %v2884, 1
  %v2886 = vmax.f32 %v2884, %v2885
  %v2887 = vmax.f32 %v2440, %v2444
  %v2888 = vrot.slane %v2887, 4
  %v2889 = vmax.f32 %v2887, %v2888
  %v2890 = vrot.slane %v2889, 2
  %v2891 = vmax.f32 %v2889, %v2890
  %v2892 = vrot.slane %v2891, 1
  %v2893 = vmax.f32 %v2891, %v2892
  %p2894 = scmp.eq.s32.totalorder 0, 0
  // Predicated region
  $region58: #{pointnet_cls_forward.3} parent=0 // pred_check
    %p2895 = pneg %p2894
  $region59: #{pointnet_cls_forward.3} parent=0 // pred_check_branch
    %2897 = sbr.rel (%p2895) target = $region61
  $region60: #{pointnet_cls_forward.3} parent=0 // pred_region
    %vm2962 = vcmask 1041409
    %v2963 = vsel %vm2962, %v2508, %v2452
    %vm2964 = vcmask 1042434
    %v2965 = vsel %vm2964, %v2564, %v2963
    %vm2966 = vcmask 1043459
    %v2967 = vsel %vm2966, %v2620, %v2965
    %vm2968 = vcmask 1044484
    %v2969 = vsel %vm2968, %v2676, %v2967
    %vm2970 = vcmask 1045509
    %v2971 = vsel %vm2970, %v2732, %v2969
    %vm2972 = vcmask 1046534
    %v2973 = vsel %vm2972, %v2788, %v2971
    %vm2974 = vcmask 1047559
    %v2975 = vsel %vm2974, %v2844, %v2973
    %v2976 = vsel %vm2962, %v2515, %v2459
    %v2977 = vsel %vm2964, %v2571, %v2976
    %v2978 = vsel %vm2966, %v2627, %v2977
    %v2979 = vsel %vm2968, %v2683, %v2978
    %v2980 = vsel %vm2970, %v2739, %v2979
    %v2981 = vsel %vm2972, %v2795, %v2980
    %v2982 = vsel %vm2974, %v2851, %v2981
    %v2983 = vsel %vm2962, %v2522, %v2466
    %v2984 = vsel %vm2964, %v2578, %v2983
    %v2985 = vsel %vm2966, %v2634, %v2984
    %v2986 = vsel %vm2968, %v2690, %v2985
    %v2987 = vsel %vm2970, %v2746, %v2986
    %v2988 = vsel %vm2972, %v2802, %v2987
    %v2989 = vsel %vm2974, %v2858, %v2988
    %v2990 = vsel %vm2962, %v2529, %v2473
    %v2991 = vsel %vm2964, %v2585, %v2990
    %v2992 = vsel %vm2966, %v2641, %v2991
    %v2993 = vsel %vm2968, %v2697, %v2992
    %v2994 = vsel %vm2970, %v2753, %v2993
    %v2995 = vsel %vm2972, %v2809, %v2994
    %v2996 = vsel %vm2974, %v2865, %v2995
    %v2997 = vsel %vm2962, %v2536, %v2480
    %v2998 = vsel %vm2964, %v2592, %v2997
    %v2999 = vsel %vm2966, %v2648, %v2998
    %v3000 = vsel %vm2968, %v2704, %v2999
    %v3001 = vsel %vm2970, %v2760, %v3000
    %v3002 = vsel %vm2972, %v2816, %v3001
    %v3003 = vsel %vm2974, %v2872, %v3002
    %v3004 = vsel %vm2962, %v2543, %v2487
    %v3005 = vsel %vm2964, %v2599, %v3004
    %v3006 = vsel %vm2966, %v2655, %v3005
    %v3007 = vsel %vm2968, %v2711, %v3006
    %v3008 = vsel %vm2970, %v2767, %v3007
    %v3009 = vsel %vm2972, %v2823, %v3008
    %v3010 = vsel %vm2974, %v2879, %v3009
    %v3011 = vsel %vm2962, %v2550, %v2494
    %v3012 = vsel %vm2964, %v2606, %v3011
    %v3013 = vsel %vm2966, %v2662, %v3012
    %v3014 = vsel %vm2968, %v2718, %v3013
    %v3015 = vsel %vm2970, %v2774, %v3014
    %v3016 = vsel %vm2972, %v2830, %v3015
    %v3017 = vsel %vm2974, %v2886, %v3016
    %v3018 = vsel %vm2962, %v2557, %v2501
    %v3019 = vsel %vm2964, %v2613, %v3018
    %v3020 = vsel %vm2966, %v2669, %v3019
    %v3021 = vsel %vm2968, %v2725, %v3020
    %v3022 = vsel %vm2970, %v2781, %v3021
    %v3023 = vsel %vm2972, %v2837, %v3022
    %v3024 = vsel %vm2974, %v2893, %v3023
    %3033 = vst [vmem:[%s14] sm:$0xff] %v2975
    %3034 = vst [vmem:[%s14 + $0x8] sm:$0xff] %v2982
    %3035 = vst [vmem:[%s14 + $0x10] sm:$0xff] %v2989
    %3036 = vst [vmem:[%s14 + $0x18] sm:$0xff] %v2996
    %3037 = vst [vmem:[%s14 + $0x20] sm:$0xff] %v3003
    %3038 = vst [vmem:[%s14 + $0x28] sm:$0xff] %v3010
    %3039 = vst [vmem:[%s14 + $0x30] sm:$0xff] %v3017
    %3040 = vst [vmem:[%s14 + $0x38] sm:$0xff] %v3024
  $region61: #{pointnet_cls_forward.3} parent=0 // pred_fallthru
    _
  %p3041 = scmp.ne.s32.totalorder 0, 0
  // Predicated region
  $region62: #{pointnet_cls_forward.3} parent=0 // pred_check
    %p3042 = pneg %p3041
  $region63: #{pointnet_cls_forward.3} parent=0 // pred_check_branch
    %3044 = sbr.rel (%p3042) target = $region65
  $region64: #{pointnet_cls_forward.3} parent=0 // pred_region
    %v3045 = vld [vmem:[%s14] sm:$0xff]
    %v3046 = vld [vmem:[%s14 + $0x8] sm:$0xff]
    %v3047 = vld [vmem:[%s14 + $0x10] sm:$0xff]
    %v3048 = vld [vmem:[%s14 + $0x18] sm:$0xff]
    %v3049 = vld [vmem:[%s14 + $0x20] sm:$0xff]
    %v3050 = vld [vmem:[%s14 + $0x28] sm:$0xff]
    %v3051 = vld [vmem:[%s14 + $0x30] sm:$0xff]
    %v3052 = vld [vmem:[%s14 + $0x38] sm:$0xff]
    %vm3117 = vcmask 1041409
    %v3118 = vsel %vm3117, %v2508, %v2452
    %vm3119 = vcmask 1042434
    %v3120 = vsel %vm3119, %v2564, %v3118
    %vm3121 = vcmask 1043459
    %v3122 = vsel %vm3121, %v2620, %v3120
    %vm3123 = vcmask 1044484
    %v3124 = vsel %vm3123, %v2676, %v3122
    %vm3125 = vcmask 1045509
    %v3126 = vsel %vm3125, %v2732, %v3124
    %vm3127 = vcmask 1046534
    %v3128 = vsel %vm3127, %v2788, %v3126
    %vm3129 = vcmask 1047559
    %v3130 = vsel %vm3129, %v2844, %v3128
    %v3131 = vsel %vm3117, %v2515, %v2459
    %v3132 = vsel %vm3119, %v2571, %v3131
    %v3133 = vsel %vm3121, %v2627, %v3132
    %v3134 = vsel %vm3123, %v2683, %v3133
    %v3135 = vsel %vm3125, %v2739, %v3134
    %v3136 = vsel %vm3127, %v2795, %v3135
    %v3137 = vsel %vm3129, %v2851, %v3136
    %v3138 = vsel %vm3117, %v2522, %v2466
    %v3139 = vsel %vm3119, %v2578, %v3138
    %v3140 = vsel %vm3121, %v2634, %v3139
    %v3141 = vsel %vm3123, %v2690, %v3140
    %v3142 = vsel %vm3125, %v2746, %v3141
    %v3143 = vsel %vm3127, %v2802, %v3142
    %v3144 = vsel %vm3129, %v2858, %v3143
    %v3145 = vsel %vm3117, %v2529, %v2473
    %v3146 = vsel %vm3119, %v2585, %v3145
    %v3147 = vsel %vm3121, %v2641, %v3146
    %v3148 = vsel %vm3123, %v2697, %v3147
    %v3149 = vsel %vm3125, %v2753, %v3148
    %v3150 = vsel %vm3127, %v2809, %v3149
    %v3151 = vsel %vm3129, %v2865, %v3150
    %v3152 = vsel %vm3117, %v2536, %v2480
    %v3153 = vsel %vm3119, %v2592, %v3152
    %v3154 = vsel %vm3121, %v2648, %v3153
    %v3155 = vsel %vm3123, %v2704, %v3154
    %v3156 = vsel %vm3125, %v2760, %v3155
    %v3157 = vsel %vm3127, %v2816, %v3156
    %v3158 = vsel %vm3129, %v2872, %v3157
    %v3159 = vsel %vm3117, %v2543, %v2487
    %v3160 = vsel %vm3119, %v2599, %v3159
    %v3161 = vsel %vm3121, %v2655, %v3160
    %v3162 = vsel %vm3123, %v2711, %v3161
    %v3163 = vsel %vm3125, %v2767, %v3162
    %v3164 = vsel %vm3127, %v2823, %v3163
    %v3165 = vsel %vm3129, %v2879, %v3164
    %v3166 = vsel %vm3117, %v2550, %v2494
    %v3167 = vsel %vm3119, %v2606, %v3166
    %v3168 = vsel %vm3121, %v2662, %v3167
    %v3169 = vsel %vm3123, %v2718, %v3168
    %v3170 = vsel %vm3125, %v2774, %v3169
    %v3171 = vsel %vm3127, %v2830, %v3170
    %v3172 = vsel %vm3129, %v2886, %v3171
    %v3173 = vsel %vm3117, %v2557, %v2501
    %v3174 = vsel %vm3119, %v2613, %v3173
    %v3175 = vsel %vm3121, %v2669, %v3174
    %v3176 = vsel %vm3123, %v2725, %v3175
    %v3177 = vsel %vm3125, %v2781, %v3176
    %v3178 = vsel %vm3127, %v2837, %v3177
    %v3179 = vsel %vm3129, %v2893, %v3178
    %v3188 = vmax.f32 %v3045, %v3130
    %v3189 = vmax.f32 %v3046, %v3137
    %v3190 = vmax.f32 %v3047, %v3144
    %v3191 = vmax.f32 %v3048, %v3151
    %v3192 = vmax.f32 %v3049, %v3158
    %v3193 = vmax.f32 %v3050, %v3165
    %v3194 = vmax.f32 %v3051, %v3172
    %v3195 = vmax.f32 %v3052, %v3179
    %3196 = vst [vmem:[%s14] sm:$0xff] %v3188
    %3197 = vst [vmem:[%s14 + $0x8] sm:$0xff] %v3189
    %3198 = vst [vmem:[%s14 + $0x10] sm:$0xff] %v3190
    %3199 = vst [vmem:[%s14 + $0x18] sm:$0xff] %v3191
    %3200 = vst [vmem:[%s14 + $0x20] sm:$0xff] %v3192
    %3201 = vst [vmem:[%s14 + $0x28] sm:$0xff] %v3193
    %3202 = vst [vmem:[%s14 + $0x30] sm:$0xff] %v3194
    %3203 = vst [vmem:[%s14 + $0x38] sm:$0xff] %v3195
  $region65: #{pointnet_cls_forward.3} parent=0 // pred_fallthru
    _
  // Predicated region
  $region66: #{pointnet_cls_forward.3} parent=0 // pred_check
    %p3204 = pneg %p2894
  $region67: #{pointnet_cls_forward.3} parent=0 // pred_check_branch
    %3206 = sbr.rel (%p3204) target = $region69
  $region68: #{pointnet_cls_forward.3} parent=0 // pred_region
    %v3207 = vld [vmem:[%s14] sm:$0xff]
    %v3208 = vld [vmem:[%s14 + $0x8] sm:$0xff]
    %v3209 = vld [vmem:[%s14 + $0x10] sm:$0xff]
    %v3210 = vld [vmem:[%s14 + $0x18] sm:$0xff]
    %v3211 = vld [vmem:[%s14 + $0x20] sm:$0xff]
    %v3212 = vld [vmem:[%s14 + $0x28] sm:$0xff]
    %v3213 = vld [vmem:[%s14 + $0x30] sm:$0xff]
    %v3214 = vld [vmem:[%s14 + $0x38] sm:$0xff]
    %v3215 = vld [vmem:[%s8] sm:$0xff]
    %v3216 = vld [vmem:[%s8 + $0x8] sm:$0xff]
    %v3217 = vld [vmem:[%s8 + $0x10] sm:$0xff]
    %v3218 = vld [vmem:[%s8 + $0x18] sm:$0xff]
    %v3219 = vld [vmem:[%s8 + $0x20] sm:$0xff]
    %v3220 = vld [vmem:[%s8 + $0x28] sm:$0xff]
    %v3221 = vld [vmem:[%s8 + $0x30] sm:$0xff]
    %v3222 = vld [vmem:[%s8 + $0x38] sm:$0xff]
    %v3223 = vld [vmem:[%s8 + $0x40] sm:$0xff]
    %v3224 = vld [vmem:[%s8 + $0x48] sm:$0xff]
    %v3225 = vld [vmem:[%s8 + $0x50] sm:$0xff]
    %v3226 = vld [vmem:[%s8 + $0x58] sm:$0xff]
    %v3227 = vld [vmem:[%s8 + $0x60] sm:$0xff]
    %v3228 = vld [vmem:[%s8 + $0x68] sm:$0xff]
    %v3229 = vld [vmem:[%s8 + $0x70] sm:$0xff]
    %v3230 = vld [vmem:[%s8 + $0x78] sm:$0xff]
    %v3231 = vld [vmem:[%s8 + $0x80] sm:$0xff]
    %v3232 = vld [vmem:[%s8 + $0x88] sm:$0xff]
    %v3233 = vld [vmem:[%s8 + $0x90] sm:$0xff]
    %v3234 = vld [vmem:[%s8 + $0x98] sm:$0xff]
    %v3235 = vld [vmem:[%s8 + $0xa0] sm:$0xff]
    %v3236 = vld [vmem:[%s8 + $0xa8] sm:$0xff]
    %v3237 = vld [vmem:[%s8 + $0xb0] sm:$0xff]
    %v3238 = vld [vmem:[%s8 + $0xb8] sm:$0xff]
    %v3239 = vld [vmem:[%s8 + $0xc0] sm:$0xff]
    %v3240 = vld [vmem:[%s8 + $0xc8] sm:$0xff]
    %v3241 = vld [vmem:[%s8 + $0xd0] sm:$0xff]
    %v3242 = vld [vmem:[%s8 + $0xd8] sm:$0xff]
    %v3243 = vld [vmem:[%s8 + $0xe0] sm:$0xff]
    %v3244 = vld [vmem:[%s8 + $0xe8] sm:$0xff]
    %v3245 = vld [vmem:[%s8 + $0xf0] sm:$0xff]
    %v3246 = vld [vmem:[%s8 + $0xf8] sm:$0xff]
    %v3247 = vld [vmem:[%s8 + $0x100] sm:$0xff]
    %v3248 = vld [vmem:[%s8 + $0x108] sm:$0xff]
    %v3249 = vld [vmem:[%s8 + $0x110] sm:$0xff]
    %v3250 = vld [vmem:[%s8 + $0x118] sm:$0xff]
    %v3251 = vld [vmem:[%s8 + $0x120] sm:$0xff]
    %v3252 = vld [vmem:[%s8 + $0x128] sm:$0xff]
    %v3253 = vld [vmem:[%s8 + $0x130] sm:$0xff]
    %v3254 = vld [vmem:[%s8 + $0x138] sm:$0xff]
    %v3255 = vld [vmem:[%s8 + $0x140] sm:$0xff]
    %v3256 = vld [vmem:[%s8 + $0x148] sm:$0xff]
    %v3257 = vld [vmem:[%s8 + $0x150] sm:$0xff]
    %v3258 = vld [vmem:[%s8 + $0x158] sm:$0xff]
    %v3259 = vld [vmem:[%s8 + $0x160] sm:$0xff]
    %v3260 = vld [vmem:[%s8 + $0x168] sm:$0xff]
    %v3261 = vld [vmem:[%s8 + $0x170] sm:$0xff]
    %v3262 = vld [vmem:[%s8 + $0x178] sm:$0xff]
    %v3263 = vld [vmem:[%s8 + $0x180] sm:$0xff]
    %v3264 = vld [vmem:[%s8 + $0x188] sm:$0xff]
    %v3265 = vld [vmem:[%s8 + $0x190] sm:$0xff]
    %v3266 = vld [vmem:[%s8 + $0x198] sm:$0xff]
    %v3267 = vld [vmem:[%s8 + $0x1a0] sm:$0xff]
    %v3268 = vld [vmem:[%s8 + $0x1a8] sm:$0xff]
    %v3269 = vld [vmem:[%s8 + $0x1b0] sm:$0xff]
    %v3270 = vld [vmem:[%s8 + $0x1b8] sm:$0xff]
    %v3271 = vld [vmem:[%s8 + $0x1c0] sm:$0xff]
    %v3272 = vld [vmem:[%s8 + $0x1c8] sm:$0xff]
    %v3273 = vld [vmem:[%s8 + $0x1d0] sm:$0xff]
    %v3274 = vld [vmem:[%s8 + $0x1d8] sm:$0xff]
    %v3275 = vld [vmem:[%s8 + $0x1e0] sm:$0xff]
    %v3276 = vld [vmem:[%s8 + $0x1e8] sm:$0xff]
    %v3277 = vld [vmem:[%s8 + $0x1f0] sm:$0xff]
    %v3278 = vld [vmem:[%s8 + $0x1f8] sm:$0xff]
    %v3279 = vld [vmem:[%s8 + $0x200] sm:$0xff]
    %v3280 = vld [vmem:[%s8 + $0x208] sm:$0xff]
    %v3281 = vld [vmem:[%s8 + $0x210] sm:$0xff]
    %v3282 = vld [vmem:[%s8 + $0x218] sm:$0xff]
    %v3283 = vld [vmem:[%s8 + $0x220] sm:$0xff]
    %v3284 = vld [vmem:[%s8 + $0x228] sm:$0xff]
    %v3285 = vld [vmem:[%s8 + $0x230] sm:$0xff]
    %v3286 = vld [vmem:[%s8 + $0x238] sm:$0xff]
    %v3287 = vld [vmem:[%s8 + $0x240] sm:$0xff]
    %v3288 = vld [vmem:[%s8 + $0x248] sm:$0xff]
    %v3289 = vld [vmem:[%s8 + $0x250] sm:$0xff]
    %v3290 = vld [vmem:[%s8 + $0x258] sm:$0xff]
    %v3291 = vld [vmem:[%s8 + $0x260] sm:$0xff]
    %v3292 = vld [vmem:[%s8 + $0x268] sm:$0xff]
    %v3293 = vld [vmem:[%s8 + $0x270] sm:$0xff]
    %v3294 = vld [vmem:[%s8 + $0x278] sm:$0xff]
    %v3295 = vld [vmem:[%s8 + $0x280] sm:$0xff]
    %v3296 = vld [vmem:[%s8 + $0x288] sm:$0xff]
    %v3297 = vld [vmem:[%s8 + $0x290] sm:$0xff]
    %v3298 = vld [vmem:[%s8 + $0x298] sm:$0xff]
    %v3299 = vld [vmem:[%s8 + $0x2a0] sm:$0xff]
    %v3300 = vld [vmem:[%s8 + $0x2a8] sm:$0xff]
    %v3301 = vld [vmem:[%s8 + $0x2b0] sm:$0xff]
    %v3302 = vld [vmem:[%s8 + $0x2b8] sm:$0xff]
    %v3303 = vld [vmem:[%s8 + $0x2c0] sm:$0xff]
    %v3304 = vld [vmem:[%s8 + $0x2c8] sm:$0xff]
    %v3305 = vld [vmem:[%s8 + $0x2d0] sm:$0xff]
    %v3306 = vld [vmem:[%s8 + $0x2d8] sm:$0xff]
    %v3307 = vld [vmem:[%s8 + $0x2e0] sm:$0xff]
    %v3308 = vld [vmem:[%s8 + $0x2e8] sm:$0xff]
    %v3309 = vld [vmem:[%s8 + $0x2f0] sm:$0xff]
    %v3310 = vld [vmem:[%s8 + $0x2f8] sm:$0xff]
    %v3311 = vld [vmem:[%s8 + $0x300] sm:$0xff]
    %v3312 = vld [vmem:[%s8 + $0x308] sm:$0xff]
    %v3313 = vld [vmem:[%s8 + $0x310] sm:$0xff]
    %v3314 = vld [vmem:[%s8 + $0x318] sm:$0xff]
    %v3315 = vld [vmem:[%s8 + $0x320] sm:$0xff]
    %v3316 = vld [vmem:[%s8 + $0x328] sm:$0xff]
    %v3317 = vld [vmem:[%s8 + $0x330] sm:$0xff]
    %v3318 = vld [vmem:[%s8 + $0x338] sm:$0xff]
    %v3319 = vld [vmem:[%s8 + $0x340] sm:$0xff]
    %v3320 = vld [vmem:[%s8 + $0x348] sm:$0xff]
    %v3321 = vld [vmem:[%s8 + $0x350] sm:$0xff]
    %v3322 = vld [vmem:[%s8 + $0x358] sm:$0xff]
    %v3323 = vld [vmem:[%s8 + $0x360] sm:$0xff]
    %v3324 = vld [vmem:[%s8 + $0x368] sm:$0xff]
    %v3325 = vld [vmem:[%s8 + $0x370] sm:$0xff]
    %v3326 = vld [vmem:[%s8 + $0x378] sm:$0xff]
    %v3327 = vld [vmem:[%s8 + $0x380] sm:$0xff]
    %v3328 = vld [vmem:[%s8 + $0x388] sm:$0xff]
    %v3329 = vld [vmem:[%s8 + $0x390] sm:$0xff]
    %v3330 = vld [vmem:[%s8 + $0x398] sm:$0xff]
    %v3331 = vld [vmem:[%s8 + $0x3a0] sm:$0xff]
    %v3332 = vld [vmem:[%s8 + $0x3a8] sm:$0xff]
    %v3333 = vld [vmem:[%s8 + $0x3b0] sm:$0xff]
    %v3334 = vld [vmem:[%s8 + $0x3b8] sm:$0xff]
    %v3335 = vld [vmem:[%s8 + $0x3c0] sm:$0xff]
    %v3336 = vld [vmem:[%s8 + $0x3c8] sm:$0xff]
    %v3337 = vld [vmem:[%s8 + $0x3d0] sm:$0xff]
    %v3338 = vld [vmem:[%s8 + $0x3d8] sm:$0xff]
    %v3339 = vld [vmem:[%s8 + $0x3e0] sm:$0xff]
    %v3340 = vld [vmem:[%s8 + $0x3e8] sm:$0xff]
    %v3341 = vld [vmem:[%s8 + $0x3f0] sm:$0xff]
    %v3342 = vld [vmem:[%s8 + $0x3f8] sm:$0xff]
    %v3343 = vld [vmem:[%s8 + $0x400] sm:$0xff]
    %v3344 = vld [vmem:[%s8 + $0x408] sm:$0xff]
    %v3345 = vld [vmem:[%s8 + $0x410] sm:$0xff]
    %v3346 = vld [vmem:[%s8 + $0x418] sm:$0xff]
    %v3347 = vld [vmem:[%s8 + $0x420] sm:$0xff]
    %v3348 = vld [vmem:[%s8 + $0x428] sm:$0xff]
    %v3349 = vld [vmem:[%s8 + $0x430] sm:$0xff]
    %v3350 = vld [vmem:[%s8 + $0x438] sm:$0xff]
    %v3351 = vld [vmem:[%s8 + $0x440] sm:$0xff]
    %v3352 = vld [vmem:[%s8 + $0x448] sm:$0xff]
    %v3353 = vld [vmem:[%s8 + $0x450] sm:$0xff]
    %v3354 = vld [vmem:[%s8 + $0x458] sm:$0xff]
    %v3355 = vld [vmem:[%s8 + $0x460] sm:$0xff]
    %v3356 = vld [vmem:[%s8 + $0x468] sm:$0xff]
    %v3357 = vld [vmem:[%s8 + $0x470] sm:$0xff]
    %v3358 = vld [vmem:[%s8 + $0x478] sm:$0xff]
    %v3359 = vld [vmem:[%s8 + $0x480] sm:$0xff]
    %v3360 = vld [vmem:[%s8 + $0x488] sm:$0xff]
    %v3361 = vld [vmem:[%s8 + $0x490] sm:$0xff]
    %v3362 = vld [vmem:[%s8 + $0x498] sm:$0xff]
    %v3363 = vld [vmem:[%s8 + $0x4a0] sm:$0xff]
    %v3364 = vld [vmem:[%s8 + $0x4a8] sm:$0xff]
    %v3365 = vld [vmem:[%s8 + $0x4b0] sm:$0xff]
    %v3366 = vld [vmem:[%s8 + $0x4b8] sm:$0xff]
    %v3367 = vld [vmem:[%s8 + $0x4c0] sm:$0xff]
    %v3368 = vld [vmem:[%s8 + $0x4c8] sm:$0xff]
    %v3369 = vld [vmem:[%s8 + $0x4d0] sm:$0xff]
    %v3370 = vld [vmem:[%s8 + $0x4d8] sm:$0xff]
    %v3371 = vld [vmem:[%s8 + $0x4e0] sm:$0xff]
    %v3372 = vld [vmem:[%s8 + $0x4e8] sm:$0xff]
    %v3373 = vld [vmem:[%s8 + $0x4f0] sm:$0xff]
    %v3374 = vld [vmem:[%s8 + $0x4f8] sm:$0xff]
    %v3375 = vld [vmem:[%s8 + $0x500] sm:$0xff]
    %v3376 = vld [vmem:[%s8 + $0x508] sm:$0xff]
    %v3377 = vld [vmem:[%s8 + $0x510] sm:$0xff]
    %v3378 = vld [vmem:[%s8 + $0x518] sm:$0xff]
    %v3379 = vld [vmem:[%s8 + $0x520] sm:$0xff]
    %v3380 = vld [vmem:[%s8 + $0x528] sm:$0xff]
    %v3381 = vld [vmem:[%s8 + $0x530] sm:$0xff]
    %v3382 = vld [vmem:[%s8 + $0x538] sm:$0xff]
    %v3383 = vld [vmem:[%s8 + $0x540] sm:$0xff]
    %v3384 = vld [vmem:[%s8 + $0x548] sm:$0xff]
    %v3385 = vld [vmem:[%s8 + $0x550] sm:$0xff]
    %v3386 = vld [vmem:[%s8 + $0x558] sm:$0xff]
    %v3387 = vld [vmem:[%s8 + $0x560] sm:$0xff]
    %v3388 = vld [vmem:[%s8 + $0x568] sm:$0xff]
    %v3389 = vld [vmem:[%s8 + $0x570] sm:$0xff]
    %v3390 = vld [vmem:[%s8 + $0x578] sm:$0xff]
    %v3391 = vld [vmem:[%s8 + $0x580] sm:$0xff]
    %v3392 = vld [vmem:[%s8 + $0x588] sm:$0xff]
    %v3393 = vld [vmem:[%s8 + $0x590] sm:$0xff]
    %v3394 = vld [vmem:[%s8 + $0x598] sm:$0xff]
    %v3395 = vld [vmem:[%s8 + $0x5a0] sm:$0xff]
    %v3396 = vld [vmem:[%s8 + $0x5a8] sm:$0xff]
    %v3397 = vld [vmem:[%s8 + $0x5b0] sm:$0xff]
    %v3398 = vld [vmem:[%s8 + $0x5b8] sm:$0xff]
    %v3399 = vld [vmem:[%s8 + $0x5c0] sm:$0xff]
    %v3400 = vld [vmem:[%s8 + $0x5c8] sm:$0xff]
    %v3401 = vld [vmem:[%s8 + $0x5d0] sm:$0xff]
    %v3402 = vld [vmem:[%s8 + $0x5d8] sm:$0xff]
    %v3403 = vld [vmem:[%s8 + $0x5e0] sm:$0xff]
    %v3404 = vld [vmem:[%s8 + $0x5e8] sm:$0xff]
    %v3405 = vld [vmem:[%s8 + $0x5f0] sm:$0xff]
    %v3406 = vld [vmem:[%s8 + $0x5f8] sm:$0xff]
    %v3407 = vld [vmem:[%s8 + $0x600] sm:$0xff]
    %v3408 = vld [vmem:[%s8 + $0x608] sm:$0xff]
    %v3409 = vld [vmem:[%s8 + $0x610] sm:$0xff]
    %v3410 = vld [vmem:[%s8 + $0x618] sm:$0xff]
    %v3411 = vld [vmem:[%s8 + $0x620] sm:$0xff]
    %v3412 = vld [vmem:[%s8 + $0x628] sm:$0xff]
    %v3413 = vld [vmem:[%s8 + $0x630] sm:$0xff]
    %v3414 = vld [vmem:[%s8 + $0x638] sm:$0xff]
    %v3415 = vld [vmem:[%s8 + $0x640] sm:$0xff]
    %v3416 = vld [vmem:[%s8 + $0x648] sm:$0xff]
    %v3417 = vld [vmem:[%s8 + $0x650] sm:$0xff]
    %v3418 = vld [vmem:[%s8 + $0x658] sm:$0xff]
    %v3419 = vld [vmem:[%s8 + $0x660] sm:$0xff]
    %v3420 = vld [vmem:[%s8 + $0x668] sm:$0xff]
    %v3421 = vld [vmem:[%s8 + $0x670] sm:$0xff]
    %v3422 = vld [vmem:[%s8 + $0x678] sm:$0xff]
    %v3423 = vld [vmem:[%s8 + $0x680] sm:$0xff]
    %v3424 = vld [vmem:[%s8 + $0x688] sm:$0xff]
    %v3425 = vld [vmem:[%s8 + $0x690] sm:$0xff]
    %v3426 = vld [vmem:[%s8 + $0x698] sm:$0xff]
    %v3427 = vld [vmem:[%s8 + $0x6a0] sm:$0xff]
    %v3428 = vld [vmem:[%s8 + $0x6a8] sm:$0xff]
    %v3429 = vld [vmem:[%s8 + $0x6b0] sm:$0xff]
    %v3430 = vld [vmem:[%s8 + $0x6b8] sm:$0xff]
    %v3431 = vld [vmem:[%s8 + $0x6c0] sm:$0xff]
    %v3432 = vld [vmem:[%s8 + $0x6c8] sm:$0xff]
    %v3433 = vld [vmem:[%s8 + $0x6d0] sm:$0xff]
    %v3434 = vld [vmem:[%s8 + $0x6d8] sm:$0xff]
    %v3435 = vld [vmem:[%s8 + $0x6e0] sm:$0xff]
    %v3436 = vld [vmem:[%s8 + $0x6e8] sm:$0xff]
    %v3437 = vld [vmem:[%s8 + $0x6f0] sm:$0xff]
    %v3438 = vld [vmem:[%s8 + $0x6f8] sm:$0xff]
    %v3439 = vld [vmem:[%s8 + $0x700] sm:$0xff]
    %v3440 = vld [vmem:[%s8 + $0x708] sm:$0xff]
    %v3441 = vld [vmem:[%s8 + $0x710] sm:$0xff]
    %v3442 = vld [vmem:[%s8 + $0x718] sm:$0xff]
    %v3443 = vld [vmem:[%s8 + $0x720] sm:$0xff]
    %v3444 = vld [vmem:[%s8 + $0x728] sm:$0xff]
    %v3445 = vld [vmem:[%s8 + $0x730] sm:$0xff]
    %v3446 = vld [vmem:[%s8 + $0x738] sm:$0xff]
    %v3447 = vld [vmem:[%s8 + $0x740] sm:$0xff]
    %v3448 = vld [vmem:[%s8 + $0x748] sm:$0xff]
    %v3449 = vld [vmem:[%s8 + $0x750] sm:$0xff]
    %v3450 = vld [vmem:[%s8 + $0x758] sm:$0xff]
    %v3451 = vld [vmem:[%s8 + $0x760] sm:$0xff]
    %v3452 = vld [vmem:[%s8 + $0x768] sm:$0xff]
    %v3453 = vld [vmem:[%s8 + $0x770] sm:$0xff]
    %v3454 = vld [vmem:[%s8 + $0x778] sm:$0xff]
    %v3455 = vld [vmem:[%s8 + $0x780] sm:$0xff]
    %v3456 = vld [vmem:[%s8 + $0x788] sm:$0xff]
    %v3457 = vld [vmem:[%s8 + $0x790] sm:$0xff]
    %v3458 = vld [vmem:[%s8 + $0x798] sm:$0xff]
    %v3459 = vld [vmem:[%s8 + $0x7a0] sm:$0xff]
    %v3460 = vld [vmem:[%s8 + $0x7a8] sm:$0xff]
    %v3461 = vld [vmem:[%s8 + $0x7b0] sm:$0xff]
    %v3462 = vld [vmem:[%s8 + $0x7b8] sm:$0xff]
    %v3463 = vld [vmem:[%s8 + $0x7c0] sm:$0xff]
    %v3464 = vld [vmem:[%s8 + $0x7c8] sm:$0xff]
    %v3465 = vld [vmem:[%s8 + $0x7d0] sm:$0xff]
    %v3466 = vld [vmem:[%s8 + $0x7d8] sm:$0xff]
    %v3467 = vld [vmem:[%s8 + $0x7e0] sm:$0xff]
    %v3468 = vld [vmem:[%s8 + $0x7e8] sm:$0xff]
    %v3469 = vld [vmem:[%s8 + $0x7f0] sm:$0xff]
    %v3470 = vld [vmem:[%s8 + $0x7f8] sm:$0xff]
    %v3471 = vld [vmem:[%s8 + $0x800] sm:$0xff]
    %v3472 = vld [vmem:[%s8 + $0x808] sm:$0xff]
    %v3473 = vld [vmem:[%s8 + $0x810] sm:$0xff]
    %v3474 = vld [vmem:[%s8 + $0x818] sm:$0xff]
    %v3475 = vld [vmem:[%s8 + $0x820] sm:$0xff]
    %v3476 = vld [vmem:[%s8 + $0x828] sm:$0xff]
    %v3477 = vld [vmem:[%s8 + $0x830] sm:$0xff]
    %v3478 = vld [vmem:[%s8 + $0x838] sm:$0xff]
    %v3479 = vld [vmem:[%s8 + $0x840] sm:$0xff]
    %v3480 = vld [vmem:[%s8 + $0x848] sm:$0xff]
    %v3481 = vld [vmem:[%s8 + $0x850] sm:$0xff]
    %v3482 = vld [vmem:[%s8 + $0x858] sm:$0xff]
    %v3483 = vld [vmem:[%s8 + $0x860] sm:$0xff]
    %v3484 = vld [vmem:[%s8 + $0x868] sm:$0xff]
    %v3485 = vld [vmem:[%s8 + $0x870] sm:$0xff]
    %v3486 = vld [vmem:[%s8 + $0x878] sm:$0xff]
    %v3487 = vld [vmem:[%s8 + $0x880] sm:$0xff]
    %v3488 = vld [vmem:[%s8 + $0x888] sm:$0xff]
    %v3489 = vld [vmem:[%s8 + $0x890] sm:$0xff]
    %v3490 = vld [vmem:[%s8 + $0x898] sm:$0xff]
    %v3491 = vld [vmem:[%s8 + $0x8a0] sm:$0xff]
    %v3492 = vld [vmem:[%s8 + $0x8a8] sm:$0xff]
    %v3493 = vld [vmem:[%s8 + $0x8b0] sm:$0xff]
    %v3494 = vld [vmem:[%s8 + $0x8b8] sm:$0xff]
    %v3495 = vld [vmem:[%s8 + $0x8c0] sm:$0xff]
    %v3496 = vld [vmem:[%s8 + $0x8c8] sm:$0xff]
    %v3497 = vld [vmem:[%s8 + $0x8d0] sm:$0xff]
    %v3498 = vld [vmem:[%s8 + $0x8d8] sm:$0xff]
    %v3499 = vld [vmem:[%s8 + $0x8e0] sm:$0xff]
    %v3500 = vld [vmem:[%s8 + $0x8e8] sm:$0xff]
    %v3501 = vld [vmem:[%s8 + $0x8f0] sm:$0xff]
    %v3502 = vld [vmem:[%s8 + $0x8f8] sm:$0xff]
    %v3503 = vld [vmem:[%s8 + $0x900] sm:$0xff]
    %v3504 = vld [vmem:[%s8 + $0x908] sm:$0xff]
    %v3505 = vld [vmem:[%s8 + $0x910] sm:$0xff]
    %v3506 = vld [vmem:[%s8 + $0x918] sm:$0xff]
    %v3507 = vld [vmem:[%s8 + $0x920] sm:$0xff]
    %v3508 = vld [vmem:[%s8 + $0x928] sm:$0xff]
    %v3509 = vld [vmem:[%s8 + $0x930] sm:$0xff]
    %v3510 = vld [vmem:[%s8 + $0x938] sm:$0xff]
    %v3511 = vld [vmem:[%s8 + $0x940] sm:$0xff]
    %v3512 = vld [vmem:[%s8 + $0x948] sm:$0xff]
    %v3513 = vld [vmem:[%s8 + $0x950] sm:$0xff]
    %v3514 = vld [vmem:[%s8 + $0x958] sm:$0xff]
    %v3515 = vld [vmem:[%s8 + $0x960] sm:$0xff]
    %v3516 = vld [vmem:[%s8 + $0x968] sm:$0xff]
    %v3517 = vld [vmem:[%s8 + $0x970] sm:$0xff]
    %v3518 = vld [vmem:[%s8 + $0x978] sm:$0xff]
    %v3519 = vld [vmem:[%s8 + $0x980] sm:$0xff]
    %v3520 = vld [vmem:[%s8 + $0x988] sm:$0xff]
    %v3521 = vld [vmem:[%s8 + $0x990] sm:$0xff]
    %v3522 = vld [vmem:[%s8 + $0x998] sm:$0xff]
    %v3523 = vld [vmem:[%s8 + $0x9a0] sm:$0xff]
    %v3524 = vld [vmem:[%s8 + $0x9a8] sm:$0xff]
    %v3525 = vld [vmem:[%s8 + $0x9b0] sm:$0xff]
    %v3526 = vld [vmem:[%s8 + $0x9b8] sm:$0xff]
    %v3527 = vld [vmem:[%s8 + $0x9c0] sm:$0xff]
    %v3528 = vld [vmem:[%s8 + $0x9c8] sm:$0xff]
    %v3529 = vld [vmem:[%s8 + $0x9d0] sm:$0xff]
    %v3530 = vld [vmem:[%s8 + $0x9d8] sm:$0xff]
    %v3531 = vld [vmem:[%s8 + $0x9e0] sm:$0xff]
    %v3532 = vld [vmem:[%s8 + $0x9e8] sm:$0xff]
    %v3533 = vld [vmem:[%s8 + $0x9f0] sm:$0xff]
    %v3534 = vld [vmem:[%s8 + $0x9f8] sm:$0xff]
    %v3535 = vld [vmem:[%s8 + $0xa00] sm:$0xff]
    %v3536 = vld [vmem:[%s8 + $0xa08] sm:$0xff]
    %v3537 = vld [vmem:[%s8 + $0xa10] sm:$0xff]
    %v3538 = vld [vmem:[%s8 + $0xa18] sm:$0xff]
    %v3539 = vld [vmem:[%s8 + $0xa20] sm:$0xff]
    %v3540 = vld [vmem:[%s8 + $0xa28] sm:$0xff]
    %v3541 = vld [vmem:[%s8 + $0xa30] sm:$0xff]
    %v3542 = vld [vmem:[%s8 + $0xa38] sm:$0xff]
    %v3543 = vld [vmem:[%s8 + $0xa40] sm:$0xff]
    %v3544 = vld [vmem:[%s8 + $0xa48] sm:$0xff]
    %v3545 = vld [vmem:[%s8 + $0xa50] sm:$0xff]
    %v3546 = vld [vmem:[%s8 + $0xa58] sm:$0xff]
    %v3547 = vld [vmem:[%s8 + $0xa60] sm:$0xff]
    %v3548 = vld [vmem:[%s8 + $0xa68] sm:$0xff]
    %v3549 = vld [vmem:[%s8 + $0xa70] sm:$0xff]
    %v3550 = vld [vmem:[%s8 + $0xa78] sm:$0xff]
    %v3551 = vld [vmem:[%s8 + $0xa80] sm:$0xff]
    %v3552 = vld [vmem:[%s8 + $0xa88] sm:$0xff]
    %v3553 = vld [vmem:[%s8 + $0xa90] sm:$0xff]
    %v3554 = vld [vmem:[%s8 + $0xa98] sm:$0xff]
    %v3555 = vld [vmem:[%s8 + $0xaa0] sm:$0xff]
    %v3556 = vld [vmem:[%s8 + $0xaa8] sm:$0xff]
    %v3557 = vld [vmem:[%s8 + $0xab0] sm:$0xff]
    %v3558 = vld [vmem:[%s8 + $0xab8] sm:$0xff]
    %v3559 = vld [vmem:[%s8 + $0xac0] sm:$0xff]
    %v3560 = vld [vmem:[%s8 + $0xac8] sm:$0xff]
    %v3561 = vld [vmem:[%s8 + $0xad0] sm:$0xff]
    %v3562 = vld [vmem:[%s8 + $0xad8] sm:$0xff]
    %v3563 = vld [vmem:[%s8 + $0xae0] sm:$0xff]
    %v3564 = vld [vmem:[%s8 + $0xae8] sm:$0xff]
    %v3565 = vld [vmem:[%s8 + $0xaf0] sm:$0xff]
    %v3566 = vld [vmem:[%s8 + $0xaf8] sm:$0xff]
    %v3567 = vld [vmem:[%s8 + $0xb00] sm:$0xff]
    %v3568 = vld [vmem:[%s8 + $0xb08] sm:$0xff]
    %v3569 = vld [vmem:[%s8 + $0xb10] sm:$0xff]
    %v3570 = vld [vmem:[%s8 + $0xb18] sm:$0xff]
    %v3571 = vld [vmem:[%s8 + $0xb20] sm:$0xff]
    %v3572 = vld [vmem:[%s8 + $0xb28] sm:$0xff]
    %v3573 = vld [vmem:[%s8 + $0xb30] sm:$0xff]
    %v3574 = vld [vmem:[%s8 + $0xb38] sm:$0xff]
    %v3575 = vld [vmem:[%s8 + $0xb40] sm:$0xff]
    %v3576 = vld [vmem:[%s8 + $0xb48] sm:$0xff]
    %v3577 = vld [vmem:[%s8 + $0xb50] sm:$0xff]
    %v3578 = vld [vmem:[%s8 + $0xb58] sm:$0xff]
    %v3579 = vld [vmem:[%s8 + $0xb60] sm:$0xff]
    %v3580 = vld [vmem:[%s8 + $0xb68] sm:$0xff]
    %v3581 = vld [vmem:[%s8 + $0xb70] sm:$0xff]
    %v3582 = vld [vmem:[%s8 + $0xb78] sm:$0xff]
    %v3583 = vld [vmem:[%s8 + $0xb80] sm:$0xff]
    %v3584 = vld [vmem:[%s8 + $0xb88] sm:$0xff]
    %v3585 = vld [vmem:[%s8 + $0xb90] sm:$0xff]
    %v3586 = vld [vmem:[%s8 + $0xb98] sm:$0xff]
    %v3587 = vld [vmem:[%s8 + $0xba0] sm:$0xff]
    %v3588 = vld [vmem:[%s8 + $0xba8] sm:$0xff]
    %v3589 = vld [vmem:[%s8 + $0xbb0] sm:$0xff]
    %v3590 = vld [vmem:[%s8 + $0xbb8] sm:$0xff]
    %v3591 = vld [vmem:[%s8 + $0xbc0] sm:$0xff]
    %v3592 = vld [vmem:[%s8 + $0xbc8] sm:$0xff]
    %v3593 = vld [vmem:[%s8 + $0xbd0] sm:$0xff]
    %v3594 = vld [vmem:[%s8 + $0xbd8] sm:$0xff]
    %v3595 = vld [vmem:[%s8 + $0xbe0] sm:$0xff]
    %v3596 = vld [vmem:[%s8 + $0xbe8] sm:$0xff]
    %v3597 = vld [vmem:[%s8 + $0xbf0] sm:$0xff]
    %v3598 = vld [vmem:[%s8 + $0xbf8] sm:$0xff]
    %v3599 = vld [vmem:[%s8 + $0xc00] sm:$0xff]
    %v3600 = vld [vmem:[%s8 + $0xc08] sm:$0xff]
    %v3601 = vld [vmem:[%s8 + $0xc10] sm:$0xff]
    %v3602 = vld [vmem:[%s8 + $0xc18] sm:$0xff]
    %v3603 = vld [vmem:[%s8 + $0xc20] sm:$0xff]
    %v3604 = vld [vmem:[%s8 + $0xc28] sm:$0xff]
    %v3605 = vld [vmem:[%s8 + $0xc30] sm:$0xff]
    %v3606 = vld [vmem:[%s8 + $0xc38] sm:$0xff]
    %v3607 = vld [vmem:[%s8 + $0xc40] sm:$0xff]
    %v3608 = vld [vmem:[%s8 + $0xc48] sm:$0xff]
    %v3609 = vld [vmem:[%s8 + $0xc50] sm:$0xff]
    %v3610 = vld [vmem:[%s8 + $0xc58] sm:$0xff]
    %v3611 = vld [vmem:[%s8 + $0xc60] sm:$0xff]
    %v3612 = vld [vmem:[%s8 + $0xc68] sm:$0xff]
    %v3613 = vld [vmem:[%s8 + $0xc70] sm:$0xff]
    %v3614 = vld [vmem:[%s8 + $0xc78] sm:$0xff]
    %v3615 = vld [vmem:[%s8 + $0xc80] sm:$0xff]
    %v3616 = vld [vmem:[%s8 + $0xc88] sm:$0xff]
    %v3617 = vld [vmem:[%s8 + $0xc90] sm:$0xff]
    %v3618 = vld [vmem:[%s8 + $0xc98] sm:$0xff]
    %v3619 = vld [vmem:[%s8 + $0xca0] sm:$0xff]
    %v3620 = vld [vmem:[%s8 + $0xca8] sm:$0xff]
    %v3621 = vld [vmem:[%s8 + $0xcb0] sm:$0xff]
    %v3622 = vld [vmem:[%s8 + $0xcb8] sm:$0xff]
    %v3623 = vld [vmem:[%s8 + $0xcc0] sm:$0xff]
    %v3624 = vld [vmem:[%s8 + $0xcc8] sm:$0xff]
    %v3625 = vld [vmem:[%s8 + $0xcd0] sm:$0xff]
    %v3626 = vld [vmem:[%s8 + $0xcd8] sm:$0xff]
    %v3627 = vld [vmem:[%s8 + $0xce0] sm:$0xff]
    %v3628 = vld [vmem:[%s8 + $0xce8] sm:$0xff]
    %v3629 = vld [vmem:[%s8 + $0xcf0] sm:$0xff]
    %v3630 = vld [vmem:[%s8 + $0xcf8] sm:$0xff]
    %v3631 = vld [vmem:[%s8 + $0xd00] sm:$0xff]
    %v3632 = vld [vmem:[%s8 + $0xd08] sm:$0xff]
    %v3633 = vld [vmem:[%s8 + $0xd10] sm:$0xff]
    %v3634 = vld [vmem:[%s8 + $0xd18] sm:$0xff]
    %v3635 = vld [vmem:[%s8 + $0xd20] sm:$0xff]
    %v3636 = vld [vmem:[%s8 + $0xd28] sm:$0xff]
    %v3637 = vld [vmem:[%s8 + $0xd30] sm:$0xff]
    %v3638 = vld [vmem:[%s8 + $0xd38] sm:$0xff]
    %v3639 = vld [vmem:[%s8 + $0xd40] sm:$0xff]
    %v3640 = vld [vmem:[%s8 + $0xd48] sm:$0xff]
    %v3641 = vld [vmem:[%s8 + $0xd50] sm:$0xff]
    %v3642 = vld [vmem:[%s8 + $0xd58] sm:$0xff]
    %v3643 = vld [vmem:[%s8 + $0xd60] sm:$0xff]
    %v3644 = vld [vmem:[%s8 + $0xd68] sm:$0xff]
    %v3645 = vld [vmem:[%s8 + $0xd70] sm:$0xff]
    %v3646 = vld [vmem:[%s8 + $0xd78] sm:$0xff]
    %v3647 = vld [vmem:[%s8 + $0xd80] sm:$0xff]
    %v3648 = vld [vmem:[%s8 + $0xd88] sm:$0xff]
    %v3649 = vld [vmem:[%s8 + $0xd90] sm:$0xff]
    %v3650 = vld [vmem:[%s8 + $0xd98] sm:$0xff]
    %v3651 = vld [vmem:[%s8 + $0xda0] sm:$0xff]
    %v3652 = vld [vmem:[%s8 + $0xda8] sm:$0xff]
    %v3653 = vld [vmem:[%s8 + $0xdb0] sm:$0xff]
    %v3654 = vld [vmem:[%s8 + $0xdb8] sm:$0xff]
    %v3655 = vld [vmem:[%s8 + $0xdc0] sm:$0xff]
    %v3656 = vld [vmem:[%s8 + $0xdc8] sm:$0xff]
    %v3657 = vld [vmem:[%s8 + $0xdd0] sm:$0xff]
    %v3658 = vld [vmem:[%s8 + $0xdd8] sm:$0xff]
    %v3659 = vld [vmem:[%s8 + $0xde0] sm:$0xff]
    %v3660 = vld [vmem:[%s8 + $0xde8] sm:$0xff]
    %v3661 = vld [vmem:[%s8 + $0xdf0] sm:$0xff]
    %v3662 = vld [vmem:[%s8 + $0xdf8] sm:$0xff]
    %v3663 = vld [vmem:[%s8 + $0xe00] sm:$0xff]
    %v3664 = vld [vmem:[%s8 + $0xe08] sm:$0xff]
    %v3665 = vld [vmem:[%s8 + $0xe10] sm:$0xff]
    %v3666 = vld [vmem:[%s8 + $0xe18] sm:$0xff]
    %v3667 = vld [vmem:[%s8 + $0xe20] sm:$0xff]
    %v3668 = vld [vmem:[%s8 + $0xe28] sm:$0xff]
    %v3669 = vld [vmem:[%s8 + $0xe30] sm:$0xff]
    %v3670 = vld [vmem:[%s8 + $0xe38] sm:$0xff]
    %v3671 = vld [vmem:[%s8 + $0xe40] sm:$0xff]
    %v3672 = vld [vmem:[%s8 + $0xe48] sm:$0xff]
    %v3673 = vld [vmem:[%s8 + $0xe50] sm:$0xff]
    %v3674 = vld [vmem:[%s8 + $0xe58] sm:$0xff]
    %v3675 = vld [vmem:[%s8 + $0xe60] sm:$0xff]
    %v3676 = vld [vmem:[%s8 + $0xe68] sm:$0xff]
    %v3677 = vld [vmem:[%s8 + $0xe70] sm:$0xff]
    %v3678 = vld [vmem:[%s8 + $0xe78] sm:$0xff]
    %v3679 = vld [vmem:[%s8 + $0xe80] sm:$0xff]
    %v3680 = vld [vmem:[%s8 + $0xe88] sm:$0xff]
    %v3681 = vld [vmem:[%s8 + $0xe90] sm:$0xff]
    %v3682 = vld [vmem:[%s8 + $0xe98] sm:$0xff]
    %v3683 = vld [vmem:[%s8 + $0xea0] sm:$0xff]
    %v3684 = vld [vmem:[%s8 + $0xea8] sm:$0xff]
    %v3685 = vld [vmem:[%s8 + $0xeb0] sm:$0xff]
    %v3686 = vld [vmem:[%s8 + $0xeb8] sm:$0xff]
    %v3687 = vld [vmem:[%s8 + $0xec0] sm:$0xff]
    %v3688 = vld [vmem:[%s8 + $0xec8] sm:$0xff]
    %v3689 = vld [vmem:[%s8 + $0xed0] sm:$0xff]
    %v3690 = vld [vmem:[%s8 + $0xed8] sm:$0xff]
    %v3691 = vld [vmem:[%s8 + $0xee0] sm:$0xff]
    %v3692 = vld [vmem:[%s8 + $0xee8] sm:$0xff]
    %v3693 = vld [vmem:[%s8 + $0xef0] sm:$0xff]
    %v3694 = vld [vmem:[%s8 + $0xef8] sm:$0xff]
    %v3695 = vld [vmem:[%s8 + $0xf00] sm:$0xff]
    %v3696 = vld [vmem:[%s8 + $0xf08] sm:$0xff]
    %v3697 = vld [vmem:[%s8 + $0xf10] sm:$0xff]
    %v3698 = vld [vmem:[%s8 + $0xf18] sm:$0xff]
    %v3699 = vld [vmem:[%s8 + $0xf20] sm:$0xff]
    %v3700 = vld [vmem:[%s8 + $0xf28] sm:$0xff]
    %v3701 = vld [vmem:[%s8 + $0xf30] sm:$0xff]
    %v3702 = vld [vmem:[%s8 + $0xf38] sm:$0xff]
    %v3703 = vld [vmem:[%s8 + $0xf40] sm:$0xff]
    %v3704 = vld [vmem:[%s8 + $0xf48] sm:$0xff]
    %v3705 = vld [vmem:[%s8 + $0xf50] sm:$0xff]
    %v3706 = vld [vmem:[%s8 + $0xf58] sm:$0xff]
    %v3707 = vld [vmem:[%s8 + $0xf60] sm:$0xff]
    %v3708 = vld [vmem:[%s8 + $0xf68] sm:$0xff]
    %v3709 = vld [vmem:[%s8 + $0xf70] sm:$0xff]
    %v3710 = vld [vmem:[%s8 + $0xf78] sm:$0xff]
    %v3711 = vld [vmem:[%s8 + $0xf80] sm:$0xff]
    %v3712 = vld [vmem:[%s8 + $0xf88] sm:$0xff]
    %v3713 = vld [vmem:[%s8 + $0xf90] sm:$0xff]
    %v3714 = vld [vmem:[%s8 + $0xf98] sm:$0xff]
    %v3715 = vld [vmem:[%s8 + $0xfa0] sm:$0xff]
    %v3716 = vld [vmem:[%s8 + $0xfa8] sm:$0xff]
    %v3717 = vld [vmem:[%s8 + $0xfb0] sm:$0xff]
    %v3718 = vld [vmem:[%s8 + $0xfb8] sm:$0xff]
    %v3719 = vld [vmem:[%s8 + $0xfc0] sm:$0xff]
    %v3720 = vld [vmem:[%s8 + $0xfc8] sm:$0xff]
    %v3721 = vld [vmem:[%s8 + $0xfd0] sm:$0xff]
    %v3722 = vld [vmem:[%s8 + $0xfd8] sm:$0xff]
    %v3723 = vld [vmem:[%s8 + $0xfe0] sm:$0xff]
    %v3724 = vld [vmem:[%s8 + $0xfe8] sm:$0xff]
    %v3725 = vld [vmem:[%s8 + $0xff0] sm:$0xff]
    %v3726 = vld [vmem:[%s8 + $0xff8] sm:$0xff]
    %v3727 = vld [vmem:[%s9] sm:$0xf]
    %v3729 = vlaneseq
    %v3730 = vshrl.u32 %v3729, 7
    %v3731 = vsub.s32 0, %v3730
    %v3732 = vrot.slane %v3727, %v3731
    %v3733 = vlaneseq
    %v3734 = vshrl.u32 %v3733, 7
    %v3735 = vsub.s32 1, %v3734
    %v3736 = vrot.slane %v3727, %v3735
    %v3737 = vlaneseq
    %v3738 = vshrl.u32 %v3737, 7
    %v3739 = vsub.s32 2, %v3738
    %v3740 = vrot.slane %v3727, %v3739
    %v3741 = vlaneseq
    %v3742 = vshrl.u32 %v3741, 7
    %v3743 = vsub.s32 3, %v3742
    %v3744 = vrot.slane %v3727, %v3743
    %3749 = vmatprep.subr.mxu0 %v3216
    %3750 = vmatpush1.msra.mxu0 %v3215
    %3751 = vmatprep.subr.mxu0 %v3220
    %3752 = vmatpush1.msra.mxu0 %v3219
    %3753 = vmatprep.subr.mxu0 %v3224
    %3754 = vmatpush1.msra.mxu0 %v3223
    %3755 = vmatprep.subr.mxu0 %v3228
    %3756 = vmatpush1.msra.mxu0 %v3227
    %3757 = vmatprep.subr.mxu0 %v3232
    %3758 = vmatpush1.msra.mxu0 %v3231
    %3759 = vmatprep.subr.mxu0 %v3236
    %3760 = vmatpush1.msra.mxu0 %v3235
    %3761 = vmatprep.subr.mxu0 %v3240
    %3762 = vmatpush1.msra.mxu0 %v3239
    %3763 = vmatprep.subr.mxu0 %v3244
    %3764 = vmatpush1.msra.mxu0 %v3243
    %3765 = vmatprep.subr.mxu0 %v3248
    %3766 = vmatpush1.msra.mxu0 %v3247
    %3767 = vmatprep.subr.mxu0 %v3252
    %3768 = vmatpush1.msra.mxu0 %v3251
    %3769 = vmatprep.subr.mxu0 %v3256
    %3770 = vmatpush1.msra.mxu0 %v3255
    %3771 = vmatprep.subr.mxu0 %v3260
    %3772 = vmatpush1.msra.mxu0 %v3259
    %3773 = vmatprep.subr.mxu0 %v3264
    %3774 = vmatpush1.msra.mxu0 %v3263
    %3775 = vmatprep.subr.mxu0 %v3268
    %3776 = vmatpush1.msra.mxu0 %v3267
    %3777 = vmatprep.subr.mxu0 %v3272
    %3778 = vmatpush1.msra.mxu0 %v3271
    %3779 = vmatprep.subr.mxu0 %v3276
    %3780 = vmatpush1.msra.mxu0 %v3275
    %3781 = vmatprep.subr.mxu0 %v3280
    %3782 = vmatpush1.msra.mxu0 %v3279
    %3783 = vmatprep.subr.mxu0 %v3284
    %3784 = vmatpush1.msra.mxu0 %v3283
    %3785 = vmatprep.subr.mxu0 %v3288
    %3786 = vmatpush1.msra.mxu0 %v3287
    %3787 = vmatprep.subr.mxu0 %v3292
    %3788 = vmatpush1.msra.mxu0 %v3291
    %3789 = vmatprep.subr.mxu0 %v3296
    %3790 = vmatpush1.msra.mxu0 %v3295
    %3791 = vmatprep.subr.mxu0 %v3300
    %3792 = vmatpush1.msra.mxu0 %v3299
    %3793 = vmatprep.subr.mxu0 %v3304
    %3794 = vmatpush1.msra.mxu0 %v3303
    %3795 = vmatprep.subr.mxu0 %v3308
    %3796 = vmatpush1.msra.mxu0 %v3307
    %3797 = vmatprep.subr.mxu0 %v3312
    %3798 = vmatpush1.msra.mxu0 %v3311
    %3799 = vmatprep.subr.mxu0 %v3316
    %3800 = vmatpush1.msra.mxu0 %v3315
    %3801 = vmatprep.subr.mxu0 %v3320
    %3802 = vmatpush1.msra.mxu0 %v3319
    %3803 = vmatprep.subr.mxu0 %v3324
    %3804 = vmatpush1.msra.mxu0 %v3323
    %3805 = vmatprep.subr.mxu0 %v3328
    %3806 = vmatpush1.msra.mxu0 %v3327
    %3807 = vmatprep.subr.mxu0 %v3332
    %3808 = vmatpush1.msra.mxu0 %v3331
    %3809 = vmatprep.subr.mxu0 %v3336
    %3810 = vmatpush1.msra.mxu0 %v3335
    %3811 = vmatprep.subr.mxu0 %v3340
    %3812 = vmatpush1.msra.mxu0 %v3339
    %3813 = vmatprep.mubr.f32.mxu0 %v3208
    %3814 = vmatmul.mubr.f32.gmra.mrb[0].mxu0 %v3207
    %v3815 = vpop.f32.mrb[0].mxu0
    %v3816 = vadd.f32 %v3732, %v3815
    %v3817 = vpop.f32.mrb[0].mxu0
    %v3818 = vadd.f32 %v3736, %v3817
    %3819 = vdwg.mxu0
    %3820 = vmatprep.subr.mxu0 %v3344
    %3821 = vmatpush1.msra.mxu0 %v3343
    %3822 = vmatprep.subr.mxu0 %v3348
    %3823 = vmatpush1.msra.mxu0 %v3347
    %3824 = vmatprep.subr.mxu0 %v3352
    %3825 = vmatpush1.msra.mxu0 %v3351
    %3826 = vmatprep.subr.mxu0 %v3356
    %3827 = vmatpush1.msra.mxu0 %v3355
    %3828 = vmatprep.subr.mxu0 %v3360
    %3829 = vmatpush1.msra.mxu0 %v3359
    %3830 = vmatprep.subr.mxu0 %v3364
    %3831 = vmatpush1.msra.mxu0 %v3363
    %3832 = vmatprep.subr.mxu0 %v3368
    %3833 = vmatpush1.msra.mxu0 %v3367
    %3834 = vmatprep.subr.mxu0 %v3372
    %3835 = vmatpush1.msra.mxu0 %v3371
    %3836 = vmatprep.subr.mxu0 %v3376
    %3837 = vmatpush1.msra.mxu0 %v3375
    %3838 = vmatprep.subr.mxu0 %v3380
    %3839 = vmatpush1.msra.mxu0 %v3379
    %3840 = vmatprep.subr.mxu0 %v3384
    %3841 = vmatpush1.msra.mxu0 %v3383
    %3842 = vmatprep.subr.mxu0 %v3388
    %3843 = vmatpush1.msra.mxu0 %v3387
    %3844 = vmatprep.subr.mxu0 %v3392
    %3845 = vmatpush1.msra.mxu0 %v3391
    %3846 = vmatprep.subr.mxu0 %v3396
    %3847 = vmatpush1.msra.mxu0 %v3395
    %3848 = vmatprep.subr.mxu0 %v3400
    %3849 = vmatpush1.msra.mxu0 %v3399
    %3850 = vmatprep.subr.mxu0 %v3404
    %3851 = vmatpush1.msra.mxu0 %v3403
    %3852 = vmatprep.subr.mxu0 %v3408
    %3853 = vmatpush1.msra.mxu0 %v3407
    %3854 = vmatprep.subr.mxu0 %v3412
    %3855 = vmatpush1.msra.mxu0 %v3411
    %3856 = vmatprep.subr.mxu0 %v3416
    %3857 = vmatpush1.msra.mxu0 %v3415
    %3858 = vmatprep.subr.mxu0 %v3420
    %3859 = vmatpush1.msra.mxu0 %v3419
    %3860 = vmatprep.subr.mxu0 %v3424
    %3861 = vmatpush1.msra.mxu0 %v3423
    %3862 = vmatprep.subr.mxu0 %v3428
    %3863 = vmatpush1.msra.mxu0 %v3427
    %3864 = vmatprep.subr.mxu0 %v3432
    %3865 = vmatpush1.msra.mxu0 %v3431
    %3866 = vmatprep.subr.mxu0 %v3436
    %3867 = vmatpush1.msra.mxu0 %v3435
    %3868 = vmatprep.subr.mxu0 %v3440
    %3869 = vmatpush1.msra.mxu0 %v3439
    %3870 = vmatprep.subr.mxu0 %v3444
    %3871 = vmatpush1.msra.mxu0 %v3443
    %3872 = vmatprep.subr.mxu0 %v3448
    %3873 = vmatpush1.msra.mxu0 %v3447
    %3874 = vmatprep.subr.mxu0 %v3452
    %3875 = vmatpush1.msra.mxu0 %v3451
    %3876 = vmatprep.subr.mxu0 %v3456
    %3877 = vmatpush1.msra.mxu0 %v3455
    %3878 = vmatprep.subr.mxu0 %v3460
    %3879 = vmatpush1.msra.mxu0 %v3459
    %3880 = vmatprep.subr.mxu0 %v3464
    %3881 = vmatpush1.msra.mxu0 %v3463
    %3882 = vmatprep.subr.mxu0 %v3468
    %3883 = vmatpush1.msra.mxu0 %v3467
    %3884 = vmatprep.mubr.f32.mxu0 %v3210
    %3885 = vmatmul.mubr.f32.gmra.mrb[0].mxu0 %v3209
    %v3886 = vpop.f32.mrb[0].mxu0
    %v3887 = vadd.f32 %v3816, %v3886
    %v3888 = vpop.f32.mrb[0].mxu0
    %v3889 = vadd.f32 %v3818, %v3888
    %3890 = vdwg.mxu0
    %3891 = vmatprep.subr.mxu0 %v3472
    %3892 = vmatpush1.msra.mxu0 %v3471
    %3893 = vmatprep.subr.mxu0 %v3476
    %3894 = vmatpush1.msra.mxu0 %v3475
    %3895 = vmatprep.subr.mxu0 %v3480
    %3896 = vmatpush1.msra.mxu0 %v3479
    %3897 = vmatprep.subr.mxu0 %v3484
    %3898 = vmatpush1.msra.mxu0 %v3483
    %3899 = vmatprep.subr.mxu0 %v3488
    %3900 = vmatpush1.msra.mxu0 %v3487
    %3901 = vmatprep.subr.mxu0 %v3492
    %3902 = vmatpush1.msra.mxu0 %v3491
    %3903 = vmatprep.subr.mxu0 %v3496
    %3904 = vmatpush1.msra.mxu0 %v3495
    %3905 = vmatprep.subr.mxu0 %v3500
    %3906 = vmatpush1.msra.mxu0 %v3499
    %3907 = vmatprep.subr.mxu0 %v3504
    %3908 = vmatpush1.msra.mxu0 %v3503
    %3909 = vmatprep.subr.mxu0 %v3508
    %3910 = vmatpush1.msra.mxu0 %v3507
    %3911 = vmatprep.subr.mxu0 %v3512
    %3912 = vmatpush1.msra.mxu0 %v3511
    %3913 = vmatprep.subr.mxu0 %v3516
    %3914 = vmatpush1.msra.mxu0 %v3515
    %3915 = vmatprep.subr.mxu0 %v3520
    %3916 = vmatpush1.msra.mxu0 %v3519
    %3917 = vmatprep.subr.mxu0 %v3524
    %3918 = vmatpush1.msra.mxu0 %v3523
    %3919 = vmatprep.subr.mxu0 %v3528
    %3920 = vmatpush1.msra.mxu0 %v3527
    %3921 = vmatprep.subr.mxu0 %v3532
    %3922 = vmatpush1.msra.mxu0 %v3531
    %3923 = vmatprep.subr.mxu0 %v3536
    %3924 = vmatpush1.msra.mxu0 %v3535
    %3925 = vmatprep.subr.mxu0 %v3540
    %3926 = vmatpush1.msra.mxu0 %v3539
    %3927 = vmatprep.subr.mxu0 %v3544
    %3928 = vmatpush1.msra.mxu0 %v3543
    %3929 = vmatprep.subr.mxu0 %v3548
    %3930 = vmatpush1.msra.mxu0 %v3547
    %3931 = vmatprep.subr.mxu0 %v3552
    %3932 = vmatpush1.msra.mxu0 %v3551
    %3933 = vmatprep.subr.mxu0 %v3556
    %3934 = vmatpush1.msra.mxu0 %v3555
    %3935 = vmatprep.subr.mxu0 %v3560
    %3936 = vmatpush1.msra.mxu0 %v3559
    %3937 = vmatprep.subr.mxu0 %v3564
    %3938 = vmatpush1.msra.mxu0 %v3563
    %3939 = vmatprep.subr.mxu0 %v3568
    %3940 = vmatpush1.msra.mxu0 %v3567
    %3941 = vmatprep.subr.mxu0 %v3572
    %3942 = vmatpush1.msra.mxu0 %v3571
    %3943 = vmatprep.subr.mxu0 %v3576
    %3944 = vmatpush1.msra.mxu0 %v3575
    %3945 = vmatprep.subr.mxu0 %v3580
    %3946 = vmatpush1.msra.mxu0 %v3579
    %3947 = vmatprep.subr.mxu0 %v3584
    %3948 = vmatpush1.msra.mxu0 %v3583
    %3949 = vmatprep.subr.mxu0 %v3588
    %3950 = vmatpush1.msra.mxu0 %v3587
    %3951 = vmatprep.subr.mxu0 %v3592
    %3952 = vmatpush1.msra.mxu0 %v3591
    %3953 = vmatprep.subr.mxu0 %v3596
    %3954 = vmatpush1.msra.mxu0 %v3595
    %3955 = vmatprep.mubr.f32.mxu0 %v3212
    %3956 = vmatmul.mubr.f32.gmra.mrb[0].mxu0 %v3211
    %v3957 = vpop.f32.mrb[0].mxu0
    %v3958 = vadd.f32 %v3887, %v3957
    %v3959 = vpop.f32.mrb[0].mxu0
    %v3960 = vadd.f32 %v3889, %v3959
    %3961 = vdwg.mxu0
    %3962 = vmatprep.subr.mxu0 %v3600
    %3963 = vmatpush1.msra.mxu0 %v3599
    %3964 = vmatprep.subr.mxu0 %v3604
    %3965 = vmatpush1.msra.mxu0 %v3603
    %3966 = vmatprep.subr.mxu0 %v3608
    %3967 = vmatpush1.msra.mxu0 %v3607
    %3968 = vmatprep.subr.mxu0 %v3612
    %3969 = vmatpush1.msra.mxu0 %v3611
    %3970 = vmatprep.subr.mxu0 %v3616
    %3971 = vmatpush1.msra.mxu0 %v3615
    %3972 = vmatprep.subr.mxu0 %v3620
    %3973 = vmatpush1.msra.mxu0 %v3619
    %3974 = vmatprep.subr.mxu0 %v3624
    %3975 = vmatpush1.msra.mxu0 %v3623
    %3976 = vmatprep.subr.mxu0 %v3628
    %3977 = vmatpush1.msra.mxu0 %v3627
    %3978 = vmatprep.subr.mxu0 %v3632
    %3979 = vmatpush1.msra.mxu0 %v3631
    %3980 = vmatprep.subr.mxu0 %v3636
    %3981 = vmatpush1.msra.mxu0 %v3635
    %3982 = vmatprep.subr.mxu0 %v3640
    %3983 = vmatpush1.msra.mxu0 %v3639
    %3984 = vmatprep.subr.mxu0 %v3644
    %3985 = vmatpush1.msra.mxu0 %v3643
    %3986 = vmatprep.subr.mxu0 %v3648
    %3987 = vmatpush1.msra.mxu0 %v3647
    %3988 = vmatprep.subr.mxu0 %v3652
    %3989 = vmatpush1.msra.mxu0 %v3651
    %3990 = vmatprep.subr.mxu0 %v3656
    %3991 = vmatpush1.msra.mxu0 %v3655
    %3992 = vmatprep.subr.mxu0 %v3660
    %3993 = vmatpush1.msra.mxu0 %v3659
    %3994 = vmatprep.subr.mxu0 %v3664
    %3995 = vmatpush1.msra.mxu0 %v3663
    %3996 = vmatprep.subr.mxu0 %v3668
    %3997 = vmatpush1.msra.mxu0 %v3667
    %3998 = vmatprep.subr.mxu0 %v3672
    %3999 = vmatpush1.msra.mxu0 %v3671
    %4000 = vmatprep.subr.mxu0 %v3676
    %4001 = vmatpush1.msra.mxu0 %v3675
    %4002 = vmatprep.subr.mxu0 %v3680
    %4003 = vmatpush1.msra.mxu0 %v3679
    %4004 = vmatprep.subr.mxu0 %v3684
    %4005 = vmatpush1.msra.mxu0 %v3683
    %4006 = vmatprep.subr.mxu0 %v3688
    %4007 = vmatpush1.msra.mxu0 %v3687
    %4008 = vmatprep.subr.mxu0 %v3692
    %4009 = vmatpush1.msra.mxu0 %v3691
    %4010 = vmatprep.subr.mxu0 %v3696
    %4011 = vmatpush1.msra.mxu0 %v3695
    %4012 = vmatprep.subr.mxu0 %v3700
    %4013 = vmatpush1.msra.mxu0 %v3699
    %4014 = vmatprep.subr.mxu0 %v3704
    %4015 = vmatpush1.msra.mxu0 %v3703
    %4016 = vmatprep.subr.mxu0 %v3708
    %4017 = vmatpush1.msra.mxu0 %v3707
    %4018 = vmatprep.subr.mxu0 %v3712
    %4019 = vmatpush1.msra.mxu0 %v3711
    %4020 = vmatprep.subr.mxu0 %v3716
    %4021 = vmatpush1.msra.mxu0 %v3715
    %4022 = vmatprep.subr.mxu0 %v3720
    %4023 = vmatpush1.msra.mxu0 %v3719
    %4024 = vmatprep.subr.mxu0 %v3724
    %4025 = vmatpush1.msra.mxu0 %v3723
    %4026 = vmatprep.mubr.f32.mxu0 %v3214
    %4027 = vmatmul.mubr.f32.gmra.mrb[0].mxu0 %v3213
    %v4028 = vpop.f32.mrb[0].mxu0
    %v4029 = vadd.f32 %v3958, %v4028
    %v4030 = vpop.f32.mrb[0].mxu0
    %v4031 = vadd.f32 %v3960, %v4030
    %4032 = vdwg.mxu0
    %4033 = vmatprep.subr.mxu0 %v3218
    %4034 = vmatpush1.msra.mxu0 %v3217
    %4035 = vmatprep.subr.mxu0 %v3222
    %4036 = vmatpush1.msra.mxu0 %v3221
    %4037 = vmatprep.subr.mxu0 %v3226
    %4038 = vmatpush1.msra.mxu0 %v3225
    %4039 = vmatprep.subr.mxu0 %v3230
    %4040 = vmatpush1.msra.mxu0 %v3229
    %4041 = vmatprep.subr.mxu0 %v3234
    %4042 = vmatpush1.msra.mxu0 %v3233
    %4043 = vmatprep.subr.mxu0 %v3238
    %4044 = vmatpush1.msra.mxu0 %v3237
    %4045 = vmatprep.subr.mxu0 %v3242
    %4046 = vmatpush1.msra.mxu0 %v3241
    %4047 = vmatprep.subr.mxu0 %v3246
    %4048 = vmatpush1.msra.mxu0 %v3245
    %4049 = vmatprep.subr.mxu0 %v3250
    %4050 = vmatpush1.msra.mxu0 %v3249
    %4051 = vmatprep.subr.mxu0 %v3254
    %4052 = vmatpush1.msra.mxu0 %v3253
    %4053 = vmatprep.subr.mxu0 %v3258
    %4054 = vmatpush1.msra.mxu0 %v3257
    %4055 = vmatprep.subr.mxu0 %v3262
    %4056 = vmatpush1.msra.mxu0 %v3261
    %4057 = vmatprep.subr.mxu0 %v3266
    %4058 = vmatpush1.msra.mxu0 %v3265
    %4059 = vmatprep.subr.mxu0 %v3270
    %4060 = vmatpush1.msra.mxu0 %v3269
    %4061 = vmatprep.subr.mxu0 %v3274
    %4062 = vmatpush1.msra.mxu0 %v3273
    %4063 = vmatprep.subr.mxu0 %v3278
    %4064 = vmatpush1.msra.mxu0 %v3277
    %4065 = vmatprep.subr.mxu0 %v3282
    %4066 = vmatpush1.msra.mxu0 %v3281
    %4067 = vmatprep.subr.mxu0 %v3286
    %4068 = vmatpush1.msra.mxu0 %v3285
    %4069 = vmatprep.subr.mxu0 %v3290
    %4070 = vmatpush1.msra.mxu0 %v3289
    %4071 = vmatprep.subr.mxu0 %v3294
    %4072 = vmatpush1.msra.mxu0 %v3293
    %4073 = vmatprep.subr.mxu0 %v3298
    %4074 = vmatpush1.msra.mxu0 %v3297
    %4075 = vmatprep.subr.mxu0 %v3302
    %4076 = vmatpush1.msra.mxu0 %v3301
    %4077 = vmatprep.subr.mxu0 %v3306
    %4078 = vmatpush1.msra.mxu0 %v3305
    %4079 = vmatprep.subr.mxu0 %v3310
    %4080 = vmatpush1.msra.mxu0 %v3309
    %4081 = vmatprep.subr.mxu0 %v3314
    %4082 = vmatpush1.msra.mxu0 %v3313
    %4083 = vmatprep.subr.mxu0 %v3318
    %4084 = vmatpush1.msra.mxu0 %v3317
    %4085 = vmatprep.subr.mxu0 %v3322
    %4086 = vmatpush1.msra.mxu0 %v3321
    %4087 = vmatprep.subr.mxu0 %v3326
    %4088 = vmatpush1.msra.mxu0 %v3325
    %4089 = vmatprep.subr.mxu0 %v3330
    %4090 = vmatpush1.msra.mxu0 %v3329
    %4091 = vmatprep.subr.mxu0 %v3334
    %4092 = vmatpush1.msra.mxu0 %v3333
    %4093 = vmatprep.subr.mxu0 %v3338
    %4094 = vmatpush1.msra.mxu0 %v3337
    %4095 = vmatprep.subr.mxu0 %v3342
    %4096 = vmatpush1.msra.mxu0 %v3341
    %4097 = vmatprep.mubr.f32.mxu0 %v3208
    %4098 = vmatmul.mubr.f32.gmra.mrb[0].mxu0 %v3207
    %v4099 = vpop.f32.mrb[0].mxu0
    %v4100 = vadd.f32 %v3740, %v4099
    %v4101 = vpop.f32.mrb[0].mxu0
    %v4102 = vadd.f32 %v3744, %v4101
    %4103 = vdwg.mxu0
    %4104 = vmatprep.subr.mxu0 %v3346
    %4105 = vmatpush1.msra.mxu0 %v3345
    %4106 = vmatprep.subr.mxu0 %v3350
    %4107 = vmatpush1.msra.mxu0 %v3349
    %4108 = vmatprep.subr.mxu0 %v3354
    %4109 = vmatpush1.msra.mxu0 %v3353
    %4110 = vmatprep.subr.mxu0 %v3358
    %4111 = vmatpush1.msra.mxu0 %v3357
    %4112 = vmatprep.subr.mxu0 %v3362
    %4113 = vmatpush1.msra.mxu0 %v3361
    %4114 = vmatprep.subr.mxu0 %v3366
    %4115 = vmatpush1.msra.mxu0 %v3365
    %4116 = vmatprep.subr.mxu0 %v3370
    %4117 = vmatpush1.msra.mxu0 %v3369
    %4118 = vmatprep.subr.mxu0 %v3374
    %4119 = vmatpush1.msra.mxu0 %v3373
    %4120 = vmatprep.subr.mxu0 %v3378
    %4121 = vmatpush1.msra.mxu0 %v3377
    %4122 = vmatprep.subr.mxu0 %v3382
    %4123 = vmatpush1.msra.mxu0 %v3381
    %4124 = vmatprep.subr.mxu0 %v3386
    %4125 = vmatpush1.msra.mxu0 %v3385
    %4126 = vmatprep.subr.mxu0 %v3390
    %4127 = vmatpush1.msra.mxu0 %v3389
    %4128 = vmatprep.subr.mxu0 %v3394
    %4129 = vmatpush1.msra.mxu0 %v3393
    %4130 = vmatprep.subr.mxu0 %v3398
    %4131 = vmatpush1.msra.mxu0 %v3397
    %4132 = vmatprep.subr.mxu0 %v3402
    %4133 = vmatpush1.msra.mxu0 %v3401
    %4134 = vmatprep.subr.mxu0 %v3406
    %4135 = vmatpush1.msra.mxu0 %v3405
    %4136 = vmatprep.subr.mxu0 %v3410
    %4137 = vmatpush1.msra.mxu0 %v3409
    %4138 = vmatprep.subr.mxu0 %v3414
    %4139 = vmatpush1.msra.mxu0 %v3413
    %4140 = vmatprep.subr.mxu0 %v3418
    %4141 = vmatpush1.msra.mxu0 %v3417
    %4142 = vmatprep.subr.mxu0 %v3422
    %4143 = vmatpush1.msra.mxu0 %v3421
    %4144 = vmatprep.subr.mxu0 %v3426
    %4145 = vmatpush1.msra.mxu0 %v3425
    %4146 = vmatprep.subr.mxu0 %v3430
    %4147 = vmatpush1.msra.mxu0 %v3429
    %4148 = vmatprep.subr.mxu0 %v3434
    %4149 = vmatpush1.msra.mxu0 %v3433
    %4150 = vmatprep.subr.mxu0 %v3438
    %4151 = vmatpush1.msra.mxu0 %v3437
    %4152 = vmatprep.subr.mxu0 %v3442
    %4153 = vmatpush1.msra.mxu0 %v3441
    %4154 = vmatprep.subr.mxu0 %v3446
    %4155 = vmatpush1.msra.mxu0 %v3445
    %4156 = vmatprep.subr.mxu0 %v3450
    %4157 = vmatpush1.msra.mxu0 %v3449
    %4158 = vmatprep.subr.mxu0 %v3454
    %4159 = vmatpush1.msra.mxu0 %v3453
    %4160 = vmatprep.subr.mxu0 %v3458
    %4161 = vmatpush1.msra.mxu0 %v3457
    %4162 = vmatprep.subr.mxu0 %v3462
    %4163 = vmatpush1.msra.mxu0 %v3461
    %4164 = vmatprep.subr.mxu0 %v3466
    %4165 = vmatpush1.msra.mxu0 %v3465
    %4166 = vmatprep.subr.mxu0 %v3470
    %4167 = vmatpush1.msra.mxu0 %v3469
    %4168 = vmatprep.mubr.f32.mxu0 %v3210
    %4169 = vmatmul.mubr.f32.gmra.mrb[0].mxu0 %v3209
    %v4170 = vpop.f32.mrb[0].mxu0
    %v4171 = vadd.f32 %v4100, %v4170
    %v4172 = vpop.f32.mrb[0].mxu0
    %v4173 = vadd.f32 %v4102, %v4172
    %4174 = vdwg.mxu0
    %4175 = vmatprep.subr.mxu0 %v3474
    %4176 = vmatpush1.msra.mxu0 %v3473
    %4177 = vmatprep.subr.mxu0 %v3478
    %4178 = vmatpush1.msra.mxu0 %v3477
    %4179 = vmatprep.subr.mxu0 %v3482
    %4180 = vmatpush1.msra.mxu0 %v3481
    %4181 = vmatprep.subr.mxu0 %v3486
    %4182 = vmatpush1.msra.mxu0 %v3485
    %4183 = vmatprep.subr.mxu0 %v3490
    %4184 = vmatpush1.msra.mxu0 %v3489
    %4185 = vmatprep.subr.mxu0 %v3494
    %4186 = vmatpush1.msra.mxu0 %v3493
    %4187 = vmatprep.subr.mxu0 %v3498
    %4188 = vmatpush1.msra.mxu0 %v3497
    %4189 = vmatprep.subr.mxu0 %v3502
    %4190 = vmatpush1.msra.mxu0 %v3501
    %4191 = vmatprep.subr.mxu0 %v3506
    %4192 = vmatpush1.msra.mxu0 %v3505
    %4193 = vmatprep.subr.mxu0 %v3510
    %4194 = vmatpush1.msra.mxu0 %v3509
    %4195 = vmatprep.subr.mxu0 %v3514
    %4196 = vmatpush1.msra.mxu0 %v3513
    %4197 = vmatprep.subr.mxu0 %v3518
    %4198 = vmatpush1.msra.mxu0 %v3517
    %4199 = vmatprep.subr.mxu0 %v3522
    %4200 = vmatpush1.msra.mxu0 %v3521
    %4201 = vmatprep.subr.mxu0 %v3526
    %4202 = vmatpush1.msra.mxu0 %v3525
    %4203 = vmatprep.subr.mxu0 %v3530
    %4204 = vmatpush1.msra.mxu0 %v3529
    %4205 = vmatprep.subr.mxu0 %v3534
    %4206 = vmatpush1.msra.mxu0 %v3533
    %4207 = vmatprep.subr.mxu0 %v3538
    %4208 = vmatpush1.msra.mxu0 %v3537
    %4209 = vmatprep.subr.mxu0 %v3542
    %4210 = vmatpush1.msra.mxu0 %v3541
    %4211 = vmatprep.subr.mxu0 %v3546
    %4212 = vmatpush1.msra.mxu0 %v3545
    %4213 = vmatprep.subr.mxu0 %v3550
    %4214 = vmatpush1.msra.mxu0 %v3549
    %4215 = vmatprep.subr.mxu0 %v3554
    %4216 = vmatpush1.msra.mxu0 %v3553
    %4217 = vmatprep.subr.mxu0 %v3558
    %4218 = vmatpush1.msra.mxu0 %v3557
    %4219 = vmatprep.subr.mxu0 %v3562
    %4220 = vmatpush1.msra.mxu0 %v3561
    %4221 = vmatprep.subr.mxu0 %v3566
    %4222 = vmatpush1.msra.mxu0 %v3565
    %4223 = vmatprep.subr.mxu0 %v3570
    %4224 = vmatpush1.msra.mxu0 %v3569
    %4225 = vmatprep.subr.mxu0 %v3574
    %4226 = vmatpush1.msra.mxu0 %v3573
    %4227 = vmatprep.subr.mxu0 %v3578
    %4228 = vmatpush1.msra.mxu0 %v3577
    %4229 = vmatprep.subr.mxu0 %v3582
    %4230 = vmatpush1.msra.mxu0 %v3581
    %4231 = vmatprep.subr.mxu0 %v3586
    %4232 = vmatpush1.msra.mxu0 %v3585
    %4233 = vmatprep.subr.mxu0 %v3590
    %4234 = vmatpush1.msra.mxu0 %v3589
    %4235 = vmatprep.subr.mxu0 %v3594
    %4236 = vmatpush1.msra.mxu0 %v3593
    %4237 = vmatprep.subr.mxu0 %v3598
    %4238 = vmatpush1.msra.mxu0 %v3597
    %4239 = vmatprep.mubr.f32.mxu0 %v3212
    %4240 = vmatmul.mubr.f32.gmra.mrb[0].mxu0 %v3211
    %v4241 = vpop.f32.mrb[0].mxu0
    %v4242 = vadd.f32 %v4171, %v4241
    %v4243 = vpop.f32.mrb[0].mxu0
    %v4244 = vadd.f32 %v4173, %v4243
    %4245 = vdwg.mxu0
    %4246 = vmatprep.subr.mxu0 %v3602
    %4247 = vmatpush1.msra.mxu0 %v3601
    %4248 = vmatprep.subr.mxu0 %v3606
    %4249 = vmatpush1.msra.mxu0 %v3605
    %4250 = vmatprep.subr.mxu0 %v3610
    %4251 = vmatpush1.msra.mxu0 %v3609
    %4252 = vmatprep.subr.mxu0 %v3614
    %4253 = vmatpush1.msra.mxu0 %v3613
    %4254 = vmatprep.subr.mxu0 %v3618
    %4255 = vmatpush1.msra.mxu0 %v3617
    %4256 = vmatprep.subr.mxu0 %v3622
    %4257 = vmatpush1.msra.mxu0 %v3621
    %4258 = vmatprep.subr.mxu0 %v3626
    %4259 = vmatpush1.msra.mxu0 %v3625
    %4260 = vmatprep.subr.mxu0 %v3630
    %4261 = vmatpush1.msra.mxu0 %v3629
    %4262 = vmatprep.subr.mxu0 %v3634
    %4263 = vmatpush1.msra.mxu0 %v3633
    %4264 = vmatprep.subr.mxu0 %v3638
    %4265 = vmatpush1.msra.mxu0 %v3637
    %4266 = vmatprep.subr.mxu0 %v3642
    %4267 = vmatpush1.msra.mxu0 %v3641
    %4268 = vmatprep.subr.mxu0 %v3646
    %4269 = vmatpush1.msra.mxu0 %v3645
    %4270 = vmatprep.subr.mxu0 %v3650
    %4271 = vmatpush1.msra.mxu0 %v3649
    %4272 = vmatprep.subr.mxu0 %v3654
    %4273 = vmatpush1.msra.mxu0 %v3653
    %4274 = vmatprep.subr.mxu0 %v3658
    %4275 = vmatpush1.msra.mxu0 %v3657
    %4276 = vmatprep.subr.mxu0 %v3662
    %4277 = vmatpush1.msra.mxu0 %v3661
    %4278 = vmatprep.subr.mxu0 %v3666
    %4279 = vmatpush1.msra.mxu0 %v3665
    %4280 = vmatprep.subr.mxu0 %v3670
    %4281 = vmatpush1.msra.mxu0 %v3669
    %4282 = vmatprep.subr.mxu0 %v3674
    %4283 = vmatpush1.msra.mxu0 %v3673
    %4284 = vmatprep.subr.mxu0 %v3678
    %4285 = vmatpush1.msra.mxu0 %v3677
    %4286 = vmatprep.subr.mxu0 %v3682
    %4287 = vmatpush1.msra.mxu0 %v3681
    %4288 = vmatprep.subr.mxu0 %v3686
    %4289 = vmatpush1.msra.mxu0 %v3685
    %4290 = vmatprep.subr.mxu0 %v3690
    %4291 = vmatpush1.msra.mxu0 %v3689
    %4292 = vmatprep.subr.mxu0 %v3694
    %4293 = vmatpush1.msra.mxu0 %v3693
    %4294 = vmatprep.subr.mxu0 %v3698
    %4295 = vmatpush1.msra.mxu0 %v3697
    %4296 = vmatprep.subr.mxu0 %v3702
    %4297 = vmatpush1.msra.mxu0 %v3701
    %4298 = vmatprep.subr.mxu0 %v3706
    %4299 = vmatpush1.msra.mxu0 %v3705
    %4300 = vmatprep.subr.mxu0 %v3710
    %4301 = vmatpush1.msra.mxu0 %v3709
    %4302 = vmatprep.subr.mxu0 %v3714
    %4303 = vmatpush1.msra.mxu0 %v3713
    %4304 = vmatprep.subr.mxu0 %v3718
    %4305 = vmatpush1.msra.mxu0 %v3717
    %4306 = vmatprep.subr.mxu0 %v3722
    %4307 = vmatpush1.msra.mxu0 %v3721
    %4308 = vmatprep.subr.mxu0 %v3726
    %4309 = vmatpush1.msra.mxu0 %v3725
    %4310 = vmatprep.mubr.f32.mxu0 %v3214
    %4311 = vmatmul.mubr.f32.gmra.mrb[0].mxu0 %v3213
    %v4312 = vpop.f32.mrb[0].mxu0
    %v4313 = vadd.f32 %v4242, %v4312
    %v4314 = vpop.f32.mrb[0].mxu0
    %v4315 = vadd.f32 %v4244, %v4314
    %4316 = vdwg.mxu0
    %v4317 = vmax.f32 %v4029, 0.0
    %v4318 = vmax.f32 %v4031, 0.0
    %v4319 = vmax.f32 %v4313, 0.0
    %v4320 = vmax.f32 %v4315, 0.0
    %v4321 = vld [vmem:[%s10] sm:$0xff]
    %v4322 = vld [vmem:[%s10 + $0x8] sm:$0xff]
    %v4323 = vld [vmem:[%s10 + $0x10] sm:$0xff]
    %v4324 = vld [vmem:[%s10 + $0x18] sm:$0xff]
    %v4325 = vld [vmem:[%s10 + $0x20] sm:$0xff]
    %v4326 = vld [vmem:[%s10 + $0x28] sm:$0xff]
    %v4327 = vld [vmem:[%s10 + $0x30] sm:$0xff]
    %v4328 = vld [vmem:[%s10 + $0x38] sm:$0xff]
    %v4329 = vld [vmem:[%s10 + $0x40] sm:$0xff]
    %v4330 = vld [vmem:[%s10 + $0x48] sm:$0xff]
    %v4331 = vld [vmem:[%s10 + $0x50] sm:$0xff]
    %v4332 = vld [vmem:[%s10 + $0x58] sm:$0xff]
    %v4333 = vld [vmem:[%s10 + $0x60] sm:$0xff]
    %v4334 = vld [vmem:[%s10 + $0x68] sm:$0xff]
    %v4335 = vld [vmem:[%s10 + $0x70] sm:$0xff]
    %v4336 = vld [vmem:[%s10 + $0x78] sm:$0xff]
    %v4337 = vld [vmem:[%s10 + $0x80] sm:$0xff]
    %v4338 = vld [vmem:[%s10 + $0x88] sm:$0xff]
    %v4339 = vld [vmem:[%s10 + $0x90] sm:$0xff]
    %v4340 = vld [vmem:[%s10 + $0x98] sm:$0xff]
    %v4341 = vld [vmem:[%s10 + $0xa0] sm:$0xff]
    %v4342 = vld [vmem:[%s10 + $0xa8] sm:$0xff]
    %v4343 = vld [vmem:[%s10 + $0xb0] sm:$0xff]
    %v4344 = vld [vmem:[%s10 + $0xb8] sm:$0xff]
    %v4345 = vld [vmem:[%s10 + $0xc0] sm:$0xff]
    %v4346 = vld [vmem:[%s10 + $0xc8] sm:$0xff]
    %v4347 = vld [vmem:[%s10 + $0xd0] sm:$0xff]
    %v4348 = vld [vmem:[%s10 + $0xd8] sm:$0xff]
    %v4349 = vld [vmem:[%s10 + $0xe0] sm:$0xff]
    %v4350 = vld [vmem:[%s10 + $0xe8] sm:$0xff]
    %v4351 = vld [vmem:[%s10 + $0xf0] sm:$0xff]
    %v4352 = vld [vmem:[%s10 + $0xf8] sm:$0xff]
    %v4353 = vld [vmem:[%s10 + $0x100] sm:$0xff]
    %v4354 = vld [vmem:[%s10 + $0x108] sm:$0xff]
    %v4355 = vld [vmem:[%s10 + $0x110] sm:$0xff]
    %v4356 = vld [vmem:[%s10 + $0x118] sm:$0xff]
    %v4357 = vld [vmem:[%s10 + $0x120] sm:$0xff]
    %v4358 = vld [vmem:[%s10 + $0x128] sm:$0xff]
    %v4359 = vld [vmem:[%s10 + $0x130] sm:$0xff]
    %v4360 = vld [vmem:[%s10 + $0x138] sm:$0xff]
    %v4361 = vld [vmem:[%s10 + $0x140] sm:$0xff]
    %v4362 = vld [vmem:[%s10 + $0x148] sm:$0xff]
    %v4363 = vld [vmem:[%s10 + $0x150] sm:$0xff]
    %v4364 = vld [vmem:[%s10 + $0x158] sm:$0xff]
    %v4365 = vld [vmem:[%s10 + $0x160] sm:$0xff]
    %v4366 = vld [vmem:[%s10 + $0x168] sm:$0xff]
    %v4367 = vld [vmem:[%s10 + $0x170] sm:$0xff]
    %v4368 = vld [vmem:[%s10 + $0x178] sm:$0xff]
    %v4369 = vld [vmem:[%s10 + $0x180] sm:$0xff]
    %v4370 = vld [vmem:[%s10 + $0x188] sm:$0xff]
    %v4371 = vld [vmem:[%s10 + $0x190] sm:$0xff]
    %v4372 = vld [vmem:[%s10 + $0x198] sm:$0xff]
    %v4373 = vld [vmem:[%s10 + $0x1a0] sm:$0xff]
    %v4374 = vld [vmem:[%s10 + $0x1a8] sm:$0xff]
    %v4375 = vld [vmem:[%s10 + $0x1b0] sm:$0xff]
    %v4376 = vld [vmem:[%s10 + $0x1b8] sm:$0xff]
    %v4377 = vld [vmem:[%s10 + $0x1c0] sm:$0xff]
    %v4378 = vld [vmem:[%s10 + $0x1c8] sm:$0xff]
    %v4379 = vld [vmem:[%s10 + $0x1d0] sm:$0xff]
    %v4380 = vld [vmem:[%s10 + $0x1d8] sm:$0xff]
    %v4381 = vld [vmem:[%s10 + $0x1e0] sm:$0xff]
    %v4382 = vld [vmem:[%s10 + $0x1e8] sm:$0xff]
    %v4383 = vld [vmem:[%s10 + $0x1f0] sm:$0xff]
    %v4384 = vld [vmem:[%s10 + $0x1f8] sm:$0xff]
    %v4385 = vld [vmem:[%s10 + $0x200] sm:$0xff]
    %v4386 = vld [vmem:[%s10 + $0x208] sm:$0xff]
    %v4387 = vld [vmem:[%s10 + $0x210] sm:$0xff]
    %v4388 = vld [vmem:[%s10 + $0x218] sm:$0xff]
    %v4389 = vld [vmem:[%s10 + $0x220] sm:$0xff]
    %v4390 = vld [vmem:[%s10 + $0x228] sm:$0xff]
    %v4391 = vld [vmem:[%s10 + $0x230] sm:$0xff]
    %v4392 = vld [vmem:[%s10 + $0x238] sm:$0xff]
    %v4393 = vld [vmem:[%s10 + $0x240] sm:$0xff]
    %v4394 = vld [vmem:[%s10 + $0x248] sm:$0xff]
    %v4395 = vld [vmem:[%s10 + $0x250] sm:$0xff]
    %v4396 = vld [vmem:[%s10 + $0x258] sm:$0xff]
    %v4397 = vld [vmem:[%s10 + $0x260] sm:$0xff]
    %v4398 = vld [vmem:[%s10 + $0x268] sm:$0xff]
    %v4399 = vld [vmem:[%s10 + $0x270] sm:$0xff]
    %v4400 = vld [vmem:[%s10 + $0x278] sm:$0xff]
    %v4401 = vld [vmem:[%s10 + $0x280] sm:$0xff]
    %v4402 = vld [vmem:[%s10 + $0x288] sm:$0xff]
    %v4403 = vld [vmem:[%s10 + $0x290] sm:$0xff]
    %v4404 = vld [vmem:[%s10 + $0x298] sm:$0xff]
    %v4405 = vld [vmem:[%s10 + $0x2a0] sm:$0xff]
    %v4406 = vld [vmem:[%s10 + $0x2a8] sm:$0xff]
    %v4407 = vld [vmem:[%s10 + $0x2b0] sm:$0xff]
    %v4408 = vld [vmem:[%s10 + $0x2b8] sm:$0xff]
    %v4409 = vld [vmem:[%s10 + $0x2c0] sm:$0xff]
    %v4410 = vld [vmem:[%s10 + $0x2c8] sm:$0xff]
    %v4411 = vld [vmem:[%s10 + $0x2d0] sm:$0xff]
    %v4412 = vld [vmem:[%s10 + $0x2d8] sm:$0xff]
    %v4413 = vld [vmem:[%s10 + $0x2e0] sm:$0xff]
    %v4414 = vld [vmem:[%s10 + $0x2e8] sm:$0xff]
    %v4415 = vld [vmem:[%s10 + $0x2f0] sm:$0xff]
    %v4416 = vld [vmem:[%s10 + $0x2f8] sm:$0xff]
    %v4417 = vld [vmem:[%s10 + $0x300] sm:$0xff]
    %v4418 = vld [vmem:[%s10 + $0x308] sm:$0xff]
    %v4419 = vld [vmem:[%s10 + $0x310] sm:$0xff]
    %v4420 = vld [vmem:[%s10 + $0x318] sm:$0xff]
    %v4421 = vld [vmem:[%s10 + $0x320] sm:$0xff]
    %v4422 = vld [vmem:[%s10 + $0x328] sm:$0xff]
    %v4423 = vld [vmem:[%s10 + $0x330] sm:$0xff]
    %v4424 = vld [vmem:[%s10 + $0x338] sm:$0xff]
    %v4425 = vld [vmem:[%s10 + $0x340] sm:$0xff]
    %v4426 = vld [vmem:[%s10 + $0x348] sm:$0xff]
    %v4427 = vld [vmem:[%s10 + $0x350] sm:$0xff]
    %v4428 = vld [vmem:[%s10 + $0x358] sm:$0xff]
    %v4429 = vld [vmem:[%s10 + $0x360] sm:$0xff]
    %v4430 = vld [vmem:[%s10 + $0x368] sm:$0xff]
    %v4431 = vld [vmem:[%s10 + $0x370] sm:$0xff]
    %v4432 = vld [vmem:[%s10 + $0x378] sm:$0xff]
    %v4433 = vld [vmem:[%s10 + $0x380] sm:$0xff]
    %v4434 = vld [vmem:[%s10 + $0x388] sm:$0xff]
    %v4435 = vld [vmem:[%s10 + $0x390] sm:$0xff]
    %v4436 = vld [vmem:[%s10 + $0x398] sm:$0xff]
    %v4437 = vld [vmem:[%s10 + $0x3a0] sm:$0xff]
    %v4438 = vld [vmem:[%s10 + $0x3a8] sm:$0xff]
    %v4439 = vld [vmem:[%s10 + $0x3b0] sm:$0xff]
    %v4440 = vld [vmem:[%s10 + $0x3b8] sm:$0xff]
    %v4441 = vld [vmem:[%s10 + $0x3c0] sm:$0xff]
    %v4442 = vld [vmem:[%s10 + $0x3c8] sm:$0xff]
    %v4443 = vld [vmem:[%s10 + $0x3d0] sm:$0xff]
    %v4444 = vld [vmem:[%s10 + $0x3d8] sm:$0xff]
    %v4445 = vld [vmem:[%s10 + $0x3e0] sm:$0xff]
    %v4446 = vld [vmem:[%s10 + $0x3e8] sm:$0xff]
    %v4447 = vld [vmem:[%s10 + $0x3f0] sm:$0xff]
    %v4448 = vld [vmem:[%s10 + $0x3f8] sm:$0xff]
    %v4449 = vld [vmem:[%s11] sm:$0x3]
    %v4451 = vlaneseq
    %v4452 = vshrl.u32 %v4451, 7
    %v4453 = vsub.s32 0, %v4452
    %v4454 = vrot.slane %v4449, %v4453
    %v4455 = vlaneseq
    %v4456 = vshrl.u32 %v4455, 7
    %v4457 = vsub.s32 1, %v4456
    %v4458 = vrot.slane %v4449, %v4457
    %4461 = vmatprep.subr.mxu0 %v4322
    %4462 = vmatpush1.msra.mxu0 %v4321
    %4463 = vmatprep.subr.mxu0 %v4324
    %4464 = vmatpush1.msra.mxu0 %v4323
    %4465 = vmatprep.subr.mxu0 %v4326
    %4466 = vmatpush1.msra.mxu0 %v4325
    %4467 = vmatprep.subr.mxu0 %v4328
    %4468 = vmatpush1.msra.mxu0 %v4327
    %4469 = vmatprep.subr.mxu0 %v4330
    %4470 = vmatpush1.msra.mxu0 %v4329
    %4471 = vmatprep.subr.mxu0 %v4332
    %4472 = vmatpush1.msra.mxu0 %v4331
    %4473 = vmatprep.subr.mxu0 %v4334
    %4474 = vmatpush1.msra.mxu0 %v4333
    %4475 = vmatprep.subr.mxu0 %v4336
    %4476 = vmatpush1.msra.mxu0 %v4335
    %4477 = vmatprep.subr.mxu0 %v4338
    %4478 = vmatpush1.msra.mxu0 %v4337
    %4479 = vmatprep.subr.mxu0 %v4340
    %4480 = vmatpush1.msra.mxu0 %v4339
    %4481 = vmatprep.subr.mxu0 %v4342
    %4482 = vmatpush1.msra.mxu0 %v4341
    %4483 = vmatprep.subr.mxu0 %v4344
    %4484 = vmatpush1.msra.mxu0 %v4343
    %4485 = vmatprep.subr.mxu0 %v4346
    %4486 = vmatpush1.msra.mxu0 %v4345
    %4487 = vmatprep.subr.mxu0 %v4348
    %4488 = vmatpush1.msra.mxu0 %v4347
    %4489 = vmatprep.subr.mxu0 %v4350
    %4490 = vmatpush1.msra.mxu0 %v4349
    %4491 = vmatprep.subr.mxu0 %v4352
    %4492 = vmatpush1.msra.mxu0 %v4351
    %4493 = vmatprep.subr.mxu0 %v4354
    %4494 = vmatpush1.msra.mxu0 %v4353
    %4495 = vmatprep.subr.mxu0 %v4356
    %4496 = vmatpush1.msra.mxu0 %v4355
    %4497 = vmatprep.subr.mxu0 %v4358
    %4498 = vmatpush1.msra.mxu0 %v4357
    %4499 = vmatprep.subr.mxu0 %v4360
    %4500 = vmatpush1.msra.mxu0 %v4359
    %4501 = vmatprep.subr.mxu0 %v4362
    %4502 = vmatpush1.msra.mxu0 %v4361
    %4503 = vmatprep.subr.mxu0 %v4364
    %4504 = vmatpush1.msra.mxu0 %v4363
    %4505 = vmatprep.subr.mxu0 %v4366
    %4506 = vmatpush1.msra.mxu0 %v4365
    %4507 = vmatprep.subr.mxu0 %v4368
    %4508 = vmatpush1.msra.mxu0 %v4367
    %4509 = vmatprep.subr.mxu0 %v4370
    %4510 = vmatpush1.msra.mxu0 %v4369
    %4511 = vmatprep.subr.mxu0 %v4372
    %4512 = vmatpush1.msra.mxu0 %v4371
    %4513 = vmatprep.subr.mxu0 %v4374
    %4514 = vmatpush1.msra.mxu0 %v4373
    %4515 = vmatprep.subr.mxu0 %v4376
    %4516 = vmatpush1.msra.mxu0 %v4375
    %4517 = vmatprep.subr.mxu0 %v4378
    %4518 = vmatpush1.msra.mxu0 %v4377
    %4519 = vmatprep.subr.mxu0 %v4380
    %4520 = vmatpush1.msra.mxu0 %v4379
    %4521 = vmatprep.subr.mxu0 %v4382
    %4522 = vmatpush1.msra.mxu0 %v4381
    %4523 = vmatprep.subr.mxu0 %v4384
    %4524 = vmatpush1.msra.mxu0 %v4383
    %4525 = vmatprep.mubr.f32.mxu0 %v4318
    %4526 = vmatmul.mubr.f32.gmra.mrb[0].mxu0 %v4317
    %v4527 = vpop.f32.mrb[0].mxu0
    %v4528 = vadd.f32 %v4454, %v4527
    %v4529 = vpop.f32.mrb[0].mxu0
    %v4530 = vadd.f32 %v4458, %v4529
    %4531 = vdwg.mxu0
    %4532 = vmatprep.subr.mxu0 %v4386
    %4533 = vmatpush1.msra.mxu0 %v4385
    %4534 = vmatprep.subr.mxu0 %v4388
    %4535 = vmatpush1.msra.mxu0 %v4387
    %4536 = vmatprep.subr.mxu0 %v4390
    %4537 = vmatpush1.msra.mxu0 %v4389
    %4538 = vmatprep.subr.mxu0 %v4392
    %4539 = vmatpush1.msra.mxu0 %v4391
    %4540 = vmatprep.subr.mxu0 %v4394
    %4541 = vmatpush1.msra.mxu0 %v4393
    %4542 = vmatprep.subr.mxu0 %v4396
    %4543 = vmatpush1.msra.mxu0 %v4395
    %4544 = vmatprep.subr.mxu0 %v4398
    %4545 = vmatpush1.msra.mxu0 %v4397
    %4546 = vmatprep.subr.mxu0 %v4400
    %4547 = vmatpush1.msra.mxu0 %v4399
    %4548 = vmatprep.subr.mxu0 %v4402
    %4549 = vmatpush1.msra.mxu0 %v4401
    %4550 = vmatprep.subr.mxu0 %v4404
    %4551 = vmatpush1.msra.mxu0 %v4403
    %4552 = vmatprep.subr.mxu0 %v4406
    %4553 = vmatpush1.msra.mxu0 %v4405
    %4554 = vmatprep.subr.mxu0 %v4408
    %4555 = vmatpush1.msra.mxu0 %v4407
    %4556 = vmatprep.subr.mxu0 %v4410
    %4557 = vmatpush1.msra.mxu0 %v4409
    %4558 = vmatprep.subr.mxu0 %v4412
    %4559 = vmatpush1.msra.mxu0 %v4411
    %4560 = vmatprep.subr.mxu0 %v4414
    %4561 = vmatpush1.msra.mxu0 %v4413
    %4562 = vmatprep.subr.mxu0 %v4416
    %4563 = vmatpush1.msra.mxu0 %v4415
    %4564 = vmatprep.subr.mxu0 %v4418
    %4565 = vmatpush1.msra.mxu0 %v4417
    %4566 = vmatprep.subr.mxu0 %v4420
    %4567 = vmatpush1.msra.mxu0 %v4419
    %4568 = vmatprep.subr.mxu0 %v4422
    %4569 = vmatpush1.msra.mxu0 %v4421
    %4570 = vmatprep.subr.mxu0 %v4424
    %4571 = vmatpush1.msra.mxu0 %v4423
    %4572 = vmatprep.subr.mxu0 %v4426
    %4573 = vmatpush1.msra.mxu0 %v4425
    %4574 = vmatprep.subr.mxu0 %v4428
    %4575 = vmatpush1.msra.mxu0 %v4427
    %4576 = vmatprep.subr.mxu0 %v4430
    %4577 = vmatpush1.msra.mxu0 %v4429
    %4578 = vmatprep.subr.mxu0 %v4432
    %4579 = vmatpush1.msra.mxu0 %v4431
    %4580 = vmatprep.subr.mxu0 %v4434
    %4581 = vmatpush1.msra.mxu0 %v4433
    %4582 = vmatprep.subr.mxu0 %v4436
    %4583 = vmatpush1.msra.mxu0 %v4435
    %4584 = vmatprep.subr.mxu0 %v4438
    %4585 = vmatpush1.msra.mxu0 %v4437
    %4586 = vmatprep.subr.mxu0 %v4440
    %4587 = vmatpush1.msra.mxu0 %v4439
    %4588 = vmatprep.subr.mxu0 %v4442
    %4589 = vmatpush1.msra.mxu0 %v4441
    %4590 = vmatprep.subr.mxu0 %v4444
    %4591 = vmatpush1.msra.mxu0 %v4443
    %4592 = vmatprep.subr.mxu0 %v4446
    %4593 = vmatpush1.msra.mxu0 %v4445
    %4594 = vmatprep.subr.mxu0 %v4448
    %4595 = vmatpush1.msra.mxu0 %v4447
    %4596 = vmatprep.mubr.f32.mxu0 %v4320
    %4597 = vmatmul.mubr.f32.gmra.mrb[0].mxu0 %v4319
    %v4598 = vpop.f32.mrb[0].mxu0
    %v4599 = vadd.f32 %v4528, %v4598
    %v4600 = vpop.f32.mrb[0].mxu0
    %v4601 = vadd.f32 %v4530, %v4600
    %4602 = vdwg.mxu0
    %v4603 = vmax.f32 %v4599, 0.0
    %v4604 = vmax.f32 %v4601, 0.0
    %v4605 = vld [vmem:[%s12] sm:$0xff]
    %v4606 = vld [vmem:[%s12 + $0x8] sm:$0xff]
    %v4607 = vld [vmem:[%s12 + $0x10] sm:$0xff]
    %v4608 = vld [vmem:[%s12 + $0x18] sm:$0xff]
    %v4609 = vld [vmem:[%s12 + $0x20] sm:$0xff]
    %v4610 = vld [vmem:[%s12 + $0x28] sm:$0xff]
    %v4611 = vld [vmem:[%s12 + $0x30] sm:$0xff]
    %v4612 = vld [vmem:[%s12 + $0x38] sm:$0xff]
    %v4613 = vld [vmem:[%s12 + $0x40] sm:$0xff]
    %v4614 = vld [vmem:[%s12 + $0x48] sm:$0xff]
    %v4615 = vld [vmem:[%s12 + $0x50] sm:$0xff]
    %v4616 = vld [vmem:[%s12 + $0x58] sm:$0xff]
    %v4617 = vld [vmem:[%s12 + $0x60] sm:$0xff]
    %v4618 = vld [vmem:[%s12 + $0x68] sm:$0xff]
    %v4619 = vld [vmem:[%s12 + $0x70] sm:$0xff]
    %v4620 = vld [vmem:[%s12 + $0x78] sm:$0xff]
    %v4621 = vld [vmem:[%s12 + $0x80] sm:$0xff]
    %v4622 = vld [vmem:[%s12 + $0x88] sm:$0xff]
    %v4623 = vld [vmem:[%s12 + $0x90] sm:$0xff]
    %v4624 = vld [vmem:[%s12 + $0x98] sm:$0xff]
    %v4625 = vld [vmem:[%s12 + $0xa0] sm:$0xff]
    %v4626 = vld [vmem:[%s12 + $0xa8] sm:$0xff]
    %v4627 = vld [vmem:[%s12 + $0xb0] sm:$0xff]
    %v4628 = vld [vmem:[%s12 + $0xb8] sm:$0xff]
    %v4629 = vld [vmem:[%s12 + $0xc0] sm:$0xff]
    %v4630 = vld [vmem:[%s12 + $0xc8] sm:$0xff]
    %v4631 = vld [vmem:[%s12 + $0xd0] sm:$0xff]
    %v4632 = vld [vmem:[%s12 + $0xd8] sm:$0xff]
    %v4633 = vld [vmem:[%s12 + $0xe0] sm:$0xff]
    %v4634 = vld [vmem:[%s12 + $0xe8] sm:$0xff]
    %v4635 = vld [vmem:[%s12 + $0xf0] sm:$0xff]
    %v4636 = vld [vmem:[%s12 + $0xf8] sm:$0xff]
    %v4637 = vld [vmem:[%s13] sm:$0x1]
    %v4639 = vlaneseq
    %v4640 = vshrl.u32 %v4639, 7
    %v4641 = vsub.s32 0, %v4640
    %v4642 = vrot.slane %v4637, %v4641
    %4644 = vmatprep.subr.mxu0 0.0
    %4645 = vmatpush1.msra.mxu0 %v4605
    %4646 = vmatprep.subr.mxu0 0.0
    %4647 = vmatpush1.msra.mxu0 %v4606
    %4648 = vmatprep.subr.mxu0 0.0
    %4649 = vmatpush1.msra.mxu0 %v4607
    %4650 = vmatprep.subr.mxu0 0.0
    %4651 = vmatpush1.msra.mxu0 %v4608
    %4652 = vmatprep.subr.mxu0 0.0
    %4653 = vmatpush1.msra.mxu0 %v4609
    %4654 = vmatprep.subr.mxu0 0.0
    %4655 = vmatpush1.msra.mxu0 %v4610
    %4656 = vmatprep.subr.mxu0 0.0
    %4657 = vmatpush1.msra.mxu0 %v4611
    %4658 = vmatprep.subr.mxu0 0.0
    %4659 = vmatpush1.msra.mxu0 %v4612
    %4660 = vmatprep.subr.mxu0 0.0
    %4661 = vmatpush1.msra.mxu0 %v4613
    %4662 = vmatprep.subr.mxu0 0.0
    %4663 = vmatpush1.msra.mxu0 %v4614
    %4664 = vmatprep.subr.mxu0 0.0
    %4665 = vmatpush1.msra.mxu0 %v4615
    %4666 = vmatprep.subr.mxu0 0.0
    %4667 = vmatpush1.msra.mxu0 %v4616
    %4668 = vmatprep.subr.mxu0 0.0
    %4669 = vmatpush1.msra.mxu0 %v4617
    %4670 = vmatprep.subr.mxu0 0.0
    %4671 = vmatpush1.msra.mxu0 %v4618
    %4672 = vmatprep.subr.mxu0 0.0
    %4673 = vmatpush1.msra.mxu0 %v4619
    %4674 = vmatprep.subr.mxu0 0.0
    %4675 = vmatpush1.msra.mxu0 %v4620
    %4676 = vmatprep.subr.mxu0 0.0
    %4677 = vmatpush1.msra.mxu0 %v4621
    %4678 = vmatprep.subr.mxu0 0.0
    %4679 = vmatpush1.msra.mxu0 %v4622
    %4680 = vmatprep.subr.mxu0 0.0
    %4681 = vmatpush1.msra.mxu0 %v4623
    %4682 = vmatprep.subr.mxu0 0.0
    %4683 = vmatpush1.msra.mxu0 %v4624
    %4684 = vmatprep.subr.mxu0 0.0
    %4685 = vmatpush1.msra.mxu0 %v4625
    %4686 = vmatprep.subr.mxu0 0.0
    %4687 = vmatpush1.msra.mxu0 %v4626
    %4688 = vmatprep.subr.mxu0 0.0
    %4689 = vmatpush1.msra.mxu0 %v4627
    %4690 = vmatprep.subr.mxu0 0.0
    %4691 = vmatpush1.msra.mxu0 %v4628
    %4692 = vmatprep.subr.mxu0 0.0
    %4693 = vmatpush1.msra.mxu0 %v4629
    %4694 = vmatprep.subr.mxu0 0.0
    %4695 = vmatpush1.msra.mxu0 %v4630
    %4696 = vmatprep.subr.mxu0 0.0
    %4697 = vmatpush1.msra.mxu0 %v4631
    %4698 = vmatprep.subr.mxu0 0.0
    %4699 = vmatpush1.msra.mxu0 %v4632
    %4700 = vmatprep.subr.mxu0 0.0
    %4701 = vmatpush1.msra.mxu0 %v4633
    %4702 = vmatprep.subr.mxu0 0.0
    %4703 = vmatpush1.msra.mxu0 %v4634
    %4704 = vmatprep.subr.mxu0 0.0
    %4705 = vmatpush1.msra.mxu0 %v4635
    %4706 = vmatprep.subr.mxu0 0.0
    %4707 = vmatpush1.msra.mxu0 %v4636
    %4708 = vmatprep.mubr.f32.mxu0 %v4604
    %4709 = vmatmul.mubr.f32.gmra.mrb[0].mxu0 %v4603
    %v4710 = vpop.f32.mrb[0].mxu0
    %v4711 = vadd.f32 %v4642, %v4710
    %v4712 = vpop.f32.mrb[0].mxu0
    %4713 = vdwg.mxu0
    %4714 = vmax.xlane.f32.xlu0 %v4711
    %v4715 = vpop.xlane.xlu0 %4714
    %v4716 = vsub.f32 %v4711, %v4715
    %v4717 = vmul.f32 %v4716, 1.442695
    %v4718 = vpow.pop %v4717
    %4719 = vadd.xlane.f32.xlu0 %v4718
    %v4720 = vpop.xlane.xlu0 %4719
    %v4721 = vlog2.pop %v4720
    %v4722 = vmul.f32 %v4721, 0.6931472
    %v4723 = vsub.f32 %v4716, %v4722
    %4724 = vst [vmem:[%s15] sm:$0xff] %v4723
  $region69: #{pointnet_cls_forward.3} parent=0 // pred_fallthru
    _
  // Predicated region
  $region70: #{pointnet_cls_forward.3} parent=0 // pred_check
    _
  $region71: #{pointnet_cls_forward.3} parent=0 // pred_check_branch
    %4726 = sbr.rel (0) target = $region73
  $region72: #{pointnet_cls_forward.3} parent=0 // pred_region
    _
  $region73: #{pointnet_cls_forward.3} parent=0 // pred_fallthru
    _
  // Predicated region
  $region74: #{pointnet_cls_forward.3} parent=0 // pred_check
    _
  $region75: #{pointnet_cls_forward.3} parent=0 // pred_check_branch
    %4728 = sbr.rel (0) target = $region77
  $region76: #{pointnet_cls_forward.3} parent=0 // pred_region
    _
  $region77: #{pointnet_cls_forward.3} parent=0 // pred_fallthru
    _
  // Predicated region
  $region78: #{pointnet_cls_forward.3} parent=0 // pred_check
    _
  $region79: #{pointnet_cls_forward.3} parent=0 // pred_check_branch
    %4730 = sbr.rel (0) target = $region81
  $region80: #{pointnet_cls_forward.3} parent=0 // pred_region
    _
  $region81: #{pointnet_cls_forward.3} parent=0 // pred_fallthru
    _
  // Predicated region
  $region82: #{pointnet_cls_forward.3} parent=0 // pred_check
    _
  $region83: #{pointnet_cls_forward.3} parent=0 // pred_check_branch
    %4732 = sbr.rel (0) target = $region85
  $region84: #{pointnet_cls_forward.3} parent=0 // pred_region
    _
  $region85: #{pointnet_cls_forward.3} parent=0 // pred_fallthru
    _

</llo_original>
